<compile_context>
chip_gen: v6e
topology: v6e:2x2x1
jax: 0.10.0
libtpu: 0.0.40
codegen_flags: <defaults>
</compile_context>

<pallas_src>
import math

import jax
import jax.numpy as jnp
from jax.experimental import pallas as pl
from jax.experimental.pallas import tpu as pltpu


# ----------------------------- Pallas kernel ------------------------------ #

def _osg_decoder_kernel(feat_ref, w1_ref, b1_ref, w2r_ref, b2r_ref, w2s_ref, b2s_ref,
                        rgb_ref, sigma_ref):
    """Fused: plane-sum -> FC1(+softplus) -> FC2 -> sigma / activated rgb.

    feat_ref  : (P, T, C)  tile of T rows of all P planes (native layout, batch dim squeezed)
    w1_ref    : (C, H)     first FC weight (lr_mul/sqrt(fan_in) and 1/P pre-folded)
    b1_ref    : (1, H)
    w2r_ref   : (H, R)     second FC weight, rgb columns (gain pre-folded), R = out_dim
    b2r_ref   : (1, R)
    w2s_ref   : (H, 1)     second FC weight, sigma column
    b2s_ref   : (1, 1)
    rgb_ref   : (T, R)     sigmoid(y_rgb) * 1.002 - 0.001
    sigma_ref : (T, 1)     raw y_sigma
    """
    feat = feat_ref[...].astype(jnp.float32)             # (P, T, C)  bf16 -> f32 at load
    # Plane mean: 1/P is folded into w1, so a plain sum suffices (cheap VPU adds).
    x = jnp.sum(feat, axis=0)                             # (T, C)

    # FC1 + Softplus (softplus == logaddexp(x, 0), numerically stable).
    h = jnp.dot(x, w1_ref[...], preferred_element_type=jnp.float32) + b1_ref[...]
    h = jnp.logaddexp(h, 0.0)

    # FC2, split into rgb / sigma heads (no in-kernel column slicing needed).
    rgb = jnp.dot(h, w2r_ref[...], preferred_element_type=jnp.float32) + b2r_ref[...]
    rgb_ref[...] = (jax.nn.sigmoid(rgb) * (1.0 + 2.0 * 0.001) - 0.001).astype(rgb_ref.dtype)

    sig = jnp.dot(h, w2s_ref[...], preferred_element_type=jnp.float32) + b2s_ref[...]
    sigma_ref[...] = sig.astype(sigma_ref.dtype)


# ------------------------------ JAX wrapper -------------------------------- #

_LANE = 128
_VMEM_ROW_BUDGET_BYTES = 48 << 20   # keep comfortably under v7x's 64 MiB physical VMEM


def osg_decoder_forward(sampled_features, ray_directions, params,
                        *, activation="sigmoid", row_tile=4096):
    """sampled_features: (N, P, M, C) — feed as bfloat16 from the caller for the
    HBM-stream win; any float dtype is accepted. ray_directions unused (as in torch)."""
    del ray_directions  # unused by OSGDecoder.forward
    assert activation == "sigmoid"  # TODO(synk): add 'lrelu' branch if needed

    N, P, M, C = sampled_features.shape

    w1, b1, w2, b2 = params["w1"], params["b1"], params["w2"], params["b2"]
    H = w1.shape[1]
    O = w2.shape[1]          # 1 + decoder_output_dim
    R = O - 1                # rgb channels

    # Fold the 1/P plane-mean scale into the first FC weight (tiny host-side op),
    # and split the second FC into sigma (col 0) / rgb (cols 1:) heads.
    w1_eff = (w1 * (1.0 / P)).astype(jnp.float32)
    w2_sig = w2[:, 0:1].astype(jnp.float32)
    b2_sig = b2[:, 0:1].astype(jnp.float32)
    w2_rgb = w2[:, 1:].astype(jnp.float32)
    b2_rgb = b2[:, 1:].astype(jnp.float32)

    # ---- row tile: clamp to M, to a multiple of 8, and to the VMEM budget ---- #
    feat_item = jnp.dtype(sampled_features.dtype).itemsize
    # Per-row VMEM bytes with lane padding (C=32 and O columns both pad to 128 lanes):
    #   feat (P, rt, C->128) * itemsize  +  rgb (rt, 128) f32  +  sigma (rt, 128) f32
    bytes_per_row = P * _LANE * feat_item + _LANE * 4 + _LANE * 4
    rt_cap = max(8, (_VMEM_ROW_BUDGET_BYTES // (2 * bytes_per_row)) // 8 * 8)

    rt = min(row_tile, M, rt_cap)
    if rt != M and rt % 8 != 0:
        rt = max(8, (rt // 8) * 8)
    grid = (N, pl.cdiv(M, rt))

    # Explicit scoped-VMEM limit derived from the chosen tile (double-buffered blocks
    # + weights + headroom); never below the default-ish 16 MiB, never above 64 MiB.
    needed = 2 * rt * bytes_per_row
    vmem_limit = min(max(int(needed * 1.5) + (4 << 20), 16 << 20), 64 << 20)

    rgb_out, sigma_out = pl.pallas_call(
        _osg_decoder_kernel,
        out_shape=(
            jax.ShapeDtypeStruct((N, M, R), jnp.float32),
            jax.ShapeDtypeStruct((N, M, 1), jnp.float32),
        ),
        grid_spec=pltpu.PrefetchScalarGridSpec(
            num_scalar_prefetch=0,
            grid=grid,
            in_specs=[
                # Native (N, P, M, C) layout: batch squeezed, P kept, M tiled, C full.
                pl.BlockSpec((pl.Squeezed(), P, rt, C), lambda n, i: (n, 0, i, 0)),
                pl.BlockSpec((C, H), lambda n, i: (0, 0)),   # w1 (resident)
                pl.BlockSpec((1, H), lambda n, i: (0, 0)),   # b1
                pl.BlockSpec((H, R), lambda n, i: (0, 0)),   # w2 rgb
                pl.BlockSpec((1, R), lambda n, i: (0, 0)),   # b2 rgb
                pl.BlockSpec((H, 1), lambda n, i: (0, 0)),   # w2 sigma
                pl.BlockSpec((1, 1), lambda n, i: (0, 0)),   # b2 sigma
            ],
            out_specs=[
                pl.BlockSpec((pl.Squeezed(), rt, R), lambda n, i: (n, i, 0)),
                pl.BlockSpec((pl.Squeezed(), rt, 1), lambda n, i: (n, i, 0)),
            ],
        ),
        compiler_params=pltpu.CompilerParams(
            dimension_semantics=("parallel", "parallel"),
            vmem_limit_bytes=vmem_limit,
        ),
    )(sampled_features, w1_eff, b1, w2_rgb, b2_rgb, w2_sig, b2_sig)

    return {"rgb": rgb_out, "sigma": sigma_out}


# --------------------------- parameter creation ---------------------------- #

def make_osg_decoder_params(key, n_features, decoder_output_dim,
                            decoder_lr_mul=1.0, hidden_dim=64):
    """Deterministic synthetic parameters, matching FullyConnectedLayer init.

    StyleGAN FullyConnectedLayer stores raw weight (out, in) = randn/lr_mul and
    applies weight * (lr_mul / sqrt(in)), bias * lr_mul at forward time.
    Here we pre-fold the gains and transpose to (in, out) for the kernel.
    """
    k1, k2, k3, k4 = jax.random.split(key, 4)
    out_dim = 1 + decoder_output_dim

    w1_raw = jax.random.normal(k1, (hidden_dim, n_features), jnp.float32) / decoder_lr_mul
    b1_raw = jax.random.normal(k2, (hidden_dim,), jnp.float32) * 0.1
    w2_raw = jax.random.normal(k3, (out_dim, hidden_dim), jnp.float32) / decoder_lr_mul
    b2_raw = jax.random.normal(k4, (out_dim,), jnp.float32) * 0.1

    w1 = (w1_raw * (decoder_lr_mul / math.sqrt(n_features))).T          # (C, H)
    b1 = (b1_raw * decoder_lr_mul).reshape(1, hidden_dim)               # (1, H)
    w2 = (w2_raw * (decoder_lr_mul / math.sqrt(hidden_dim))).T          # (H, O)
    b2 = (b2_raw * decoder_lr_mul).reshape(1, out_dim)                  # (1, O)
    return {"w1": w1, "b1": b1, "w2": w2, "b2": b2}


# ------------------------------ reference ---------------------------------- #

def osg_decoder_reference(sampled_features, params):
    x = jnp.mean(sampled_features.astype(jnp.float32), axis=1)          # (N, M, C)
    N, M, C = x.shape
    x = x.reshape(N * M, C)
    h = jnp.logaddexp(x @ params["w1"] + params["b1"], 0.0)
    y = h @ params["w2"] + params["b2"]
    y = y.reshape(N, M, -1)
    sigma = y[..., 0:1]
    rgb = jax.nn.sigmoid(y[..., 1:]) * (1.0 + 2.0 * 0.001) - 0.001
    return {"rgb": rgb, "sigma": sigma}


# ---------------------------------- main ------------------------------------ #

if __name__ == "__main__":
    key = jax.random.PRNGKey(0)
    k_feat, k_ray, k_par = jax.random.split(key, 3)

    # Shapes consistent with OSGDecoder: N ray-batches, 3 triplanes,
    # M samples per batch, C = n_features channels.
    N, P, M, C = 2, 3, 1024, 32
    decoder_output_dim = 32
    decoder_lr_mul = 1.0

    sampled_features = jax.random.normal(k_feat, (N, P, M, C), jnp.float32)
    ray_directions = jax.random.normal(k_ray, (N, M, 3), jnp.float32)  # unused, API parity
    params = make_osg_decoder_params(k_par, C, decoder_output_dim, decoder_lr_mul)

    # Caller-side bf16 cast: halves the dominant HBM stream; the kernel immediately
    # upcasts to f32 so all math stays in f32 on every TPU generation.
    feats_bf16 = sampled_features.astype(jnp.bfloat16)

    out = osg_decoder_forward(feats_bf16, ray_directions, params)
    out = jax.block_until_ready(out)

    # Reference starts from the same bf16-quantized features so the comparison is
    # f32-math vs f32-math on identical inputs.
    ref = osg_decoder_reference(feats_bf16, params)
    assert out["rgb"].shape == (N, M, decoder_output_dim)
    assert out["sigma"].shape == (N, M, 1)
    assert jnp.allclose(out["rgb"], ref["rgb"], atol=3e-5, rtol=1e-5)
    assert jnp.allclose(out["sigma"], ref["sigma"], atol=3e-5, rtol=1e-5)

    print("KERNEL_OK")
</pallas_src>

<mosaic_0001>
module attributes {stable_mosaic.version = 11 : i64} {
  func.func @_osg_decoder_kernel(%arg0: i32, %arg1: i32, %arg2: memref<1x3x1024x32xbf16, #tpu.memory_space<vmem>>, %arg3: memref<32x64xf32, #tpu.memory_space<vmem>>, %arg4: memref<1x64xf32, #tpu.memory_space<vmem>>, %arg5: memref<64x32xf32, #tpu.memory_space<vmem>>, %arg6: memref<1x32xf32, #tpu.memory_space<vmem>>, %arg7: memref<64x1xf32, #tpu.memory_space<vmem>>, %arg8: memref<1x1xf32, #tpu.memory_space<vmem>>, %arg9: memref<1x1024x32xf32, #tpu.memory_space<vmem>>, %arg10: memref<1x1024x1xf32, #tpu.memory_space<vmem>>) attributes {dimension_semantics = [#tpu.dimension_semantics<parallel>, #tpu.dimension_semantics<parallel>], iteration_bounds = array<i64: 2, 1>, scalar_prefetch = 0 : i64, scratch_operands = 0 : i64, tpu.core_type = #tpu.core_type<tc>, window_params = [{transform_indices = @transform_0, window_bounds = array<i64: 1, 3, 1024, 32>}, {pipeline_mode = #tpu.pipeline_mode<synchronous>, transform_indices = @transform_1, window_bounds = array<i64: 32, 64>}, {pipeline_mode = #tpu.pipeline_mode<synchronous>, transform_indices = @transform_2, window_bounds = array<i64: 1, 64>}, {pipeline_mode = #tpu.pipeline_mode<synchronous>, transform_indices = @transform_3, window_bounds = array<i64: 64, 32>}, {pipeline_mode = #tpu.pipeline_mode<synchronous>, transform_indices = @transform_4, window_bounds = array<i64: 1, 32>}, {pipeline_mode = #tpu.pipeline_mode<synchronous>, transform_indices = @transform_5, window_bounds = array<i64: 64, 1>}, {pipeline_mode = #tpu.pipeline_mode<synchronous>, transform_indices = @transform_6, window_bounds = array<i64: 1, 1>}, {transform_indices = @transform_7, window_bounds = array<i64: 1, 1024, 32>}, {transform_indices = @transform_8, window_bounds = array<i64: 1, 1024, 1>}]} {
    %c0 = arith.constant 0 : index
    %c0_0 = arith.constant 0 : index
    %c0_1 = arith.constant 0 : index
    %c0_2 = arith.constant 0 : index
    %0 = vector.load %arg2[%c0, %c0_0, %c0_1, %c0_2] : memref<1x3x1024x32xbf16, #tpu.memory_space<vmem>>, vector<1x3x1024x32xbf16>
    %1 = vector.shape_cast %0 : vector<1x3x1024x32xbf16> to vector<3x1024x32xbf16>
    %2 = arith.extf %1 : vector<3x1024x32xbf16> to vector<3x1024x32xf32>
    %cst = arith.constant dense<0.000000e+00> : vector<1024x32xf32>
    %3 = vector.multi_reduction <add>, %2, %cst [0] : vector<3x1024x32xf32> to vector<1024x32xf32>
    %c0_3 = arith.constant 0 : index
    %c0_4 = arith.constant 0 : index
    %4 = vector.load %arg3[%c0_3, %c0_4] : memref<32x64xf32, #tpu.memory_space<vmem>>, vector<32x64xf32>
    %cst_5 = arith.constant dense<0.000000e+00> : vector<1024x64xf32>
    %5 = tpu.matmul %3, %4, %cst_5 {dimension_numbers = #tpu.dot_dimension_numbers<[1], [0], [0], [1], [0, 0, 1, 1], [], []>} : vector<1024x32xf32>, vector<32x64xf32>, vector<1024x64xf32> -> vector<1024x64xf32>
    %c0_6 = arith.constant 0 : index
    %c0_7 = arith.constant 0 : index
    %6 = vector.load %arg4[%c0_6, %c0_7] : memref<1x64xf32, #tpu.memory_space<vmem>>, vector<1x64xf32>
    %7 = vector.broadcast %6 : vector<1x64xf32> to vector<1024x64xf32>
    %8 = arith.addf %5, %7 : vector<1024x64xf32>
    %cst_8 = arith.constant 0.000000e+00 : f32
    %9 = vector.broadcast %cst_8 : f32 to vector<1024x64xf32>
    %10 = arith.maximumf %8, %9 : vector<1024x64xf32>
    %11 = vector.broadcast %cst_8 : f32 to vector<1024x64xf32>
    %12 = arith.subf %8, %11 : vector<1024x64xf32>
    %13 = arith.cmpf one, %12, %12 : vector<1024x64xf32>
    %14 = vector.broadcast %cst_8 : f32 to vector<1024x64xf32>
    %15 = arith.addf %8, %14 : vector<1024x64xf32>
    %16 = math.absf %12 : vector<1024x64xf32>
    %cst_9 = arith.constant 0.000000e+00 : f32
    %17 = vector.broadcast %cst_9 : f32 to vector<1024x64xf32>
    %18 = arith.subf %17, %16 : vector<1024x64xf32>
    %19 = math.exp %18 : vector<1024x64xf32>
    %20 = math.log1p %19 : vector<1024x64xf32>
    %21 = arith.addf %10, %20 : vector<1024x64xf32>
    %22 = arith.select %13, %15, %21 : vector<1024x64xi1>, vector<1024x64xf32>
    %c0_10 = arith.constant 0 : index
    %c0_11 = arith.constant 0 : index
    %23 = vector.load %arg5[%c0_10, %c0_11] : memref<64x32xf32, #tpu.memory_space<vmem>>, vector<64x32xf32>
    %cst_12 = arith.constant dense<0.000000e+00> : vector<1024x32xf32>
    %24 = tpu.matmul %22, %23, %cst_12 {dimension_numbers = #tpu.dot_dimension_numbers<[1], [0], [0], [1], [0, 0, 1, 1], [], []>} : vector<1024x64xf32>, vector<64x32xf32>, vector<1024x32xf32> -> vector<1024x32xf32>
    %c0_13 = arith.constant 0 : index
    %c0_14 = arith.constant 0 : index
    %25 = vector.load %arg6[%c0_13, %c0_14] : memref<1x32xf32, #tpu.memory_space<vmem>>, vector<1x32xf32>
    %26 = vector.broadcast %25 : vector<1x32xf32> to vector<1024x32xf32>
    %27 = arith.addf %24, %26 : vector<1024x32xf32>
    %28 = arith.negf %27 : vector<1024x32xf32>
    %29 = math.exp %28 : vector<1024x32xf32>
    %cst_15 = arith.constant 1.000000e+00 : f32
    %30 = vector.broadcast %cst_15 : f32 to vector<1024x32xf32>
    %31 = arith.addf %30, %29 : vector<1024x32xf32>
    %32 = arith.divf %30, %31 : vector<1024x32xf32>
    %cst_16 = arith.constant 1.002000e+00 : f32
    %33 = vector.broadcast %cst_16 : f32 to vector<1024x32xf32>
    %34 = arith.mulf %32, %33 : vector<1024x32xf32>
    %cst_17 = arith.constant 1.000000e-03 : f32
    %35 = vector.broadcast %cst_17 : f32 to vector<1024x32xf32>
    %36 = arith.subf %34, %35 : vector<1024x32xf32>
    %c0_18 = arith.constant 0 : index
    %c0_19 = arith.constant 0 : index
    %c0_20 = arith.constant 0 : index
    %37 = vector.load %arg9[%c0_18, %c0_19, %c0_20] : memref<1x1024x32xf32, #tpu.memory_space<vmem>>, vector<1x1024x32xf32>
    %38 = vector.shape_cast %37 : vector<1x1024x32xf32> to vector<1024x32xf32>
    %39 = vector.shape_cast %36 : vector<1024x32xf32> to vector<1x1024x32xf32>
    tpu.vector_store %arg9[%c0_18, %c0_19, %c0_20], %39 {strides = array<i32>} : memref<1x1024x32xf32, #tpu.memory_space<vmem>>, vector<1x1024x32xf32>,
    %c0_21 = arith.constant 0 : index
    %c0_22 = arith.constant 0 : index
    %40 = vector.load %arg7[%c0_21, %c0_22] : memref<64x1xf32, #tpu.memory_space<vmem>>, vector<64x1xf32>
    %cst_23 = arith.constant dense<0.000000e+00> : vector<1024x1xf32>
    %41 = tpu.matmul %22, %40, %cst_23 {dimension_numbers = #tpu.dot_dimension_numbers<[1], [0], [0], [1], [0, 0, 1, 1], [], []>} : vector<1024x64xf32>, vector<64x1xf32>, vector<1024x1xf32> -> vector<1024x1xf32>
    %c0_24 = arith.constant 0 : index
    %c0_25 = arith.constant 0 : index
    %42 = vector.load %arg8[%c0_24, %c0_25] : memref<1x1xf32, #tpu.memory_space<vmem>>, vector<1x1xf32>
    %43 = vector.broadcast %42 : vector<1x1xf32> to vector<1024x1xf32>
    %44 = arith.addf %41, %43 : vector<1024x1xf32>
    %c0_26 = arith.constant 0 : index
    %c0_27 = arith.constant 0 : index
    %c0_28 = arith.constant 0 : index
    %45 = vector.load %arg10[%c0_26, %c0_27, %c0_28] : memref<1x1024x1xf32, #tpu.memory_space<vmem>>, vector<1x1024x1xf32>
    %46 = vector.shape_cast %45 : vector<1x1024x1xf32> to vector<1024x1xf32>
    %47 = vector.shape_cast %44 : vector<1024x1xf32> to vector<1x1024x1xf32>
    tpu.vector_store %arg10[%c0_26, %c0_27, %c0_28], %47 {strides = array<i32>} : memref<1x1024x1xf32, #tpu.memory_space<vmem>>, vector<1x1024x1xf32>,
    return
  }
  func.func @transform_0(%arg0: i32, %arg1: i32) -> (i32, i32, i32, i32) {
    %c0_i32 = arith.constant 0 : i32
    %c0_i32_0 = arith.constant 0 : i32
    %c0_i32_1 = arith.constant 0 : i32
    return %arg0, %c0_i32, %arg1, %c0_i32_0 : i32, i32, i32, i32
  }
  func.func @transform_1(%arg0: i32, %arg1: i32) -> (i32, i32) {
    %c0_i32 = arith.constant 0 : i32
    %c0_i32_0 = arith.constant 0 : i32
    %c0_i32_1 = arith.constant 0 : i32
    return %c0_i32, %c0_i32_0 : i32, i32
  }
  func.func @transform_2(%arg0: i32, %arg1: i32) -> (i32, i32) {
    %c0_i32 = arith.constant 0 : i32
    %c0_i32_0 = arith.constant 0 : i32
    %c0_i32_1 = arith.constant 0 : i32
    return %c0_i32, %c0_i32_0 : i32, i32
  }
  func.func @transform_3(%arg0: i32, %arg1: i32) -> (i32, i32) {
    %c0_i32 = arith.constant 0 : i32
    %c0_i32_0 = arith.constant 0 : i32
    %c0_i32_1 = arith.constant 0 : i32
    return %c0_i32, %c0_i32_0 : i32, i32
  }
  func.func @transform_4(%arg0: i32, %arg1: i32) -> (i32, i32) {
    %c0_i32 = arith.constant 0 : i32
    %c0_i32_0 = arith.constant 0 : i32
    %c0_i32_1 = arith.constant 0 : i32
    return %c0_i32, %c0_i32_0 : i32, i32
  }
  func.func @transform_5(%arg0: i32, %arg1: i32) -> (i32, i32) {
    %c0_i32 = arith.constant 0 : i32
    %c0_i32_0 = arith.constant 0 : i32
    %c0_i32_1 = arith.constant 0 : i32
    return %c0_i32, %c0_i32_0 : i32, i32
  }
  func.func @transform_6(%arg0: i32, %arg1: i32) -> (i32, i32) {
    %c0_i32 = arith.constant 0 : i32
    %c0_i32_0 = arith.constant 0 : i32
    %c0_i32_1 = arith.constant 0 : i32
    return %c0_i32, %c0_i32_0 : i32, i32
  }
  func.func @transform_7(%arg0: i32, %arg1: i32) -> (i32, i32, i32) {
    %c0_i32 = arith.constant 0 : i32
    %c0_i32_0 = arith.constant 0 : i32
    return %arg0, %arg1, %c0_i32 : i32, i32, i32
  }
  func.func @transform_8(%arg0: i32, %arg1: i32) -> (i32, i32, i32) {
    %c0_i32 = arith.constant 0 : i32
    %c0_i32_0 = arith.constant 0 : i32
    return %arg0, %arg1, %c0_i32 : i32, i32, i32
  }
}

</mosaic_0001>

<llo_original>
// kernel: tpu_custom_call.1
$region0: #{tpu_custom_call.1}
  #allocation0 [shape = 'u32[]', space=smem, size = 0x4, offset = 0x4, fixed_abs, tag = 'smem constant byte address 0x4 - core index']
  #allocation1 [shape = 'u32[144,128]{1,0:T(1,128)}', space=vmem, size = 0x12000, scoped, tag = 'internal scratch']
  #allocation2 [shape = 'f32[1,1]{1,0:T(1,128)S(1)}', space=vmem, size = 0x200, scoped, tag = 'scoped memory for tpu_custom_call.1']
  %s0 = inlined_call_operand.vmem [shape: bf16[2,3,1024,32], index: 0, kind: input, shape index: {}]
  %s1 = inlined_call_operand.vmem [shape: f32[32,64], index: 1, kind: input, shape index: {}]
  %s2 = inlined_call_operand.vmem [shape: f32[1,64], index: 2, kind: input, shape index: {}]
  %s3 = inlined_call_operand.vmem [shape: f32[64,32], index: 3, kind: input, shape index: {}]
  %s4 = inlined_call_operand.vmem [shape: f32[1,32], index: 4, kind: input, shape index: {}]
  %s5 = inlined_call_operand.vmem [shape: f32[64,1], index: 5, kind: input, shape index: {}]
  %s6 = inlined_call_operand.<no memory space> [shape: f32[1,1], index: 6, kind: input, shape index: {}]
  %s7 = inlined_call_operand.vmem [shape: f32[2,1024,32], index: 7, kind: output, shape index: {0}]
  %s8 = inlined_call_operand.vmem [shape: f32[2,1024,1], index: 8, kind: output, shape index: {1}]
  %9 = xla_tuple %s7, %s8
  %s10 = sld [smem:[#allocation0]]
  $region69: #{tpu_custom_call.1} parent=0
    _
  %s12 = ssub.s32 1, %s10
  %s13 = scalar_select 0, %s12, %s10
  %v14 = vstv %s6
  %15 = vst [vmem:[#allocation2] sm:$0x1] %v14
  loop: start=0, step=1, limit=4
  $region2: #{tpu_custom_call.1} parent=0 // loop_pre_header
    _
  $region3: #{tpu_custom_call.1} parent=0 // loop_header
    %s17 = sphi 0, %s21
    %p18 = scmp.ge.s32.totalorder %s17, 4
    %s24 = sphi 0, %s36
    %s25 = sphi 0, %s32
    %s26 = sphi 0, %s24
    %s27 = sphi 0, %s25
    %s28 = sphi 0, %s26
    %s29 = sphi 0, %s27
    %s41 = sphi 0, %s43
    %s44 = sphi 0, %s41
    %s45 = sphi 0, %s44
    %s61 = sphi 0, %s45
    %s65 = sphi 0, %s65
    %s67 = sphi 0, %s65
    %s68 = sphi 0, %s67
    %s82 = sphi 0, %s68
    %s86 = sphi 0, %s86
    %s88 = sphi 0, %s86
    %s89 = sphi 0, %s88
    %s103 = sphi 0, %s89
    %s107 = sphi 0, %s107
    %s109 = sphi 0, %s107
    %s110 = sphi 0, %s109
    %s124 = sphi 0, %s110
    %s128 = sphi 0, %s128
    %s130 = sphi 0, %s128
    %s131 = sphi 0, %s130
    %s145 = sphi 0, %s131
    %s149 = sphi 0, %s149
    %s151 = sphi 0, %s149
    %s152 = sphi 0, %s151
    %s166 = sphi 0, %s152
    %s170 = sphi 0, %s170
    %s172 = sphi 0, %s170
    %s173 = sphi 0, %s172
    %s187 = sphi 0, %s173
    %s195 = sphi 0, %s197
    %s198 = sphi 0, %s195
    %s199 = sphi 0, %s198
    %s215 = sphi 0, %s199
    %s223 = sphi 0, %s225
    %s226 = sphi 0, %s223
    %s227 = sphi 0, %s226
    %s243 = sphi 0, %s227
  $region4: #{tpu_custom_call.1} parent=0 // loop_header_branch
    %20 = sbr.rel (%p18) target = $region8
  $region5: #{tpu_custom_call.1} parent=0 // loop_body
    %s22 = ssub.s32 %s17, 1
    %s23 = ssub.s32 %s17, 2
    %s30 = sadd.s32 1, %s25
    %p31 = scmp.ge.s32.totalorder %s30, 1
    %s32 = scalar_select %p31, 0, %s30
    %s33 = sadd.s32 1, %s24
    %s34 = scalar_select %p31, %s33, %s24
    %p35 = scmp.ge.s32.totalorder %s34, 2
    %s36 = scalar_select %p35, 0, %s34
    %s37 = ssub.s32 %s24, %s36
    %s38 = ssub.s32 %s25, %s32
    %s39 = sor.u32 %s37, %s38
    %p40 = scmp.eq.s32.totalorder %s39, 0
    %s42 = sadd.s32 %s41, 1
    %s43 = scalar_select %p40, %s41, %s42
    %p46 = pneg %p40
    %p47 = scmp.eq.s32.totalorder %s17, 1
    %p48 = por %p46, %p47
    %p49 = scmp.ne.s32.totalorder %s41, %s44
    %p50 = scmp.eq.s32.totalorder %s17, 0
    %p51 = por %p49, %p50
    %p52 = scmp.ne.s32.totalorder %s41, %s44
    %p53 = scmp.eq.s32.totalorder %s22, 1
    %p54 = por %p52, %p53
    %p55 = scmp.ne.s32.totalorder %s44, %s45
    %p56 = scmp.eq.s32.totalorder %s22, 0
    %p57 = por %p55, %p56
    %p58 = scmp.ne.s32.totalorder %s44, %s45
    %p59 = scmp.eq.s32.totalorder %s23, 1
    %p60 = por %p58, %p59
    %p62 = scmp.ne.s32.totalorder %s45, %s61
    %p63 = scmp.eq.s32.totalorder %s23, 0
    %p64 = por %p62, %p63
    %s66 = sadd.s32 %s65, 1
    %p69 = scmp.eq.s32.totalorder %s17, 1
    %p70 = scmp.ne.s32.totalorder %s65, %s67
    %p71 = scmp.eq.s32.totalorder %s17, 0
    %p72 = por %p70, %p71
    %p73 = scmp.ne.s32.totalorder %s65, %s67
    %p74 = scmp.eq.s32.totalorder %s22, 1
    %p75 = por %p73, %p74
    %p76 = scmp.ne.s32.totalorder %s67, %s68
    %p77 = scmp.eq.s32.totalorder %s22, 0
    %p78 = por %p76, %p77
    %p79 = scmp.ne.s32.totalorder %s67, %s68
    %p80 = scmp.eq.s32.totalorder %s23, 1
    %p81 = por %p79, %p80
    %p83 = scmp.ne.s32.totalorder %s68, %s82
    %p84 = scmp.eq.s32.totalorder %s23, 0
    %p85 = por %p83, %p84
    %s87 = sadd.s32 %s86, 1
    %p90 = scmp.eq.s32.totalorder %s17, 1
    %p91 = scmp.ne.s32.totalorder %s86, %s88
    %p92 = scmp.eq.s32.totalorder %s17, 0
    %p93 = por %p91, %p92
    %p94 = scmp.ne.s32.totalorder %s86, %s88
    %p95 = scmp.eq.s32.totalorder %s22, 1
    %p96 = por %p94, %p95
    %p97 = scmp.ne.s32.totalorder %s88, %s89
    %p98 = scmp.eq.s32.totalorder %s22, 0
    %p99 = por %p97, %p98
    %p100 = scmp.ne.s32.totalorder %s88, %s89
    %p101 = scmp.eq.s32.totalorder %s23, 1
    %p102 = por %p100, %p101
    %p104 = scmp.ne.s32.totalorder %s89, %s103
    %p105 = scmp.eq.s32.totalorder %s23, 0
    %p106 = por %p104, %p105
    %s108 = sadd.s32 %s107, 1
    %p111 = scmp.eq.s32.totalorder %s17, 1
    %p112 = scmp.ne.s32.totalorder %s107, %s109
    %p113 = scmp.eq.s32.totalorder %s17, 0
    %p114 = por %p112, %p113
    %p115 = scmp.ne.s32.totalorder %s107, %s109
    %p116 = scmp.eq.s32.totalorder %s22, 1
    %p117 = por %p115, %p116
    %p118 = scmp.ne.s32.totalorder %s109, %s110
    %p119 = scmp.eq.s32.totalorder %s22, 0
    %p120 = por %p118, %p119
    %p121 = scmp.ne.s32.totalorder %s109, %s110
    %p122 = scmp.eq.s32.totalorder %s23, 1
    %p123 = por %p121, %p122
    %p125 = scmp.ne.s32.totalorder %s110, %s124
    %p126 = scmp.eq.s32.totalorder %s23, 0
    %p127 = por %p125, %p126
    %s129 = sadd.s32 %s128, 1
    %p132 = scmp.eq.s32.totalorder %s17, 1
    %p133 = scmp.ne.s32.totalorder %s128, %s130
    %p134 = scmp.eq.s32.totalorder %s17, 0
    %p135 = por %p133, %p134
    %p136 = scmp.ne.s32.totalorder %s128, %s130
    %p137 = scmp.eq.s32.totalorder %s22, 1
    %p138 = por %p136, %p137
    %p139 = scmp.ne.s32.totalorder %s130, %s131
    %p140 = scmp.eq.s32.totalorder %s22, 0
    %p141 = por %p139, %p140
    %p142 = scmp.ne.s32.totalorder %s130, %s131
    %p143 = scmp.eq.s32.totalorder %s23, 1
    %p144 = por %p142, %p143
    %p146 = scmp.ne.s32.totalorder %s131, %s145
    %p147 = scmp.eq.s32.totalorder %s23, 0
    %p148 = por %p146, %p147
    %s150 = sadd.s32 %s149, 1
    %p153 = scmp.eq.s32.totalorder %s17, 1
    %p154 = scmp.ne.s32.totalorder %s149, %s151
    %p155 = scmp.eq.s32.totalorder %s17, 0
    %p156 = por %p154, %p155
    %p157 = scmp.ne.s32.totalorder %s149, %s151
    %p158 = scmp.eq.s32.totalorder %s22, 1
    %p159 = por %p157, %p158
    %p160 = scmp.ne.s32.totalorder %s151, %s152
    %p161 = scmp.eq.s32.totalorder %s22, 0
    %p162 = por %p160, %p161
    %p163 = scmp.ne.s32.totalorder %s151, %s152
    %p164 = scmp.eq.s32.totalorder %s23, 1
    %p165 = por %p163, %p164
    %p167 = scmp.ne.s32.totalorder %s152, %s166
    %p168 = scmp.eq.s32.totalorder %s23, 0
    %p169 = por %p167, %p168
    %s171 = sadd.s32 %s170, 1
    %p174 = scmp.eq.s32.totalorder %s17, 1
    %p175 = scmp.ne.s32.totalorder %s170, %s172
    %p176 = scmp.eq.s32.totalorder %s17, 0
    %p177 = por %p175, %p176
    %p178 = scmp.ne.s32.totalorder %s170, %s172
    %p179 = scmp.eq.s32.totalorder %s22, 1
    %p180 = por %p178, %p179
    %p181 = scmp.ne.s32.totalorder %s172, %s173
    %p182 = scmp.eq.s32.totalorder %s22, 0
    %p183 = por %p181, %p182
    %p184 = scmp.ne.s32.totalorder %s172, %s173
    %p185 = scmp.eq.s32.totalorder %s23, 1
    %p186 = por %p184, %p185
    %p188 = scmp.ne.s32.totalorder %s173, %s187
    %p189 = scmp.eq.s32.totalorder %s23, 0
    %p190 = por %p188, %p189
    %s191 = ssub.s32 %s24, %s36
    %s192 = ssub.s32 %s25, %s32
    %s193 = sor.u32 %s191, %s192
    %p194 = scmp.eq.s32.totalorder %s193, 0
    %s196 = sadd.s32 %s195, 1
    %s197 = scalar_select %p194, %s195, %s196
    %p200 = pneg %p194
    %p201 = scmp.eq.s32.totalorder %s17, 1
    %p202 = por %p200, %p201
    %p203 = scmp.ne.s32.totalorder %s195, %s198
    %p204 = scmp.eq.s32.totalorder %s17, 0
    %p205 = por %p203, %p204
    %p206 = scmp.ne.s32.totalorder %s195, %s198
    %p207 = scmp.eq.s32.totalorder %s22, 1
    %p208 = por %p206, %p207
    %p209 = scmp.ne.s32.totalorder %s198, %s199
    %p210 = scmp.eq.s32.totalorder %s22, 0
    %p211 = por %p209, %p210
    %p212 = scmp.ne.s32.totalorder %s198, %s199
    %p213 = scmp.eq.s32.totalorder %s23, 1
    %p214 = por %p212, %p213
    %p216 = scmp.ne.s32.totalorder %s199, %s215
    %p217 = scmp.eq.s32.totalorder %s23, 0
    %p218 = por %p216, %p217
    %s219 = ssub.s32 %s24, %s36
    %s220 = ssub.s32 %s25, %s32
    %s221 = sor.u32 %s219, %s220
    %p222 = scmp.eq.s32.totalorder %s221, 0
    %s224 = sadd.s32 %s223, 1
    %s225 = scalar_select %p222, %s223, %s224
    %p228 = pneg %p222
    %p229 = scmp.eq.s32.totalorder %s17, 1
    %p230 = por %p228, %p229
    %p231 = scmp.ne.s32.totalorder %s223, %s226
    %p232 = scmp.eq.s32.totalorder %s17, 0
    %p233 = por %p231, %p232
    %p234 = scmp.ne.s32.totalorder %s223, %s226
    %p235 = scmp.eq.s32.totalorder %s22, 1
    %p236 = por %p234, %p235
    %p237 = scmp.ne.s32.totalorder %s226, %s227
    %p238 = scmp.eq.s32.totalorder %s22, 0
    %p239 = por %p237, %p238
    %p240 = scmp.ne.s32.totalorder %s226, %s227
    %p241 = scmp.eq.s32.totalorder %s23, 1
    %p242 = por %p240, %p241
    %p244 = scmp.ne.s32.totalorder %s227, %s243
    %p245 = scmp.eq.s32.totalorder %s23, 0
    %p246 = por %p244, %p245
    %p247 = scmp.le.s32.totalorder 1, %s17
    %p248 = scmp.lt.s32.totalorder %s17, 3
    %p249 = pnand %p247, %p248
    %p250 = pneg %p249
    // Predicated region
    $region9: #{tpu_custom_call.1} parent=5 // pred_check
      _
    $region10: #{tpu_custom_call.1} parent=5 // pred_check_branch
      %252 = sbr.rel (%p249) target = $region12
    $region11: #{tpu_custom_call.1} parent=5 // pred_region
      %s253 = ssub.s32 %s17, 1
      // Predicated region
      $region13: #{tpu_custom_call.1} parent=11 // pred_check
        %p254 = pneg %p78
      $region14: #{tpu_custom_call.1} parent=11 // pred_check_branch
        %256 = sbr.rel (%p254) target = $region16
      $region15: #{tpu_custom_call.1} parent=11 // pred_region
        _
      $region16: #{tpu_custom_call.1} parent=11 // pred_fallthru
        _
      // Predicated region
      $region17: #{tpu_custom_call.1} parent=11 // pred_check
        %p257 = pneg %p99
      $region18: #{tpu_custom_call.1} parent=11 // pred_check_branch
        %259 = sbr.rel (%p257) target = $region20
      $region19: #{tpu_custom_call.1} parent=11 // pred_region
        _
      $region20: #{tpu_custom_call.1} parent=11 // pred_fallthru
        _
      // Predicated region
      $region21: #{tpu_custom_call.1} parent=11 // pred_check
        %p260 = pneg %p120
      $region22: #{tpu_custom_call.1} parent=11 // pred_check_branch
        %262 = sbr.rel (%p260) target = $region24
      $region23: #{tpu_custom_call.1} parent=11 // pred_region
        _
      $region24: #{tpu_custom_call.1} parent=11 // pred_fallthru
        _
      // Predicated region
      $region25: #{tpu_custom_call.1} parent=11 // pred_check
        %p263 = pneg %p141
      $region26: #{tpu_custom_call.1} parent=11 // pred_check_branch
        %265 = sbr.rel (%p263) target = $region28
      $region27: #{tpu_custom_call.1} parent=11 // pred_region
        _
      $region28: #{tpu_custom_call.1} parent=11 // pred_fallthru
        _
      // Predicated region
      $region29: #{tpu_custom_call.1} parent=11 // pred_check
        %p266 = pneg %p162
      $region30: #{tpu_custom_call.1} parent=11 // pred_check_branch
        %268 = sbr.rel (%p266) target = $region32
      $region31: #{tpu_custom_call.1} parent=11 // pred_region
        _
      $region32: #{tpu_custom_call.1} parent=11 // pred_fallthru
        _
      // Predicated region
      $region33: #{tpu_custom_call.1} parent=11 // pred_check
        %p269 = pneg %p183
      $region34: #{tpu_custom_call.1} parent=11 // pred_check_branch
        %271 = sbr.rel (%p269) target = $region36
      $region35: #{tpu_custom_call.1} parent=11 // pred_region
        _
      $region36: #{tpu_custom_call.1} parent=11 // pred_fallthru
        _
    $region12: #{tpu_custom_call.1} parent=5 // pred_fallthru
      _
    %p272 = scmp.lt.s32.totalorder %s17, 2
    // Predicated region
    $region37: #{tpu_custom_call.1} parent=5 // pred_check
      %p273 = pneg %p272
    $region38: #{tpu_custom_call.1} parent=5 // pred_check_branch
      %275 = sbr.rel (%p273) target = $region40
    $region39: #{tpu_custom_call.1} parent=5 // pred_region
      // Predicated region
      $region41: #{tpu_custom_call.1} parent=39 // pred_check
        %p276 = pneg %p51
      $region42: #{tpu_custom_call.1} parent=39 // pred_check_branch
        %278 = sbr.rel (%p276) target = $region44
      $region43: #{tpu_custom_call.1} parent=39 // pred_region
        %s279 = smul.u32 128, %s25
        %p280 = scmp.lt.s32.totalorder %s24, 1
        %s281 = scalar_select %p280, %s24, 1
        %p282 = scmp.lt.s32.totalorder %s279, 127
        %s283 = scalar_select %p282, %s279, 127
        %s284 = smul.addr %s281, 384
        %s285 = sadd.s32 %s283, %s284
        %s286 = smul.addr %s285, 4
        %s287 = scalar_lea.vmem %s0, %s286
        %s288 = smul.u32 128, %s25
      $region44: #{tpu_custom_call.1} parent=39 // pred_fallthru
        _
    $region40: #{tpu_custom_call.1} parent=5 // pred_fallthru
      _
    %p289 = scmp.le.s32.totalorder 1, %s17
    %p290 = scmp.lt.s32.totalorder %s17, 3
    %p291 = pnand %p289, %p290
    %p292 = pneg %p291
    // Predicated region
    $region45: #{tpu_custom_call.1} parent=5 // pred_check
      _
    $region46: #{tpu_custom_call.1} parent=5 // pred_check_branch
      %294 = sbr.rel (%p291) target = $region48
    $region47: #{tpu_custom_call.1} parent=5 // pred_region
      %s295 = ssub.s32 %s17, 1
      %s296 = smul.u32 128, %s27
      %p297 = scmp.lt.s32.totalorder %s26, 1
      %s298 = scalar_select %p297, %s26, 1
      %p299 = scmp.lt.s32.totalorder %s296, 127
      %s300 = scalar_select %p299, %s296, 127
      %s301 = smul.addr %s298, 384
      %s302 = sadd.s32 %s300, %s301
      %s303 = smul.addr %s302, 4
      %s304 = scalar_lea.vmem %s0, %s303
      %p305 = pneg %p57
      %p306 = pneg %p54
      %p307 = pneg %p78
      %p308 = pneg %p75
      %p309 = pneg %p99
      %p310 = pneg %p96
      %p311 = pneg %p120
      %p312 = pneg %p117
      %p313 = pneg %p141
      %p314 = pneg %p138
      %p315 = pneg %p162
      %p316 = pneg %p159
      %p317 = pneg %p183
      %p318 = pneg %p180
      %p319 = pneg %p211
      %p320 = pneg %p208
      %s321 = smul.u32 128, %s27
      %p322 = scmp.lt.s32.totalorder %s26, 1
      %s323 = scalar_select %p322, %s26, 1
      %p324 = scmp.lt.s32.totalorder %s321, 127
      %s325 = scalar_select %p324, %s321, 127
      %s326 = smul.addr %s323, 128
      %s327 = sadd.s32 %s325, %s326
      %s328 = smul.addr %s327, 8
      %s329 = scalar_lea.vmem %s7, %s328
      %p330 = pneg %p239
      %p331 = pneg %p236
      %s332 = smul.u32 128, %s27
      %p333 = scmp.lt.s32.totalorder %s26, 1
      %s334 = scalar_select %p333, %s26, 1
      %p335 = scmp.lt.s32.totalorder %s332, 127
      %s336 = scalar_select %p335, %s332, 127
      %s337 = smul.addr %s334, 128
      %s338 = sadd.s32 %s336, %s337
      %s339 = smul.addr %s338, 8
      %s340 = scalar_lea.vmem %s8, %s339
      %s341 = smul.u32 128, %s27
      %p342 = scmp.lt.s32.totalorder %s26, 1
      %s343 = scalar_select %p342, %s26, 1
      %p344 = scmp.lt.s32.totalorder %s341, 127
      %s345 = scalar_select %p344, %s341, 127
      %s346 = smul.addr %s343, 384
      %s347 = sadd.s32 %s345, %s346
      %s348 = smul.addr %s347, 4
      %s349 = scalar_lea.vmem %s0, %s348
      %s350 = smul.u32 128, %s27
      %s351 = smul.u32 128, %s27
      %p352 = scmp.lt.s32.totalorder %s26, 1
      %s353 = scalar_select %p352, %s26, 1
      %p354 = scmp.lt.s32.totalorder %s351, 127
      %s355 = scalar_select %p354, %s351, 127
      %s356 = smul.addr %s353, 128
      %s357 = sadd.s32 %s355, %s356
      %s358 = smul.addr %s357, 8
      %s359 = scalar_lea.vmem %s7, %s358
      %s360 = smul.u32 128, %s27
      %s361 = smul.u32 128, %s27
      %p362 = scmp.lt.s32.totalorder %s26, 1
      %s363 = scalar_select %p362, %s26, 1
      %p364 = scmp.lt.s32.totalorder %s361, 127
      %s365 = scalar_select %p364, %s361, 127
      %s366 = smul.addr %s363, 128
      %s367 = sadd.s32 %s365, %s366
      %s368 = smul.addr %s367, 8
      %s369 = scalar_lea.vmem %s8, %s368
      %s370 = smul.u32 128, %s27
      %v371 = vld [vmem:[%s349] sm:$0xf]
      %v372 = vld [vmem:[%s349 + $0x4] sm:$0xf]
      %v373 = vld [vmem:[%s349 + $0x8] sm:$0xf]
      %v374 = vld [vmem:[%s349 + $0xc] sm:$0xf]
      %v375 = vld [vmem:[%s349 + $0x10] sm:$0xf]
      %v376 = vld [vmem:[%s349 + $0x14] sm:$0xf]
      %v377 = vld [vmem:[%s349 + $0x18] sm:$0xf]
      %v378 = vld [vmem:[%s349 + $0x1c] sm:$0xf]
      %v379 = vld [vmem:[%s349 + $0x20] sm:$0xf]
      %v380 = vld [vmem:[%s349 + $0x24] sm:$0xf]
      %v381 = vld [vmem:[%s349 + $0x28] sm:$0xf]
      %v382 = vld [vmem:[%s349 + $0x2c] sm:$0xf]
      %v383 = vld [vmem:[%s349 + $0x30] sm:$0xf]
      %v384 = vld [vmem:[%s349 + $0x34] sm:$0xf]
      %v385 = vld [vmem:[%s349 + $0x38] sm:$0xf]
      %v386 = vld [vmem:[%s349 + $0x3c] sm:$0xf]
      %v387 = vld [vmem:[%s349 + $0x40] sm:$0xf]
      %v388 = vld [vmem:[%s349 + $0x44] sm:$0xf]
      %v389 = vld [vmem:[%s349 + $0x48] sm:$0xf]
      %v390 = vld [vmem:[%s349 + $0x4c] sm:$0xf]
      %v391 = vld [vmem:[%s349 + $0x50] sm:$0xf]
      %v392 = vld [vmem:[%s349 + $0x54] sm:$0xf]
      %v393 = vld [vmem:[%s349 + $0x58] sm:$0xf]
      %v394 = vld [vmem:[%s349 + $0x5c] sm:$0xf]
      %v395 = vld [vmem:[%s349 + $0x60] sm:$0xf]
      %v396 = vld [vmem:[%s349 + $0x64] sm:$0xf]
      %v397 = vld [vmem:[%s349 + $0x68] sm:$0xf]
      %v398 = vld [vmem:[%s349 + $0x6c] sm:$0xf]
      %v399 = vld [vmem:[%s349 + $0x70] sm:$0xf]
      %v400 = vld [vmem:[%s349 + $0x74] sm:$0xf]
      %v401 = vld [vmem:[%s349 + $0x78] sm:$0xf]
      %v402 = vld [vmem:[%s349 + $0x7c] sm:$0xf]
      %v403 = vld [vmem:[%s349 + $0x80] sm:$0xf]
      %v404 = vld [vmem:[%s349 + $0x84] sm:$0xf]
      %v405 = vld [vmem:[%s349 + $0x88] sm:$0xf]
      %v406 = vld [vmem:[%s349 + $0x8c] sm:$0xf]
      %v407 = vld [vmem:[%s349 + $0x90] sm:$0xf]
      %v408 = vld [vmem:[%s349 + $0x94] sm:$0xf]
      %v409 = vld [vmem:[%s349 + $0x98] sm:$0xf]
      %v410 = vld [vmem:[%s349 + $0x9c] sm:$0xf]
      %v411 = vld [vmem:[%s349 + $0xa0] sm:$0xf]
      %v412 = vld [vmem:[%s349 + $0xa4] sm:$0xf]
      %v413 = vld [vmem:[%s349 + $0xa8] sm:$0xf]
      %v414 = vld [vmem:[%s349 + $0xac] sm:$0xf]
      %v415 = vld [vmem:[%s349 + $0xb0] sm:$0xf]
      %v416 = vld [vmem:[%s349 + $0xb4] sm:$0xf]
      %v417 = vld [vmem:[%s349 + $0xb8] sm:$0xf]
      %v418 = vld [vmem:[%s349 + $0xbc] sm:$0xf]
      %v419 = vld [vmem:[%s349 + $0xc0] sm:$0xf]
      %v420 = vld [vmem:[%s349 + $0xc4] sm:$0xf]
      %v421 = vld [vmem:[%s349 + $0xc8] sm:$0xf]
      %v422 = vld [vmem:[%s349 + $0xcc] sm:$0xf]
      %v423 = vld [vmem:[%s349 + $0xd0] sm:$0xf]
      %v424 = vld [vmem:[%s349 + $0xd4] sm:$0xf]
      %v425 = vld [vmem:[%s349 + $0xd8] sm:$0xf]
      %v426 = vld [vmem:[%s349 + $0xdc] sm:$0xf]
      %v427 = vld [vmem:[%s349 + $0xe0] sm:$0xf]
      %v428 = vld [vmem:[%s349 + $0xe4] sm:$0xf]
      %v429 = vld [vmem:[%s349 + $0xe8] sm:$0xf]
      %v430 = vld [vmem:[%s349 + $0xec] sm:$0xf]
      %v431 = vld [vmem:[%s349 + $0xf0] sm:$0xf]
      %v432 = vld [vmem:[%s349 + $0xf4] sm:$0xf]
      %v433 = vld [vmem:[%s349 + $0xf8] sm:$0xf]
      %v434 = vld [vmem:[%s349 + $0xfc] sm:$0xf]
      %v435 = vld [vmem:[%s349 + $0x100] sm:$0xf]
      %v436 = vld [vmem:[%s349 + $0x104] sm:$0xf]
      %v437 = vld [vmem:[%s349 + $0x108] sm:$0xf]
      %v438 = vld [vmem:[%s349 + $0x10c] sm:$0xf]
      %v439 = vld [vmem:[%s349 + $0x110] sm:$0xf]
      %v440 = vld [vmem:[%s349 + $0x114] sm:$0xf]
      %v441 = vld [vmem:[%s349 + $0x118] sm:$0xf]
      %v442 = vld [vmem:[%s349 + $0x11c] sm:$0xf]
      %v443 = vld [vmem:[%s349 + $0x120] sm:$0xf]
      %v444 = vld [vmem:[%s349 + $0x124] sm:$0xf]
      %v445 = vld [vmem:[%s349 + $0x128] sm:$0xf]
      %v446 = vld [vmem:[%s349 + $0x12c] sm:$0xf]
      %v447 = vld [vmem:[%s349 + $0x130] sm:$0xf]
      %v448 = vld [vmem:[%s349 + $0x134] sm:$0xf]
      %v449 = vld [vmem:[%s349 + $0x138] sm:$0xf]
      %v450 = vld [vmem:[%s349 + $0x13c] sm:$0xf]
      %v451 = vld [vmem:[%s349 + $0x140] sm:$0xf]
      %v452 = vld [vmem:[%s349 + $0x144] sm:$0xf]
      %v453 = vld [vmem:[%s349 + $0x148] sm:$0xf]
      %v454 = vld [vmem:[%s349 + $0x14c] sm:$0xf]
      %v455 = vld [vmem:[%s349 + $0x150] sm:$0xf]
      %v456 = vld [vmem:[%s349 + $0x154] sm:$0xf]
      %v457 = vld [vmem:[%s349 + $0x158] sm:$0xf]
      %v458 = vld [vmem:[%s349 + $0x15c] sm:$0xf]
      %v459 = vld [vmem:[%s349 + $0x160] sm:$0xf]
      %v460 = vld [vmem:[%s349 + $0x164] sm:$0xf]
      %v461 = vld [vmem:[%s349 + $0x168] sm:$0xf]
      %v462 = vld [vmem:[%s349 + $0x16c] sm:$0xf]
      %v463 = vld [vmem:[%s349 + $0x170] sm:$0xf]
      %v464 = vld [vmem:[%s349 + $0x174] sm:$0xf]
      %v465 = vld [vmem:[%s349 + $0x178] sm:$0xf]
      %v466 = vld [vmem:[%s349 + $0x17c] sm:$0xf]
      %v467 = vld [vmem:[%s349 + $0x180] sm:$0xf]
      %v468 = vld [vmem:[%s349 + $0x184] sm:$0xf]
      %v469 = vld [vmem:[%s349 + $0x188] sm:$0xf]
      %v470 = vld [vmem:[%s349 + $0x18c] sm:$0xf]
      %v471 = vld [vmem:[%s349 + $0x190] sm:$0xf]
      %v472 = vld [vmem:[%s349 + $0x194] sm:$0xf]
      %v473 = vld [vmem:[%s349 + $0x198] sm:$0xf]
      %v474 = vld [vmem:[%s349 + $0x19c] sm:$0xf]
      %v475 = vld [vmem:[%s349 + $0x1a0] sm:$0xf]
      %v476 = vld [vmem:[%s349 + $0x1a4] sm:$0xf]
      %v477 = vld [vmem:[%s349 + $0x1a8] sm:$0xf]
      %v478 = vld [vmem:[%s349 + $0x1ac] sm:$0xf]
      %v479 = vld [vmem:[%s349 + $0x1b0] sm:$0xf]
      %v480 = vld [vmem:[%s349 + $0x1b4] sm:$0xf]
      %v481 = vld [vmem:[%s349 + $0x1b8] sm:$0xf]
      %v482 = vld [vmem:[%s349 + $0x1bc] sm:$0xf]
      %v483 = vld [vmem:[%s349 + $0x1c0] sm:$0xf]
      %v484 = vld [vmem:[%s349 + $0x1c4] sm:$0xf]
      %v485 = vld [vmem:[%s349 + $0x1c8] sm:$0xf]
      %v486 = vld [vmem:[%s349 + $0x1cc] sm:$0xf]
      %v487 = vld [vmem:[%s349 + $0x1d0] sm:$0xf]
      %v488 = vld [vmem:[%s349 + $0x1d4] sm:$0xf]
      %v489 = vld [vmem:[%s349 + $0x1d8] sm:$0xf]
      %v490 = vld [vmem:[%s349 + $0x1dc] sm:$0xf]
      %v491 = vld [vmem:[%s349 + $0x1e0] sm:$0xf]
      %v492 = vld [vmem:[%s349 + $0x1e4] sm:$0xf]
      %v493 = vld [vmem:[%s349 + $0x1e8] sm:$0xf]
      %v494 = vld [vmem:[%s349 + $0x1ec] sm:$0xf]
      %v495 = vld [vmem:[%s349 + $0x1f0] sm:$0xf]
      %v496 = vld [vmem:[%s349 + $0x1f4] sm:$0xf]
      %v497 = vld [vmem:[%s349 + $0x1f8] sm:$0xf]
      %v498 = vld [vmem:[%s349 + $0x1fc] sm:$0xf]
      %v499 = vld [vmem:[%s349 + $0x200] sm:$0xf]
      %v500 = vld [vmem:[%s349 + $0x204] sm:$0xf]
      %v501 = vld [vmem:[%s349 + $0x208] sm:$0xf]
      %v502 = vld [vmem:[%s349 + $0x20c] sm:$0xf]
      %v503 = vld [vmem:[%s349 + $0x210] sm:$0xf]
      %v504 = vld [vmem:[%s349 + $0x214] sm:$0xf]
      %v505 = vld [vmem:[%s349 + $0x218] sm:$0xf]
      %v506 = vld [vmem:[%s349 + $0x21c] sm:$0xf]
      %v507 = vld [vmem:[%s349 + $0x220] sm:$0xf]
      %v508 = vld [vmem:[%s349 + $0x224] sm:$0xf]
      %v509 = vld [vmem:[%s349 + $0x228] sm:$0xf]
      %v510 = vld [vmem:[%s349 + $0x22c] sm:$0xf]
      %v511 = vld [vmem:[%s349 + $0x230] sm:$0xf]
      %v512 = vld [vmem:[%s349 + $0x234] sm:$0xf]
      %v513 = vld [vmem:[%s349 + $0x238] sm:$0xf]
      %v514 = vld [vmem:[%s349 + $0x23c] sm:$0xf]
      %v515 = vld [vmem:[%s349 + $0x240] sm:$0xf]
      %v516 = vld [vmem:[%s349 + $0x244] sm:$0xf]
      %v517 = vld [vmem:[%s349 + $0x248] sm:$0xf]
      %v518 = vld [vmem:[%s349 + $0x24c] sm:$0xf]
      %v519 = vld [vmem:[%s349 + $0x250] sm:$0xf]
      %v520 = vld [vmem:[%s349 + $0x254] sm:$0xf]
      %v521 = vld [vmem:[%s349 + $0x258] sm:$0xf]
      %v522 = vld [vmem:[%s349 + $0x25c] sm:$0xf]
      %v523 = vld [vmem:[%s349 + $0x260] sm:$0xf]
      %v524 = vld [vmem:[%s349 + $0x264] sm:$0xf]
      %v525 = vld [vmem:[%s349 + $0x268] sm:$0xf]
      %v526 = vld [vmem:[%s349 + $0x26c] sm:$0xf]
      %v527 = vld [vmem:[%s349 + $0x270] sm:$0xf]
      %v528 = vld [vmem:[%s349 + $0x274] sm:$0xf]
      %v529 = vld [vmem:[%s349 + $0x278] sm:$0xf]
      %v530 = vld [vmem:[%s349 + $0x27c] sm:$0xf]
      %v531 = vld [vmem:[%s349 + $0x280] sm:$0xf]
      %v532 = vld [vmem:[%s349 + $0x284] sm:$0xf]
      %v533 = vld [vmem:[%s349 + $0x288] sm:$0xf]
      %v534 = vld [vmem:[%s349 + $0x28c] sm:$0xf]
      %v535 = vld [vmem:[%s349 + $0x290] sm:$0xf]
      %v536 = vld [vmem:[%s349 + $0x294] sm:$0xf]
      %v537 = vld [vmem:[%s349 + $0x298] sm:$0xf]
      %v538 = vld [vmem:[%s349 + $0x29c] sm:$0xf]
      %v539 = vld [vmem:[%s349 + $0x2a0] sm:$0xf]
      %v540 = vld [vmem:[%s349 + $0x2a4] sm:$0xf]
      %v541 = vld [vmem:[%s349 + $0x2a8] sm:$0xf]
      %v542 = vld [vmem:[%s349 + $0x2ac] sm:$0xf]
      %v543 = vld [vmem:[%s349 + $0x2b0] sm:$0xf]
      %v544 = vld [vmem:[%s349 + $0x2b4] sm:$0xf]
      %v545 = vld [vmem:[%s349 + $0x2b8] sm:$0xf]
      %v546 = vld [vmem:[%s349 + $0x2bc] sm:$0xf]
      %v547 = vld [vmem:[%s349 + $0x2c0] sm:$0xf]
      %v548 = vld [vmem:[%s349 + $0x2c4] sm:$0xf]
      %v549 = vld [vmem:[%s349 + $0x2c8] sm:$0xf]
      %v550 = vld [vmem:[%s349 + $0x2cc] sm:$0xf]
      %v551 = vld [vmem:[%s349 + $0x2d0] sm:$0xf]
      %v552 = vld [vmem:[%s349 + $0x2d4] sm:$0xf]
      %v553 = vld [vmem:[%s349 + $0x2d8] sm:$0xf]
      %v554 = vld [vmem:[%s349 + $0x2dc] sm:$0xf]
      %v555 = vld [vmem:[%s349 + $0x2e0] sm:$0xf]
      %v556 = vld [vmem:[%s349 + $0x2e4] sm:$0xf]
      %v557 = vld [vmem:[%s349 + $0x2e8] sm:$0xf]
      %v558 = vld [vmem:[%s349 + $0x2ec] sm:$0xf]
      %v559 = vld [vmem:[%s349 + $0x2f0] sm:$0xf]
      %v560 = vld [vmem:[%s349 + $0x2f4] sm:$0xf]
      %v561 = vld [vmem:[%s349 + $0x2f8] sm:$0xf]
      %v562 = vld [vmem:[%s349 + $0x2fc] sm:$0xf]
      %v563 = vld [vmem:[%s349 + $0x300] sm:$0xf]
      %v564 = vld [vmem:[%s349 + $0x304] sm:$0xf]
      %v565 = vld [vmem:[%s349 + $0x308] sm:$0xf]
      %v566 = vld [vmem:[%s349 + $0x30c] sm:$0xf]
      %v567 = vld [vmem:[%s349 + $0x310] sm:$0xf]
      %v568 = vld [vmem:[%s349 + $0x314] sm:$0xf]
      %v569 = vld [vmem:[%s349 + $0x318] sm:$0xf]
      %v570 = vld [vmem:[%s349 + $0x31c] sm:$0xf]
      %v571 = vld [vmem:[%s349 + $0x320] sm:$0xf]
      %v572 = vld [vmem:[%s349 + $0x324] sm:$0xf]
      %v573 = vld [vmem:[%s349 + $0x328] sm:$0xf]
      %v574 = vld [vmem:[%s349 + $0x32c] sm:$0xf]
      %v575 = vld [vmem:[%s349 + $0x330] sm:$0xf]
      %v576 = vld [vmem:[%s349 + $0x334] sm:$0xf]
      %v577 = vld [vmem:[%s349 + $0x338] sm:$0xf]
      %v578 = vld [vmem:[%s349 + $0x33c] sm:$0xf]
      %v579 = vld [vmem:[%s349 + $0x340] sm:$0xf]
      %v580 = vld [vmem:[%s349 + $0x344] sm:$0xf]
      %v581 = vld [vmem:[%s349 + $0x348] sm:$0xf]
      %v582 = vld [vmem:[%s349 + $0x34c] sm:$0xf]
      %v583 = vld [vmem:[%s349 + $0x350] sm:$0xf]
      %v584 = vld [vmem:[%s349 + $0x354] sm:$0xf]
      %v585 = vld [vmem:[%s349 + $0x358] sm:$0xf]
      %v586 = vld [vmem:[%s349 + $0x35c] sm:$0xf]
      %v587 = vld [vmem:[%s349 + $0x360] sm:$0xf]
      %v588 = vld [vmem:[%s349 + $0x364] sm:$0xf]
      %v589 = vld [vmem:[%s349 + $0x368] sm:$0xf]
      %v590 = vld [vmem:[%s349 + $0x36c] sm:$0xf]
      %v591 = vld [vmem:[%s349 + $0x370] sm:$0xf]
      %v592 = vld [vmem:[%s349 + $0x374] sm:$0xf]
      %v593 = vld [vmem:[%s349 + $0x378] sm:$0xf]
      %v594 = vld [vmem:[%s349 + $0x37c] sm:$0xf]
      %v595 = vld [vmem:[%s349 + $0x380] sm:$0xf]
      %v596 = vld [vmem:[%s349 + $0x384] sm:$0xf]
      %v597 = vld [vmem:[%s349 + $0x388] sm:$0xf]
      %v598 = vld [vmem:[%s349 + $0x38c] sm:$0xf]
      %v599 = vld [vmem:[%s349 + $0x390] sm:$0xf]
      %v600 = vld [vmem:[%s349 + $0x394] sm:$0xf]
      %v601 = vld [vmem:[%s349 + $0x398] sm:$0xf]
      %v602 = vld [vmem:[%s349 + $0x39c] sm:$0xf]
      %v603 = vld [vmem:[%s349 + $0x3a0] sm:$0xf]
      %v604 = vld [vmem:[%s349 + $0x3a4] sm:$0xf]
      %v605 = vld [vmem:[%s349 + $0x3a8] sm:$0xf]
      %v606 = vld [vmem:[%s349 + $0x3ac] sm:$0xf]
      %v607 = vld [vmem:[%s349 + $0x3b0] sm:$0xf]
      %v608 = vld [vmem:[%s349 + $0x3b4] sm:$0xf]
      %v609 = vld [vmem:[%s349 + $0x3b8] sm:$0xf]
      %v610 = vld [vmem:[%s349 + $0x3bc] sm:$0xf]
      %v611 = vld [vmem:[%s349 + $0x3c0] sm:$0xf]
      %v612 = vld [vmem:[%s349 + $0x3c4] sm:$0xf]
      %v613 = vld [vmem:[%s349 + $0x3c8] sm:$0xf]
      %v614 = vld [vmem:[%s349 + $0x3cc] sm:$0xf]
      %v615 = vld [vmem:[%s349 + $0x3d0] sm:$0xf]
      %v616 = vld [vmem:[%s349 + $0x3d4] sm:$0xf]
      %v617 = vld [vmem:[%s349 + $0x3d8] sm:$0xf]
      %v618 = vld [vmem:[%s349 + $0x3dc] sm:$0xf]
      %v619 = vld [vmem:[%s349 + $0x3e0] sm:$0xf]
      %v620 = vld [vmem:[%s349 + $0x3e4] sm:$0xf]
      %v621 = vld [vmem:[%s349 + $0x3e8] sm:$0xf]
      %v622 = vld [vmem:[%s349 + $0x3ec] sm:$0xf]
      %v623 = vld [vmem:[%s349 + $0x3f0] sm:$0xf]
      %v624 = vld [vmem:[%s349 + $0x3f4] sm:$0xf]
      %v625 = vld [vmem:[%s349 + $0x3f8] sm:$0xf]
      %v626 = vld [vmem:[%s349 + $0x3fc] sm:$0xf]
      %v627 = vld [vmem:[%s349 + $0x400] sm:$0xf]
      %v628 = vld [vmem:[%s349 + $0x404] sm:$0xf]
      %v629 = vld [vmem:[%s349 + $0x408] sm:$0xf]
      %v630 = vld [vmem:[%s349 + $0x40c] sm:$0xf]
      %v631 = vld [vmem:[%s349 + $0x410] sm:$0xf]
      %v632 = vld [vmem:[%s349 + $0x414] sm:$0xf]
      %v633 = vld [vmem:[%s349 + $0x418] sm:$0xf]
      %v634 = vld [vmem:[%s349 + $0x41c] sm:$0xf]
      %v635 = vld [vmem:[%s349 + $0x420] sm:$0xf]
      %v636 = vld [vmem:[%s349 + $0x424] sm:$0xf]
      %v637 = vld [vmem:[%s349 + $0x428] sm:$0xf]
      %v638 = vld [vmem:[%s349 + $0x42c] sm:$0xf]
      %v639 = vld [vmem:[%s349 + $0x430] sm:$0xf]
      %v640 = vld [vmem:[%s349 + $0x434] sm:$0xf]
      %v641 = vld [vmem:[%s349 + $0x438] sm:$0xf]
      %v642 = vld [vmem:[%s349 + $0x43c] sm:$0xf]
      %v643 = vld [vmem:[%s349 + $0x440] sm:$0xf]
      %v644 = vld [vmem:[%s349 + $0x444] sm:$0xf]
      %v645 = vld [vmem:[%s349 + $0x448] sm:$0xf]
      %v646 = vld [vmem:[%s349 + $0x44c] sm:$0xf]
      %v647 = vld [vmem:[%s349 + $0x450] sm:$0xf]
      %v648 = vld [vmem:[%s349 + $0x454] sm:$0xf]
      %v649 = vld [vmem:[%s349 + $0x458] sm:$0xf]
      %v650 = vld [vmem:[%s349 + $0x45c] sm:$0xf]
      %v651 = vld [vmem:[%s349 + $0x460] sm:$0xf]
      %v652 = vld [vmem:[%s349 + $0x464] sm:$0xf]
      %v653 = vld [vmem:[%s349 + $0x468] sm:$0xf]
      %v654 = vld [vmem:[%s349 + $0x46c] sm:$0xf]
      %v655 = vld [vmem:[%s349 + $0x470] sm:$0xf]
      %v656 = vld [vmem:[%s349 + $0x474] sm:$0xf]
      %v657 = vld [vmem:[%s349 + $0x478] sm:$0xf]
      %v658 = vld [vmem:[%s349 + $0x47c] sm:$0xf]
      %v659 = vld [vmem:[%s349 + $0x480] sm:$0xf]
      %v660 = vld [vmem:[%s349 + $0x484] sm:$0xf]
      %v661 = vld [vmem:[%s349 + $0x488] sm:$0xf]
      %v662 = vld [vmem:[%s349 + $0x48c] sm:$0xf]
      %v663 = vld [vmem:[%s349 + $0x490] sm:$0xf]
      %v664 = vld [vmem:[%s349 + $0x494] sm:$0xf]
      %v665 = vld [vmem:[%s349 + $0x498] sm:$0xf]
      %v666 = vld [vmem:[%s349 + $0x49c] sm:$0xf]
      %v667 = vld [vmem:[%s349 + $0x4a0] sm:$0xf]
      %v668 = vld [vmem:[%s349 + $0x4a4] sm:$0xf]
      %v669 = vld [vmem:[%s349 + $0x4a8] sm:$0xf]
      %v670 = vld [vmem:[%s349 + $0x4ac] sm:$0xf]
      %v671 = vld [vmem:[%s349 + $0x4b0] sm:$0xf]
      %v672 = vld [vmem:[%s349 + $0x4b4] sm:$0xf]
      %v673 = vld [vmem:[%s349 + $0x4b8] sm:$0xf]
      %v674 = vld [vmem:[%s349 + $0x4bc] sm:$0xf]
      %v675 = vld [vmem:[%s349 + $0x4c0] sm:$0xf]
      %v676 = vld [vmem:[%s349 + $0x4c4] sm:$0xf]
      %v677 = vld [vmem:[%s349 + $0x4c8] sm:$0xf]
      %v678 = vld [vmem:[%s349 + $0x4cc] sm:$0xf]
      %v679 = vld [vmem:[%s349 + $0x4d0] sm:$0xf]
      %v680 = vld [vmem:[%s349 + $0x4d4] sm:$0xf]
      %v681 = vld [vmem:[%s349 + $0x4d8] sm:$0xf]
      %v682 = vld [vmem:[%s349 + $0x4dc] sm:$0xf]
      %v683 = vld [vmem:[%s349 + $0x4e0] sm:$0xf]
      %v684 = vld [vmem:[%s349 + $0x4e4] sm:$0xf]
      %v685 = vld [vmem:[%s349 + $0x4e8] sm:$0xf]
      %v686 = vld [vmem:[%s349 + $0x4ec] sm:$0xf]
      %v687 = vld [vmem:[%s349 + $0x4f0] sm:$0xf]
      %v688 = vld [vmem:[%s349 + $0x4f4] sm:$0xf]
      %v689 = vld [vmem:[%s349 + $0x4f8] sm:$0xf]
      %v690 = vld [vmem:[%s349 + $0x4fc] sm:$0xf]
      %v691 = vld [vmem:[%s349 + $0x500] sm:$0xf]
      %v692 = vld [vmem:[%s349 + $0x504] sm:$0xf]
      %v693 = vld [vmem:[%s349 + $0x508] sm:$0xf]
      %v694 = vld [vmem:[%s349 + $0x50c] sm:$0xf]
      %v695 = vld [vmem:[%s349 + $0x510] sm:$0xf]
      %v696 = vld [vmem:[%s349 + $0x514] sm:$0xf]
      %v697 = vld [vmem:[%s349 + $0x518] sm:$0xf]
      %v698 = vld [vmem:[%s349 + $0x51c] sm:$0xf]
      %v699 = vld [vmem:[%s349 + $0x520] sm:$0xf]
      %v700 = vld [vmem:[%s349 + $0x524] sm:$0xf]
      %v701 = vld [vmem:[%s349 + $0x528] sm:$0xf]
      %v702 = vld [vmem:[%s349 + $0x52c] sm:$0xf]
      %v703 = vld [vmem:[%s349 + $0x530] sm:$0xf]
      %v704 = vld [vmem:[%s349 + $0x534] sm:$0xf]
      %v705 = vld [vmem:[%s349 + $0x538] sm:$0xf]
      %v706 = vld [vmem:[%s349 + $0x53c] sm:$0xf]
      %v707 = vld [vmem:[%s349 + $0x540] sm:$0xf]
      %v708 = vld [vmem:[%s349 + $0x544] sm:$0xf]
      %v709 = vld [vmem:[%s349 + $0x548] sm:$0xf]
      %v710 = vld [vmem:[%s349 + $0x54c] sm:$0xf]
      %v711 = vld [vmem:[%s349 + $0x550] sm:$0xf]
      %v712 = vld [vmem:[%s349 + $0x554] sm:$0xf]
      %v713 = vld [vmem:[%s349 + $0x558] sm:$0xf]
      %v714 = vld [vmem:[%s349 + $0x55c] sm:$0xf]
      %v715 = vld [vmem:[%s349 + $0x560] sm:$0xf]
      %v716 = vld [vmem:[%s349 + $0x564] sm:$0xf]
      %v717 = vld [vmem:[%s349 + $0x568] sm:$0xf]
      %v718 = vld [vmem:[%s349 + $0x56c] sm:$0xf]
      %v719 = vld [vmem:[%s349 + $0x570] sm:$0xf]
      %v720 = vld [vmem:[%s349 + $0x574] sm:$0xf]
      %v721 = vld [vmem:[%s349 + $0x578] sm:$0xf]
      %v722 = vld [vmem:[%s349 + $0x57c] sm:$0xf]
      %v723 = vld [vmem:[%s349 + $0x580] sm:$0xf]
      %v724 = vld [vmem:[%s349 + $0x584] sm:$0xf]
      %v725 = vld [vmem:[%s349 + $0x588] sm:$0xf]
      %v726 = vld [vmem:[%s349 + $0x58c] sm:$0xf]
      %v727 = vld [vmem:[%s349 + $0x590] sm:$0xf]
      %v728 = vld [vmem:[%s349 + $0x594] sm:$0xf]
      %v729 = vld [vmem:[%s349 + $0x598] sm:$0xf]
      %v730 = vld [vmem:[%s349 + $0x59c] sm:$0xf]
      %v731 = vld [vmem:[%s349 + $0x5a0] sm:$0xf]
      %v732 = vld [vmem:[%s349 + $0x5a4] sm:$0xf]
      %v733 = vld [vmem:[%s349 + $0x5a8] sm:$0xf]
      %v734 = vld [vmem:[%s349 + $0x5ac] sm:$0xf]
      %v735 = vld [vmem:[%s349 + $0x5b0] sm:$0xf]
      %v736 = vld [vmem:[%s349 + $0x5b4] sm:$0xf]
      %v737 = vld [vmem:[%s349 + $0x5b8] sm:$0xf]
      %v738 = vld [vmem:[%s349 + $0x5bc] sm:$0xf]
      %v739 = vld [vmem:[%s349 + $0x5c0] sm:$0xf]
      %v740 = vld [vmem:[%s349 + $0x5c4] sm:$0xf]
      %v741 = vld [vmem:[%s349 + $0x5c8] sm:$0xf]
      %v742 = vld [vmem:[%s349 + $0x5cc] sm:$0xf]
      %v743 = vld [vmem:[%s349 + $0x5d0] sm:$0xf]
      %v744 = vld [vmem:[%s349 + $0x5d4] sm:$0xf]
      %v745 = vld [vmem:[%s349 + $0x5d8] sm:$0xf]
      %v746 = vld [vmem:[%s349 + $0x5dc] sm:$0xf]
      %v747 = vld [vmem:[%s349 + $0x5e0] sm:$0xf]
      %v748 = vld [vmem:[%s349 + $0x5e4] sm:$0xf]
      %v749 = vld [vmem:[%s349 + $0x5e8] sm:$0xf]
      %v750 = vld [vmem:[%s349 + $0x5ec] sm:$0xf]
      %v751 = vld [vmem:[%s349 + $0x5f0] sm:$0xf]
      %v752 = vld [vmem:[%s349 + $0x5f4] sm:$0xf]
      %v753 = vld [vmem:[%s349 + $0x5f8] sm:$0xf]
      %v754 = vld [vmem:[%s349 + $0x5fc] sm:$0xf]
      %v755 = vunpack.c.l.bf16 %v371
      %v756 = vunpack.c.l.bf16 %v372
      %v757 = vunpack.c.l.bf16 %v373
      %v758 = vunpack.c.l.bf16 %v374
      %v759 = vunpack.c.l.bf16 %v375
      %v760 = vunpack.c.l.bf16 %v376
      %v761 = vunpack.c.l.bf16 %v377
      %v762 = vunpack.c.l.bf16 %v378
      %v763 = vunpack.c.l.bf16 %v379
      %v764 = vunpack.c.l.bf16 %v380
      %v765 = vunpack.c.l.bf16 %v381
      %v766 = vunpack.c.l.bf16 %v382
      %v767 = vunpack.c.l.bf16 %v383
      %v768 = vunpack.c.l.bf16 %v384
      %v769 = vunpack.c.l.bf16 %v385
      %v770 = vunpack.c.l.bf16 %v386
      %v771 = vunpack.c.l.bf16 %v387
      %v772 = vunpack.c.l.bf16 %v388
      %v773 = vunpack.c.l.bf16 %v389
      %v774 = vunpack.c.l.bf16 %v390
      %v775 = vunpack.c.l.bf16 %v391
      %v776 = vunpack.c.l.bf16 %v392
      %v777 = vunpack.c.l.bf16 %v393
      %v778 = vunpack.c.l.bf16 %v394
      %v779 = vunpack.c.l.bf16 %v395
      %v780 = vunpack.c.l.bf16 %v396
      %v781 = vunpack.c.l.bf16 %v397
      %v782 = vunpack.c.l.bf16 %v398
      %v783 = vunpack.c.l.bf16 %v399
      %v784 = vunpack.c.l.bf16 %v400
      %v785 = vunpack.c.l.bf16 %v401
      %v786 = vunpack.c.l.bf16 %v402
      %v787 = vunpack.c.l.bf16 %v403
      %v788 = vunpack.c.l.bf16 %v404
      %v789 = vunpack.c.l.bf16 %v405
      %v790 = vunpack.c.l.bf16 %v406
      %v791 = vunpack.c.l.bf16 %v407
      %v792 = vunpack.c.l.bf16 %v408
      %v793 = vunpack.c.l.bf16 %v409
      %v794 = vunpack.c.l.bf16 %v410
      %v795 = vunpack.c.l.bf16 %v411
      %v796 = vunpack.c.l.bf16 %v412
      %v797 = vunpack.c.l.bf16 %v413
      %v798 = vunpack.c.l.bf16 %v414
      %v799 = vunpack.c.l.bf16 %v415
      %v800 = vunpack.c.l.bf16 %v416
      %v801 = vunpack.c.l.bf16 %v417
      %v802 = vunpack.c.l.bf16 %v418
      %v803 = vunpack.c.l.bf16 %v419
      %v804 = vunpack.c.l.bf16 %v420
      %v805 = vunpack.c.l.bf16 %v421
      %v806 = vunpack.c.l.bf16 %v422
      %v807 = vunpack.c.l.bf16 %v423
      %v808 = vunpack.c.l.bf16 %v424
      %v809 = vunpack.c.l.bf16 %v425
      %v810 = vunpack.c.l.bf16 %v426
      %v811 = vunpack.c.l.bf16 %v427
      %v812 = vunpack.c.l.bf16 %v428
      %v813 = vunpack.c.l.bf16 %v429
      %v814 = vunpack.c.l.bf16 %v430
      %v815 = vunpack.c.l.bf16 %v431
      %v816 = vunpack.c.l.bf16 %v432
      %v817 = vunpack.c.l.bf16 %v433
      %v818 = vunpack.c.l.bf16 %v434
      %v819 = vunpack.c.l.bf16 %v435
      %v820 = vunpack.c.l.bf16 %v436
      %v821 = vunpack.c.l.bf16 %v437
      %v822 = vunpack.c.l.bf16 %v438
      %v823 = vunpack.c.l.bf16 %v439
      %v824 = vunpack.c.l.bf16 %v440
      %v825 = vunpack.c.l.bf16 %v441
      %v826 = vunpack.c.l.bf16 %v442
      %v827 = vunpack.c.l.bf16 %v443
      %v828 = vunpack.c.l.bf16 %v444
      %v829 = vunpack.c.l.bf16 %v445
      %v830 = vunpack.c.l.bf16 %v446
      %v831 = vunpack.c.l.bf16 %v447
      %v832 = vunpack.c.l.bf16 %v448
      %v833 = vunpack.c.l.bf16 %v449
      %v834 = vunpack.c.l.bf16 %v450
      %v835 = vunpack.c.l.bf16 %v451
      %v836 = vunpack.c.l.bf16 %v452
      %v837 = vunpack.c.l.bf16 %v453
      %v838 = vunpack.c.l.bf16 %v454
      %v839 = vunpack.c.l.bf16 %v455
      %v840 = vunpack.c.l.bf16 %v456
      %v841 = vunpack.c.l.bf16 %v457
      %v842 = vunpack.c.l.bf16 %v458
      %v843 = vunpack.c.l.bf16 %v459
      %v844 = vunpack.c.l.bf16 %v460
      %v845 = vunpack.c.l.bf16 %v461
      %v846 = vunpack.c.l.bf16 %v462
      %v847 = vunpack.c.l.bf16 %v463
      %v848 = vunpack.c.l.bf16 %v464
      %v849 = vunpack.c.l.bf16 %v465
      %v850 = vunpack.c.l.bf16 %v466
      %v851 = vunpack.c.l.bf16 %v467
      %v852 = vunpack.c.l.bf16 %v468
      %v853 = vunpack.c.l.bf16 %v469
      %v854 = vunpack.c.l.bf16 %v470
      %v855 = vunpack.c.l.bf16 %v471
      %v856 = vunpack.c.l.bf16 %v472
      %v857 = vunpack.c.l.bf16 %v473
      %v858 = vunpack.c.l.bf16 %v474
      %v859 = vunpack.c.l.bf16 %v475
      %v860 = vunpack.c.l.bf16 %v476
      %v861 = vunpack.c.l.bf16 %v477
      %v862 = vunpack.c.l.bf16 %v478
      %v863 = vunpack.c.l.bf16 %v479
      %v864 = vunpack.c.l.bf16 %v480
      %v865 = vunpack.c.l.bf16 %v481
      %v866 = vunpack.c.l.bf16 %v482
      %v867 = vunpack.c.l.bf16 %v483
      %v868 = vunpack.c.l.bf16 %v484
      %v869 = vunpack.c.l.bf16 %v485
      %v870 = vunpack.c.l.bf16 %v486
      %v871 = vunpack.c.l.bf16 %v487
      %v872 = vunpack.c.l.bf16 %v488
      %v873 = vunpack.c.l.bf16 %v489
      %v874 = vunpack.c.l.bf16 %v490
      %v875 = vunpack.c.l.bf16 %v491
      %v876 = vunpack.c.l.bf16 %v492
      %v877 = vunpack.c.l.bf16 %v493
      %v878 = vunpack.c.l.bf16 %v494
      %v879 = vunpack.c.l.bf16 %v495
      %v880 = vunpack.c.l.bf16 %v496
      %v881 = vunpack.c.l.bf16 %v497
      %v882 = vunpack.c.l.bf16 %v498
      %v883 = vunpack.c.l.bf16 %v499
      %v884 = vunpack.c.l.bf16 %v500
      %v885 = vunpack.c.l.bf16 %v501
      %v886 = vunpack.c.l.bf16 %v502
      %v887 = vunpack.c.l.bf16 %v503
      %v888 = vunpack.c.l.bf16 %v504
      %v889 = vunpack.c.l.bf16 %v505
      %v890 = vunpack.c.l.bf16 %v506
      %v891 = vunpack.c.l.bf16 %v507
      %v892 = vunpack.c.l.bf16 %v508
      %v893 = vunpack.c.l.bf16 %v509
      %v894 = vunpack.c.l.bf16 %v510
      %v895 = vunpack.c.l.bf16 %v511
      %v896 = vunpack.c.l.bf16 %v512
      %v897 = vunpack.c.l.bf16 %v513
      %v898 = vunpack.c.l.bf16 %v514
      %v899 = vunpack.c.l.bf16 %v515
      %v900 = vunpack.c.l.bf16 %v516
      %v901 = vunpack.c.l.bf16 %v517
      %v902 = vunpack.c.l.bf16 %v518
      %v903 = vunpack.c.l.bf16 %v519
      %v904 = vunpack.c.l.bf16 %v520
      %v905 = vunpack.c.l.bf16 %v521
      %v906 = vunpack.c.l.bf16 %v522
      %v907 = vunpack.c.l.bf16 %v523
      %v908 = vunpack.c.l.bf16 %v524
      %v909 = vunpack.c.l.bf16 %v525
      %v910 = vunpack.c.l.bf16 %v526
      %v911 = vunpack.c.l.bf16 %v527
      %v912 = vunpack.c.l.bf16 %v528
      %v913 = vunpack.c.l.bf16 %v529
      %v914 = vunpack.c.l.bf16 %v530
      %v915 = vunpack.c.l.bf16 %v531
      %v916 = vunpack.c.l.bf16 %v532
      %v917 = vunpack.c.l.bf16 %v533
      %v918 = vunpack.c.l.bf16 %v534
      %v919 = vunpack.c.l.bf16 %v535
      %v920 = vunpack.c.l.bf16 %v536
      %v921 = vunpack.c.l.bf16 %v537
      %v922 = vunpack.c.l.bf16 %v538
      %v923 = vunpack.c.l.bf16 %v539
      %v924 = vunpack.c.l.bf16 %v540
      %v925 = vunpack.c.l.bf16 %v541
      %v926 = vunpack.c.l.bf16 %v542
      %v927 = vunpack.c.l.bf16 %v543
      %v928 = vunpack.c.l.bf16 %v544
      %v929 = vunpack.c.l.bf16 %v545
      %v930 = vunpack.c.l.bf16 %v546
      %v931 = vunpack.c.l.bf16 %v547
      %v932 = vunpack.c.l.bf16 %v548
      %v933 = vunpack.c.l.bf16 %v549
      %v934 = vunpack.c.l.bf16 %v550
      %v935 = vunpack.c.l.bf16 %v551
      %v936 = vunpack.c.l.bf16 %v552
      %v937 = vunpack.c.l.bf16 %v553
      %v938 = vunpack.c.l.bf16 %v554
      %v939 = vunpack.c.l.bf16 %v555
      %v940 = vunpack.c.l.bf16 %v556
      %v941 = vunpack.c.l.bf16 %v557
      %v942 = vunpack.c.l.bf16 %v558
      %v943 = vunpack.c.l.bf16 %v559
      %v944 = vunpack.c.l.bf16 %v560
      %v945 = vunpack.c.l.bf16 %v561
      %v946 = vunpack.c.l.bf16 %v562
      %v947 = vunpack.c.l.bf16 %v563
      %v948 = vunpack.c.l.bf16 %v564
      %v949 = vunpack.c.l.bf16 %v565
      %v950 = vunpack.c.l.bf16 %v566
      %v951 = vunpack.c.l.bf16 %v567
      %v952 = vunpack.c.l.bf16 %v568
      %v953 = vunpack.c.l.bf16 %v569
      %v954 = vunpack.c.l.bf16 %v570
      %v955 = vunpack.c.l.bf16 %v571
      %v956 = vunpack.c.l.bf16 %v572
      %v957 = vunpack.c.l.bf16 %v573
      %v958 = vunpack.c.l.bf16 %v574
      %v959 = vunpack.c.l.bf16 %v575
      %v960 = vunpack.c.l.bf16 %v576
      %v961 = vunpack.c.l.bf16 %v577
      %v962 = vunpack.c.l.bf16 %v578
      %v963 = vunpack.c.l.bf16 %v579
      %v964 = vunpack.c.l.bf16 %v580
      %v965 = vunpack.c.l.bf16 %v581
      %v966 = vunpack.c.l.bf16 %v582
      %v967 = vunpack.c.l.bf16 %v583
      %v968 = vunpack.c.l.bf16 %v584
      %v969 = vunpack.c.l.bf16 %v585
      %v970 = vunpack.c.l.bf16 %v586
      %v971 = vunpack.c.l.bf16 %v587
      %v972 = vunpack.c.l.bf16 %v588
      %v973 = vunpack.c.l.bf16 %v589
      %v974 = vunpack.c.l.bf16 %v590
      %v975 = vunpack.c.l.bf16 %v591
      %v976 = vunpack.c.l.bf16 %v592
      %v977 = vunpack.c.l.bf16 %v593
      %v978 = vunpack.c.l.bf16 %v594
      %v979 = vunpack.c.l.bf16 %v595
      %v980 = vunpack.c.l.bf16 %v596
      %v981 = vunpack.c.l.bf16 %v597
      %v982 = vunpack.c.l.bf16 %v598
      %v983 = vunpack.c.l.bf16 %v599
      %v984 = vunpack.c.l.bf16 %v600
      %v985 = vunpack.c.l.bf16 %v601
      %v986 = vunpack.c.l.bf16 %v602
      %v987 = vunpack.c.l.bf16 %v603
      %v988 = vunpack.c.l.bf16 %v604
      %v989 = vunpack.c.l.bf16 %v605
      %v990 = vunpack.c.l.bf16 %v606
      %v991 = vunpack.c.l.bf16 %v607
      %v992 = vunpack.c.l.bf16 %v608
      %v993 = vunpack.c.l.bf16 %v609
      %v994 = vunpack.c.l.bf16 %v610
      %v995 = vunpack.c.l.bf16 %v611
      %v996 = vunpack.c.l.bf16 %v612
      %v997 = vunpack.c.l.bf16 %v613
      %v998 = vunpack.c.l.bf16 %v614
      %v999 = vunpack.c.l.bf16 %v615
      %v1000 = vunpack.c.l.bf16 %v616
      %v1001 = vunpack.c.l.bf16 %v617
      %v1002 = vunpack.c.l.bf16 %v618
      %v1003 = vunpack.c.l.bf16 %v619
      %v1004 = vunpack.c.l.bf16 %v620
      %v1005 = vunpack.c.l.bf16 %v621
      %v1006 = vunpack.c.l.bf16 %v622
      %v1007 = vunpack.c.l.bf16 %v623
      %v1008 = vunpack.c.l.bf16 %v624
      %v1009 = vunpack.c.l.bf16 %v625
      %v1010 = vunpack.c.l.bf16 %v626
      %v1011 = vunpack.c.l.bf16 %v627
      %v1012 = vunpack.c.l.bf16 %v628
      %v1013 = vunpack.c.l.bf16 %v629
      %v1014 = vunpack.c.l.bf16 %v630
      %v1015 = vunpack.c.l.bf16 %v631
      %v1016 = vunpack.c.l.bf16 %v632
      %v1017 = vunpack.c.l.bf16 %v633
      %v1018 = vunpack.c.l.bf16 %v634
      %v1019 = vunpack.c.l.bf16 %v635
      %v1020 = vunpack.c.l.bf16 %v636
      %v1021 = vunpack.c.l.bf16 %v637
      %v1022 = vunpack.c.l.bf16 %v638
      %v1023 = vunpack.c.l.bf16 %v639
      %v1024 = vunpack.c.l.bf16 %v640
      %v1025 = vunpack.c.l.bf16 %v641
      %v1026 = vunpack.c.l.bf16 %v642
      %v1027 = vunpack.c.l.bf16 %v643
      %v1028 = vunpack.c.l.bf16 %v644
      %v1029 = vunpack.c.l.bf16 %v645
      %v1030 = vunpack.c.l.bf16 %v646
      %v1031 = vunpack.c.l.bf16 %v647
      %v1032 = vunpack.c.l.bf16 %v648
      %v1033 = vunpack.c.l.bf16 %v649
      %v1034 = vunpack.c.l.bf16 %v650
      %v1035 = vunpack.c.l.bf16 %v651
      %v1036 = vunpack.c.l.bf16 %v652
      %v1037 = vunpack.c.l.bf16 %v653
      %v1038 = vunpack.c.l.bf16 %v654
      %v1039 = vunpack.c.l.bf16 %v655
      %v1040 = vunpack.c.l.bf16 %v656
      %v1041 = vunpack.c.l.bf16 %v657
      %v1042 = vunpack.c.l.bf16 %v658
      %v1043 = vunpack.c.l.bf16 %v659
      %v1044 = vunpack.c.l.bf16 %v660
      %v1045 = vunpack.c.l.bf16 %v661
      %v1046 = vunpack.c.l.bf16 %v662
      %v1047 = vunpack.c.l.bf16 %v663
      %v1048 = vunpack.c.l.bf16 %v664
      %v1049 = vunpack.c.l.bf16 %v665
      %v1050 = vunpack.c.l.bf16 %v666
      %v1051 = vunpack.c.l.bf16 %v667
      %v1052 = vunpack.c.l.bf16 %v668
      %v1053 = vunpack.c.l.bf16 %v669
      %v1054 = vunpack.c.l.bf16 %v670
      %v1055 = vunpack.c.l.bf16 %v671
      %v1056 = vunpack.c.l.bf16 %v672
      %v1057 = vunpack.c.l.bf16 %v673
      %v1058 = vunpack.c.l.bf16 %v674
      %v1059 = vunpack.c.l.bf16 %v675
      %v1060 = vunpack.c.l.bf16 %v676
      %v1061 = vunpack.c.l.bf16 %v677
      %v1062 = vunpack.c.l.bf16 %v678
      %v1063 = vunpack.c.l.bf16 %v679
      %v1064 = vunpack.c.l.bf16 %v680
      %v1065 = vunpack.c.l.bf16 %v681
      %v1066 = vunpack.c.l.bf16 %v682
      %v1067 = vunpack.c.l.bf16 %v683
      %v1068 = vunpack.c.l.bf16 %v684
      %v1069 = vunpack.c.l.bf16 %v685
      %v1070 = vunpack.c.l.bf16 %v686
      %v1071 = vunpack.c.l.bf16 %v687
      %v1072 = vunpack.c.l.bf16 %v688
      %v1073 = vunpack.c.l.bf16 %v689
      %v1074 = vunpack.c.l.bf16 %v690
      %v1075 = vunpack.c.l.bf16 %v691
      %v1076 = vunpack.c.l.bf16 %v692
      %v1077 = vunpack.c.l.bf16 %v693
      %v1078 = vunpack.c.l.bf16 %v694
      %v1079 = vunpack.c.l.bf16 %v695
      %v1080 = vunpack.c.l.bf16 %v696
      %v1081 = vunpack.c.l.bf16 %v697
      %v1082 = vunpack.c.l.bf16 %v698
      %v1083 = vunpack.c.l.bf16 %v699
      %v1084 = vunpack.c.l.bf16 %v700
      %v1085 = vunpack.c.l.bf16 %v701
      %v1086 = vunpack.c.l.bf16 %v702
      %v1087 = vunpack.c.l.bf16 %v703
      %v1088 = vunpack.c.l.bf16 %v704
      %v1089 = vunpack.c.l.bf16 %v705
      %v1090 = vunpack.c.l.bf16 %v706
      %v1091 = vunpack.c.l.bf16 %v707
      %v1092 = vunpack.c.l.bf16 %v708
      %v1093 = vunpack.c.l.bf16 %v709
      %v1094 = vunpack.c.l.bf16 %v710
      %v1095 = vunpack.c.l.bf16 %v711
      %v1096 = vunpack.c.l.bf16 %v712
      %v1097 = vunpack.c.l.bf16 %v713
      %v1098 = vunpack.c.l.bf16 %v714
      %v1099 = vunpack.c.l.bf16 %v715
      %v1100 = vunpack.c.l.bf16 %v716
      %v1101 = vunpack.c.l.bf16 %v717
      %v1102 = vunpack.c.l.bf16 %v718
      %v1103 = vunpack.c.l.bf16 %v719
      %v1104 = vunpack.c.l.bf16 %v720
      %v1105 = vunpack.c.l.bf16 %v721
      %v1106 = vunpack.c.l.bf16 %v722
      %v1107 = vunpack.c.l.bf16 %v723
      %v1108 = vunpack.c.l.bf16 %v724
      %v1109 = vunpack.c.l.bf16 %v725
      %v1110 = vunpack.c.l.bf16 %v726
      %v1111 = vunpack.c.l.bf16 %v727
      %v1112 = vunpack.c.l.bf16 %v728
      %v1113 = vunpack.c.l.bf16 %v729
      %v1114 = vunpack.c.l.bf16 %v730
      %v1115 = vunpack.c.l.bf16 %v731
      %v1116 = vunpack.c.l.bf16 %v732
      %v1117 = vunpack.c.l.bf16 %v733
      %v1118 = vunpack.c.l.bf16 %v734
      %v1119 = vunpack.c.l.bf16 %v735
      %v1120 = vunpack.c.l.bf16 %v736
      %v1121 = vunpack.c.l.bf16 %v737
      %v1122 = vunpack.c.l.bf16 %v738
      %v1123 = vunpack.c.l.bf16 %v739
      %v1124 = vunpack.c.l.bf16 %v740
      %v1125 = vunpack.c.l.bf16 %v741
      %v1126 = vunpack.c.l.bf16 %v742
      %v1127 = vunpack.c.l.bf16 %v743
      %v1128 = vunpack.c.l.bf16 %v744
      %v1129 = vunpack.c.l.bf16 %v745
      %v1130 = vunpack.c.l.bf16 %v746
      %v1131 = vunpack.c.l.bf16 %v747
      %v1132 = vunpack.c.l.bf16 %v748
      %v1133 = vunpack.c.l.bf16 %v749
      %v1134 = vunpack.c.l.bf16 %v750
      %v1135 = vunpack.c.l.bf16 %v751
      %v1136 = vunpack.c.l.bf16 %v752
      %v1137 = vunpack.c.l.bf16 %v753
      %v1138 = vunpack.c.l.bf16 %v754
      %vm1139 = vcmask 261120
      %v1140 = vsel %vm1139, %v755, 0.0
      %v1141 = vsel %vm1139, %v883, 0.0
      %v1142 = vadd.f32 %v1140, %v1141
      %v1143 = vsel %vm1139, %v1011, 0.0
      %v1144 = vadd.f32 %v1142, %v1143
      %v1145 = vsel %vm1139, %v756, 0.0
      %v1146 = vsel %vm1139, %v884, 0.0
      %v1147 = vadd.f32 %v1145, %v1146
      %v1148 = vsel %vm1139, %v1012, 0.0
      %v1149 = vadd.f32 %v1147, %v1148
      %v1150 = vsel %vm1139, %v757, 0.0
      %v1151 = vsel %vm1139, %v885, 0.0
      %v1152 = vadd.f32 %v1150, %v1151
      %v1153 = vsel %vm1139, %v1013, 0.0
      %v1154 = vadd.f32 %v1152, %v1153
      %v1155 = vsel %vm1139, %v758, 0.0
      %v1156 = vsel %vm1139, %v886, 0.0
      %v1157 = vadd.f32 %v1155, %v1156
      %v1158 = vsel %vm1139, %v1014, 0.0
      %v1159 = vadd.f32 %v1157, %v1158
      %v1160 = vsel %vm1139, %v759, 0.0
      %v1161 = vsel %vm1139, %v887, 0.0
      %v1162 = vadd.f32 %v1160, %v1161
      %v1163 = vsel %vm1139, %v1015, 0.0
      %v1164 = vadd.f32 %v1162, %v1163
      %v1165 = vsel %vm1139, %v760, 0.0
      %v1166 = vsel %vm1139, %v888, 0.0
      %v1167 = vadd.f32 %v1165, %v1166
      %v1168 = vsel %vm1139, %v1016, 0.0
      %v1169 = vadd.f32 %v1167, %v1168
      %v1170 = vsel %vm1139, %v761, 0.0
      %v1171 = vsel %vm1139, %v889, 0.0
      %v1172 = vadd.f32 %v1170, %v1171
      %v1173 = vsel %vm1139, %v1017, 0.0
      %v1174 = vadd.f32 %v1172, %v1173
      %v1175 = vsel %vm1139, %v762, 0.0
      %v1176 = vsel %vm1139, %v890, 0.0
      %v1177 = vadd.f32 %v1175, %v1176
      %v1178 = vsel %vm1139, %v1018, 0.0
      %v1179 = vadd.f32 %v1177, %v1178
      %v1180 = vsel %vm1139, %v763, 0.0
      %v1181 = vsel %vm1139, %v891, 0.0
      %v1182 = vadd.f32 %v1180, %v1181
      %v1183 = vsel %vm1139, %v1019, 0.0
      %v1184 = vadd.f32 %v1182, %v1183
      %v1185 = vsel %vm1139, %v764, 0.0
      %v1186 = vsel %vm1139, %v892, 0.0
      %v1187 = vadd.f32 %v1185, %v1186
      %v1188 = vsel %vm1139, %v1020, 0.0
      %v1189 = vadd.f32 %v1187, %v1188
      %v1190 = vsel %vm1139, %v765, 0.0
      %v1191 = vsel %vm1139, %v893, 0.0
      %v1192 = vadd.f32 %v1190, %v1191
      %v1193 = vsel %vm1139, %v1021, 0.0
      %v1194 = vadd.f32 %v1192, %v1193
      %v1195 = vsel %vm1139, %v766, 0.0
      %v1196 = vsel %vm1139, %v894, 0.0
      %v1197 = vadd.f32 %v1195, %v1196
      %v1198 = vsel %vm1139, %v1022, 0.0
      %v1199 = vadd.f32 %v1197, %v1198
      %v1200 = vsel %vm1139, %v767, 0.0
      %v1201 = vsel %vm1139, %v895, 0.0
      %v1202 = vadd.f32 %v1200, %v1201
      %v1203 = vsel %vm1139, %v1023, 0.0
      %v1204 = vadd.f32 %v1202, %v1203
      %v1205 = vsel %vm1139, %v768, 0.0
      %v1206 = vsel %vm1139, %v896, 0.0
      %v1207 = vadd.f32 %v1205, %v1206
      %v1208 = vsel %vm1139, %v1024, 0.0
      %v1209 = vadd.f32 %v1207, %v1208
      %v1210 = vsel %vm1139, %v769, 0.0
      %v1211 = vsel %vm1139, %v897, 0.0
      %v1212 = vadd.f32 %v1210, %v1211
      %v1213 = vsel %vm1139, %v1025, 0.0
      %v1214 = vadd.f32 %v1212, %v1213
      %v1215 = vsel %vm1139, %v770, 0.0
      %v1216 = vsel %vm1139, %v898, 0.0
      %v1217 = vadd.f32 %v1215, %v1216
      %v1218 = vsel %vm1139, %v1026, 0.0
      %v1219 = vadd.f32 %v1217, %v1218
      %v1220 = vsel %vm1139, %v771, 0.0
      %v1221 = vsel %vm1139, %v899, 0.0
      %v1222 = vadd.f32 %v1220, %v1221
      %v1223 = vsel %vm1139, %v1027, 0.0
      %v1224 = vadd.f32 %v1222, %v1223
      %v1225 = vsel %vm1139, %v772, 0.0
      %v1226 = vsel %vm1139, %v900, 0.0
      %v1227 = vadd.f32 %v1225, %v1226
      %v1228 = vsel %vm1139, %v1028, 0.0
      %v1229 = vadd.f32 %v1227, %v1228
      %v1230 = vsel %vm1139, %v773, 0.0
      %v1231 = vsel %vm1139, %v901, 0.0
      %v1232 = vadd.f32 %v1230, %v1231
      %v1233 = vsel %vm1139, %v1029, 0.0
      %v1234 = vadd.f32 %v1232, %v1233
      %v1235 = vsel %vm1139, %v774, 0.0
      %v1236 = vsel %vm1139, %v902, 0.0
      %v1237 = vadd.f32 %v1235, %v1236
      %v1238 = vsel %vm1139, %v1030, 0.0
      %v1239 = vadd.f32 %v1237, %v1238
      %v1240 = vsel %vm1139, %v775, 0.0
      %v1241 = vsel %vm1139, %v903, 0.0
      %v1242 = vadd.f32 %v1240, %v1241
      %v1243 = vsel %vm1139, %v1031, 0.0
      %v1244 = vadd.f32 %v1242, %v1243
      %v1245 = vsel %vm1139, %v776, 0.0
      %v1246 = vsel %vm1139, %v904, 0.0
      %v1247 = vadd.f32 %v1245, %v1246
      %v1248 = vsel %vm1139, %v1032, 0.0
      %v1249 = vadd.f32 %v1247, %v1248
      %v1250 = vsel %vm1139, %v777, 0.0
      %v1251 = vsel %vm1139, %v905, 0.0
      %v1252 = vadd.f32 %v1250, %v1251
      %v1253 = vsel %vm1139, %v1033, 0.0
      %v1254 = vadd.f32 %v1252, %v1253
      %v1255 = vsel %vm1139, %v778, 0.0
      %v1256 = vsel %vm1139, %v906, 0.0
      %v1257 = vadd.f32 %v1255, %v1256
      %v1258 = vsel %vm1139, %v1034, 0.0
      %v1259 = vadd.f32 %v1257, %v1258
      %v1260 = vsel %vm1139, %v779, 0.0
      %v1261 = vsel %vm1139, %v907, 0.0
      %v1262 = vadd.f32 %v1260, %v1261
      %v1263 = vsel %vm1139, %v1035, 0.0
      %v1264 = vadd.f32 %v1262, %v1263
      %v1265 = vsel %vm1139, %v780, 0.0
      %v1266 = vsel %vm1139, %v908, 0.0
      %v1267 = vadd.f32 %v1265, %v1266
      %v1268 = vsel %vm1139, %v1036, 0.0
      %v1269 = vadd.f32 %v1267, %v1268
      %v1270 = vsel %vm1139, %v781, 0.0
      %v1271 = vsel %vm1139, %v909, 0.0
      %v1272 = vadd.f32 %v1270, %v1271
      %v1273 = vsel %vm1139, %v1037, 0.0
      %v1274 = vadd.f32 %v1272, %v1273
      %v1275 = vsel %vm1139, %v782, 0.0
      %v1276 = vsel %vm1139, %v910, 0.0
      %v1277 = vadd.f32 %v1275, %v1276
      %v1278 = vsel %vm1139, %v1038, 0.0
      %v1279 = vadd.f32 %v1277, %v1278
      %v1280 = vsel %vm1139, %v783, 0.0
      %v1281 = vsel %vm1139, %v911, 0.0
      %v1282 = vadd.f32 %v1280, %v1281
      %v1283 = vsel %vm1139, %v1039, 0.0
      %v1284 = vadd.f32 %v1282, %v1283
      %v1285 = vsel %vm1139, %v784, 0.0
      %v1286 = vsel %vm1139, %v912, 0.0
      %v1287 = vadd.f32 %v1285, %v1286
      %v1288 = vsel %vm1139, %v1040, 0.0
      %v1289 = vadd.f32 %v1287, %v1288
      %v1290 = vsel %vm1139, %v785, 0.0
      %v1291 = vsel %vm1139, %v913, 0.0
      %v1292 = vadd.f32 %v1290, %v1291
      %v1293 = vsel %vm1139, %v1041, 0.0
      %v1294 = vadd.f32 %v1292, %v1293
      %v1295 = vsel %vm1139, %v786, 0.0
      %v1296 = vsel %vm1139, %v914, 0.0
      %v1297 = vadd.f32 %v1295, %v1296
      %v1298 = vsel %vm1139, %v1042, 0.0
      %v1299 = vadd.f32 %v1297, %v1298
      %v1300 = vsel %vm1139, %v787, 0.0
      %v1301 = vsel %vm1139, %v915, 0.0
      %v1302 = vadd.f32 %v1300, %v1301
      %v1303 = vsel %vm1139, %v1043, 0.0
      %v1304 = vadd.f32 %v1302, %v1303
      %v1305 = vsel %vm1139, %v788, 0.0
      %v1306 = vsel %vm1139, %v916, 0.0
      %v1307 = vadd.f32 %v1305, %v1306
      %v1308 = vsel %vm1139, %v1044, 0.0
      %v1309 = vadd.f32 %v1307, %v1308
      %v1310 = vsel %vm1139, %v789, 0.0
      %v1311 = vsel %vm1139, %v917, 0.0
      %v1312 = vadd.f32 %v1310, %v1311
      %v1313 = vsel %vm1139, %v1045, 0.0
      %v1314 = vadd.f32 %v1312, %v1313
      %v1315 = vsel %vm1139, %v790, 0.0
      %v1316 = vsel %vm1139, %v918, 0.0
      %v1317 = vadd.f32 %v1315, %v1316
      %v1318 = vsel %vm1139, %v1046, 0.0
      %v1319 = vadd.f32 %v1317, %v1318
      %v1320 = vsel %vm1139, %v791, 0.0
      %v1321 = vsel %vm1139, %v919, 0.0
      %v1322 = vadd.f32 %v1320, %v1321
      %v1323 = vsel %vm1139, %v1047, 0.0
      %v1324 = vadd.f32 %v1322, %v1323
      %v1325 = vsel %vm1139, %v792, 0.0
      %v1326 = vsel %vm1139, %v920, 0.0
      %v1327 = vadd.f32 %v1325, %v1326
      %v1328 = vsel %vm1139, %v1048, 0.0
      %v1329 = vadd.f32 %v1327, %v1328
      %v1330 = vsel %vm1139, %v793, 0.0
      %v1331 = vsel %vm1139, %v921, 0.0
      %v1332 = vadd.f32 %v1330, %v1331
      %v1333 = vsel %vm1139, %v1049, 0.0
      %v1334 = vadd.f32 %v1332, %v1333
      %v1335 = vsel %vm1139, %v794, 0.0
      %v1336 = vsel %vm1139, %v922, 0.0
      %v1337 = vadd.f32 %v1335, %v1336
      %v1338 = vsel %vm1139, %v1050, 0.0
      %v1339 = vadd.f32 %v1337, %v1338
      %v1340 = vsel %vm1139, %v795, 0.0
      %v1341 = vsel %vm1139, %v923, 0.0
      %v1342 = vadd.f32 %v1340, %v1341
      %v1343 = vsel %vm1139, %v1051, 0.0
      %v1344 = vadd.f32 %v1342, %v1343
      %v1345 = vsel %vm1139, %v796, 0.0
      %v1346 = vsel %vm1139, %v924, 0.0
      %v1347 = vadd.f32 %v1345, %v1346
      %v1348 = vsel %vm1139, %v1052, 0.0
      %v1349 = vadd.f32 %v1347, %v1348
      %v1350 = vsel %vm1139, %v797, 0.0
      %v1351 = vsel %vm1139, %v925, 0.0
      %v1352 = vadd.f32 %v1350, %v1351
      %v1353 = vsel %vm1139, %v1053, 0.0
      %v1354 = vadd.f32 %v1352, %v1353
      %v1355 = vsel %vm1139, %v798, 0.0
      %v1356 = vsel %vm1139, %v926, 0.0
      %v1357 = vadd.f32 %v1355, %v1356
      %v1358 = vsel %vm1139, %v1054, 0.0
      %v1359 = vadd.f32 %v1357, %v1358
      %v1360 = vsel %vm1139, %v799, 0.0
      %v1361 = vsel %vm1139, %v927, 0.0
      %v1362 = vadd.f32 %v1360, %v1361
      %v1363 = vsel %vm1139, %v1055, 0.0
      %v1364 = vadd.f32 %v1362, %v1363
      %v1365 = vsel %vm1139, %v800, 0.0
      %v1366 = vsel %vm1139, %v928, 0.0
      %v1367 = vadd.f32 %v1365, %v1366
      %v1368 = vsel %vm1139, %v1056, 0.0
      %v1369 = vadd.f32 %v1367, %v1368
      %v1370 = vsel %vm1139, %v801, 0.0
      %v1371 = vsel %vm1139, %v929, 0.0
      %v1372 = vadd.f32 %v1370, %v1371
      %v1373 = vsel %vm1139, %v1057, 0.0
      %v1374 = vadd.f32 %v1372, %v1373
      %v1375 = vsel %vm1139, %v802, 0.0
      %v1376 = vsel %vm1139, %v930, 0.0
      %v1377 = vadd.f32 %v1375, %v1376
      %v1378 = vsel %vm1139, %v1058, 0.0
      %v1379 = vadd.f32 %v1377, %v1378
      %v1380 = vsel %vm1139, %v803, 0.0
      %v1381 = vsel %vm1139, %v931, 0.0
      %v1382 = vadd.f32 %v1380, %v1381
      %v1383 = vsel %vm1139, %v1059, 0.0
      %v1384 = vadd.f32 %v1382, %v1383
      %v1385 = vsel %vm1139, %v804, 0.0
      %v1386 = vsel %vm1139, %v932, 0.0
      %v1387 = vadd.f32 %v1385, %v1386
      %v1388 = vsel %vm1139, %v1060, 0.0
      %v1389 = vadd.f32 %v1387, %v1388
      %v1390 = vsel %vm1139, %v805, 0.0
      %v1391 = vsel %vm1139, %v933, 0.0
      %v1392 = vadd.f32 %v1390, %v1391
      %v1393 = vsel %vm1139, %v1061, 0.0
      %v1394 = vadd.f32 %v1392, %v1393
      %v1395 = vsel %vm1139, %v806, 0.0
      %v1396 = vsel %vm1139, %v934, 0.0
      %v1397 = vadd.f32 %v1395, %v1396
      %v1398 = vsel %vm1139, %v1062, 0.0
      %v1399 = vadd.f32 %v1397, %v1398
      %v1400 = vsel %vm1139, %v807, 0.0
      %v1401 = vsel %vm1139, %v935, 0.0
      %v1402 = vadd.f32 %v1400, %v1401
      %v1403 = vsel %vm1139, %v1063, 0.0
      %v1404 = vadd.f32 %v1402, %v1403
      %v1405 = vsel %vm1139, %v808, 0.0
      %v1406 = vsel %vm1139, %v936, 0.0
      %v1407 = vadd.f32 %v1405, %v1406
      %v1408 = vsel %vm1139, %v1064, 0.0
      %v1409 = vadd.f32 %v1407, %v1408
      %v1410 = vsel %vm1139, %v809, 0.0
      %v1411 = vsel %vm1139, %v937, 0.0
      %v1412 = vadd.f32 %v1410, %v1411
      %v1413 = vsel %vm1139, %v1065, 0.0
      %v1414 = vadd.f32 %v1412, %v1413
      %v1415 = vsel %vm1139, %v810, 0.0
      %v1416 = vsel %vm1139, %v938, 0.0
      %v1417 = vadd.f32 %v1415, %v1416
      %v1418 = vsel %vm1139, %v1066, 0.0
      %v1419 = vadd.f32 %v1417, %v1418
      %v1420 = vsel %vm1139, %v811, 0.0
      %v1421 = vsel %vm1139, %v939, 0.0
      %v1422 = vadd.f32 %v1420, %v1421
      %v1423 = vsel %vm1139, %v1067, 0.0
      %v1424 = vadd.f32 %v1422, %v1423
      %v1425 = vsel %vm1139, %v812, 0.0
      %v1426 = vsel %vm1139, %v940, 0.0
      %v1427 = vadd.f32 %v1425, %v1426
      %v1428 = vsel %vm1139, %v1068, 0.0
      %v1429 = vadd.f32 %v1427, %v1428
      %v1430 = vsel %vm1139, %v813, 0.0
      %v1431 = vsel %vm1139, %v941, 0.0
      %v1432 = vadd.f32 %v1430, %v1431
      %v1433 = vsel %vm1139, %v1069, 0.0
      %v1434 = vadd.f32 %v1432, %v1433
      %v1435 = vsel %vm1139, %v814, 0.0
      %v1436 = vsel %vm1139, %v942, 0.0
      %v1437 = vadd.f32 %v1435, %v1436
      %v1438 = vsel %vm1139, %v1070, 0.0
      %v1439 = vadd.f32 %v1437, %v1438
      %v1440 = vsel %vm1139, %v815, 0.0
      %v1441 = vsel %vm1139, %v943, 0.0
      %v1442 = vadd.f32 %v1440, %v1441
      %v1443 = vsel %vm1139, %v1071, 0.0
      %v1444 = vadd.f32 %v1442, %v1443
      %v1445 = vsel %vm1139, %v816, 0.0
      %v1446 = vsel %vm1139, %v944, 0.0
      %v1447 = vadd.f32 %v1445, %v1446
      %v1448 = vsel %vm1139, %v1072, 0.0
      %v1449 = vadd.f32 %v1447, %v1448
      %v1450 = vsel %vm1139, %v817, 0.0
      %v1451 = vsel %vm1139, %v945, 0.0
      %v1452 = vadd.f32 %v1450, %v1451
      %v1453 = vsel %vm1139, %v1073, 0.0
      %v1454 = vadd.f32 %v1452, %v1453
      %v1455 = vsel %vm1139, %v818, 0.0
      %v1456 = vsel %vm1139, %v946, 0.0
      %v1457 = vadd.f32 %v1455, %v1456
      %v1458 = vsel %vm1139, %v1074, 0.0
      %v1459 = vadd.f32 %v1457, %v1458
      %v1460 = vsel %vm1139, %v819, 0.0
      %v1461 = vsel %vm1139, %v947, 0.0
      %v1462 = vadd.f32 %v1460, %v1461
      %v1463 = vsel %vm1139, %v1075, 0.0
      %v1464 = vadd.f32 %v1462, %v1463
      %v1465 = vsel %vm1139, %v820, 0.0
      %v1466 = vsel %vm1139, %v948, 0.0
      %v1467 = vadd.f32 %v1465, %v1466
      %v1468 = vsel %vm1139, %v1076, 0.0
      %v1469 = vadd.f32 %v1467, %v1468
      %v1470 = vsel %vm1139, %v821, 0.0
      %v1471 = vsel %vm1139, %v949, 0.0
      %v1472 = vadd.f32 %v1470, %v1471
      %v1473 = vsel %vm1139, %v1077, 0.0
      %v1474 = vadd.f32 %v1472, %v1473
      %v1475 = vsel %vm1139, %v822, 0.0
      %v1476 = vsel %vm1139, %v950, 0.0
      %v1477 = vadd.f32 %v1475, %v1476
      %v1478 = vsel %vm1139, %v1078, 0.0
      %v1479 = vadd.f32 %v1477, %v1478
      %v1480 = vsel %vm1139, %v823, 0.0
      %v1481 = vsel %vm1139, %v951, 0.0
      %v1482 = vadd.f32 %v1480, %v1481
      %v1483 = vsel %vm1139, %v1079, 0.0
      %v1484 = vadd.f32 %v1482, %v1483
      %v1485 = vsel %vm1139, %v824, 0.0
      %v1486 = vsel %vm1139, %v952, 0.0
      %v1487 = vadd.f32 %v1485, %v1486
      %v1488 = vsel %vm1139, %v1080, 0.0
      %v1489 = vadd.f32 %v1487, %v1488
      %v1490 = vsel %vm1139, %v825, 0.0
      %v1491 = vsel %vm1139, %v953, 0.0
      %v1492 = vadd.f32 %v1490, %v1491
      %v1493 = vsel %vm1139, %v1081, 0.0
      %v1494 = vadd.f32 %v1492, %v1493
      %v1495 = vsel %vm1139, %v826, 0.0
      %v1496 = vsel %vm1139, %v954, 0.0
      %v1497 = vadd.f32 %v1495, %v1496
      %v1498 = vsel %vm1139, %v1082, 0.0
      %v1499 = vadd.f32 %v1497, %v1498
      %v1500 = vsel %vm1139, %v827, 0.0
      %v1501 = vsel %vm1139, %v955, 0.0
      %v1502 = vadd.f32 %v1500, %v1501
      %v1503 = vsel %vm1139, %v1083, 0.0
      %v1504 = vadd.f32 %v1502, %v1503
      %v1505 = vsel %vm1139, %v828, 0.0
      %v1506 = vsel %vm1139, %v956, 0.0
      %v1507 = vadd.f32 %v1505, %v1506
      %v1508 = vsel %vm1139, %v1084, 0.0
      %v1509 = vadd.f32 %v1507, %v1508
      %v1510 = vsel %vm1139, %v829, 0.0
      %v1511 = vsel %vm1139, %v957, 0.0
      %v1512 = vadd.f32 %v1510, %v1511
      %v1513 = vsel %vm1139, %v1085, 0.0
      %v1514 = vadd.f32 %v1512, %v1513
      %v1515 = vsel %vm1139, %v830, 0.0
      %v1516 = vsel %vm1139, %v958, 0.0
      %v1517 = vadd.f32 %v1515, %v1516
      %v1518 = vsel %vm1139, %v1086, 0.0
      %v1519 = vadd.f32 %v1517, %v1518
      %v1520 = vsel %vm1139, %v831, 0.0
      %v1521 = vsel %vm1139, %v959, 0.0
      %v1522 = vadd.f32 %v1520, %v1521
      %v1523 = vsel %vm1139, %v1087, 0.0
      %v1524 = vadd.f32 %v1522, %v1523
      %v1525 = vsel %vm1139, %v832, 0.0
      %v1526 = vsel %vm1139, %v960, 0.0
      %v1527 = vadd.f32 %v1525, %v1526
      %v1528 = vsel %vm1139, %v1088, 0.0
      %v1529 = vadd.f32 %v1527, %v1528
      %v1530 = vsel %vm1139, %v833, 0.0
      %v1531 = vsel %vm1139, %v961, 0.0
      %v1532 = vadd.f32 %v1530, %v1531
      %v1533 = vsel %vm1139, %v1089, 0.0
      %v1534 = vadd.f32 %v1532, %v1533
      %v1535 = vsel %vm1139, %v834, 0.0
      %v1536 = vsel %vm1139, %v962, 0.0
      %v1537 = vadd.f32 %v1535, %v1536
      %v1538 = vsel %vm1139, %v1090, 0.0
      %v1539 = vadd.f32 %v1537, %v1538
      %v1540 = vsel %vm1139, %v835, 0.0
      %v1541 = vsel %vm1139, %v963, 0.0
      %v1542 = vadd.f32 %v1540, %v1541
      %v1543 = vsel %vm1139, %v1091, 0.0
      %v1544 = vadd.f32 %v1542, %v1543
      %v1545 = vsel %vm1139, %v836, 0.0
      %v1546 = vsel %vm1139, %v964, 0.0
      %v1547 = vadd.f32 %v1545, %v1546
      %v1548 = vsel %vm1139, %v1092, 0.0
      %v1549 = vadd.f32 %v1547, %v1548
      %v1550 = vsel %vm1139, %v837, 0.0
      %v1551 = vsel %vm1139, %v965, 0.0
      %v1552 = vadd.f32 %v1550, %v1551
      %v1553 = vsel %vm1139, %v1093, 0.0
      %v1554 = vadd.f32 %v1552, %v1553
      %v1555 = vsel %vm1139, %v838, 0.0
      %v1556 = vsel %vm1139, %v966, 0.0
      %v1557 = vadd.f32 %v1555, %v1556
      %v1558 = vsel %vm1139, %v1094, 0.0
      %v1559 = vadd.f32 %v1557, %v1558
      %v1560 = vsel %vm1139, %v839, 0.0
      %v1561 = vsel %vm1139, %v967, 0.0
      %v1562 = vadd.f32 %v1560, %v1561
      %v1563 = vsel %vm1139, %v1095, 0.0
      %v1564 = vadd.f32 %v1562, %v1563
      %v1565 = vsel %vm1139, %v840, 0.0
      %v1566 = vsel %vm1139, %v968, 0.0
      %v1567 = vadd.f32 %v1565, %v1566
      %v1568 = vsel %vm1139, %v1096, 0.0
      %v1569 = vadd.f32 %v1567, %v1568
      %v1570 = vsel %vm1139, %v841, 0.0
      %v1571 = vsel %vm1139, %v969, 0.0
      %v1572 = vadd.f32 %v1570, %v1571
      %v1573 = vsel %vm1139, %v1097, 0.0
      %v1574 = vadd.f32 %v1572, %v1573
      %v1575 = vsel %vm1139, %v842, 0.0
      %v1576 = vsel %vm1139, %v970, 0.0
      %v1577 = vadd.f32 %v1575, %v1576
      %v1578 = vsel %vm1139, %v1098, 0.0
      %v1579 = vadd.f32 %v1577, %v1578
      %v1580 = vsel %vm1139, %v843, 0.0
      %v1581 = vsel %vm1139, %v971, 0.0
      %v1582 = vadd.f32 %v1580, %v1581
      %v1583 = vsel %vm1139, %v1099, 0.0
      %v1584 = vadd.f32 %v1582, %v1583
      %v1585 = vsel %vm1139, %v844, 0.0
      %v1586 = vsel %vm1139, %v972, 0.0
      %v1587 = vadd.f32 %v1585, %v1586
      %v1588 = vsel %vm1139, %v1100, 0.0
      %v1589 = vadd.f32 %v1587, %v1588
      %v1590 = vsel %vm1139, %v845, 0.0
      %v1591 = vsel %vm1139, %v973, 0.0
      %v1592 = vadd.f32 %v1590, %v1591
      %v1593 = vsel %vm1139, %v1101, 0.0
      %v1594 = vadd.f32 %v1592, %v1593
      %v1595 = vsel %vm1139, %v846, 0.0
      %v1596 = vsel %vm1139, %v974, 0.0
      %v1597 = vadd.f32 %v1595, %v1596
      %v1598 = vsel %vm1139, %v1102, 0.0
      %v1599 = vadd.f32 %v1597, %v1598
      %v1600 = vsel %vm1139, %v847, 0.0
      %v1601 = vsel %vm1139, %v975, 0.0
      %v1602 = vadd.f32 %v1600, %v1601
      %v1603 = vsel %vm1139, %v1103, 0.0
      %v1604 = vadd.f32 %v1602, %v1603
      %v1605 = vsel %vm1139, %v848, 0.0
      %v1606 = vsel %vm1139, %v976, 0.0
      %v1607 = vadd.f32 %v1605, %v1606
      %v1608 = vsel %vm1139, %v1104, 0.0
      %v1609 = vadd.f32 %v1607, %v1608
      %v1610 = vsel %vm1139, %v849, 0.0
      %v1611 = vsel %vm1139, %v977, 0.0
      %v1612 = vadd.f32 %v1610, %v1611
      %v1613 = vsel %vm1139, %v1105, 0.0
      %v1614 = vadd.f32 %v1612, %v1613
      %v1615 = vsel %vm1139, %v850, 0.0
      %v1616 = vsel %vm1139, %v978, 0.0
      %v1617 = vadd.f32 %v1615, %v1616
      %v1618 = vsel %vm1139, %v1106, 0.0
      %v1619 = vadd.f32 %v1617, %v1618
      %v1620 = vsel %vm1139, %v851, 0.0
      %v1621 = vsel %vm1139, %v979, 0.0
      %v1622 = vadd.f32 %v1620, %v1621
      %v1623 = vsel %vm1139, %v1107, 0.0
      %v1624 = vadd.f32 %v1622, %v1623
      %v1625 = vsel %vm1139, %v852, 0.0
      %v1626 = vsel %vm1139, %v980, 0.0
      %v1627 = vadd.f32 %v1625, %v1626
      %v1628 = vsel %vm1139, %v1108, 0.0
      %v1629 = vadd.f32 %v1627, %v1628
      %v1630 = vsel %vm1139, %v853, 0.0
      %v1631 = vsel %vm1139, %v981, 0.0
      %v1632 = vadd.f32 %v1630, %v1631
      %v1633 = vsel %vm1139, %v1109, 0.0
      %v1634 = vadd.f32 %v1632, %v1633
      %v1635 = vsel %vm1139, %v854, 0.0
      %v1636 = vsel %vm1139, %v982, 0.0
      %v1637 = vadd.f32 %v1635, %v1636
      %v1638 = vsel %vm1139, %v1110, 0.0
      %v1639 = vadd.f32 %v1637, %v1638
      %v1640 = vsel %vm1139, %v855, 0.0
      %v1641 = vsel %vm1139, %v983, 0.0
      %v1642 = vadd.f32 %v1640, %v1641
      %v1643 = vsel %vm1139, %v1111, 0.0
      %v1644 = vadd.f32 %v1642, %v1643
      %v1645 = vsel %vm1139, %v856, 0.0
      %v1646 = vsel %vm1139, %v984, 0.0
      %v1647 = vadd.f32 %v1645, %v1646
      %v1648 = vsel %vm1139, %v1112, 0.0
      %v1649 = vadd.f32 %v1647, %v1648
      %v1650 = vsel %vm1139, %v857, 0.0
      %v1651 = vsel %vm1139, %v985, 0.0
      %v1652 = vadd.f32 %v1650, %v1651
      %v1653 = vsel %vm1139, %v1113, 0.0
      %v1654 = vadd.f32 %v1652, %v1653
      %v1655 = vsel %vm1139, %v858, 0.0
      %v1656 = vsel %vm1139, %v986, 0.0
      %v1657 = vadd.f32 %v1655, %v1656
      %v1658 = vsel %vm1139, %v1114, 0.0
      %v1659 = vadd.f32 %v1657, %v1658
      %v1660 = vsel %vm1139, %v859, 0.0
      %v1661 = vsel %vm1139, %v987, 0.0
      %v1662 = vadd.f32 %v1660, %v1661
      %v1663 = vsel %vm1139, %v1115, 0.0
      %v1664 = vadd.f32 %v1662, %v1663
      %v1665 = vsel %vm1139, %v860, 0.0
      %v1666 = vsel %vm1139, %v988, 0.0
      %v1667 = vadd.f32 %v1665, %v1666
      %v1668 = vsel %vm1139, %v1116, 0.0
      %v1669 = vadd.f32 %v1667, %v1668
      %v1670 = vsel %vm1139, %v861, 0.0
      %v1671 = vsel %vm1139, %v989, 0.0
      %v1672 = vadd.f32 %v1670, %v1671
      %v1673 = vsel %vm1139, %v1117, 0.0
      %v1674 = vadd.f32 %v1672, %v1673
      %v1675 = vsel %vm1139, %v862, 0.0
      %v1676 = vsel %vm1139, %v990, 0.0
      %v1677 = vadd.f32 %v1675, %v1676
      %v1678 = vsel %vm1139, %v1118, 0.0
      %v1679 = vadd.f32 %v1677, %v1678
      %v1680 = vsel %vm1139, %v863, 0.0
      %v1681 = vsel %vm1139, %v991, 0.0
      %v1682 = vadd.f32 %v1680, %v1681
      %v1683 = vsel %vm1139, %v1119, 0.0
      %v1684 = vadd.f32 %v1682, %v1683
      %v1685 = vsel %vm1139, %v864, 0.0
      %v1686 = vsel %vm1139, %v992, 0.0
      %v1687 = vadd.f32 %v1685, %v1686
      %v1688 = vsel %vm1139, %v1120, 0.0
      %v1689 = vadd.f32 %v1687, %v1688
      %v1690 = vsel %vm1139, %v865, 0.0
      %v1691 = vsel %vm1139, %v993, 0.0
      %v1692 = vadd.f32 %v1690, %v1691
      %v1693 = vsel %vm1139, %v1121, 0.0
      %v1694 = vadd.f32 %v1692, %v1693
      %v1695 = vsel %vm1139, %v866, 0.0
      %v1696 = vsel %vm1139, %v994, 0.0
      %v1697 = vadd.f32 %v1695, %v1696
      %v1698 = vsel %vm1139, %v1122, 0.0
      %v1699 = vadd.f32 %v1697, %v1698
      %v1700 = vsel %vm1139, %v867, 0.0
      %v1701 = vsel %vm1139, %v995, 0.0
      %v1702 = vadd.f32 %v1700, %v1701
      %v1703 = vsel %vm1139, %v1123, 0.0
      %v1704 = vadd.f32 %v1702, %v1703
      %v1705 = vsel %vm1139, %v868, 0.0
      %v1706 = vsel %vm1139, %v996, 0.0
      %v1707 = vadd.f32 %v1705, %v1706
      %v1708 = vsel %vm1139, %v1124, 0.0
      %v1709 = vadd.f32 %v1707, %v1708
      %v1710 = vsel %vm1139, %v869, 0.0
      %v1711 = vsel %vm1139, %v997, 0.0
      %v1712 = vadd.f32 %v1710, %v1711
      %v1713 = vsel %vm1139, %v1125, 0.0
      %v1714 = vadd.f32 %v1712, %v1713
      %v1715 = vsel %vm1139, %v870, 0.0
      %v1716 = vsel %vm1139, %v998, 0.0
      %v1717 = vadd.f32 %v1715, %v1716
      %v1718 = vsel %vm1139, %v1126, 0.0
      %v1719 = vadd.f32 %v1717, %v1718
      %v1720 = vsel %vm1139, %v871, 0.0
      %v1721 = vsel %vm1139, %v999, 0.0
      %v1722 = vadd.f32 %v1720, %v1721
      %v1723 = vsel %vm1139, %v1127, 0.0
      %v1724 = vadd.f32 %v1722, %v1723
      %v1725 = vsel %vm1139, %v872, 0.0
      %v1726 = vsel %vm1139, %v1000, 0.0
      %v1727 = vadd.f32 %v1725, %v1726
      %v1728 = vsel %vm1139, %v1128, 0.0
      %v1729 = vadd.f32 %v1727, %v1728
      %v1730 = vsel %vm1139, %v873, 0.0
      %v1731 = vsel %vm1139, %v1001, 0.0
      %v1732 = vadd.f32 %v1730, %v1731
      %v1733 = vsel %vm1139, %v1129, 0.0
      %v1734 = vadd.f32 %v1732, %v1733
      %v1735 = vsel %vm1139, %v874, 0.0
      %v1736 = vsel %vm1139, %v1002, 0.0
      %v1737 = vadd.f32 %v1735, %v1736
      %v1738 = vsel %vm1139, %v1130, 0.0
      %v1739 = vadd.f32 %v1737, %v1738
      %v1740 = vsel %vm1139, %v875, 0.0
      %v1741 = vsel %vm1139, %v1003, 0.0
      %v1742 = vadd.f32 %v1740, %v1741
      %v1743 = vsel %vm1139, %v1131, 0.0
      %v1744 = vadd.f32 %v1742, %v1743
      %v1745 = vsel %vm1139, %v876, 0.0
      %v1746 = vsel %vm1139, %v1004, 0.0
      %v1747 = vadd.f32 %v1745, %v1746
      %v1748 = vsel %vm1139, %v1132, 0.0
      %v1749 = vadd.f32 %v1747, %v1748
      %v1750 = vsel %vm1139, %v877, 0.0
      %v1751 = vsel %vm1139, %v1005, 0.0
      %v1752 = vadd.f32 %v1750, %v1751
      %v1753 = vsel %vm1139, %v1133, 0.0
      %v1754 = vadd.f32 %v1752, %v1753
      %v1755 = vsel %vm1139, %v878, 0.0
      %v1756 = vsel %vm1139, %v1006, 0.0
      %v1757 = vadd.f32 %v1755, %v1756
      %v1758 = vsel %vm1139, %v1134, 0.0
      %v1759 = vadd.f32 %v1757, %v1758
      %v1760 = vsel %vm1139, %v879, 0.0
      %v1761 = vsel %vm1139, %v1007, 0.0
      %v1762 = vadd.f32 %v1760, %v1761
      %v1763 = vsel %vm1139, %v1135, 0.0
      %v1764 = vadd.f32 %v1762, %v1763
      %v1765 = vsel %vm1139, %v880, 0.0
      %v1766 = vsel %vm1139, %v1008, 0.0
      %v1767 = vadd.f32 %v1765, %v1766
      %v1768 = vsel %vm1139, %v1136, 0.0
      %v1769 = vadd.f32 %v1767, %v1768
      %v1770 = vsel %vm1139, %v881, 0.0
      %v1771 = vsel %vm1139, %v1009, 0.0
      %v1772 = vadd.f32 %v1770, %v1771
      %v1773 = vsel %vm1139, %v1137, 0.0
      %v1774 = vadd.f32 %v1772, %v1773
      %v1775 = vsel %vm1139, %v882, 0.0
      %v1776 = vsel %vm1139, %v1010, 0.0
      %v1777 = vadd.f32 %v1775, %v1776
      %v1778 = vsel %vm1139, %v1138, 0.0
      %v1779 = vadd.f32 %v1777, %v1778
      %v1780 = vld [vmem:[%s1] sm:$0xff]
      %v1781 = vld [vmem:[%s1 + $0x8] sm:$0xff]
      %v1782 = vld [vmem:[%s1 + $0x10] sm:$0xff]
      %v1783 = vld [vmem:[%s1 + $0x18] sm:$0xff]
      %v1784 = vld [vmem:[%s2] sm:$0x1]
      %v1786 = vlaneseq
      %v1787 = vshrl.u32 %v1786, 7
      %v1788 = vsub.s32 0, %v1787
      %v1789 = vrot.slane %v1784, %v1788
      %v1792 = vsel %vm1139, %v1144, 0
      %v1795 = vsel %vm1139, %v1149, 0
      %v1798 = vsel %vm1139, %v1154, 0
      %v1801 = vsel %vm1139, %v1159, 0
      %v1804 = vsel %vm1139, %v1164, 0
      %v1807 = vsel %vm1139, %v1169, 0
      %v1810 = vsel %vm1139, %v1174, 0
      %v1813 = vsel %vm1139, %v1179, 0
      %v1816 = vsel %vm1139, %v1184, 0
      %v1819 = vsel %vm1139, %v1189, 0
      %v1822 = vsel %vm1139, %v1194, 0
      %v1825 = vsel %vm1139, %v1199, 0
      %v1828 = vsel %vm1139, %v1204, 0
      %v1831 = vsel %vm1139, %v1209, 0
      %v1834 = vsel %vm1139, %v1214, 0
      %v1837 = vsel %vm1139, %v1219, 0
      %v1840 = vsel %vm1139, %v1224, 0
      %v1843 = vsel %vm1139, %v1229, 0
      %v1846 = vsel %vm1139, %v1234, 0
      %v1849 = vsel %vm1139, %v1239, 0
      %v1852 = vsel %vm1139, %v1244, 0
      %v1855 = vsel %vm1139, %v1249, 0
      %v1858 = vsel %vm1139, %v1254, 0
      %v1861 = vsel %vm1139, %v1259, 0
      %v1864 = vsel %vm1139, %v1264, 0
      %v1867 = vsel %vm1139, %v1269, 0
      %v1870 = vsel %vm1139, %v1274, 0
      %v1873 = vsel %vm1139, %v1279, 0
      %v1876 = vsel %vm1139, %v1284, 0
      %v1879 = vsel %vm1139, %v1289, 0
      %v1882 = vsel %vm1139, %v1294, 0
      %v1885 = vsel %vm1139, %v1299, 0
      %v1888 = vsel %vm1139, %v1304, 0
      %v1891 = vsel %vm1139, %v1309, 0
      %v1894 = vsel %vm1139, %v1314, 0
      %v1897 = vsel %vm1139, %v1319, 0
      %v1900 = vsel %vm1139, %v1324, 0
      %v1903 = vsel %vm1139, %v1329, 0
      %v1906 = vsel %vm1139, %v1334, 0
      %v1909 = vsel %vm1139, %v1339, 0
      %v1912 = vsel %vm1139, %v1344, 0
      %v1915 = vsel %vm1139, %v1349, 0
      %v1918 = vsel %vm1139, %v1354, 0
      %v1921 = vsel %vm1139, %v1359, 0
      %v1924 = vsel %vm1139, %v1364, 0
      %v1927 = vsel %vm1139, %v1369, 0
      %v1930 = vsel %vm1139, %v1374, 0
      %v1933 = vsel %vm1139, %v1379, 0
      %v1936 = vsel %vm1139, %v1384, 0
      %v1939 = vsel %vm1139, %v1389, 0
      %v1942 = vsel %vm1139, %v1394, 0
      %v1945 = vsel %vm1139, %v1399, 0
      %v1948 = vsel %vm1139, %v1404, 0
      %v1951 = vsel %vm1139, %v1409, 0
      %v1954 = vsel %vm1139, %v1414, 0
      %v1957 = vsel %vm1139, %v1419, 0
      %v1960 = vsel %vm1139, %v1424, 0
      %v1963 = vsel %vm1139, %v1429, 0
      %v1966 = vsel %vm1139, %v1434, 0
      %v1969 = vsel %vm1139, %v1439, 0
      %v1972 = vsel %vm1139, %v1444, 0
      %v1975 = vsel %vm1139, %v1449, 0
      %v1978 = vsel %vm1139, %v1454, 0
      %v1981 = vsel %vm1139, %v1459, 0
      %v1984 = vsel %vm1139, %v1464, 0
      %v1987 = vsel %vm1139, %v1469, 0
      %v1990 = vsel %vm1139, %v1474, 0
      %v1993 = vsel %vm1139, %v1479, 0
      %v1996 = vsel %vm1139, %v1484, 0
      %v1999 = vsel %vm1139, %v1489, 0
      %v2002 = vsel %vm1139, %v1494, 0
      %v2005 = vsel %vm1139, %v1499, 0
      %v2008 = vsel %vm1139, %v1504, 0
      %v2011 = vsel %vm1139, %v1509, 0
      %v2014 = vsel %vm1139, %v1514, 0
      %v2017 = vsel %vm1139, %v1519, 0
      %v2020 = vsel %vm1139, %v1524, 0
      %v2023 = vsel %vm1139, %v1529, 0
      %v2026 = vsel %vm1139, %v1534, 0
      %v2029 = vsel %vm1139, %v1539, 0
      %v2032 = vsel %vm1139, %v1544, 0
      %v2035 = vsel %vm1139, %v1549, 0
      %v2038 = vsel %vm1139, %v1554, 0
      %v2041 = vsel %vm1139, %v1559, 0
      %v2044 = vsel %vm1139, %v1564, 0
      %v2047 = vsel %vm1139, %v1569, 0
      %v2050 = vsel %vm1139, %v1574, 0
      %v2053 = vsel %vm1139, %v1579, 0
      %v2056 = vsel %vm1139, %v1584, 0
      %v2059 = vsel %vm1139, %v1589, 0
      %v2062 = vsel %vm1139, %v1594, 0
      %v2065 = vsel %vm1139, %v1599, 0
      %v2068 = vsel %vm1139, %v1604, 0
      %v2071 = vsel %vm1139, %v1609, 0
      %v2074 = vsel %vm1139, %v1614, 0
      %v2077 = vsel %vm1139, %v1619, 0
      %v2080 = vsel %vm1139, %v1624, 0
      %v2083 = vsel %vm1139, %v1629, 0
      %v2086 = vsel %vm1139, %v1634, 0
      %v2089 = vsel %vm1139, %v1639, 0
      %v2092 = vsel %vm1139, %v1644, 0
      %v2095 = vsel %vm1139, %v1649, 0
      %v2098 = vsel %vm1139, %v1654, 0
      %v2101 = vsel %vm1139, %v1659, 0
      %v2104 = vsel %vm1139, %v1664, 0
      %v2107 = vsel %vm1139, %v1669, 0
      %v2110 = vsel %vm1139, %v1674, 0
      %v2113 = vsel %vm1139, %v1679, 0
      %v2116 = vsel %vm1139, %v1684, 0
      %v2119 = vsel %vm1139, %v1689, 0
      %v2122 = vsel %vm1139, %v1694, 0
      %v2125 = vsel %vm1139, %v1699, 0
      %v2128 = vsel %vm1139, %v1704, 0
      %v2131 = vsel %vm1139, %v1709, 0
      %v2134 = vsel %vm1139, %v1714, 0
      %v2137 = vsel %vm1139, %v1719, 0
      %v2140 = vsel %vm1139, %v1724, 0
      %v2143 = vsel %vm1139, %v1729, 0
      %v2146 = vsel %vm1139, %v1734, 0
      %v2149 = vsel %vm1139, %v1739, 0
      %v2152 = vsel %vm1139, %v1744, 0
      %v2155 = vsel %vm1139, %v1749, 0
      %v2158 = vsel %vm1139, %v1754, 0
      %v2161 = vsel %vm1139, %v1759, 0
      %v2164 = vsel %vm1139, %v1764, 0
      %v2167 = vsel %vm1139, %v1769, 0
      %v2170 = vsel %vm1139, %v1774, 0
      %v2173 = vsel %vm1139, %v1779, 0
      %2175 = vmatprep.subr.mxu0 0.0
      %2176 = vmatpush1.msra.mxu0 0.0
      %2177 = vmatprep.subr.mxu0 0.0
      %2178 = vmatpush1.msra.mxu0 0.0
      %2179 = vmatprep.subr.mxu0 0.0
      %2180 = vmatpush1.msra.mxu0 0.0
      %2181 = vmatprep.subr.mxu0 0.0
      %2182 = vmatpush1.msra.mxu0 0.0
      %2183 = vmatprep.subr.mxu0 0.0
      %2184 = vmatpush1.msra.mxu0 0.0
      %2185 = vmatprep.subr.mxu0 0.0
      %2186 = vmatpush1.msra.mxu0 0.0
      %2187 = vmatprep.subr.mxu0 0.0
      %2188 = vmatpush1.msra.mxu0 0.0
      %2189 = vmatprep.subr.mxu0 0.0
      %2190 = vmatpush1.msra.mxu0 0.0
      %2191 = vmatprep.subr.mxu0 0.0
      %2192 = vmatpush1.msra.mxu0 0.0
      %2193 = vmatprep.subr.mxu0 0.0
      %2194 = vmatpush1.msra.mxu0 0.0
      %2195 = vmatprep.subr.mxu0 0.0
      %2196 = vmatpush1.msra.mxu0 0.0
      %2197 = vmatprep.subr.mxu0 0.0
      %2198 = vmatpush1.msra.mxu0 0.0
      %2199 = vmatprep.subr.mxu0 0.0
      %2200 = vmatpush1.msra.mxu0 %v1783
      %2201 = vmatprep.subr.mxu0 0.0
      %2202 = vmatpush1.msra.mxu0 %v1782
      %2203 = vmatprep.subr.mxu0 0.0
      %2204 = vmatpush1.msra.mxu0 %v1781
      %2205 = vmatprep.subr.mxu0 0.0
      %2206 = vmatpush1.msra.mxu0 %v1780
      %2207 = vmatprep.subr.mxu0 0.0
      %2208 = vmatpush2.msra.mxu0 0.0
      %2209 = vmatprep.subr.mxu0 0.0
      %2210 = vmatpush2.msra.mxu0 0.0
      %2211 = vmatprep.subr.mxu0 0.0
      %2212 = vmatpush2.msra.mxu0 0.0
      %2213 = vmatprep.subr.mxu0 0.0
      %2214 = vmatpush2.msra.mxu0 0.0
      %2215 = vmatprep.subr.mxu0 0.0
      %2216 = vmatpush2.msra.mxu0 0.0
      %2217 = vmatprep.subr.mxu0 0.0
      %2218 = vmatpush2.msra.mxu0 0.0
      %2219 = vmatprep.subr.mxu0 0.0
      %2220 = vmatpush2.msra.mxu0 0.0
      %2221 = vmatprep.subr.mxu0 0.0
      %2222 = vmatpush2.msra.mxu0 0.0
      %2223 = vmatprep.subr.mxu0 0.0
      %2224 = vmatpush2.msra.mxu0 0.0
      %2225 = vmatprep.subr.mxu0 0.0
      %2226 = vmatpush2.msra.mxu0 0.0
      %2227 = vmatprep.subr.mxu0 0.0
      %2228 = vmatpush2.msra.mxu0 0.0
      %2229 = vmatprep.subr.mxu0 0.0
      %2230 = vmatpush2.msra.mxu0 0.0
      %2231 = vmatprep.subr.mxu0 0.0
      %2232 = vmatpush2.msra.mxu0 0.0
      %2233 = vmatprep.subr.mxu0 0.0
      %2234 = vmatpush2.msra.mxu0 0.0
      %2235 = vmatprep.subr.mxu0 0.0
      %2236 = vmatpush2.msra.mxu0 0.0
      %2237 = vmatprep.subr.mxu0 0.0
      %2238 = vmatpush2.msra.mxu0 0.0
      %2239 = vmatprep.mubr.f32.mxu0 0.0
      %2240 = vmatmul.mubr.f32.gmra.mxu0 %v1792
      %v2241 = vpop.f32.mrf.mxu0
      %v2242 = vadd.f32 %v1789, %v2241
      %v2243 = vpop.f32.mrf.mxu0
      %2244 = vmatprep.mubr.f32.mxu0 0.0
      %2245 = vmatmul.mubr.f32.gmra.mxu0 %v1795
      %v2246 = vpop.f32.mrf.mxu0
      %v2247 = vadd.f32 %v1789, %v2246
      %v2248 = vpop.f32.mrf.mxu0
      %2249 = vmatprep.mubr.f32.mxu0 0.0
      %2250 = vmatmul.mubr.f32.gmra.mxu0 %v1798
      %v2251 = vpop.f32.mrf.mxu0
      %v2252 = vadd.f32 %v1789, %v2251
      %v2253 = vpop.f32.mrf.mxu0
      %2254 = vmatprep.mubr.f32.mxu0 0.0
      %2255 = vmatmul.mubr.f32.gmra.mxu0 %v1801
      %v2256 = vpop.f32.mrf.mxu0
      %v2257 = vadd.f32 %v1789, %v2256
      %v2258 = vpop.f32.mrf.mxu0
      %2259 = vmatprep.mubr.f32.mxu0 0.0
      %2260 = vmatmul.mubr.f32.gmra.mxu0 %v1804
      %v2261 = vpop.f32.mrf.mxu0
      %v2262 = vadd.f32 %v1789, %v2261
      %v2263 = vpop.f32.mrf.mxu0
      %2264 = vmatprep.mubr.f32.mxu0 0.0
      %2265 = vmatmul.mubr.f32.gmra.mxu0 %v1807
      %v2266 = vpop.f32.mrf.mxu0
      %v2267 = vadd.f32 %v1789, %v2266
      %v2268 = vpop.f32.mrf.mxu0
      %2269 = vmatprep.mubr.f32.mxu0 0.0
      %2270 = vmatmul.mubr.f32.gmra.mxu0 %v1810
      %v2271 = vpop.f32.mrf.mxu0
      %v2272 = vadd.f32 %v1789, %v2271
      %v2273 = vpop.f32.mrf.mxu0
      %2274 = vmatprep.mubr.f32.mxu0 0.0
      %2275 = vmatmul.mubr.f32.gmra.mxu0 %v1813
      %v2276 = vpop.f32.mrf.mxu0
      %v2277 = vadd.f32 %v1789, %v2276
      %v2278 = vpop.f32.mrf.mxu0
      %2279 = vmatprep.mubr.f32.mxu0 0.0
      %2280 = vmatmul.mubr.f32.gmra.mxu0 %v1816
      %v2281 = vpop.f32.mrf.mxu0
      %v2282 = vadd.f32 %v1789, %v2281
      %v2283 = vpop.f32.mrf.mxu0
      %2284 = vmatprep.mubr.f32.mxu0 0.0
      %2285 = vmatmul.mubr.f32.gmra.mxu0 %v1819
      %v2286 = vpop.f32.mrf.mxu0
      %v2287 = vadd.f32 %v1789, %v2286
      %v2288 = vpop.f32.mrf.mxu0
      %2289 = vmatprep.mubr.f32.mxu0 0.0
      %2290 = vmatmul.mubr.f32.gmra.mxu0 %v1822
      %v2291 = vpop.f32.mrf.mxu0
      %v2292 = vadd.f32 %v1789, %v2291
      %v2293 = vpop.f32.mrf.mxu0
      %2294 = vmatprep.mubr.f32.mxu0 0.0
      %2295 = vmatmul.mubr.f32.gmra.mxu0 %v1825
      %v2296 = vpop.f32.mrf.mxu0
      %v2297 = vadd.f32 %v1789, %v2296
      %v2298 = vpop.f32.mrf.mxu0
      %2299 = vmatprep.mubr.f32.mxu0 0.0
      %2300 = vmatmul.mubr.f32.gmra.mxu0 %v1828
      %v2301 = vpop.f32.mrf.mxu0
      %v2302 = vadd.f32 %v1789, %v2301
      %v2303 = vpop.f32.mrf.mxu0
      %2304 = vmatprep.mubr.f32.mxu0 0.0
      %2305 = vmatmul.mubr.f32.gmra.mxu0 %v1831
      %v2306 = vpop.f32.mrf.mxu0
      %v2307 = vadd.f32 %v1789, %v2306
      %v2308 = vpop.f32.mrf.mxu0
      %2309 = vmatprep.mubr.f32.mxu0 0.0
      %2310 = vmatmul.mubr.f32.gmra.mxu0 %v1834
      %v2311 = vpop.f32.mrf.mxu0
      %v2312 = vadd.f32 %v1789, %v2311
      %v2313 = vpop.f32.mrf.mxu0
      %2314 = vmatprep.mubr.f32.mxu0 0.0
      %2315 = vmatmul.mubr.f32.gmra.mxu0 %v1837
      %v2316 = vpop.f32.mrf.mxu0
      %v2317 = vadd.f32 %v1789, %v2316
      %v2318 = vpop.f32.mrf.mxu0
      %2319 = vmatprep.mubr.f32.mxu0 0.0
      %2320 = vmatmul.mubr.f32.gmra.mxu0 %v1840
      %v2321 = vpop.f32.mrf.mxu0
      %v2322 = vadd.f32 %v1789, %v2321
      %v2323 = vpop.f32.mrf.mxu0
      %2324 = vmatprep.mubr.f32.mxu0 0.0
      %2325 = vmatmul.mubr.f32.gmra.mxu0 %v1843
      %v2326 = vpop.f32.mrf.mxu0
      %v2327 = vadd.f32 %v1789, %v2326
      %v2328 = vpop.f32.mrf.mxu0
      %2329 = vmatprep.mubr.f32.mxu0 0.0
      %2330 = vmatmul.mubr.f32.gmra.mxu0 %v1846
      %v2331 = vpop.f32.mrf.mxu0
      %v2332 = vadd.f32 %v1789, %v2331
      %v2333 = vpop.f32.mrf.mxu0
      %2334 = vmatprep.mubr.f32.mxu0 0.0
      %2335 = vmatmul.mubr.f32.gmra.mxu0 %v1849
      %v2336 = vpop.f32.mrf.mxu0
      %v2337 = vadd.f32 %v1789, %v2336
      %v2338 = vpop.f32.mrf.mxu0
      %2339 = vmatprep.mubr.f32.mxu0 0.0
      %2340 = vmatmul.mubr.f32.gmra.mxu0 %v1852
      %v2341 = vpop.f32.mrf.mxu0
      %v2342 = vadd.f32 %v1789, %v2341
      %v2343 = vpop.f32.mrf.mxu0
      %2344 = vmatprep.mubr.f32.mxu0 0.0
      %2345 = vmatmul.mubr.f32.gmra.mxu0 %v1855
      %v2346 = vpop.f32.mrf.mxu0
      %v2347 = vadd.f32 %v1789, %v2346
      %v2348 = vpop.f32.mrf.mxu0
      %2349 = vmatprep.mubr.f32.mxu0 0.0
      %2350 = vmatmul.mubr.f32.gmra.mxu0 %v1858
      %v2351 = vpop.f32.mrf.mxu0
      %v2352 = vadd.f32 %v1789, %v2351
      %v2353 = vpop.f32.mrf.mxu0
      %2354 = vmatprep.mubr.f32.mxu0 0.0
      %2355 = vmatmul.mubr.f32.gmra.mxu0 %v1861
      %v2356 = vpop.f32.mrf.mxu0
      %v2357 = vadd.f32 %v1789, %v2356
      %v2358 = vpop.f32.mrf.mxu0
      %2359 = vmatprep.mubr.f32.mxu0 0.0
      %2360 = vmatmul.mubr.f32.gmra.mxu0 %v1864
      %v2361 = vpop.f32.mrf.mxu0
      %v2362 = vadd.f32 %v1789, %v2361
      %v2363 = vpop.f32.mrf.mxu0
      %2364 = vmatprep.mubr.f32.mxu0 0.0
      %2365 = vmatmul.mubr.f32.gmra.mxu0 %v1867
      %v2366 = vpop.f32.mrf.mxu0
      %v2367 = vadd.f32 %v1789, %v2366
      %v2368 = vpop.f32.mrf.mxu0
      %2369 = vmatprep.mubr.f32.mxu0 0.0
      %2370 = vmatmul.mubr.f32.gmra.mxu0 %v1870
      %v2371 = vpop.f32.mrf.mxu0
      %v2372 = vadd.f32 %v1789, %v2371
      %v2373 = vpop.f32.mrf.mxu0
      %2374 = vmatprep.mubr.f32.mxu0 0.0
      %2375 = vmatmul.mubr.f32.gmra.mxu0 %v1873
      %v2376 = vpop.f32.mrf.mxu0
      %v2377 = vadd.f32 %v1789, %v2376
      %v2378 = vpop.f32.mrf.mxu0
      %2379 = vmatprep.mubr.f32.mxu0 0.0
      %2380 = vmatmul.mubr.f32.gmra.mxu0 %v1876
      %v2381 = vpop.f32.mrf.mxu0
      %v2382 = vadd.f32 %v1789, %v2381
      %v2383 = vpop.f32.mrf.mxu0
      %2384 = vmatprep.mubr.f32.mxu0 0.0
      %2385 = vmatmul.mubr.f32.gmra.mxu0 %v1879
      %v2386 = vpop.f32.mrf.mxu0
      %v2387 = vadd.f32 %v1789, %v2386
      %v2388 = vpop.f32.mrf.mxu0
      %2389 = vmatprep.mubr.f32.mxu0 0.0
      %2390 = vmatmul.mubr.f32.gmra.mxu0 %v1882
      %v2391 = vpop.f32.mrf.mxu0
      %v2392 = vadd.f32 %v1789, %v2391
      %v2393 = vpop.f32.mrf.mxu0
      %2394 = vmatprep.mubr.f32.mxu0 0.0
      %2395 = vmatmul.mubr.f32.gmra.mxu0 %v1885
      %v2396 = vpop.f32.mrf.mxu0
      %v2397 = vadd.f32 %v1789, %v2396
      %v2398 = vpop.f32.mrf.mxu0
      %2399 = vmatprep.mubr.f32.mxu0 0.0
      %2400 = vmatmul.mubr.f32.gmra.mxu0 %v1888
      %v2401 = vpop.f32.mrf.mxu0
      %v2402 = vadd.f32 %v1789, %v2401
      %v2403 = vpop.f32.mrf.mxu0
      %2404 = vmatprep.mubr.f32.mxu0 0.0
      %2405 = vmatmul.mubr.f32.gmra.mxu0 %v1891
      %v2406 = vpop.f32.mrf.mxu0
      %v2407 = vadd.f32 %v1789, %v2406
      %v2408 = vpop.f32.mrf.mxu0
      %2409 = vmatprep.mubr.f32.mxu0 0.0
      %2410 = vmatmul.mubr.f32.gmra.mxu0 %v1894
      %v2411 = vpop.f32.mrf.mxu0
      %v2412 = vadd.f32 %v1789, %v2411
      %v2413 = vpop.f32.mrf.mxu0
      %2414 = vmatprep.mubr.f32.mxu0 0.0
      %2415 = vmatmul.mubr.f32.gmra.mxu0 %v1897
      %v2416 = vpop.f32.mrf.mxu0
      %v2417 = vadd.f32 %v1789, %v2416
      %v2418 = vpop.f32.mrf.mxu0
      %2419 = vmatprep.mubr.f32.mxu0 0.0
      %2420 = vmatmul.mubr.f32.gmra.mxu0 %v1900
      %v2421 = vpop.f32.mrf.mxu0
      %v2422 = vadd.f32 %v1789, %v2421
      %v2423 = vpop.f32.mrf.mxu0
      %2424 = vmatprep.mubr.f32.mxu0 0.0
      %2425 = vmatmul.mubr.f32.gmra.mxu0 %v1903
      %v2426 = vpop.f32.mrf.mxu0
      %v2427 = vadd.f32 %v1789, %v2426
      %v2428 = vpop.f32.mrf.mxu0
      %2429 = vmatprep.mubr.f32.mxu0 0.0
      %2430 = vmatmul.mubr.f32.gmra.mxu0 %v1906
      %v2431 = vpop.f32.mrf.mxu0
      %v2432 = vadd.f32 %v1789, %v2431
      %v2433 = vpop.f32.mrf.mxu0
      %2434 = vmatprep.mubr.f32.mxu0 0.0
      %2435 = vmatmul.mubr.f32.gmra.mxu0 %v1909
      %v2436 = vpop.f32.mrf.mxu0
      %v2437 = vadd.f32 %v1789, %v2436
      %v2438 = vpop.f32.mrf.mxu0
      %2439 = vmatprep.mubr.f32.mxu0 0.0
      %2440 = vmatmul.mubr.f32.gmra.mxu0 %v1912
      %v2441 = vpop.f32.mrf.mxu0
      %v2442 = vadd.f32 %v1789, %v2441
      %v2443 = vpop.f32.mrf.mxu0
      %2444 = vmatprep.mubr.f32.mxu0 0.0
      %2445 = vmatmul.mubr.f32.gmra.mxu0 %v1915
      %v2446 = vpop.f32.mrf.mxu0
      %v2447 = vadd.f32 %v1789, %v2446
      %v2448 = vpop.f32.mrf.mxu0
      %2449 = vmatprep.mubr.f32.mxu0 0.0
      %2450 = vmatmul.mubr.f32.gmra.mxu0 %v1918
      %v2451 = vpop.f32.mrf.mxu0
      %v2452 = vadd.f32 %v1789, %v2451
      %v2453 = vpop.f32.mrf.mxu0
      %2454 = vmatprep.mubr.f32.mxu0 0.0
      %2455 = vmatmul.mubr.f32.gmra.mxu0 %v1921
      %v2456 = vpop.f32.mrf.mxu0
      %v2457 = vadd.f32 %v1789, %v2456
      %v2458 = vpop.f32.mrf.mxu0
      %2459 = vmatprep.mubr.f32.mxu0 0.0
      %2460 = vmatmul.mubr.f32.gmra.mxu0 %v1924
      %v2461 = vpop.f32.mrf.mxu0
      %v2462 = vadd.f32 %v1789, %v2461
      %v2463 = vpop.f32.mrf.mxu0
      %2464 = vmatprep.mubr.f32.mxu0 0.0
      %2465 = vmatmul.mubr.f32.gmra.mxu0 %v1927
      %v2466 = vpop.f32.mrf.mxu0
      %v2467 = vadd.f32 %v1789, %v2466
      %v2468 = vpop.f32.mrf.mxu0
      %2469 = vmatprep.mubr.f32.mxu0 0.0
      %2470 = vmatmul.mubr.f32.gmra.mxu0 %v1930
      %v2471 = vpop.f32.mrf.mxu0
      %v2472 = vadd.f32 %v1789, %v2471
      %v2473 = vpop.f32.mrf.mxu0
      %2474 = vmatprep.mubr.f32.mxu0 0.0
      %2475 = vmatmul.mubr.f32.gmra.mxu0 %v1933
      %v2476 = vpop.f32.mrf.mxu0
      %v2477 = vadd.f32 %v1789, %v2476
      %v2478 = vpop.f32.mrf.mxu0
      %2479 = vmatprep.mubr.f32.mxu0 0.0
      %2480 = vmatmul.mubr.f32.gmra.mxu0 %v1936
      %v2481 = vpop.f32.mrf.mxu0
      %v2482 = vadd.f32 %v1789, %v2481
      %v2483 = vpop.f32.mrf.mxu0
      %2484 = vmatprep.mubr.f32.mxu0 0.0
      %2485 = vmatmul.mubr.f32.gmra.mxu0 %v1939
      %v2486 = vpop.f32.mrf.mxu0
      %v2487 = vadd.f32 %v1789, %v2486
      %v2488 = vpop.f32.mrf.mxu0
      %2489 = vmatprep.mubr.f32.mxu0 0.0
      %2490 = vmatmul.mubr.f32.gmra.mxu0 %v1942
      %v2491 = vpop.f32.mrf.mxu0
      %v2492 = vadd.f32 %v1789, %v2491
      %v2493 = vpop.f32.mrf.mxu0
      %2494 = vmatprep.mubr.f32.mxu0 0.0
      %2495 = vmatmul.mubr.f32.gmra.mxu0 %v1945
      %v2496 = vpop.f32.mrf.mxu0
      %v2497 = vadd.f32 %v1789, %v2496
      %v2498 = vpop.f32.mrf.mxu0
      %2499 = vmatprep.mubr.f32.mxu0 0.0
      %2500 = vmatmul.mubr.f32.gmra.mxu0 %v1948
      %v2501 = vpop.f32.mrf.mxu0
      %v2502 = vadd.f32 %v1789, %v2501
      %v2503 = vpop.f32.mrf.mxu0
      %2504 = vmatprep.mubr.f32.mxu0 0.0
      %2505 = vmatmul.mubr.f32.gmra.mxu0 %v1951
      %v2506 = vpop.f32.mrf.mxu0
      %v2507 = vadd.f32 %v1789, %v2506
      %v2508 = vpop.f32.mrf.mxu0
      %2509 = vmatprep.mubr.f32.mxu0 0.0
      %2510 = vmatmul.mubr.f32.gmra.mxu0 %v1954
      %v2511 = vpop.f32.mrf.mxu0
      %v2512 = vadd.f32 %v1789, %v2511
      %v2513 = vpop.f32.mrf.mxu0
      %2514 = vmatprep.mubr.f32.mxu0 0.0
      %2515 = vmatmul.mubr.f32.gmra.mxu0 %v1957
      %v2516 = vpop.f32.mrf.mxu0
      %v2517 = vadd.f32 %v1789, %v2516
      %v2518 = vpop.f32.mrf.mxu0
      %2519 = vmatprep.mubr.f32.mxu0 0.0
      %2520 = vmatmul.mubr.f32.gmra.mxu0 %v1960
      %v2521 = vpop.f32.mrf.mxu0
      %v2522 = vadd.f32 %v1789, %v2521
      %v2523 = vpop.f32.mrf.mxu0
      %2524 = vmatprep.mubr.f32.mxu0 0.0
      %2525 = vmatmul.mubr.f32.gmra.mxu0 %v1963
      %v2526 = vpop.f32.mrf.mxu0
      %v2527 = vadd.f32 %v1789, %v2526
      %v2528 = vpop.f32.mrf.mxu0
      %2529 = vmatprep.mubr.f32.mxu0 0.0
      %2530 = vmatmul.mubr.f32.gmra.mxu0 %v1966
      %v2531 = vpop.f32.mrf.mxu0
      %v2532 = vadd.f32 %v1789, %v2531
      %v2533 = vpop.f32.mrf.mxu0
      %2534 = vmatprep.mubr.f32.mxu0 0.0
      %2535 = vmatmul.mubr.f32.gmra.mxu0 %v1969
      %v2536 = vpop.f32.mrf.mxu0
      %v2537 = vadd.f32 %v1789, %v2536
      %v2538 = vpop.f32.mrf.mxu0
      %2539 = vmatprep.mubr.f32.mxu0 0.0
      %2540 = vmatmul.mubr.f32.gmra.mxu0 %v1972
      %v2541 = vpop.f32.mrf.mxu0
      %v2542 = vadd.f32 %v1789, %v2541
      %v2543 = vpop.f32.mrf.mxu0
      %2544 = vmatprep.mubr.f32.mxu0 0.0
      %2545 = vmatmul.mubr.f32.gmra.mxu0 %v1975
      %v2546 = vpop.f32.mrf.mxu0
      %v2547 = vadd.f32 %v1789, %v2546
      %v2548 = vpop.f32.mrf.mxu0
      %2549 = vmatprep.mubr.f32.mxu0 0.0
      %2550 = vmatmul.mubr.f32.gmra.mxu0 %v1978
      %v2551 = vpop.f32.mrf.mxu0
      %v2552 = vadd.f32 %v1789, %v2551
      %v2553 = vpop.f32.mrf.mxu0
      %2554 = vmatprep.mubr.f32.mxu0 0.0
      %2555 = vmatmul.mubr.f32.gmra.mxu0 %v1981
      %v2556 = vpop.f32.mrf.mxu0
      %v2557 = vadd.f32 %v1789, %v2556
      %v2558 = vpop.f32.mrf.mxu0
      %2559 = vmatprep.mubr.f32.mxu0 0.0
      %2560 = vmatmul.mubr.f32.gmra.mxu0 %v1984
      %v2561 = vpop.f32.mrf.mxu0
      %v2562 = vadd.f32 %v1789, %v2561
      %v2563 = vpop.f32.mrf.mxu0
      %2564 = vmatprep.mubr.f32.mxu0 0.0
      %2565 = vmatmul.mubr.f32.gmra.mxu0 %v1987
      %v2566 = vpop.f32.mrf.mxu0
      %v2567 = vadd.f32 %v1789, %v2566
      %v2568 = vpop.f32.mrf.mxu0
      %2569 = vmatprep.mubr.f32.mxu0 0.0
      %2570 = vmatmul.mubr.f32.gmra.mxu0 %v1990
      %v2571 = vpop.f32.mrf.mxu0
      %v2572 = vadd.f32 %v1789, %v2571
      %v2573 = vpop.f32.mrf.mxu0
      %2574 = vmatprep.mubr.f32.mxu0 0.0
      %2575 = vmatmul.mubr.f32.gmra.mxu0 %v1993
      %v2576 = vpop.f32.mrf.mxu0
      %v2577 = vadd.f32 %v1789, %v2576
      %v2578 = vpop.f32.mrf.mxu0
      %2579 = vmatprep.mubr.f32.mxu0 0.0
      %2580 = vmatmul.mubr.f32.gmra.mxu0 %v1996
      %v2581 = vpop.f32.mrf.mxu0
      %v2582 = vadd.f32 %v1789, %v2581
      %v2583 = vpop.f32.mrf.mxu0
      %2584 = vmatprep.mubr.f32.mxu0 0.0
      %2585 = vmatmul.mubr.f32.gmra.mxu0 %v1999
      %v2586 = vpop.f32.mrf.mxu0
      %v2587 = vadd.f32 %v1789, %v2586
      %v2588 = vpop.f32.mrf.mxu0
      %2589 = vmatprep.mubr.f32.mxu0 0.0
      %2590 = vmatmul.mubr.f32.gmra.mxu0 %v2002
      %v2591 = vpop.f32.mrf.mxu0
      %v2592 = vadd.f32 %v1789, %v2591
      %v2593 = vpop.f32.mrf.mxu0
      %2594 = vmatprep.mubr.f32.mxu0 0.0
      %2595 = vmatmul.mubr.f32.gmra.mxu0 %v2005
      %v2596 = vpop.f32.mrf.mxu0
      %v2597 = vadd.f32 %v1789, %v2596
      %v2598 = vpop.f32.mrf.mxu0
      %2599 = vmatprep.mubr.f32.mxu0 0.0
      %2600 = vmatmul.mubr.f32.gmra.mxu0 %v2008
      %v2601 = vpop.f32.mrf.mxu0
      %v2602 = vadd.f32 %v1789, %v2601
      %v2603 = vpop.f32.mrf.mxu0
      %2604 = vmatprep.mubr.f32.mxu0 0.0
      %2605 = vmatmul.mubr.f32.gmra.mxu0 %v2011
      %v2606 = vpop.f32.mrf.mxu0
      %v2607 = vadd.f32 %v1789, %v2606
      %v2608 = vpop.f32.mrf.mxu0
      %2609 = vmatprep.mubr.f32.mxu0 0.0
      %2610 = vmatmul.mubr.f32.gmra.mxu0 %v2014
      %v2611 = vpop.f32.mrf.mxu0
      %v2612 = vadd.f32 %v1789, %v2611
      %v2613 = vpop.f32.mrf.mxu0
      %2614 = vmatprep.mubr.f32.mxu0 0.0
      %2615 = vmatmul.mubr.f32.gmra.mxu0 %v2017
      %v2616 = vpop.f32.mrf.mxu0
      %v2617 = vadd.f32 %v1789, %v2616
      %v2618 = vpop.f32.mrf.mxu0
      %2619 = vmatprep.mubr.f32.mxu0 0.0
      %2620 = vmatmul.mubr.f32.gmra.mxu0 %v2020
      %v2621 = vpop.f32.mrf.mxu0
      %v2622 = vadd.f32 %v1789, %v2621
      %v2623 = vpop.f32.mrf.mxu0
      %2624 = vmatprep.mubr.f32.mxu0 0.0
      %2625 = vmatmul.mubr.f32.gmra.mxu0 %v2023
      %v2626 = vpop.f32.mrf.mxu0
      %v2627 = vadd.f32 %v1789, %v2626
      %v2628 = vpop.f32.mrf.mxu0
      %2629 = vmatprep.mubr.f32.mxu0 0.0
      %2630 = vmatmul.mubr.f32.gmra.mxu0 %v2026
      %v2631 = vpop.f32.mrf.mxu0
      %v2632 = vadd.f32 %v1789, %v2631
      %v2633 = vpop.f32.mrf.mxu0
      %2634 = vmatprep.mubr.f32.mxu0 0.0
      %2635 = vmatmul.mubr.f32.gmra.mxu0 %v2029
      %v2636 = vpop.f32.mrf.mxu0
      %v2637 = vadd.f32 %v1789, %v2636
      %v2638 = vpop.f32.mrf.mxu0
      %2639 = vmatprep.mubr.f32.mxu0 0.0
      %2640 = vmatmul.mubr.f32.gmra.mxu0 %v2032
      %v2641 = vpop.f32.mrf.mxu0
      %v2642 = vadd.f32 %v1789, %v2641
      %v2643 = vpop.f32.mrf.mxu0
      %2644 = vmatprep.mubr.f32.mxu0 0.0
      %2645 = vmatmul.mubr.f32.gmra.mxu0 %v2035
      %v2646 = vpop.f32.mrf.mxu0
      %v2647 = vadd.f32 %v1789, %v2646
      %v2648 = vpop.f32.mrf.mxu0
      %2649 = vmatprep.mubr.f32.mxu0 0.0
      %2650 = vmatmul.mubr.f32.gmra.mxu0 %v2038
      %v2651 = vpop.f32.mrf.mxu0
      %v2652 = vadd.f32 %v1789, %v2651
      %v2653 = vpop.f32.mrf.mxu0
      %2654 = vmatprep.mubr.f32.mxu0 0.0
      %2655 = vmatmul.mubr.f32.gmra.mxu0 %v2041
      %v2656 = vpop.f32.mrf.mxu0
      %v2657 = vadd.f32 %v1789, %v2656
      %v2658 = vpop.f32.mrf.mxu0
      %2659 = vmatprep.mubr.f32.mxu0 0.0
      %2660 = vmatmul.mubr.f32.gmra.mxu0 %v2044
      %v2661 = vpop.f32.mrf.mxu0
      %v2662 = vadd.f32 %v1789, %v2661
      %v2663 = vpop.f32.mrf.mxu0
      %2664 = vmatprep.mubr.f32.mxu0 0.0
      %2665 = vmatmul.mubr.f32.gmra.mxu0 %v2047
      %v2666 = vpop.f32.mrf.mxu0
      %v2667 = vadd.f32 %v1789, %v2666
      %v2668 = vpop.f32.mrf.mxu0
      %2669 = vmatprep.mubr.f32.mxu0 0.0
      %2670 = vmatmul.mubr.f32.gmra.mxu0 %v2050
      %v2671 = vpop.f32.mrf.mxu0
      %v2672 = vadd.f32 %v1789, %v2671
      %v2673 = vpop.f32.mrf.mxu0
      %2674 = vmatprep.mubr.f32.mxu0 0.0
      %2675 = vmatmul.mubr.f32.gmra.mxu0 %v2053
      %v2676 = vpop.f32.mrf.mxu0
      %v2677 = vadd.f32 %v1789, %v2676
      %v2678 = vpop.f32.mrf.mxu0
      %2679 = vmatprep.mubr.f32.mxu0 0.0
      %2680 = vmatmul.mubr.f32.gmra.mxu0 %v2056
      %v2681 = vpop.f32.mrf.mxu0
      %v2682 = vadd.f32 %v1789, %v2681
      %v2683 = vpop.f32.mrf.mxu0
      %2684 = vmatprep.mubr.f32.mxu0 0.0
      %2685 = vmatmul.mubr.f32.gmra.mxu0 %v2059
      %v2686 = vpop.f32.mrf.mxu0
      %v2687 = vadd.f32 %v1789, %v2686
      %v2688 = vpop.f32.mrf.mxu0
      %2689 = vmatprep.mubr.f32.mxu0 0.0
      %2690 = vmatmul.mubr.f32.gmra.mxu0 %v2062
      %v2691 = vpop.f32.mrf.mxu0
      %v2692 = vadd.f32 %v1789, %v2691
      %v2693 = vpop.f32.mrf.mxu0
      %2694 = vmatprep.mubr.f32.mxu0 0.0
      %2695 = vmatmul.mubr.f32.gmra.mxu0 %v2065
      %v2696 = vpop.f32.mrf.mxu0
      %v2697 = vadd.f32 %v1789, %v2696
      %v2698 = vpop.f32.mrf.mxu0
      %2699 = vmatprep.mubr.f32.mxu0 0.0
      %2700 = vmatmul.mubr.f32.gmra.mxu0 %v2068
      %v2701 = vpop.f32.mrf.mxu0
      %v2702 = vadd.f32 %v1789, %v2701
      %v2703 = vpop.f32.mrf.mxu0
      %2704 = vmatprep.mubr.f32.mxu0 0.0
      %2705 = vmatmul.mubr.f32.gmra.mxu0 %v2071
      %v2706 = vpop.f32.mrf.mxu0
      %v2707 = vadd.f32 %v1789, %v2706
      %v2708 = vpop.f32.mrf.mxu0
      %2709 = vmatprep.mubr.f32.mxu0 0.0
      %2710 = vmatmul.mubr.f32.gmra.mxu0 %v2074
      %v2711 = vpop.f32.mrf.mxu0
      %v2712 = vadd.f32 %v1789, %v2711
      %v2713 = vpop.f32.mrf.mxu0
      %2714 = vmatprep.mubr.f32.mxu0 0.0
      %2715 = vmatmul.mubr.f32.gmra.mxu0 %v2077
      %v2716 = vpop.f32.mrf.mxu0
      %v2717 = vadd.f32 %v1789, %v2716
      %v2718 = vpop.f32.mrf.mxu0
      %2719 = vmatprep.mubr.f32.mxu0 0.0
      %2720 = vmatmul.mubr.f32.gmra.mxu0 %v2080
      %v2721 = vpop.f32.mrf.mxu0
      %v2722 = vadd.f32 %v1789, %v2721
      %v2723 = vpop.f32.mrf.mxu0
      %2724 = vmatprep.mubr.f32.mxu0 0.0
      %2725 = vmatmul.mubr.f32.gmra.mxu0 %v2083
      %v2726 = vpop.f32.mrf.mxu0
      %v2727 = vadd.f32 %v1789, %v2726
      %v2728 = vpop.f32.mrf.mxu0
      %2729 = vmatprep.mubr.f32.mxu0 0.0
      %2730 = vmatmul.mubr.f32.gmra.mxu0 %v2086
      %v2731 = vpop.f32.mrf.mxu0
      %v2732 = vadd.f32 %v1789, %v2731
      %v2733 = vpop.f32.mrf.mxu0
      %2734 = vmatprep.mubr.f32.mxu0 0.0
      %2735 = vmatmul.mubr.f32.gmra.mxu0 %v2089
      %v2736 = vpop.f32.mrf.mxu0
      %v2737 = vadd.f32 %v1789, %v2736
      %v2738 = vpop.f32.mrf.mxu0
      %2739 = vmatprep.mubr.f32.mxu0 0.0
      %2740 = vmatmul.mubr.f32.gmra.mxu0 %v2092
      %v2741 = vpop.f32.mrf.mxu0
      %v2742 = vadd.f32 %v1789, %v2741
      %v2743 = vpop.f32.mrf.mxu0
      %2744 = vmatprep.mubr.f32.mxu0 0.0
      %2745 = vmatmul.mubr.f32.gmra.mxu0 %v2095
      %v2746 = vpop.f32.mrf.mxu0
      %v2747 = vadd.f32 %v1789, %v2746
      %v2748 = vpop.f32.mrf.mxu0
      %2749 = vmatprep.mubr.f32.mxu0 0.0
      %2750 = vmatmul.mubr.f32.gmra.mxu0 %v2098
      %v2751 = vpop.f32.mrf.mxu0
      %v2752 = vadd.f32 %v1789, %v2751
      %v2753 = vpop.f32.mrf.mxu0
      %2754 = vmatprep.mubr.f32.mxu0 0.0
      %2755 = vmatmul.mubr.f32.gmra.mxu0 %v2101
      %v2756 = vpop.f32.mrf.mxu0
      %v2757 = vadd.f32 %v1789, %v2756
      %v2758 = vpop.f32.mrf.mxu0
      %2759 = vmatprep.mubr.f32.mxu0 0.0
      %2760 = vmatmul.mubr.f32.gmra.mxu0 %v2104
      %v2761 = vpop.f32.mrf.mxu0
      %v2762 = vadd.f32 %v1789, %v2761
      %v2763 = vpop.f32.mrf.mxu0
      %2764 = vmatprep.mubr.f32.mxu0 0.0
      %2765 = vmatmul.mubr.f32.gmra.mxu0 %v2107
      %v2766 = vpop.f32.mrf.mxu0
      %v2767 = vadd.f32 %v1789, %v2766
      %v2768 = vpop.f32.mrf.mxu0
      %2769 = vmatprep.mubr.f32.mxu0 0.0
      %2770 = vmatmul.mubr.f32.gmra.mxu0 %v2110
      %v2771 = vpop.f32.mrf.mxu0
      %v2772 = vadd.f32 %v1789, %v2771
      %v2773 = vpop.f32.mrf.mxu0
      %2774 = vmatprep.mubr.f32.mxu0 0.0
      %2775 = vmatmul.mubr.f32.gmra.mxu0 %v2113
      %v2776 = vpop.f32.mrf.mxu0
      %v2777 = vadd.f32 %v1789, %v2776
      %v2778 = vpop.f32.mrf.mxu0
      %2779 = vmatprep.mubr.f32.mxu0 0.0
      %2780 = vmatmul.mubr.f32.gmra.mxu0 %v2116
      %v2781 = vpop.f32.mrf.mxu0
      %v2782 = vadd.f32 %v1789, %v2781
      %v2783 = vpop.f32.mrf.mxu0
      %2784 = vmatprep.mubr.f32.mxu0 0.0
      %2785 = vmatmul.mubr.f32.gmra.mxu0 %v2119
      %v2786 = vpop.f32.mrf.mxu0
      %v2787 = vadd.f32 %v1789, %v2786
      %v2788 = vpop.f32.mrf.mxu0
      %2789 = vmatprep.mubr.f32.mxu0 0.0
      %2790 = vmatmul.mubr.f32.gmra.mxu0 %v2122
      %v2791 = vpop.f32.mrf.mxu0
      %v2792 = vadd.f32 %v1789, %v2791
      %v2793 = vpop.f32.mrf.mxu0
      %2794 = vmatprep.mubr.f32.mxu0 0.0
      %2795 = vmatmul.mubr.f32.gmra.mxu0 %v2125
      %v2796 = vpop.f32.mrf.mxu0
      %v2797 = vadd.f32 %v1789, %v2796
      %v2798 = vpop.f32.mrf.mxu0
      %2799 = vmatprep.mubr.f32.mxu0 0.0
      %2800 = vmatmul.mubr.f32.gmra.mxu0 %v2128
      %v2801 = vpop.f32.mrf.mxu0
      %v2802 = vadd.f32 %v1789, %v2801
      %v2803 = vpop.f32.mrf.mxu0
      %2804 = vmatprep.mubr.f32.mxu0 0.0
      %2805 = vmatmul.mubr.f32.gmra.mxu0 %v2131
      %v2806 = vpop.f32.mrf.mxu0
      %v2807 = vadd.f32 %v1789, %v2806
      %v2808 = vpop.f32.mrf.mxu0
      %2809 = vmatprep.mubr.f32.mxu0 0.0
      %2810 = vmatmul.mubr.f32.gmra.mxu0 %v2134
      %v2811 = vpop.f32.mrf.mxu0
      %v2812 = vadd.f32 %v1789, %v2811
      %v2813 = vpop.f32.mrf.mxu0
      %2814 = vmatprep.mubr.f32.mxu0 0.0
      %2815 = vmatmul.mubr.f32.gmra.mxu0 %v2137
      %v2816 = vpop.f32.mrf.mxu0
      %v2817 = vadd.f32 %v1789, %v2816
      %v2818 = vpop.f32.mrf.mxu0
      %2819 = vmatprep.mubr.f32.mxu0 0.0
      %2820 = vmatmul.mubr.f32.gmra.mxu0 %v2140
      %v2821 = vpop.f32.mrf.mxu0
      %v2822 = vadd.f32 %v1789, %v2821
      %v2823 = vpop.f32.mrf.mxu0
      %2824 = vmatprep.mubr.f32.mxu0 0.0
      %2825 = vmatmul.mubr.f32.gmra.mxu0 %v2143
      %v2826 = vpop.f32.mrf.mxu0
      %v2827 = vadd.f32 %v1789, %v2826
      %v2828 = vpop.f32.mrf.mxu0
      %2829 = vmatprep.mubr.f32.mxu0 0.0
      %2830 = vmatmul.mubr.f32.gmra.mxu0 %v2146
      %v2831 = vpop.f32.mrf.mxu0
      %v2832 = vadd.f32 %v1789, %v2831
      %v2833 = vpop.f32.mrf.mxu0
      %2834 = vmatprep.mubr.f32.mxu0 0.0
      %2835 = vmatmul.mubr.f32.gmra.mxu0 %v2149
      %v2836 = vpop.f32.mrf.mxu0
      %v2837 = vadd.f32 %v1789, %v2836
      %v2838 = vpop.f32.mrf.mxu0
      %2839 = vmatprep.mubr.f32.mxu0 0.0
      %2840 = vmatmul.mubr.f32.gmra.mxu0 %v2152
      %v2841 = vpop.f32.mrf.mxu0
      %v2842 = vadd.f32 %v1789, %v2841
      %v2843 = vpop.f32.mrf.mxu0
      %2844 = vmatprep.mubr.f32.mxu0 0.0
      %2845 = vmatmul.mubr.f32.gmra.mxu0 %v2155
      %v2846 = vpop.f32.mrf.mxu0
      %v2847 = vadd.f32 %v1789, %v2846
      %v2848 = vpop.f32.mrf.mxu0
      %2849 = vmatprep.mubr.f32.mxu0 0.0
      %2850 = vmatmul.mubr.f32.gmra.mxu0 %v2158
      %v2851 = vpop.f32.mrf.mxu0
      %v2852 = vadd.f32 %v1789, %v2851
      %v2853 = vpop.f32.mrf.mxu0
      %2854 = vmatprep.mubr.f32.mxu0 0.0
      %2855 = vmatmul.mubr.f32.gmra.mxu0 %v2161
      %v2856 = vpop.f32.mrf.mxu0
      %v2857 = vadd.f32 %v1789, %v2856
      %v2858 = vpop.f32.mrf.mxu0
      %2859 = vmatprep.mubr.f32.mxu0 0.0
      %2860 = vmatmul.mubr.f32.gmra.mxu0 %v2164
      %v2861 = vpop.f32.mrf.mxu0
      %v2862 = vadd.f32 %v1789, %v2861
      %v2863 = vpop.f32.mrf.mxu0
      %2864 = vmatprep.mubr.f32.mxu0 0.0
      %2865 = vmatmul.mubr.f32.gmra.mxu0 %v2167
      %v2866 = vpop.f32.mrf.mxu0
      %v2867 = vadd.f32 %v1789, %v2866
      %v2868 = vpop.f32.mrf.mxu0
      %2869 = vmatprep.mubr.f32.mxu0 0.0
      %2870 = vmatmul.mubr.f32.gmra.mxu0 %v2170
      %v2871 = vpop.f32.mrf.mxu0
      %v2872 = vadd.f32 %v1789, %v2871
      %v2873 = vpop.f32.mrf.mxu0
      %2874 = vmatprep.mubr.f32.mxu0 0.0
      %2875 = vmatmul.mubr.f32.gmra.mxu0 %v2173
      %v2876 = vpop.f32.mrf.mxu0
      %v2877 = vadd.f32 %v1789, %v2876
      %v2878 = vpop.f32.mrf.mxu0
      %2879 = vdwg.mxu0
      %v2880 = vmax.f32 %v2242, 0.0
      %v2881 = vmax.f32 %v2247, 0.0
      %v2882 = vmax.f32 %v2252, 0.0
      %v2883 = vmax.f32 %v2257, 0.0
      %v2884 = vmax.f32 %v2262, 0.0
      %v2885 = vmax.f32 %v2267, 0.0
      %v2886 = vmax.f32 %v2272, 0.0
      %v2887 = vmax.f32 %v2277, 0.0
      %v2888 = vmax.f32 %v2282, 0.0
      %v2889 = vmax.f32 %v2287, 0.0
      %v2890 = vmax.f32 %v2292, 0.0
      %v2891 = vmax.f32 %v2297, 0.0
      %v2892 = vmax.f32 %v2302, 0.0
      %v2893 = vmax.f32 %v2307, 0.0
      %v2894 = vmax.f32 %v2312, 0.0
      %v2895 = vmax.f32 %v2317, 0.0
      %v2896 = vmax.f32 %v2322, 0.0
      %v2897 = vmax.f32 %v2327, 0.0
      %v2898 = vmax.f32 %v2332, 0.0
      %v2899 = vmax.f32 %v2337, 0.0
      %v2900 = vmax.f32 %v2342, 0.0
      %v2901 = vmax.f32 %v2347, 0.0
      %v2902 = vmax.f32 %v2352, 0.0
      %v2903 = vmax.f32 %v2357, 0.0
      %v2904 = vmax.f32 %v2362, 0.0
      %v2905 = vmax.f32 %v2367, 0.0
      %v2906 = vmax.f32 %v2372, 0.0
      %v2907 = vmax.f32 %v2377, 0.0
      %v2908 = vmax.f32 %v2382, 0.0
      %v2909 = vmax.f32 %v2387, 0.0
      %v2910 = vmax.f32 %v2392, 0.0
      %v2911 = vmax.f32 %v2397, 0.0
      %v2912 = vmax.f32 %v2402, 0.0
      %v2913 = vmax.f32 %v2407, 0.0
      %v2914 = vmax.f32 %v2412, 0.0
      %v2915 = vmax.f32 %v2417, 0.0
      %v2916 = vmax.f32 %v2422, 0.0
      %v2917 = vmax.f32 %v2427, 0.0
      %v2918 = vmax.f32 %v2432, 0.0
      %v2919 = vmax.f32 %v2437, 0.0
      %v2920 = vmax.f32 %v2442, 0.0
      %v2921 = vmax.f32 %v2447, 0.0
      %v2922 = vmax.f32 %v2452, 0.0
      %v2923 = vmax.f32 %v2457, 0.0
      %v2924 = vmax.f32 %v2462, 0.0
      %v2925 = vmax.f32 %v2467, 0.0
      %v2926 = vmax.f32 %v2472, 0.0
      %v2927 = vmax.f32 %v2477, 0.0
      %v2928 = vmax.f32 %v2482, 0.0
      %v2929 = vmax.f32 %v2487, 0.0
      %v2930 = vmax.f32 %v2492, 0.0
      %v2931 = vmax.f32 %v2497, 0.0
      %v2932 = vmax.f32 %v2502, 0.0
      %v2933 = vmax.f32 %v2507, 0.0
      %v2934 = vmax.f32 %v2512, 0.0
      %v2935 = vmax.f32 %v2517, 0.0
      %v2936 = vmax.f32 %v2522, 0.0
      %v2937 = vmax.f32 %v2527, 0.0
      %v2938 = vmax.f32 %v2532, 0.0
      %v2939 = vmax.f32 %v2537, 0.0
      %v2940 = vmax.f32 %v2542, 0.0
      %v2941 = vmax.f32 %v2547, 0.0
      %v2942 = vmax.f32 %v2552, 0.0
      %v2943 = vmax.f32 %v2557, 0.0
      %v2944 = vmax.f32 %v2562, 0.0
      %v2945 = vmax.f32 %v2567, 0.0
      %v2946 = vmax.f32 %v2572, 0.0
      %v2947 = vmax.f32 %v2577, 0.0
      %v2948 = vmax.f32 %v2582, 0.0
      %v2949 = vmax.f32 %v2587, 0.0
      %v2950 = vmax.f32 %v2592, 0.0
      %v2951 = vmax.f32 %v2597, 0.0
      %v2952 = vmax.f32 %v2602, 0.0
      %v2953 = vmax.f32 %v2607, 0.0
      %v2954 = vmax.f32 %v2612, 0.0
      %v2955 = vmax.f32 %v2617, 0.0
      %v2956 = vmax.f32 %v2622, 0.0
      %v2957 = vmax.f32 %v2627, 0.0
      %v2958 = vmax.f32 %v2632, 0.0
      %v2959 = vmax.f32 %v2637, 0.0
      %v2960 = vmax.f32 %v2642, 0.0
      %v2961 = vmax.f32 %v2647, 0.0
      %v2962 = vmax.f32 %v2652, 0.0
      %v2963 = vmax.f32 %v2657, 0.0
      %v2964 = vmax.f32 %v2662, 0.0
      %v2965 = vmax.f32 %v2667, 0.0
      %v2966 = vmax.f32 %v2672, 0.0
      %v2967 = vmax.f32 %v2677, 0.0
      %v2968 = vmax.f32 %v2682, 0.0
      %v2969 = vmax.f32 %v2687, 0.0
      %v2970 = vmax.f32 %v2692, 0.0
      %v2971 = vmax.f32 %v2697, 0.0
      %v2972 = vmax.f32 %v2702, 0.0
      %v2973 = vmax.f32 %v2707, 0.0
      %v2974 = vmax.f32 %v2712, 0.0
      %v2975 = vmax.f32 %v2717, 0.0
      %v2976 = vmax.f32 %v2722, 0.0
      %v2977 = vmax.f32 %v2727, 0.0
      %v2978 = vmax.f32 %v2732, 0.0
      %v2979 = vmax.f32 %v2737, 0.0
      %v2980 = vmax.f32 %v2742, 0.0
      %v2981 = vmax.f32 %v2747, 0.0
      %v2982 = vmax.f32 %v2752, 0.0
      %v2983 = vmax.f32 %v2757, 0.0
      %v2984 = vmax.f32 %v2762, 0.0
      %v2985 = vmax.f32 %v2767, 0.0
      %v2986 = vmax.f32 %v2772, 0.0
      %v2987 = vmax.f32 %v2777, 0.0
      %v2988 = vmax.f32 %v2782, 0.0
      %v2989 = vmax.f32 %v2787, 0.0
      %v2990 = vmax.f32 %v2792, 0.0
      %v2991 = vmax.f32 %v2797, 0.0
      %v2992 = vmax.f32 %v2802, 0.0
      %v2993 = vmax.f32 %v2807, 0.0
      %v2994 = vmax.f32 %v2812, 0.0
      %v2995 = vmax.f32 %v2817, 0.0
      %v2996 = vmax.f32 %v2822, 0.0
      %v2997 = vmax.f32 %v2827, 0.0
      %v2998 = vmax.f32 %v2832, 0.0
      %v2999 = vmax.f32 %v2837, 0.0
      %v3000 = vmax.f32 %v2842, 0.0
      %v3001 = vmax.f32 %v2847, 0.0
      %v3002 = vmax.f32 %v2852, 0.0
      %v3003 = vmax.f32 %v2857, 0.0
      %v3004 = vmax.f32 %v2862, 0.0
      %v3005 = vmax.f32 %v2867, 0.0
      %v3006 = vmax.f32 %v2872, 0.0
      %v3007 = vmax.f32 %v2877, 0.0
      %vm3008 = vcmp.ne.f32.partialorder %v2242, %v2242
      %vm3009 = vcmp.ne.f32.partialorder %v2247, %v2247
      %vm3010 = vcmp.ne.f32.partialorder %v2252, %v2252
      %vm3011 = vcmp.ne.f32.partialorder %v2257, %v2257
      %vm3012 = vcmp.ne.f32.partialorder %v2262, %v2262
      %vm3013 = vcmp.ne.f32.partialorder %v2267, %v2267
      %vm3014 = vcmp.ne.f32.partialorder %v2272, %v2272
      %vm3015 = vcmp.ne.f32.partialorder %v2277, %v2277
      %vm3016 = vcmp.ne.f32.partialorder %v2282, %v2282
      %vm3017 = vcmp.ne.f32.partialorder %v2287, %v2287
      %vm3018 = vcmp.ne.f32.partialorder %v2292, %v2292
      %vm3019 = vcmp.ne.f32.partialorder %v2297, %v2297
      %vm3020 = vcmp.ne.f32.partialorder %v2302, %v2302
      %vm3021 = vcmp.ne.f32.partialorder %v2307, %v2307
      %vm3022 = vcmp.ne.f32.partialorder %v2312, %v2312
      %vm3023 = vcmp.ne.f32.partialorder %v2317, %v2317
      %vm3024 = vcmp.ne.f32.partialorder %v2322, %v2322
      %vm3025 = vcmp.ne.f32.partialorder %v2327, %v2327
      %vm3026 = vcmp.ne.f32.partialorder %v2332, %v2332
      %vm3027 = vcmp.ne.f32.partialorder %v2337, %v2337
      %vm3028 = vcmp.ne.f32.partialorder %v2342, %v2342
      %vm3029 = vcmp.ne.f32.partialorder %v2347, %v2347
      %vm3030 = vcmp.ne.f32.partialorder %v2352, %v2352
      %vm3031 = vcmp.ne.f32.partialorder %v2357, %v2357
      %vm3032 = vcmp.ne.f32.partialorder %v2362, %v2362
      %vm3033 = vcmp.ne.f32.partialorder %v2367, %v2367
      %vm3034 = vcmp.ne.f32.partialorder %v2372, %v2372
      %vm3035 = vcmp.ne.f32.partialorder %v2377, %v2377
      %vm3036 = vcmp.ne.f32.partialorder %v2382, %v2382
      %vm3037 = vcmp.ne.f32.partialorder %v2387, %v2387
      %vm3038 = vcmp.ne.f32.partialorder %v2392, %v2392
      %vm3039 = vcmp.ne.f32.partialorder %v2397, %v2397
      %vm3040 = vcmp.ne.f32.partialorder %v2402, %v2402
      %vm3041 = vcmp.ne.f32.partialorder %v2407, %v2407
      %vm3042 = vcmp.ne.f32.partialorder %v2412, %v2412
      %vm3043 = vcmp.ne.f32.partialorder %v2417, %v2417
      %vm3044 = vcmp.ne.f32.partialorder %v2422, %v2422
      %vm3045 = vcmp.ne.f32.partialorder %v2427, %v2427
      %vm3046 = vcmp.ne.f32.partialorder %v2432, %v2432
      %vm3047 = vcmp.ne.f32.partialorder %v2437, %v2437
      %vm3048 = vcmp.ne.f32.partialorder %v2442, %v2442
      %vm3049 = vcmp.ne.f32.partialorder %v2447, %v2447
      %vm3050 = vcmp.ne.f32.partialorder %v2452, %v2452
      %vm3051 = vcmp.ne.f32.partialorder %v2457, %v2457
      %vm3052 = vcmp.ne.f32.partialorder %v2462, %v2462
      %vm3053 = vcmp.ne.f32.partialorder %v2467, %v2467
      %vm3054 = vcmp.ne.f32.partialorder %v2472, %v2472
      %vm3055 = vcmp.ne.f32.partialorder %v2477, %v2477
      %vm3056 = vcmp.ne.f32.partialorder %v2482, %v2482
      %vm3057 = vcmp.ne.f32.partialorder %v2487, %v2487
      %vm3058 = vcmp.ne.f32.partialorder %v2492, %v2492
      %vm3059 = vcmp.ne.f32.partialorder %v2497, %v2497
      %vm3060 = vcmp.ne.f32.partialorder %v2502, %v2502
      %vm3061 = vcmp.ne.f32.partialorder %v2507, %v2507
      %vm3062 = vcmp.ne.f32.partialorder %v2512, %v2512
      %vm3063 = vcmp.ne.f32.partialorder %v2517, %v2517
      %vm3064 = vcmp.ne.f32.partialorder %v2522, %v2522
      %vm3065 = vcmp.ne.f32.partialorder %v2527, %v2527
      %vm3066 = vcmp.ne.f32.partialorder %v2532, %v2532
      %vm3067 = vcmp.ne.f32.partialorder %v2537, %v2537
      %vm3068 = vcmp.ne.f32.partialorder %v2542, %v2542
      %vm3069 = vcmp.ne.f32.partialorder %v2547, %v2547
      %vm3070 = vcmp.ne.f32.partialorder %v2552, %v2552
      %vm3071 = vcmp.ne.f32.partialorder %v2557, %v2557
      %vm3072 = vcmp.ne.f32.partialorder %v2562, %v2562
      %vm3073 = vcmp.ne.f32.partialorder %v2567, %v2567
      %vm3074 = vcmp.ne.f32.partialorder %v2572, %v2572
      %vm3075 = vcmp.ne.f32.partialorder %v2577, %v2577
      %vm3076 = vcmp.ne.f32.partialorder %v2582, %v2582
      %vm3077 = vcmp.ne.f32.partialorder %v2587, %v2587
      %vm3078 = vcmp.ne.f32.partialorder %v2592, %v2592
      %vm3079 = vcmp.ne.f32.partialorder %v2597, %v2597
      %vm3080 = vcmp.ne.f32.partialorder %v2602, %v2602
      %vm3081 = vcmp.ne.f32.partialorder %v2607, %v2607
      %vm3082 = vcmp.ne.f32.partialorder %v2612, %v2612
      %vm3083 = vcmp.ne.f32.partialorder %v2617, %v2617
      %vm3084 = vcmp.ne.f32.partialorder %v2622, %v2622
      %vm3085 = vcmp.ne.f32.partialorder %v2627, %v2627
      %vm3086 = vcmp.ne.f32.partialorder %v2632, %v2632
      %vm3087 = vcmp.ne.f32.partialorder %v2637, %v2637
      %vm3088 = vcmp.ne.f32.partialorder %v2642, %v2642
      %vm3089 = vcmp.ne.f32.partialorder %v2647, %v2647
      %vm3090 = vcmp.ne.f32.partialorder %v2652, %v2652
      %vm3091 = vcmp.ne.f32.partialorder %v2657, %v2657
      %vm3092 = vcmp.ne.f32.partialorder %v2662, %v2662
      %vm3093 = vcmp.ne.f32.partialorder %v2667, %v2667
      %vm3094 = vcmp.ne.f32.partialorder %v2672, %v2672
      %vm3095 = vcmp.ne.f32.partialorder %v2677, %v2677
      %vm3096 = vcmp.ne.f32.partialorder %v2682, %v2682
      %vm3097 = vcmp.ne.f32.partialorder %v2687, %v2687
      %vm3098 = vcmp.ne.f32.partialorder %v2692, %v2692
      %vm3099 = vcmp.ne.f32.partialorder %v2697, %v2697
      %vm3100 = vcmp.ne.f32.partialorder %v2702, %v2702
      %vm3101 = vcmp.ne.f32.partialorder %v2707, %v2707
      %vm3102 = vcmp.ne.f32.partialorder %v2712, %v2712
      %vm3103 = vcmp.ne.f32.partialorder %v2717, %v2717
      %vm3104 = vcmp.ne.f32.partialorder %v2722, %v2722
      %vm3105 = vcmp.ne.f32.partialorder %v2727, %v2727
      %vm3106 = vcmp.ne.f32.partialorder %v2732, %v2732
      %vm3107 = vcmp.ne.f32.partialorder %v2737, %v2737
      %vm3108 = vcmp.ne.f32.partialorder %v2742, %v2742
      %vm3109 = vcmp.ne.f32.partialorder %v2747, %v2747
      %vm3110 = vcmp.ne.f32.partialorder %v2752, %v2752
      %vm3111 = vcmp.ne.f32.partialorder %v2757, %v2757
      %vm3112 = vcmp.ne.f32.partialorder %v2762, %v2762
      %vm3113 = vcmp.ne.f32.partialorder %v2767, %v2767
      %vm3114 = vcmp.ne.f32.partialorder %v2772, %v2772
      %vm3115 = vcmp.ne.f32.partialorder %v2777, %v2777
      %vm3116 = vcmp.ne.f32.partialorder %v2782, %v2782
      %vm3117 = vcmp.ne.f32.partialorder %v2787, %v2787
      %vm3118 = vcmp.ne.f32.partialorder %v2792, %v2792
      %vm3119 = vcmp.ne.f32.partialorder %v2797, %v2797
      %vm3120 = vcmp.ne.f32.partialorder %v2802, %v2802
      %vm3121 = vcmp.ne.f32.partialorder %v2807, %v2807
      %vm3122 = vcmp.ne.f32.partialorder %v2812, %v2812
      %vm3123 = vcmp.ne.f32.partialorder %v2817, %v2817
      %vm3124 = vcmp.ne.f32.partialorder %v2822, %v2822
      %vm3125 = vcmp.ne.f32.partialorder %v2827, %v2827
      %vm3126 = vcmp.ne.f32.partialorder %v2832, %v2832
      %vm3127 = vcmp.ne.f32.partialorder %v2837, %v2837
      %vm3128 = vcmp.ne.f32.partialorder %v2842, %v2842
      %vm3129 = vcmp.ne.f32.partialorder %v2847, %v2847
      %vm3130 = vcmp.ne.f32.partialorder %v2852, %v2852
      %vm3131 = vcmp.ne.f32.partialorder %v2857, %v2857
      %vm3132 = vcmp.ne.f32.partialorder %v2862, %v2862
      %vm3133 = vcmp.ne.f32.partialorder %v2867, %v2867
      %vm3134 = vcmp.ne.f32.partialorder %v2872, %v2872
      %vm3135 = vcmp.ne.f32.partialorder %v2877, %v2877
      %v3136 = vadd.f32 %v2242, 0.0
      %v3137 = vadd.f32 %v2247, 0.0
      %v3138 = vadd.f32 %v2252, 0.0
      %v3139 = vadd.f32 %v2257, 0.0
      %v3140 = vadd.f32 %v2262, 0.0
      %v3141 = vadd.f32 %v2267, 0.0
      %v3142 = vadd.f32 %v2272, 0.0
      %v3143 = vadd.f32 %v2277, 0.0
      %v3144 = vadd.f32 %v2282, 0.0
      %v3145 = vadd.f32 %v2287, 0.0
      %v3146 = vadd.f32 %v2292, 0.0
      %v3147 = vadd.f32 %v2297, 0.0
      %v3148 = vadd.f32 %v2302, 0.0
      %v3149 = vadd.f32 %v2307, 0.0
      %v3150 = vadd.f32 %v2312, 0.0
      %v3151 = vadd.f32 %v2317, 0.0
      %v3152 = vadd.f32 %v2322, 0.0
      %v3153 = vadd.f32 %v2327, 0.0
      %v3154 = vadd.f32 %v2332, 0.0
      %v3155 = vadd.f32 %v2337, 0.0
      %v3156 = vadd.f32 %v2342, 0.0
      %v3157 = vadd.f32 %v2347, 0.0
      %v3158 = vadd.f32 %v2352, 0.0
      %v3159 = vadd.f32 %v2357, 0.0
      %v3160 = vadd.f32 %v2362, 0.0
      %v3161 = vadd.f32 %v2367, 0.0
      %v3162 = vadd.f32 %v2372, 0.0
      %v3163 = vadd.f32 %v2377, 0.0
      %v3164 = vadd.f32 %v2382, 0.0
      %v3165 = vadd.f32 %v2387, 0.0
      %v3166 = vadd.f32 %v2392, 0.0
      %v3167 = vadd.f32 %v2397, 0.0
      %v3168 = vadd.f32 %v2402, 0.0
      %v3169 = vadd.f32 %v2407, 0.0
      %v3170 = vadd.f32 %v2412, 0.0
      %v3171 = vadd.f32 %v2417, 0.0
      %v3172 = vadd.f32 %v2422, 0.0
      %v3173 = vadd.f32 %v2427, 0.0
      %v3174 = vadd.f32 %v2432, 0.0
      %v3175 = vadd.f32 %v2437, 0.0
      %v3176 = vadd.f32 %v2442, 0.0
      %v3177 = vadd.f32 %v2447, 0.0
      %v3178 = vadd.f32 %v2452, 0.0
      %v3179 = vadd.f32 %v2457, 0.0
      %v3180 = vadd.f32 %v2462, 0.0
      %v3181 = vadd.f32 %v2467, 0.0
      %v3182 = vadd.f32 %v2472, 0.0
      %v3183 = vadd.f32 %v2477, 0.0
      %v3184 = vadd.f32 %v2482, 0.0
      %v3185 = vadd.f32 %v2487, 0.0
      %v3186 = vadd.f32 %v2492, 0.0
      %v3187 = vadd.f32 %v2497, 0.0
      %v3188 = vadd.f32 %v2502, 0.0
      %v3189 = vadd.f32 %v2507, 0.0
      %v3190 = vadd.f32 %v2512, 0.0
      %v3191 = vadd.f32 %v2517, 0.0
      %v3192 = vadd.f32 %v2522, 0.0
      %v3193 = vadd.f32 %v2527, 0.0
      %v3194 = vadd.f32 %v2532, 0.0
      %v3195 = vadd.f32 %v2537, 0.0
      %v3196 = vadd.f32 %v2542, 0.0
      %v3197 = vadd.f32 %v2547, 0.0
      %v3198 = vadd.f32 %v2552, 0.0
      %v3199 = vadd.f32 %v2557, 0.0
      %v3200 = vadd.f32 %v2562, 0.0
      %v3201 = vadd.f32 %v2567, 0.0
      %v3202 = vadd.f32 %v2572, 0.0
      %v3203 = vadd.f32 %v2577, 0.0
      %v3204 = vadd.f32 %v2582, 0.0
      %v3205 = vadd.f32 %v2587, 0.0
      %v3206 = vadd.f32 %v2592, 0.0
      %v3207 = vadd.f32 %v2597, 0.0
      %v3208 = vadd.f32 %v2602, 0.0
      %v3209 = vadd.f32 %v2607, 0.0
      %v3210 = vadd.f32 %v2612, 0.0
      %v3211 = vadd.f32 %v2617, 0.0
      %v3212 = vadd.f32 %v2622, 0.0
      %v3213 = vadd.f32 %v2627, 0.0
      %v3214 = vadd.f32 %v2632, 0.0
      %v3215 = vadd.f32 %v2637, 0.0
      %v3216 = vadd.f32 %v2642, 0.0
      %v3217 = vadd.f32 %v2647, 0.0
      %v3218 = vadd.f32 %v2652, 0.0
      %v3219 = vadd.f32 %v2657, 0.0
      %v3220 = vadd.f32 %v2662, 0.0
      %v3221 = vadd.f32 %v2667, 0.0
      %v3222 = vadd.f32 %v2672, 0.0
      %v3223 = vadd.f32 %v2677, 0.0
      %v3224 = vadd.f32 %v2682, 0.0
      %v3225 = vadd.f32 %v2687, 0.0
      %v3226 = vadd.f32 %v2692, 0.0
      %v3227 = vadd.f32 %v2697, 0.0
      %v3228 = vadd.f32 %v2702, 0.0
      %v3229 = vadd.f32 %v2707, 0.0
      %v3230 = vadd.f32 %v2712, 0.0
      %v3231 = vadd.f32 %v2717, 0.0
      %v3232 = vadd.f32 %v2722, 0.0
      %v3233 = vadd.f32 %v2727, 0.0
      %v3234 = vadd.f32 %v2732, 0.0
      %v3235 = vadd.f32 %v2737, 0.0
      %v3236 = vadd.f32 %v2742, 0.0
      %v3237 = vadd.f32 %v2747, 0.0
      %v3238 = vadd.f32 %v2752, 0.0
      %v3239 = vadd.f32 %v2757, 0.0
      %v3240 = vadd.f32 %v2762, 0.0
      %v3241 = vadd.f32 %v2767, 0.0
      %v3242 = vadd.f32 %v2772, 0.0
      %v3243 = vadd.f32 %v2777, 0.0
      %v3244 = vadd.f32 %v2782, 0.0
      %v3245 = vadd.f32 %v2787, 0.0
      %v3246 = vadd.f32 %v2792, 0.0
      %v3247 = vadd.f32 %v2797, 0.0
      %v3248 = vadd.f32 %v2802, 0.0
      %v3249 = vadd.f32 %v2807, 0.0
      %v3250 = vadd.f32 %v2812, 0.0
      %v3251 = vadd.f32 %v2817, 0.0
      %v3252 = vadd.f32 %v2822, 0.0
      %v3253 = vadd.f32 %v2827, 0.0
      %v3254 = vadd.f32 %v2832, 0.0
      %v3255 = vadd.f32 %v2837, 0.0
      %v3256 = vadd.f32 %v2842, 0.0
      %v3257 = vadd.f32 %v2847, 0.0
      %v3258 = vadd.f32 %v2852, 0.0
      %v3259 = vadd.f32 %v2857, 0.0
      %v3260 = vadd.f32 %v2862, 0.0
      %v3261 = vadd.f32 %v2867, 0.0
      %v3262 = vadd.f32 %v2872, 0.0
      %v3263 = vadd.f32 %v2877, 0.0
      %v3264 = vand.u32 2147483647, %v2242
      %v3265 = vand.u32 2147483647, %v2247
      %v3266 = vand.u32 2147483647, %v2252
      %v3267 = vand.u32 2147483647, %v2257
      %v3268 = vand.u32 2147483647, %v2262
      %v3269 = vand.u32 2147483647, %v2267
      %v3270 = vand.u32 2147483647, %v2272
      %v3271 = vand.u32 2147483647, %v2277
      %v3272 = vand.u32 2147483647, %v2282
      %v3273 = vand.u32 2147483647, %v2287
      %v3274 = vand.u32 2147483647, %v2292
      %v3275 = vand.u32 2147483647, %v2297
      %v3276 = vand.u32 2147483647, %v2302
      %v3277 = vand.u32 2147483647, %v2307
      %v3278 = vand.u32 2147483647, %v2312
      %v3279 = vand.u32 2147483647, %v2317
      %v3280 = vand.u32 2147483647, %v2322
      %v3281 = vand.u32 2147483647, %v2327
      %v3282 = vand.u32 2147483647, %v2332
      %v3283 = vand.u32 2147483647, %v2337
      %v3284 = vand.u32 2147483647, %v2342
      %v3285 = vand.u32 2147483647, %v2347
      %v3286 = vand.u32 2147483647, %v2352
      %v3287 = vand.u32 2147483647, %v2357
      %v3288 = vand.u32 2147483647, %v2362
      %v3289 = vand.u32 2147483647, %v2367
      %v3290 = vand.u32 2147483647, %v2372
      %v3291 = vand.u32 2147483647, %v2377
      %v3292 = vand.u32 2147483647, %v2382
      %v3293 = vand.u32 2147483647, %v2387
      %v3294 = vand.u32 2147483647, %v2392
      %v3295 = vand.u32 2147483647, %v2397
      %v3296 = vand.u32 2147483647, %v2402
      %v3297 = vand.u32 2147483647, %v2407
      %v3298 = vand.u32 2147483647, %v2412
      %v3299 = vand.u32 2147483647, %v2417
      %v3300 = vand.u32 2147483647, %v2422
      %v3301 = vand.u32 2147483647, %v2427
      %v3302 = vand.u32 2147483647, %v2432
      %v3303 = vand.u32 2147483647, %v2437
      %v3304 = vand.u32 2147483647, %v2442
      %v3305 = vand.u32 2147483647, %v2447
      %v3306 = vand.u32 2147483647, %v2452
      %v3307 = vand.u32 2147483647, %v2457
      %v3308 = vand.u32 2147483647, %v2462
      %v3309 = vand.u32 2147483647, %v2467
      %v3310 = vand.u32 2147483647, %v2472
      %v3311 = vand.u32 2147483647, %v2477
      %v3312 = vand.u32 2147483647, %v2482
      %v3313 = vand.u32 2147483647, %v2487
      %v3314 = vand.u32 2147483647, %v2492
      %v3315 = vand.u32 2147483647, %v2497
      %v3316 = vand.u32 2147483647, %v2502
      %v3317 = vand.u32 2147483647, %v2507
      %v3318 = vand.u32 2147483647, %v2512
      %v3319 = vand.u32 2147483647, %v2517
      %v3320 = vand.u32 2147483647, %v2522
      %v3321 = vand.u32 2147483647, %v2527
      %v3322 = vand.u32 2147483647, %v2532
      %v3323 = vand.u32 2147483647, %v2537
      %v3324 = vand.u32 2147483647, %v2542
      %v3325 = vand.u32 2147483647, %v2547
      %v3326 = vand.u32 2147483647, %v2552
      %v3327 = vand.u32 2147483647, %v2557
      %v3328 = vand.u32 2147483647, %v2562
      %v3329 = vand.u32 2147483647, %v2567
      %v3330 = vand.u32 2147483647, %v2572
      %v3331 = vand.u32 2147483647, %v2577
      %v3332 = vand.u32 2147483647, %v2582
      %v3333 = vand.u32 2147483647, %v2587
      %v3334 = vand.u32 2147483647, %v2592
      %v3335 = vand.u32 2147483647, %v2597
      %v3336 = vand.u32 2147483647, %v2602
      %v3337 = vand.u32 2147483647, %v2607
      %v3338 = vand.u32 2147483647, %v2612
      %v3339 = vand.u32 2147483647, %v2617
      %v3340 = vand.u32 2147483647, %v2622
      %v3341 = vand.u32 2147483647, %v2627
      %v3342 = vand.u32 2147483647, %v2632
      %v3343 = vand.u32 2147483647, %v2637
      %v3344 = vand.u32 2147483647, %v2642
      %v3345 = vand.u32 2147483647, %v2647
      %v3346 = vand.u32 2147483647, %v2652
      %v3347 = vand.u32 2147483647, %v2657
      %v3348 = vand.u32 2147483647, %v2662
      %v3349 = vand.u32 2147483647, %v2667
      %v3350 = vand.u32 2147483647, %v2672
      %v3351 = vand.u32 2147483647, %v2677
      %v3352 = vand.u32 2147483647, %v2682
      %v3353 = vand.u32 2147483647, %v2687
      %v3354 = vand.u32 2147483647, %v2692
      %v3355 = vand.u32 2147483647, %v2697
      %v3356 = vand.u32 2147483647, %v2702
      %v3357 = vand.u32 2147483647, %v2707
      %v3358 = vand.u32 2147483647, %v2712
      %v3359 = vand.u32 2147483647, %v2717
      %v3360 = vand.u32 2147483647, %v2722
      %v3361 = vand.u32 2147483647, %v2727
      %v3362 = vand.u32 2147483647, %v2732
      %v3363 = vand.u32 2147483647, %v2737
      %v3364 = vand.u32 2147483647, %v2742
      %v3365 = vand.u32 2147483647, %v2747
      %v3366 = vand.u32 2147483647, %v2752
      %v3367 = vand.u32 2147483647, %v2757
      %v3368 = vand.u32 2147483647, %v2762
      %v3369 = vand.u32 2147483647, %v2767
      %v3370 = vand.u32 2147483647, %v2772
      %v3371 = vand.u32 2147483647, %v2777
      %v3372 = vand.u32 2147483647, %v2782
      %v3373 = vand.u32 2147483647, %v2787
      %v3374 = vand.u32 2147483647, %v2792
      %v3375 = vand.u32 2147483647, %v2797
      %v3376 = vand.u32 2147483647, %v2802
      %v3377 = vand.u32 2147483647, %v2807
      %v3378 = vand.u32 2147483647, %v2812
      %v3379 = vand.u32 2147483647, %v2817
      %v3380 = vand.u32 2147483647, %v2822
      %v3381 = vand.u32 2147483647, %v2827
      %v3382 = vand.u32 2147483647, %v2832
      %v3383 = vand.u32 2147483647, %v2837
      %v3384 = vand.u32 2147483647, %v2842
      %v3385 = vand.u32 2147483647, %v2847
      %v3386 = vand.u32 2147483647, %v2852
      %v3387 = vand.u32 2147483647, %v2857
      %v3388 = vand.u32 2147483647, %v2862
      %v3389 = vand.u32 2147483647, %v2867
      %v3390 = vand.u32 2147483647, %v2872
      %v3391 = vand.u32 2147483647, %v2877
      %v3392 = vsub.f32 0.0, %v3264
      %v3393 = vsub.f32 0.0, %v3265
      %v3394 = vsub.f32 0.0, %v3266
      %v3395 = vsub.f32 0.0, %v3267
      %v3396 = vsub.f32 0.0, %v3268
      %v3397 = vsub.f32 0.0, %v3269
      %v3398 = vsub.f32 0.0, %v3270
      %v3399 = vsub.f32 0.0, %v3271
      %v3400 = vsub.f32 0.0, %v3272
      %v3401 = vsub.f32 0.0, %v3273
      %v3402 = vsub.f32 0.0, %v3274
      %v3403 = vsub.f32 0.0, %v3275
      %v3404 = vsub.f32 0.0, %v3276
      %v3405 = vsub.f32 0.0, %v3277
      %v3406 = vsub.f32 0.0, %v3278
      %v3407 = vsub.f32 0.0, %v3279
      %v3408 = vsub.f32 0.0, %v3280
      %v3409 = vsub.f32 0.0, %v3281
      %v3410 = vsub.f32 0.0, %v3282
      %v3411 = vsub.f32 0.0, %v3283
      %v3412 = vsub.f32 0.0, %v3284
      %v3413 = vsub.f32 0.0, %v3285
      %v3414 = vsub.f32 0.0, %v3286
      %v3415 = vsub.f32 0.0, %v3287
      %v3416 = vsub.f32 0.0, %v3288
      %v3417 = vsub.f32 0.0, %v3289
      %v3418 = vsub.f32 0.0, %v3290
      %v3419 = vsub.f32 0.0, %v3291
      %v3420 = vsub.f32 0.0, %v3292
      %v3421 = vsub.f32 0.0, %v3293
      %v3422 = vsub.f32 0.0, %v3294
      %v3423 = vsub.f32 0.0, %v3295
      %v3424 = vsub.f32 0.0, %v3296
      %v3425 = vsub.f32 0.0, %v3297
      %v3426 = vsub.f32 0.0, %v3298
      %v3427 = vsub.f32 0.0, %v3299
      %v3428 = vsub.f32 0.0, %v3300
      %v3429 = vsub.f32 0.0, %v3301
      %v3430 = vsub.f32 0.0, %v3302
      %v3431 = vsub.f32 0.0, %v3303
      %v3432 = vsub.f32 0.0, %v3304
      %v3433 = vsub.f32 0.0, %v3305
      %v3434 = vsub.f32 0.0, %v3306
      %v3435 = vsub.f32 0.0, %v3307
      %v3436 = vsub.f32 0.0, %v3308
      %v3437 = vsub.f32 0.0, %v3309
      %v3438 = vsub.f32 0.0, %v3310
      %v3439 = vsub.f32 0.0, %v3311
      %v3440 = vsub.f32 0.0, %v3312
      %v3441 = vsub.f32 0.0, %v3313
      %v3442 = vsub.f32 0.0, %v3314
      %v3443 = vsub.f32 0.0, %v3315
      %v3444 = vsub.f32 0.0, %v3316
      %v3445 = vsub.f32 0.0, %v3317
      %v3446 = vsub.f32 0.0, %v3318
      %v3447 = vsub.f32 0.0, %v3319
      %v3448 = vsub.f32 0.0, %v3320
      %v3449 = vsub.f32 0.0, %v3321
      %v3450 = vsub.f32 0.0, %v3322
      %v3451 = vsub.f32 0.0, %v3323
      %v3452 = vsub.f32 0.0, %v3324
      %v3453 = vsub.f32 0.0, %v3325
      %v3454 = vsub.f32 0.0, %v3326
      %v3455 = vsub.f32 0.0, %v3327
      %v3456 = vsub.f32 0.0, %v3328
      %v3457 = vsub.f32 0.0, %v3329
      %v3458 = vsub.f32 0.0, %v3330
      %v3459 = vsub.f32 0.0, %v3331
      %v3460 = vsub.f32 0.0, %v3332
      %v3461 = vsub.f32 0.0, %v3333
      %v3462 = vsub.f32 0.0, %v3334
      %v3463 = vsub.f32 0.0, %v3335
      %v3464 = vsub.f32 0.0, %v3336
      %v3465 = vsub.f32 0.0, %v3337
      %v3466 = vsub.f32 0.0, %v3338
      %v3467 = vsub.f32 0.0, %v3339
      %v3468 = vsub.f32 0.0, %v3340
      %v3469 = vsub.f32 0.0, %v3341
      %v3470 = vsub.f32 0.0, %v3342
      %v3471 = vsub.f32 0.0, %v3343
      %v3472 = vsub.f32 0.0, %v3344
      %v3473 = vsub.f32 0.0, %v3345
      %v3474 = vsub.f32 0.0, %v3346
      %v3475 = vsub.f32 0.0, %v3347
      %v3476 = vsub.f32 0.0, %v3348
      %v3477 = vsub.f32 0.0, %v3349
      %v3478 = vsub.f32 0.0, %v3350
      %v3479 = vsub.f32 0.0, %v3351
      %v3480 = vsub.f32 0.0, %v3352
      %v3481 = vsub.f32 0.0, %v3353
      %v3482 = vsub.f32 0.0, %v3354
      %v3483 = vsub.f32 0.0, %v3355
      %v3484 = vsub.f32 0.0, %v3356
      %v3485 = vsub.f32 0.0, %v3357
      %v3486 = vsub.f32 0.0, %v3358
      %v3487 = vsub.f32 0.0, %v3359
      %v3488 = vsub.f32 0.0, %v3360
      %v3489 = vsub.f32 0.0, %v3361
      %v3490 = vsub.f32 0.0, %v3362
      %v3491 = vsub.f32 0.0, %v3363
      %v3492 = vsub.f32 0.0, %v3364
      %v3493 = vsub.f32 0.0, %v3365
      %v3494 = vsub.f32 0.0, %v3366
      %v3495 = vsub.f32 0.0, %v3367
      %v3496 = vsub.f32 0.0, %v3368
      %v3497 = vsub.f32 0.0, %v3369
      %v3498 = vsub.f32 0.0, %v3370
      %v3499 = vsub.f32 0.0, %v3371
      %v3500 = vsub.f32 0.0, %v3372
      %v3501 = vsub.f32 0.0, %v3373
      %v3502 = vsub.f32 0.0, %v3374
      %v3503 = vsub.f32 0.0, %v3375
      %v3504 = vsub.f32 0.0, %v3376
      %v3505 = vsub.f32 0.0, %v3377
      %v3506 = vsub.f32 0.0, %v3378
      %v3507 = vsub.f32 0.0, %v3379
      %v3508 = vsub.f32 0.0, %v3380
      %v3509 = vsub.f32 0.0, %v3381
      %v3510 = vsub.f32 0.0, %v3382
      %v3511 = vsub.f32 0.0, %v3383
      %v3512 = vsub.f32 0.0, %v3384
      %v3513 = vsub.f32 0.0, %v3385
      %v3514 = vsub.f32 0.0, %v3386
      %v3515 = vsub.f32 0.0, %v3387
      %v3516 = vsub.f32 0.0, %v3388
      %v3517 = vsub.f32 0.0, %v3389
      %v3518 = vsub.f32 0.0, %v3390
      %v3519 = vsub.f32 0.0, %v3391
      %v3520 = vmul.f32 %v3392, 1.442695
      %v3521 = vpow.pop %v3520
      %v3522 = vmul.f32 %v3393, 1.442695
      %v3523 = vpow.pop %v3522
      %v3524 = vmul.f32 %v3394, 1.442695
      %v3525 = vpow.pop %v3524
      %v3526 = vmul.f32 %v3395, 1.442695
      %v3527 = vpow.pop %v3526
      %v3528 = vmul.f32 %v3396, 1.442695
      %v3529 = vpow.pop %v3528
      %v3530 = vmul.f32 %v3397, 1.442695
      %v3531 = vpow.pop %v3530
      %v3532 = vmul.f32 %v3398, 1.442695
      %v3533 = vpow.pop %v3532
      %v3534 = vmul.f32 %v3399, 1.442695
      %v3535 = vpow.pop %v3534
      %v3536 = vmul.f32 %v3400, 1.442695
      %v3537 = vpow.pop %v3536
      %v3538 = vmul.f32 %v3401, 1.442695
      %v3539 = vpow.pop %v3538
      %v3540 = vmul.f32 %v3402, 1.442695
      %v3541 = vpow.pop %v3540
      %v3542 = vmul.f32 %v3403, 1.442695
      %v3543 = vpow.pop %v3542
      %v3544 = vmul.f32 %v3404, 1.442695
      %v3545 = vpow.pop %v3544
      %v3546 = vmul.f32 %v3405, 1.442695
      %v3547 = vpow.pop %v3546
      %v3548 = vmul.f32 %v3406, 1.442695
      %v3549 = vpow.pop %v3548
      %v3550 = vmul.f32 %v3407, 1.442695
      %v3551 = vpow.pop %v3550
      %v3552 = vmul.f32 %v3408, 1.442695
      %v3553 = vpow.pop %v3552
      %v3554 = vmul.f32 %v3409, 1.442695
      %v3555 = vpow.pop %v3554
      %v3556 = vmul.f32 %v3410, 1.442695
      %v3557 = vpow.pop %v3556
      %v3558 = vmul.f32 %v3411, 1.442695
      %v3559 = vpow.pop %v3558
      %v3560 = vmul.f32 %v3412, 1.442695
      %v3561 = vpow.pop %v3560
      %v3562 = vmul.f32 %v3413, 1.442695
      %v3563 = vpow.pop %v3562
      %v3564 = vmul.f32 %v3414, 1.442695
      %v3565 = vpow.pop %v3564
      %v3566 = vmul.f32 %v3415, 1.442695
      %v3567 = vpow.pop %v3566
      %v3568 = vmul.f32 %v3416, 1.442695
      %v3569 = vpow.pop %v3568
      %v3570 = vmul.f32 %v3417, 1.442695
      %v3571 = vpow.pop %v3570
      %v3572 = vmul.f32 %v3418, 1.442695
      %v3573 = vpow.pop %v3572
      %v3574 = vmul.f32 %v3419, 1.442695
      %v3575 = vpow.pop %v3574
      %v3576 = vmul.f32 %v3420, 1.442695
      %v3577 = vpow.pop %v3576
      %v3578 = vmul.f32 %v3421, 1.442695
      %v3579 = vpow.pop %v3578
      %v3580 = vmul.f32 %v3422, 1.442695
      %v3581 = vpow.pop %v3580
      %v3582 = vmul.f32 %v3423, 1.442695
      %v3583 = vpow.pop %v3582
      %v3584 = vmul.f32 %v3424, 1.442695
      %v3585 = vpow.pop %v3584
      %v3586 = vmul.f32 %v3425, 1.442695
      %v3587 = vpow.pop %v3586
      %v3588 = vmul.f32 %v3426, 1.442695
      %v3589 = vpow.pop %v3588
      %v3590 = vmul.f32 %v3427, 1.442695
      %v3591 = vpow.pop %v3590
      %v3592 = vmul.f32 %v3428, 1.442695
      %v3593 = vpow.pop %v3592
      %v3594 = vmul.f32 %v3429, 1.442695
      %v3595 = vpow.pop %v3594
      %v3596 = vmul.f32 %v3430, 1.442695
      %v3597 = vpow.pop %v3596
      %v3598 = vmul.f32 %v3431, 1.442695
      %v3599 = vpow.pop %v3598
      %v3600 = vmul.f32 %v3432, 1.442695
      %v3601 = vpow.pop %v3600
      %v3602 = vmul.f32 %v3433, 1.442695
      %v3603 = vpow.pop %v3602
      %v3604 = vmul.f32 %v3434, 1.442695
      %v3605 = vpow.pop %v3604
      %v3606 = vmul.f32 %v3435, 1.442695
      %v3607 = vpow.pop %v3606
      %v3608 = vmul.f32 %v3436, 1.442695
      %v3609 = vpow.pop %v3608
      %v3610 = vmul.f32 %v3437, 1.442695
      %v3611 = vpow.pop %v3610
      %v3612 = vmul.f32 %v3438, 1.442695
      %v3613 = vpow.pop %v3612
      %v3614 = vmul.f32 %v3439, 1.442695
      %v3615 = vpow.pop %v3614
      %v3616 = vmul.f32 %v3440, 1.442695
      %v3617 = vpow.pop %v3616
      %v3618 = vmul.f32 %v3441, 1.442695
      %v3619 = vpow.pop %v3618
      %v3620 = vmul.f32 %v3442, 1.442695
      %v3621 = vpow.pop %v3620
      %v3622 = vmul.f32 %v3443, 1.442695
      %v3623 = vpow.pop %v3622
      %v3624 = vmul.f32 %v3444, 1.442695
      %v3625 = vpow.pop %v3624
      %v3626 = vmul.f32 %v3445, 1.442695
      %v3627 = vpow.pop %v3626
      %v3628 = vmul.f32 %v3446, 1.442695
      %v3629 = vpow.pop %v3628
      %v3630 = vmul.f32 %v3447, 1.442695
      %v3631 = vpow.pop %v3630
      %v3632 = vmul.f32 %v3448, 1.442695
      %v3633 = vpow.pop %v3632
      %v3634 = vmul.f32 %v3449, 1.442695
      %v3635 = vpow.pop %v3634
      %v3636 = vmul.f32 %v3450, 1.442695
      %v3637 = vpow.pop %v3636
      %v3638 = vmul.f32 %v3451, 1.442695
      %v3639 = vpow.pop %v3638
      %v3640 = vmul.f32 %v3452, 1.442695
      %v3641 = vpow.pop %v3640
      %v3642 = vmul.f32 %v3453, 1.442695
      %v3643 = vpow.pop %v3642
      %v3644 = vmul.f32 %v3454, 1.442695
      %v3645 = vpow.pop %v3644
      %v3646 = vmul.f32 %v3455, 1.442695
      %v3647 = vpow.pop %v3646
      %v3648 = vmul.f32 %v3456, 1.442695
      %v3649 = vpow.pop %v3648
      %v3650 = vmul.f32 %v3457, 1.442695
      %v3651 = vpow.pop %v3650
      %v3652 = vmul.f32 %v3458, 1.442695
      %v3653 = vpow.pop %v3652
      %v3654 = vmul.f32 %v3459, 1.442695
      %v3655 = vpow.pop %v3654
      %v3656 = vmul.f32 %v3460, 1.442695
      %v3657 = vpow.pop %v3656
      %v3658 = vmul.f32 %v3461, 1.442695
      %v3659 = vpow.pop %v3658
      %v3660 = vmul.f32 %v3462, 1.442695
      %v3661 = vpow.pop %v3660
      %v3662 = vmul.f32 %v3463, 1.442695
      %v3663 = vpow.pop %v3662
      %v3664 = vmul.f32 %v3464, 1.442695
      %v3665 = vpow.pop %v3664
      %v3666 = vmul.f32 %v3465, 1.442695
      %v3667 = vpow.pop %v3666
      %v3668 = vmul.f32 %v3466, 1.442695
      %v3669 = vpow.pop %v3668
      %v3670 = vmul.f32 %v3467, 1.442695
      %v3671 = vpow.pop %v3670
      %v3672 = vmul.f32 %v3468, 1.442695
      %v3673 = vpow.pop %v3672
      %v3674 = vmul.f32 %v3469, 1.442695
      %v3675 = vpow.pop %v3674
      %v3676 = vmul.f32 %v3470, 1.442695
      %v3677 = vpow.pop %v3676
      %v3678 = vmul.f32 %v3471, 1.442695
      %v3679 = vpow.pop %v3678
      %v3680 = vmul.f32 %v3472, 1.442695
      %v3681 = vpow.pop %v3680
      %v3682 = vmul.f32 %v3473, 1.442695
      %v3683 = vpow.pop %v3682
      %v3684 = vmul.f32 %v3474, 1.442695
      %v3685 = vpow.pop %v3684
      %v3686 = vmul.f32 %v3475, 1.442695
      %v3687 = vpow.pop %v3686
      %v3688 = vmul.f32 %v3476, 1.442695
      %v3689 = vpow.pop %v3688
      %v3690 = vmul.f32 %v3477, 1.442695
      %v3691 = vpow.pop %v3690
      %v3692 = vmul.f32 %v3478, 1.442695
      %v3693 = vpow.pop %v3692
      %v3694 = vmul.f32 %v3479, 1.442695
      %v3695 = vpow.pop %v3694
      %v3696 = vmul.f32 %v3480, 1.442695
      %v3697 = vpow.pop %v3696
      %v3698 = vmul.f32 %v3481, 1.442695
      %v3699 = vpow.pop %v3698
      %v3700 = vmul.f32 %v3482, 1.442695
      %v3701 = vpow.pop %v3700
      %v3702 = vmul.f32 %v3483, 1.442695
      %v3703 = vpow.pop %v3702
      %v3704 = vmul.f32 %v3484, 1.442695
      %v3705 = vpow.pop %v3704
      %v3706 = vmul.f32 %v3485, 1.442695
      %v3707 = vpow.pop %v3706
      %v3708 = vmul.f32 %v3486, 1.442695
      %v3709 = vpow.pop %v3708
      %v3710 = vmul.f32 %v3487, 1.442695
      %v3711 = vpow.pop %v3710
      %v3712 = vmul.f32 %v3488, 1.442695
      %v3713 = vpow.pop %v3712
      %v3714 = vmul.f32 %v3489, 1.442695
      %v3715 = vpow.pop %v3714
      %v3716 = vmul.f32 %v3490, 1.442695
      %v3717 = vpow.pop %v3716
      %v3718 = vmul.f32 %v3491, 1.442695
      %v3719 = vpow.pop %v3718
      %v3720 = vmul.f32 %v3492, 1.442695
      %v3721 = vpow.pop %v3720
      %v3722 = vmul.f32 %v3493, 1.442695
      %v3723 = vpow.pop %v3722
      %v3724 = vmul.f32 %v3494, 1.442695
      %v3725 = vpow.pop %v3724
      %v3726 = vmul.f32 %v3495, 1.442695
      %v3727 = vpow.pop %v3726
      %v3728 = vmul.f32 %v3496, 1.442695
      %v3729 = vpow.pop %v3728
      %v3730 = vmul.f32 %v3497, 1.442695
      %v3731 = vpow.pop %v3730
      %v3732 = vmul.f32 %v3498, 1.442695
      %v3733 = vpow.pop %v3732
      %v3734 = vmul.f32 %v3499, 1.442695
      %v3735 = vpow.pop %v3734
      %v3736 = vmul.f32 %v3500, 1.442695
      %v3737 = vpow.pop %v3736
      %v3738 = vmul.f32 %v3501, 1.442695
      %v3739 = vpow.pop %v3738
      %v3740 = vmul.f32 %v3502, 1.442695
      %v3741 = vpow.pop %v3740
      %v3742 = vmul.f32 %v3503, 1.442695
      %v3743 = vpow.pop %v3742
      %v3744 = vmul.f32 %v3504, 1.442695
      %v3745 = vpow.pop %v3744
      %v3746 = vmul.f32 %v3505, 1.442695
      %v3747 = vpow.pop %v3746
      %v3748 = vmul.f32 %v3506, 1.442695
      %v3749 = vpow.pop %v3748
      %v3750 = vmul.f32 %v3507, 1.442695
      %v3751 = vpow.pop %v3750
      %v3752 = vmul.f32 %v3508, 1.442695
      %v3753 = vpow.pop %v3752
      %v3754 = vmul.f32 %v3509, 1.442695
      %v3755 = vpow.pop %v3754
      %v3756 = vmul.f32 %v3510, 1.442695
      %v3757 = vpow.pop %v3756
      %v3758 = vmul.f32 %v3511, 1.442695
      %v3759 = vpow.pop %v3758
      %v3760 = vmul.f32 %v3512, 1.442695
      %v3761 = vpow.pop %v3760
      %v3762 = vmul.f32 %v3513, 1.442695
      %v3763 = vpow.pop %v3762
      %v3764 = vmul.f32 %v3514, 1.442695
      %v3765 = vpow.pop %v3764
      %v3766 = vmul.f32 %v3515, 1.442695
      %v3767 = vpow.pop %v3766
      %v3768 = vmul.f32 %v3516, 1.442695
      %v3769 = vpow.pop %v3768
      %v3770 = vmul.f32 %v3517, 1.442695
      %v3771 = vpow.pop %v3770
      %v3772 = vmul.f32 %v3518, 1.442695
      %v3773 = vpow.pop %v3772
      %v3774 = vmul.f32 %v3519, 1.442695
      %v3775 = vpow.pop %v3774
      %v3776 = vadd.f32 %v3521, 1.0
      %v3777 = vlog2.pop %v3776
      %v3778 = vmul.f32 %v3777, 0.6931472
      %v3779 = vmul.f32 -0.5, %v3521
      %v3780 = vadd.f32 %v3779, 1.0
      %v3781 = vmul.f32 %v3780, %v3521
      %v3782 = vand.u32 2147483647, %v3521
      %vm3783 = vcmp.lt.f32.partialorder %v3782, 0.0004427343
      %v3784 = vsel %vm3783, %v3781, %v3778
      %v3785 = vadd.f32 %v3523, 1.0
      %v3786 = vlog2.pop %v3785
      %v3787 = vmul.f32 %v3786, 0.6931472
      %v3788 = vmul.f32 -0.5, %v3523
      %v3789 = vadd.f32 %v3788, 1.0
      %v3790 = vmul.f32 %v3789, %v3523
      %v3791 = vand.u32 2147483647, %v3523
      %vm3792 = vcmp.lt.f32.partialorder %v3791, 0.0004427343
      %v3793 = vsel %vm3792, %v3790, %v3787
      %v3794 = vadd.f32 %v3525, 1.0
      %v3795 = vlog2.pop %v3794
      %v3796 = vmul.f32 %v3795, 0.6931472
      %v3797 = vmul.f32 -0.5, %v3525
      %v3798 = vadd.f32 %v3797, 1.0
      %v3799 = vmul.f32 %v3798, %v3525
      %v3800 = vand.u32 2147483647, %v3525
      %vm3801 = vcmp.lt.f32.partialorder %v3800, 0.0004427343
      %v3802 = vsel %vm3801, %v3799, %v3796
      %v3803 = vadd.f32 %v3527, 1.0
      %v3804 = vlog2.pop %v3803
      %v3805 = vmul.f32 %v3804, 0.6931472
      %v3806 = vmul.f32 -0.5, %v3527
      %v3807 = vadd.f32 %v3806, 1.0
      %v3808 = vmul.f32 %v3807, %v3527
      %v3809 = vand.u32 2147483647, %v3527
      %vm3810 = vcmp.lt.f32.partialorder %v3809, 0.0004427343
      %v3811 = vsel %vm3810, %v3808, %v3805
      %v3812 = vadd.f32 %v3529, 1.0
      %v3813 = vlog2.pop %v3812
      %v3814 = vmul.f32 %v3813, 0.6931472
      %v3815 = vmul.f32 -0.5, %v3529
      %v3816 = vadd.f32 %v3815, 1.0
      %v3817 = vmul.f32 %v3816, %v3529
      %v3818 = vand.u32 2147483647, %v3529
      %vm3819 = vcmp.lt.f32.partialorder %v3818, 0.0004427343
      %v3820 = vsel %vm3819, %v3817, %v3814
      %v3821 = vadd.f32 %v3531, 1.0
      %v3822 = vlog2.pop %v3821
      %v3823 = vmul.f32 %v3822, 0.6931472
      %v3824 = vmul.f32 -0.5, %v3531
      %v3825 = vadd.f32 %v3824, 1.0
      %v3826 = vmul.f32 %v3825, %v3531
      %v3827 = vand.u32 2147483647, %v3531
      %vm3828 = vcmp.lt.f32.partialorder %v3827, 0.0004427343
      %v3829 = vsel %vm3828, %v3826, %v3823
      %v3830 = vadd.f32 %v3533, 1.0
      %v3831 = vlog2.pop %v3830
      %v3832 = vmul.f32 %v3831, 0.6931472
      %v3833 = vmul.f32 -0.5, %v3533
      %v3834 = vadd.f32 %v3833, 1.0
      %v3835 = vmul.f32 %v3834, %v3533
      %v3836 = vand.u32 2147483647, %v3533
      %vm3837 = vcmp.lt.f32.partialorder %v3836, 0.0004427343
      %v3838 = vsel %vm3837, %v3835, %v3832
      %v3839 = vadd.f32 %v3535, 1.0
      %v3840 = vlog2.pop %v3839
      %v3841 = vmul.f32 %v3840, 0.6931472
      %v3842 = vmul.f32 -0.5, %v3535
      %v3843 = vadd.f32 %v3842, 1.0
      %v3844 = vmul.f32 %v3843, %v3535
      %v3845 = vand.u32 2147483647, %v3535
      %vm3846 = vcmp.lt.f32.partialorder %v3845, 0.0004427343
      %v3847 = vsel %vm3846, %v3844, %v3841
      %v3848 = vadd.f32 %v3537, 1.0
      %v3849 = vlog2.pop %v3848
      %v3850 = vmul.f32 %v3849, 0.6931472
      %v3851 = vmul.f32 -0.5, %v3537
      %v3852 = vadd.f32 %v3851, 1.0
      %v3853 = vmul.f32 %v3852, %v3537
      %v3854 = vand.u32 2147483647, %v3537
      %vm3855 = vcmp.lt.f32.partialorder %v3854, 0.0004427343
      %v3856 = vsel %vm3855, %v3853, %v3850
      %v3857 = vadd.f32 %v3539, 1.0
      %v3858 = vlog2.pop %v3857
      %v3859 = vmul.f32 %v3858, 0.6931472
      %v3860 = vmul.f32 -0.5, %v3539
      %v3861 = vadd.f32 %v3860, 1.0
      %v3862 = vmul.f32 %v3861, %v3539
      %v3863 = vand.u32 2147483647, %v3539
      %vm3864 = vcmp.lt.f32.partialorder %v3863, 0.0004427343
      %v3865 = vsel %vm3864, %v3862, %v3859
      %v3866 = vadd.f32 %v3541, 1.0
      %v3867 = vlog2.pop %v3866
      %v3868 = vmul.f32 %v3867, 0.6931472
      %v3869 = vmul.f32 -0.5, %v3541
      %v3870 = vadd.f32 %v3869, 1.0
      %v3871 = vmul.f32 %v3870, %v3541
      %v3872 = vand.u32 2147483647, %v3541
      %vm3873 = vcmp.lt.f32.partialorder %v3872, 0.0004427343
      %v3874 = vsel %vm3873, %v3871, %v3868
      %v3875 = vadd.f32 %v3543, 1.0
      %v3876 = vlog2.pop %v3875
      %v3877 = vmul.f32 %v3876, 0.6931472
      %v3878 = vmul.f32 -0.5, %v3543
      %v3879 = vadd.f32 %v3878, 1.0
      %v3880 = vmul.f32 %v3879, %v3543
      %v3881 = vand.u32 2147483647, %v3543
      %vm3882 = vcmp.lt.f32.partialorder %v3881, 0.0004427343
      %v3883 = vsel %vm3882, %v3880, %v3877
      %v3884 = vadd.f32 %v3545, 1.0
      %v3885 = vlog2.pop %v3884
      %v3886 = vmul.f32 %v3885, 0.6931472
      %v3887 = vmul.f32 -0.5, %v3545
      %v3888 = vadd.f32 %v3887, 1.0
      %v3889 = vmul.f32 %v3888, %v3545
      %v3890 = vand.u32 2147483647, %v3545
      %vm3891 = vcmp.lt.f32.partialorder %v3890, 0.0004427343
      %v3892 = vsel %vm3891, %v3889, %v3886
      %v3893 = vadd.f32 %v3547, 1.0
      %v3894 = vlog2.pop %v3893
      %v3895 = vmul.f32 %v3894, 0.6931472
      %v3896 = vmul.f32 -0.5, %v3547
      %v3897 = vadd.f32 %v3896, 1.0
      %v3898 = vmul.f32 %v3897, %v3547
      %v3899 = vand.u32 2147483647, %v3547
      %vm3900 = vcmp.lt.f32.partialorder %v3899, 0.0004427343
      %v3901 = vsel %vm3900, %v3898, %v3895
      %v3902 = vadd.f32 %v3549, 1.0
      %v3903 = vlog2.pop %v3902
      %v3904 = vmul.f32 %v3903, 0.6931472
      %v3905 = vmul.f32 -0.5, %v3549
      %v3906 = vadd.f32 %v3905, 1.0
      %v3907 = vmul.f32 %v3906, %v3549
      %v3908 = vand.u32 2147483647, %v3549
      %vm3909 = vcmp.lt.f32.partialorder %v3908, 0.0004427343
      %v3910 = vsel %vm3909, %v3907, %v3904
      %v3911 = vadd.f32 %v3551, 1.0
      %v3912 = vlog2.pop %v3911
      %v3913 = vmul.f32 %v3912, 0.6931472
      %v3914 = vmul.f32 -0.5, %v3551
      %v3915 = vadd.f32 %v3914, 1.0
      %v3916 = vmul.f32 %v3915, %v3551
      %v3917 = vand.u32 2147483647, %v3551
      %vm3918 = vcmp.lt.f32.partialorder %v3917, 0.0004427343
      %v3919 = vsel %vm3918, %v3916, %v3913
      %v3920 = vadd.f32 %v3553, 1.0
      %v3921 = vlog2.pop %v3920
      %v3922 = vmul.f32 %v3921, 0.6931472
      %v3923 = vmul.f32 -0.5, %v3553
      %v3924 = vadd.f32 %v3923, 1.0
      %v3925 = vmul.f32 %v3924, %v3553
      %v3926 = vand.u32 2147483647, %v3553
      %vm3927 = vcmp.lt.f32.partialorder %v3926, 0.0004427343
      %v3928 = vsel %vm3927, %v3925, %v3922
      %v3929 = vadd.f32 %v3555, 1.0
      %v3930 = vlog2.pop %v3929
      %v3931 = vmul.f32 %v3930, 0.6931472
      %v3932 = vmul.f32 -0.5, %v3555
      %v3933 = vadd.f32 %v3932, 1.0
      %v3934 = vmul.f32 %v3933, %v3555
      %v3935 = vand.u32 2147483647, %v3555
      %vm3936 = vcmp.lt.f32.partialorder %v3935, 0.0004427343
      %v3937 = vsel %vm3936, %v3934, %v3931
      %v3938 = vadd.f32 %v3557, 1.0
      %v3939 = vlog2.pop %v3938
      %v3940 = vmul.f32 %v3939, 0.6931472
      %v3941 = vmul.f32 -0.5, %v3557
      %v3942 = vadd.f32 %v3941, 1.0
      %v3943 = vmul.f32 %v3942, %v3557
      %v3944 = vand.u32 2147483647, %v3557
      %vm3945 = vcmp.lt.f32.partialorder %v3944, 0.0004427343
      %v3946 = vsel %vm3945, %v3943, %v3940
      %v3947 = vadd.f32 %v3559, 1.0
      %v3948 = vlog2.pop %v3947
      %v3949 = vmul.f32 %v3948, 0.6931472
      %v3950 = vmul.f32 -0.5, %v3559
      %v3951 = vadd.f32 %v3950, 1.0
      %v3952 = vmul.f32 %v3951, %v3559
      %v3953 = vand.u32 2147483647, %v3559
      %vm3954 = vcmp.lt.f32.partialorder %v3953, 0.0004427343
      %v3955 = vsel %vm3954, %v3952, %v3949
      %v3956 = vadd.f32 %v3561, 1.0
      %v3957 = vlog2.pop %v3956
      %v3958 = vmul.f32 %v3957, 0.6931472
      %v3959 = vmul.f32 -0.5, %v3561
      %v3960 = vadd.f32 %v3959, 1.0
      %v3961 = vmul.f32 %v3960, %v3561
      %v3962 = vand.u32 2147483647, %v3561
      %vm3963 = vcmp.lt.f32.partialorder %v3962, 0.0004427343
      %v3964 = vsel %vm3963, %v3961, %v3958
      %v3965 = vadd.f32 %v3563, 1.0
      %v3966 = vlog2.pop %v3965
      %v3967 = vmul.f32 %v3966, 0.6931472
      %v3968 = vmul.f32 -0.5, %v3563
      %v3969 = vadd.f32 %v3968, 1.0
      %v3970 = vmul.f32 %v3969, %v3563
      %v3971 = vand.u32 2147483647, %v3563
      %vm3972 = vcmp.lt.f32.partialorder %v3971, 0.0004427343
      %v3973 = vsel %vm3972, %v3970, %v3967
      %v3974 = vadd.f32 %v3565, 1.0
      %v3975 = vlog2.pop %v3974
      %v3976 = vmul.f32 %v3975, 0.6931472
      %v3977 = vmul.f32 -0.5, %v3565
      %v3978 = vadd.f32 %v3977, 1.0
      %v3979 = vmul.f32 %v3978, %v3565
      %v3980 = vand.u32 2147483647, %v3565
      %vm3981 = vcmp.lt.f32.partialorder %v3980, 0.0004427343
      %v3982 = vsel %vm3981, %v3979, %v3976
      %v3983 = vadd.f32 %v3567, 1.0
      %v3984 = vlog2.pop %v3983
      %v3985 = vmul.f32 %v3984, 0.6931472
      %v3986 = vmul.f32 -0.5, %v3567
      %v3987 = vadd.f32 %v3986, 1.0
      %v3988 = vmul.f32 %v3987, %v3567
      %v3989 = vand.u32 2147483647, %v3567
      %vm3990 = vcmp.lt.f32.partialorder %v3989, 0.0004427343
      %v3991 = vsel %vm3990, %v3988, %v3985
      %v3992 = vadd.f32 %v3569, 1.0
      %v3993 = vlog2.pop %v3992
      %v3994 = vmul.f32 %v3993, 0.6931472
      %v3995 = vmul.f32 -0.5, %v3569
      %v3996 = vadd.f32 %v3995, 1.0
      %v3997 = vmul.f32 %v3996, %v3569
      %v3998 = vand.u32 2147483647, %v3569
      %vm3999 = vcmp.lt.f32.partialorder %v3998, 0.0004427343
      %v4000 = vsel %vm3999, %v3997, %v3994
      %v4001 = vadd.f32 %v3571, 1.0
      %v4002 = vlog2.pop %v4001
      %v4003 = vmul.f32 %v4002, 0.6931472
      %v4004 = vmul.f32 -0.5, %v3571
      %v4005 = vadd.f32 %v4004, 1.0
      %v4006 = vmul.f32 %v4005, %v3571
      %v4007 = vand.u32 2147483647, %v3571
      %vm4008 = vcmp.lt.f32.partialorder %v4007, 0.0004427343
      %v4009 = vsel %vm4008, %v4006, %v4003
      %v4010 = vadd.f32 %v3573, 1.0
      %v4011 = vlog2.pop %v4010
      %v4012 = vmul.f32 %v4011, 0.6931472
      %v4013 = vmul.f32 -0.5, %v3573
      %v4014 = vadd.f32 %v4013, 1.0
      %v4015 = vmul.f32 %v4014, %v3573
      %v4016 = vand.u32 2147483647, %v3573
      %vm4017 = vcmp.lt.f32.partialorder %v4016, 0.0004427343
      %v4018 = vsel %vm4017, %v4015, %v4012
      %v4019 = vadd.f32 %v3575, 1.0
      %v4020 = vlog2.pop %v4019
      %v4021 = vmul.f32 %v4020, 0.6931472
      %v4022 = vmul.f32 -0.5, %v3575
      %v4023 = vadd.f32 %v4022, 1.0
      %v4024 = vmul.f32 %v4023, %v3575
      %v4025 = vand.u32 2147483647, %v3575
      %vm4026 = vcmp.lt.f32.partialorder %v4025, 0.0004427343
      %v4027 = vsel %vm4026, %v4024, %v4021
      %v4028 = vadd.f32 %v3577, 1.0
      %v4029 = vlog2.pop %v4028
      %v4030 = vmul.f32 %v4029, 0.6931472
      %v4031 = vmul.f32 -0.5, %v3577
      %v4032 = vadd.f32 %v4031, 1.0
      %v4033 = vmul.f32 %v4032, %v3577
      %v4034 = vand.u32 2147483647, %v3577
      %vm4035 = vcmp.lt.f32.partialorder %v4034, 0.0004427343
      %v4036 = vsel %vm4035, %v4033, %v4030
      %v4037 = vadd.f32 %v3579, 1.0
      %v4038 = vlog2.pop %v4037
      %v4039 = vmul.f32 %v4038, 0.6931472
      %v4040 = vmul.f32 -0.5, %v3579
      %v4041 = vadd.f32 %v4040, 1.0
      %v4042 = vmul.f32 %v4041, %v3579
      %v4043 = vand.u32 2147483647, %v3579
      %vm4044 = vcmp.lt.f32.partialorder %v4043, 0.0004427343
      %v4045 = vsel %vm4044, %v4042, %v4039
      %v4046 = vadd.f32 %v3581, 1.0
      %v4047 = vlog2.pop %v4046
      %v4048 = vmul.f32 %v4047, 0.6931472
      %v4049 = vmul.f32 -0.5, %v3581
      %v4050 = vadd.f32 %v4049, 1.0
      %v4051 = vmul.f32 %v4050, %v3581
      %v4052 = vand.u32 2147483647, %v3581
      %vm4053 = vcmp.lt.f32.partialorder %v4052, 0.0004427343
      %v4054 = vsel %vm4053, %v4051, %v4048
      %v4055 = vadd.f32 %v3583, 1.0
      %v4056 = vlog2.pop %v4055
      %v4057 = vmul.f32 %v4056, 0.6931472
      %v4058 = vmul.f32 -0.5, %v3583
      %v4059 = vadd.f32 %v4058, 1.0
      %v4060 = vmul.f32 %v4059, %v3583
      %v4061 = vand.u32 2147483647, %v3583
      %vm4062 = vcmp.lt.f32.partialorder %v4061, 0.0004427343
      %v4063 = vsel %vm4062, %v4060, %v4057
      %v4064 = vadd.f32 %v3585, 1.0
      %v4065 = vlog2.pop %v4064
      %v4066 = vmul.f32 %v4065, 0.6931472
      %v4067 = vmul.f32 -0.5, %v3585
      %v4068 = vadd.f32 %v4067, 1.0
      %v4069 = vmul.f32 %v4068, %v3585
      %v4070 = vand.u32 2147483647, %v3585
      %vm4071 = vcmp.lt.f32.partialorder %v4070, 0.0004427343
      %v4072 = vsel %vm4071, %v4069, %v4066
      %v4073 = vadd.f32 %v3587, 1.0
      %v4074 = vlog2.pop %v4073
      %v4075 = vmul.f32 %v4074, 0.6931472
      %v4076 = vmul.f32 -0.5, %v3587
      %v4077 = vadd.f32 %v4076, 1.0
      %v4078 = vmul.f32 %v4077, %v3587
      %v4079 = vand.u32 2147483647, %v3587
      %vm4080 = vcmp.lt.f32.partialorder %v4079, 0.0004427343
      %v4081 = vsel %vm4080, %v4078, %v4075
      %v4082 = vadd.f32 %v3589, 1.0
      %v4083 = vlog2.pop %v4082
      %v4084 = vmul.f32 %v4083, 0.6931472
      %v4085 = vmul.f32 -0.5, %v3589
      %v4086 = vadd.f32 %v4085, 1.0
      %v4087 = vmul.f32 %v4086, %v3589
      %v4088 = vand.u32 2147483647, %v3589
      %vm4089 = vcmp.lt.f32.partialorder %v4088, 0.0004427343
      %v4090 = vsel %vm4089, %v4087, %v4084
      %v4091 = vadd.f32 %v3591, 1.0
      %v4092 = vlog2.pop %v4091
      %v4093 = vmul.f32 %v4092, 0.6931472
      %v4094 = vmul.f32 -0.5, %v3591
      %v4095 = vadd.f32 %v4094, 1.0
      %v4096 = vmul.f32 %v4095, %v3591
      %v4097 = vand.u32 2147483647, %v3591
      %vm4098 = vcmp.lt.f32.partialorder %v4097, 0.0004427343
      %v4099 = vsel %vm4098, %v4096, %v4093
      %v4100 = vadd.f32 %v3593, 1.0
      %v4101 = vlog2.pop %v4100
      %v4102 = vmul.f32 %v4101, 0.6931472
      %v4103 = vmul.f32 -0.5, %v3593
      %v4104 = vadd.f32 %v4103, 1.0
      %v4105 = vmul.f32 %v4104, %v3593
      %v4106 = vand.u32 2147483647, %v3593
      %vm4107 = vcmp.lt.f32.partialorder %v4106, 0.0004427343
      %v4108 = vsel %vm4107, %v4105, %v4102
      %v4109 = vadd.f32 %v3595, 1.0
      %v4110 = vlog2.pop %v4109
      %v4111 = vmul.f32 %v4110, 0.6931472
      %v4112 = vmul.f32 -0.5, %v3595
      %v4113 = vadd.f32 %v4112, 1.0
      %v4114 = vmul.f32 %v4113, %v3595
      %v4115 = vand.u32 2147483647, %v3595
      %vm4116 = vcmp.lt.f32.partialorder %v4115, 0.0004427343
      %v4117 = vsel %vm4116, %v4114, %v4111
      %v4118 = vadd.f32 %v3597, 1.0
      %v4119 = vlog2.pop %v4118
      %v4120 = vmul.f32 %v4119, 0.6931472
      %v4121 = vmul.f32 -0.5, %v3597
      %v4122 = vadd.f32 %v4121, 1.0
      %v4123 = vmul.f32 %v4122, %v3597
      %v4124 = vand.u32 2147483647, %v3597
      %vm4125 = vcmp.lt.f32.partialorder %v4124, 0.0004427343
      %v4126 = vsel %vm4125, %v4123, %v4120
      %v4127 = vadd.f32 %v3599, 1.0
      %v4128 = vlog2.pop %v4127
      %v4129 = vmul.f32 %v4128, 0.6931472
      %v4130 = vmul.f32 -0.5, %v3599
      %v4131 = vadd.f32 %v4130, 1.0
      %v4132 = vmul.f32 %v4131, %v3599
      %v4133 = vand.u32 2147483647, %v3599
      %vm4134 = vcmp.lt.f32.partialorder %v4133, 0.0004427343
      %v4135 = vsel %vm4134, %v4132, %v4129
      %v4136 = vadd.f32 %v3601, 1.0
      %v4137 = vlog2.pop %v4136
      %v4138 = vmul.f32 %v4137, 0.6931472
      %v4139 = vmul.f32 -0.5, %v3601
      %v4140 = vadd.f32 %v4139, 1.0
      %v4141 = vmul.f32 %v4140, %v3601
      %v4142 = vand.u32 2147483647, %v3601
      %vm4143 = vcmp.lt.f32.partialorder %v4142, 0.0004427343
      %v4144 = vsel %vm4143, %v4141, %v4138
      %v4145 = vadd.f32 %v3603, 1.0
      %v4146 = vlog2.pop %v4145
      %v4147 = vmul.f32 %v4146, 0.6931472
      %v4148 = vmul.f32 -0.5, %v3603
      %v4149 = vadd.f32 %v4148, 1.0
      %v4150 = vmul.f32 %v4149, %v3603
      %v4151 = vand.u32 2147483647, %v3603
      %vm4152 = vcmp.lt.f32.partialorder %v4151, 0.0004427343
      %v4153 = vsel %vm4152, %v4150, %v4147
      %v4154 = vadd.f32 %v3605, 1.0
      %v4155 = vlog2.pop %v4154
      %v4156 = vmul.f32 %v4155, 0.6931472
      %v4157 = vmul.f32 -0.5, %v3605
      %v4158 = vadd.f32 %v4157, 1.0
      %v4159 = vmul.f32 %v4158, %v3605
      %v4160 = vand.u32 2147483647, %v3605
      %vm4161 = vcmp.lt.f32.partialorder %v4160, 0.0004427343
      %v4162 = vsel %vm4161, %v4159, %v4156
      %v4163 = vadd.f32 %v3607, 1.0
      %v4164 = vlog2.pop %v4163
      %v4165 = vmul.f32 %v4164, 0.6931472
      %v4166 = vmul.f32 -0.5, %v3607
      %v4167 = vadd.f32 %v4166, 1.0
      %v4168 = vmul.f32 %v4167, %v3607
      %v4169 = vand.u32 2147483647, %v3607
      %vm4170 = vcmp.lt.f32.partialorder %v4169, 0.0004427343
      %v4171 = vsel %vm4170, %v4168, %v4165
      %v4172 = vadd.f32 %v3609, 1.0
      %v4173 = vlog2.pop %v4172
      %v4174 = vmul.f32 %v4173, 0.6931472
      %v4175 = vmul.f32 -0.5, %v3609
      %v4176 = vadd.f32 %v4175, 1.0
      %v4177 = vmul.f32 %v4176, %v3609
      %v4178 = vand.u32 2147483647, %v3609
      %vm4179 = vcmp.lt.f32.partialorder %v4178, 0.0004427343
      %v4180 = vsel %vm4179, %v4177, %v4174
      %v4181 = vadd.f32 %v3611, 1.0
      %v4182 = vlog2.pop %v4181
      %v4183 = vmul.f32 %v4182, 0.6931472
      %v4184 = vmul.f32 -0.5, %v3611
      %v4185 = vadd.f32 %v4184, 1.0
      %v4186 = vmul.f32 %v4185, %v3611
      %v4187 = vand.u32 2147483647, %v3611
      %vm4188 = vcmp.lt.f32.partialorder %v4187, 0.0004427343
      %v4189 = vsel %vm4188, %v4186, %v4183
      %v4190 = vadd.f32 %v3613, 1.0
      %v4191 = vlog2.pop %v4190
      %v4192 = vmul.f32 %v4191, 0.6931472
      %v4193 = vmul.f32 -0.5, %v3613
      %v4194 = vadd.f32 %v4193, 1.0
      %v4195 = vmul.f32 %v4194, %v3613
      %v4196 = vand.u32 2147483647, %v3613
      %vm4197 = vcmp.lt.f32.partialorder %v4196, 0.0004427343
      %v4198 = vsel %vm4197, %v4195, %v4192
      %v4199 = vadd.f32 %v3615, 1.0
      %v4200 = vlog2.pop %v4199
      %v4201 = vmul.f32 %v4200, 0.6931472
      %v4202 = vmul.f32 -0.5, %v3615
      %v4203 = vadd.f32 %v4202, 1.0
      %v4204 = vmul.f32 %v4203, %v3615
      %v4205 = vand.u32 2147483647, %v3615
      %vm4206 = vcmp.lt.f32.partialorder %v4205, 0.0004427343
      %v4207 = vsel %vm4206, %v4204, %v4201
      %v4208 = vadd.f32 %v3617, 1.0
      %v4209 = vlog2.pop %v4208
      %v4210 = vmul.f32 %v4209, 0.6931472
      %v4211 = vmul.f32 -0.5, %v3617
      %v4212 = vadd.f32 %v4211, 1.0
      %v4213 = vmul.f32 %v4212, %v3617
      %v4214 = vand.u32 2147483647, %v3617
      %vm4215 = vcmp.lt.f32.partialorder %v4214, 0.0004427343
      %v4216 = vsel %vm4215, %v4213, %v4210
      %v4217 = vadd.f32 %v3619, 1.0
      %v4218 = vlog2.pop %v4217
      %v4219 = vmul.f32 %v4218, 0.6931472
      %v4220 = vmul.f32 -0.5, %v3619
      %v4221 = vadd.f32 %v4220, 1.0
      %v4222 = vmul.f32 %v4221, %v3619
      %v4223 = vand.u32 2147483647, %v3619
      %vm4224 = vcmp.lt.f32.partialorder %v4223, 0.0004427343
      %v4225 = vsel %vm4224, %v4222, %v4219
      %v4226 = vadd.f32 %v3621, 1.0
      %v4227 = vlog2.pop %v4226
      %v4228 = vmul.f32 %v4227, 0.6931472
      %v4229 = vmul.f32 -0.5, %v3621
      %v4230 = vadd.f32 %v4229, 1.0
      %v4231 = vmul.f32 %v4230, %v3621
      %v4232 = vand.u32 2147483647, %v3621
      %vm4233 = vcmp.lt.f32.partialorder %v4232, 0.0004427343
      %v4234 = vsel %vm4233, %v4231, %v4228
      %v4235 = vadd.f32 %v3623, 1.0
      %v4236 = vlog2.pop %v4235
      %v4237 = vmul.f32 %v4236, 0.6931472
      %v4238 = vmul.f32 -0.5, %v3623
      %v4239 = vadd.f32 %v4238, 1.0
      %v4240 = vmul.f32 %v4239, %v3623
      %v4241 = vand.u32 2147483647, %v3623
      %vm4242 = vcmp.lt.f32.partialorder %v4241, 0.0004427343
      %v4243 = vsel %vm4242, %v4240, %v4237
      %v4244 = vadd.f32 %v3625, 1.0
      %v4245 = vlog2.pop %v4244
      %v4246 = vmul.f32 %v4245, 0.6931472
      %v4247 = vmul.f32 -0.5, %v3625
      %v4248 = vadd.f32 %v4247, 1.0
      %v4249 = vmul.f32 %v4248, %v3625
      %v4250 = vand.u32 2147483647, %v3625
      %vm4251 = vcmp.lt.f32.partialorder %v4250, 0.0004427343
      %v4252 = vsel %vm4251, %v4249, %v4246
      %v4253 = vadd.f32 %v3627, 1.0
      %v4254 = vlog2.pop %v4253
      %v4255 = vmul.f32 %v4254, 0.6931472
      %v4256 = vmul.f32 -0.5, %v3627
      %v4257 = vadd.f32 %v4256, 1.0
      %v4258 = vmul.f32 %v4257, %v3627
      %v4259 = vand.u32 2147483647, %v3627
      %vm4260 = vcmp.lt.f32.partialorder %v4259, 0.0004427343
      %v4261 = vsel %vm4260, %v4258, %v4255
      %v4262 = vadd.f32 %v3629, 1.0
      %v4263 = vlog2.pop %v4262
      %v4264 = vmul.f32 %v4263, 0.6931472
      %v4265 = vmul.f32 -0.5, %v3629
      %v4266 = vadd.f32 %v4265, 1.0
      %v4267 = vmul.f32 %v4266, %v3629
      %v4268 = vand.u32 2147483647, %v3629
      %vm4269 = vcmp.lt.f32.partialorder %v4268, 0.0004427343
      %v4270 = vsel %vm4269, %v4267, %v4264
      %v4271 = vadd.f32 %v3631, 1.0
      %v4272 = vlog2.pop %v4271
      %v4273 = vmul.f32 %v4272, 0.6931472
      %v4274 = vmul.f32 -0.5, %v3631
      %v4275 = vadd.f32 %v4274, 1.0
      %v4276 = vmul.f32 %v4275, %v3631
      %v4277 = vand.u32 2147483647, %v3631
      %vm4278 = vcmp.lt.f32.partialorder %v4277, 0.0004427343
      %v4279 = vsel %vm4278, %v4276, %v4273
      %v4280 = vadd.f32 %v3633, 1.0
      %v4281 = vlog2.pop %v4280
      %v4282 = vmul.f32 %v4281, 0.6931472
      %v4283 = vmul.f32 -0.5, %v3633
      %v4284 = vadd.f32 %v4283, 1.0
      %v4285 = vmul.f32 %v4284, %v3633
      %v4286 = vand.u32 2147483647, %v3633
      %vm4287 = vcmp.lt.f32.partialorder %v4286, 0.0004427343
      %v4288 = vsel %vm4287, %v4285, %v4282
      %v4289 = vadd.f32 %v3635, 1.0
      %v4290 = vlog2.pop %v4289
      %v4291 = vmul.f32 %v4290, 0.6931472
      %v4292 = vmul.f32 -0.5, %v3635
      %v4293 = vadd.f32 %v4292, 1.0
      %v4294 = vmul.f32 %v4293, %v3635
      %v4295 = vand.u32 2147483647, %v3635
      %vm4296 = vcmp.lt.f32.partialorder %v4295, 0.0004427343
      %v4297 = vsel %vm4296, %v4294, %v4291
      %v4298 = vadd.f32 %v3637, 1.0
      %v4299 = vlog2.pop %v4298
      %v4300 = vmul.f32 %v4299, 0.6931472
      %v4301 = vmul.f32 -0.5, %v3637
      %v4302 = vadd.f32 %v4301, 1.0
      %v4303 = vmul.f32 %v4302, %v3637
      %v4304 = vand.u32 2147483647, %v3637
      %vm4305 = vcmp.lt.f32.partialorder %v4304, 0.0004427343
      %v4306 = vsel %vm4305, %v4303, %v4300
      %v4307 = vadd.f32 %v3639, 1.0
      %v4308 = vlog2.pop %v4307
      %v4309 = vmul.f32 %v4308, 0.6931472
      %v4310 = vmul.f32 -0.5, %v3639
      %v4311 = vadd.f32 %v4310, 1.0
      %v4312 = vmul.f32 %v4311, %v3639
      %v4313 = vand.u32 2147483647, %v3639
      %vm4314 = vcmp.lt.f32.partialorder %v4313, 0.0004427343
      %v4315 = vsel %vm4314, %v4312, %v4309
      %v4316 = vadd.f32 %v3641, 1.0
      %v4317 = vlog2.pop %v4316
      %v4318 = vmul.f32 %v4317, 0.6931472
      %v4319 = vmul.f32 -0.5, %v3641
      %v4320 = vadd.f32 %v4319, 1.0
      %v4321 = vmul.f32 %v4320, %v3641
      %v4322 = vand.u32 2147483647, %v3641
      %vm4323 = vcmp.lt.f32.partialorder %v4322, 0.0004427343
      %v4324 = vsel %vm4323, %v4321, %v4318
      %v4325 = vadd.f32 %v3643, 1.0
      %v4326 = vlog2.pop %v4325
      %v4327 = vmul.f32 %v4326, 0.6931472
      %v4328 = vmul.f32 -0.5, %v3643
      %v4329 = vadd.f32 %v4328, 1.0
      %v4330 = vmul.f32 %v4329, %v3643
      %v4331 = vand.u32 2147483647, %v3643
      %vm4332 = vcmp.lt.f32.partialorder %v4331, 0.0004427343
      %v4333 = vsel %vm4332, %v4330, %v4327
      %v4334 = vadd.f32 %v3645, 1.0
      %v4335 = vlog2.pop %v4334
      %v4336 = vmul.f32 %v4335, 0.6931472
      %v4337 = vmul.f32 -0.5, %v3645
      %v4338 = vadd.f32 %v4337, 1.0
      %v4339 = vmul.f32 %v4338, %v3645
      %v4340 = vand.u32 2147483647, %v3645
      %vm4341 = vcmp.lt.f32.partialorder %v4340, 0.0004427343
      %v4342 = vsel %vm4341, %v4339, %v4336
      %v4343 = vadd.f32 %v3647, 1.0
      %v4344 = vlog2.pop %v4343
      %v4345 = vmul.f32 %v4344, 0.6931472
      %v4346 = vmul.f32 -0.5, %v3647
      %v4347 = vadd.f32 %v4346, 1.0
      %v4348 = vmul.f32 %v4347, %v3647
      %v4349 = vand.u32 2147483647, %v3647
      %vm4350 = vcmp.lt.f32.partialorder %v4349, 0.0004427343
      %v4351 = vsel %vm4350, %v4348, %v4345
      %v4352 = vadd.f32 %v3649, 1.0
      %v4353 = vlog2.pop %v4352
      %v4354 = vmul.f32 %v4353, 0.6931472
      %v4355 = vmul.f32 -0.5, %v3649
      %v4356 = vadd.f32 %v4355, 1.0
      %v4357 = vmul.f32 %v4356, %v3649
      %v4358 = vand.u32 2147483647, %v3649
      %vm4359 = vcmp.lt.f32.partialorder %v4358, 0.0004427343
      %v4360 = vsel %vm4359, %v4357, %v4354
      %v4361 = vadd.f32 %v3651, 1.0
      %v4362 = vlog2.pop %v4361
      %v4363 = vmul.f32 %v4362, 0.6931472
      %v4364 = vmul.f32 -0.5, %v3651
      %v4365 = vadd.f32 %v4364, 1.0
      %v4366 = vmul.f32 %v4365, %v3651
      %v4367 = vand.u32 2147483647, %v3651
      %vm4368 = vcmp.lt.f32.partialorder %v4367, 0.0004427343
      %v4369 = vsel %vm4368, %v4366, %v4363
      %v4370 = vadd.f32 %v3653, 1.0
      %v4371 = vlog2.pop %v4370
      %v4372 = vmul.f32 %v4371, 0.6931472
      %v4373 = vmul.f32 -0.5, %v3653
      %v4374 = vadd.f32 %v4373, 1.0
      %v4375 = vmul.f32 %v4374, %v3653
      %v4376 = vand.u32 2147483647, %v3653
      %vm4377 = vcmp.lt.f32.partialorder %v4376, 0.0004427343
      %v4378 = vsel %vm4377, %v4375, %v4372
      %v4379 = vadd.f32 %v3655, 1.0
      %v4380 = vlog2.pop %v4379
      %v4381 = vmul.f32 %v4380, 0.6931472
      %v4382 = vmul.f32 -0.5, %v3655
      %v4383 = vadd.f32 %v4382, 1.0
      %v4384 = vmul.f32 %v4383, %v3655
      %v4385 = vand.u32 2147483647, %v3655
      %vm4386 = vcmp.lt.f32.partialorder %v4385, 0.0004427343
      %v4387 = vsel %vm4386, %v4384, %v4381
      %v4388 = vadd.f32 %v3657, 1.0
      %v4389 = vlog2.pop %v4388
      %v4390 = vmul.f32 %v4389, 0.6931472
      %v4391 = vmul.f32 -0.5, %v3657
      %v4392 = vadd.f32 %v4391, 1.0
      %v4393 = vmul.f32 %v4392, %v3657
      %v4394 = vand.u32 2147483647, %v3657
      %vm4395 = vcmp.lt.f32.partialorder %v4394, 0.0004427343
      %v4396 = vsel %vm4395, %v4393, %v4390
      %v4397 = vadd.f32 %v3659, 1.0
      %v4398 = vlog2.pop %v4397
      %v4399 = vmul.f32 %v4398, 0.6931472
      %v4400 = vmul.f32 -0.5, %v3659
      %v4401 = vadd.f32 %v4400, 1.0
      %v4402 = vmul.f32 %v4401, %v3659
      %v4403 = vand.u32 2147483647, %v3659
      %vm4404 = vcmp.lt.f32.partialorder %v4403, 0.0004427343
      %v4405 = vsel %vm4404, %v4402, %v4399
      %v4406 = vadd.f32 %v3661, 1.0
      %v4407 = vlog2.pop %v4406
      %v4408 = vmul.f32 %v4407, 0.6931472
      %v4409 = vmul.f32 -0.5, %v3661
      %v4410 = vadd.f32 %v4409, 1.0
      %v4411 = vmul.f32 %v4410, %v3661
      %v4412 = vand.u32 2147483647, %v3661
      %vm4413 = vcmp.lt.f32.partialorder %v4412, 0.0004427343
      %v4414 = vsel %vm4413, %v4411, %v4408
      %v4415 = vadd.f32 %v3663, 1.0
      %v4416 = vlog2.pop %v4415
      %v4417 = vmul.f32 %v4416, 0.6931472
      %v4418 = vmul.f32 -0.5, %v3663
      %v4419 = vadd.f32 %v4418, 1.0
      %v4420 = vmul.f32 %v4419, %v3663
      %v4421 = vand.u32 2147483647, %v3663
      %vm4422 = vcmp.lt.f32.partialorder %v4421, 0.0004427343
      %v4423 = vsel %vm4422, %v4420, %v4417
      %v4424 = vadd.f32 %v3665, 1.0
      %v4425 = vlog2.pop %v4424
      %v4426 = vmul.f32 %v4425, 0.6931472
      %v4427 = vmul.f32 -0.5, %v3665
      %v4428 = vadd.f32 %v4427, 1.0
      %v4429 = vmul.f32 %v4428, %v3665
      %v4430 = vand.u32 2147483647, %v3665
      %vm4431 = vcmp.lt.f32.partialorder %v4430, 0.0004427343
      %v4432 = vsel %vm4431, %v4429, %v4426
      %v4433 = vadd.f32 %v3667, 1.0
      %v4434 = vlog2.pop %v4433
      %v4435 = vmul.f32 %v4434, 0.6931472
      %v4436 = vmul.f32 -0.5, %v3667
      %v4437 = vadd.f32 %v4436, 1.0
      %v4438 = vmul.f32 %v4437, %v3667
      %v4439 = vand.u32 2147483647, %v3667
      %vm4440 = vcmp.lt.f32.partialorder %v4439, 0.0004427343
      %v4441 = vsel %vm4440, %v4438, %v4435
      %v4442 = vadd.f32 %v3669, 1.0
      %v4443 = vlog2.pop %v4442
      %v4444 = vmul.f32 %v4443, 0.6931472
      %v4445 = vmul.f32 -0.5, %v3669
      %v4446 = vadd.f32 %v4445, 1.0
      %v4447 = vmul.f32 %v4446, %v3669
      %v4448 = vand.u32 2147483647, %v3669
      %vm4449 = vcmp.lt.f32.partialorder %v4448, 0.0004427343
      %v4450 = vsel %vm4449, %v4447, %v4444
      %v4451 = vadd.f32 %v3671, 1.0
      %v4452 = vlog2.pop %v4451
      %v4453 = vmul.f32 %v4452, 0.6931472
      %v4454 = vmul.f32 -0.5, %v3671
      %v4455 = vadd.f32 %v4454, 1.0
      %v4456 = vmul.f32 %v4455, %v3671
      %v4457 = vand.u32 2147483647, %v3671
      %vm4458 = vcmp.lt.f32.partialorder %v4457, 0.0004427343
      %v4459 = vsel %vm4458, %v4456, %v4453
      %v4460 = vadd.f32 %v3673, 1.0
      %v4461 = vlog2.pop %v4460
      %v4462 = vmul.f32 %v4461, 0.6931472
      %v4463 = vmul.f32 -0.5, %v3673
      %v4464 = vadd.f32 %v4463, 1.0
      %v4465 = vmul.f32 %v4464, %v3673
      %v4466 = vand.u32 2147483647, %v3673
      %vm4467 = vcmp.lt.f32.partialorder %v4466, 0.0004427343
      %v4468 = vsel %vm4467, %v4465, %v4462
      %v4469 = vadd.f32 %v3675, 1.0
      %v4470 = vlog2.pop %v4469
      %v4471 = vmul.f32 %v4470, 0.6931472
      %v4472 = vmul.f32 -0.5, %v3675
      %v4473 = vadd.f32 %v4472, 1.0
      %v4474 = vmul.f32 %v4473, %v3675
      %v4475 = vand.u32 2147483647, %v3675
      %vm4476 = vcmp.lt.f32.partialorder %v4475, 0.0004427343
      %v4477 = vsel %vm4476, %v4474, %v4471
      %v4478 = vadd.f32 %v3677, 1.0
      %v4479 = vlog2.pop %v4478
      %v4480 = vmul.f32 %v4479, 0.6931472
      %v4481 = vmul.f32 -0.5, %v3677
      %v4482 = vadd.f32 %v4481, 1.0
      %v4483 = vmul.f32 %v4482, %v3677
      %v4484 = vand.u32 2147483647, %v3677
      %vm4485 = vcmp.lt.f32.partialorder %v4484, 0.0004427343
      %v4486 = vsel %vm4485, %v4483, %v4480
      %v4487 = vadd.f32 %v3679, 1.0
      %v4488 = vlog2.pop %v4487
      %v4489 = vmul.f32 %v4488, 0.6931472
      %v4490 = vmul.f32 -0.5, %v3679
      %v4491 = vadd.f32 %v4490, 1.0
      %v4492 = vmul.f32 %v4491, %v3679
      %v4493 = vand.u32 2147483647, %v3679
      %vm4494 = vcmp.lt.f32.partialorder %v4493, 0.0004427343
      %v4495 = vsel %vm4494, %v4492, %v4489
      %v4496 = vadd.f32 %v3681, 1.0
      %v4497 = vlog2.pop %v4496
      %v4498 = vmul.f32 %v4497, 0.6931472
      %v4499 = vmul.f32 -0.5, %v3681
      %v4500 = vadd.f32 %v4499, 1.0
      %v4501 = vmul.f32 %v4500, %v3681
      %v4502 = vand.u32 2147483647, %v3681
      %vm4503 = vcmp.lt.f32.partialorder %v4502, 0.0004427343
      %v4504 = vsel %vm4503, %v4501, %v4498
      %v4505 = vadd.f32 %v3683, 1.0
      %v4506 = vlog2.pop %v4505
      %v4507 = vmul.f32 %v4506, 0.6931472
      %v4508 = vmul.f32 -0.5, %v3683
      %v4509 = vadd.f32 %v4508, 1.0
      %v4510 = vmul.f32 %v4509, %v3683
      %v4511 = vand.u32 2147483647, %v3683
      %vm4512 = vcmp.lt.f32.partialorder %v4511, 0.0004427343
      %v4513 = vsel %vm4512, %v4510, %v4507
      %v4514 = vadd.f32 %v3685, 1.0
      %v4515 = vlog2.pop %v4514
      %v4516 = vmul.f32 %v4515, 0.6931472
      %v4517 = vmul.f32 -0.5, %v3685
      %v4518 = vadd.f32 %v4517, 1.0
      %v4519 = vmul.f32 %v4518, %v3685
      %v4520 = vand.u32 2147483647, %v3685
      %vm4521 = vcmp.lt.f32.partialorder %v4520, 0.0004427343
      %v4522 = vsel %vm4521, %v4519, %v4516
      %v4523 = vadd.f32 %v3687, 1.0
      %v4524 = vlog2.pop %v4523
      %v4525 = vmul.f32 %v4524, 0.6931472
      %v4526 = vmul.f32 -0.5, %v3687
      %v4527 = vadd.f32 %v4526, 1.0
      %v4528 = vmul.f32 %v4527, %v3687
      %v4529 = vand.u32 2147483647, %v3687
      %vm4530 = vcmp.lt.f32.partialorder %v4529, 0.0004427343
      %v4531 = vsel %vm4530, %v4528, %v4525
      %v4532 = vadd.f32 %v3689, 1.0
      %v4533 = vlog2.pop %v4532
      %v4534 = vmul.f32 %v4533, 0.6931472
      %v4535 = vmul.f32 -0.5, %v3689
      %v4536 = vadd.f32 %v4535, 1.0
      %v4537 = vmul.f32 %v4536, %v3689
      %v4538 = vand.u32 2147483647, %v3689
      %vm4539 = vcmp.lt.f32.partialorder %v4538, 0.0004427343
      %v4540 = vsel %vm4539, %v4537, %v4534
      %v4541 = vadd.f32 %v3691, 1.0
      %v4542 = vlog2.pop %v4541
      %v4543 = vmul.f32 %v4542, 0.6931472
      %v4544 = vmul.f32 -0.5, %v3691
      %v4545 = vadd.f32 %v4544, 1.0
      %v4546 = vmul.f32 %v4545, %v3691
      %v4547 = vand.u32 2147483647, %v3691
      %vm4548 = vcmp.lt.f32.partialorder %v4547, 0.0004427343
      %v4549 = vsel %vm4548, %v4546, %v4543
      %v4550 = vadd.f32 %v3693, 1.0
      %v4551 = vlog2.pop %v4550
      %v4552 = vmul.f32 %v4551, 0.6931472
      %v4553 = vmul.f32 -0.5, %v3693
      %v4554 = vadd.f32 %v4553, 1.0
      %v4555 = vmul.f32 %v4554, %v3693
      %v4556 = vand.u32 2147483647, %v3693
      %vm4557 = vcmp.lt.f32.partialorder %v4556, 0.0004427343
      %v4558 = vsel %vm4557, %v4555, %v4552
      %v4559 = vadd.f32 %v3695, 1.0
      %v4560 = vlog2.pop %v4559
      %v4561 = vmul.f32 %v4560, 0.6931472
      %v4562 = vmul.f32 -0.5, %v3695
      %v4563 = vadd.f32 %v4562, 1.0
      %v4564 = vmul.f32 %v4563, %v3695
      %v4565 = vand.u32 2147483647, %v3695
      %vm4566 = vcmp.lt.f32.partialorder %v4565, 0.0004427343
      %v4567 = vsel %vm4566, %v4564, %v4561
      %v4568 = vadd.f32 %v3697, 1.0
      %v4569 = vlog2.pop %v4568
      %v4570 = vmul.f32 %v4569, 0.6931472
      %v4571 = vmul.f32 -0.5, %v3697
      %v4572 = vadd.f32 %v4571, 1.0
      %v4573 = vmul.f32 %v4572, %v3697
      %v4574 = vand.u32 2147483647, %v3697
      %vm4575 = vcmp.lt.f32.partialorder %v4574, 0.0004427343
      %v4576 = vsel %vm4575, %v4573, %v4570
      %v4577 = vadd.f32 %v3699, 1.0
      %v4578 = vlog2.pop %v4577
      %v4579 = vmul.f32 %v4578, 0.6931472
      %v4580 = vmul.f32 -0.5, %v3699
      %v4581 = vadd.f32 %v4580, 1.0
      %v4582 = vmul.f32 %v4581, %v3699
      %v4583 = vand.u32 2147483647, %v3699
      %vm4584 = vcmp.lt.f32.partialorder %v4583, 0.0004427343
      %v4585 = vsel %vm4584, %v4582, %v4579
      %v4586 = vadd.f32 %v3701, 1.0
      %v4587 = vlog2.pop %v4586
      %v4588 = vmul.f32 %v4587, 0.6931472
      %v4589 = vmul.f32 -0.5, %v3701
      %v4590 = vadd.f32 %v4589, 1.0
      %v4591 = vmul.f32 %v4590, %v3701
      %v4592 = vand.u32 2147483647, %v3701
      %vm4593 = vcmp.lt.f32.partialorder %v4592, 0.0004427343
      %v4594 = vsel %vm4593, %v4591, %v4588
      %v4595 = vadd.f32 %v3703, 1.0
      %v4596 = vlog2.pop %v4595
      %v4597 = vmul.f32 %v4596, 0.6931472
      %v4598 = vmul.f32 -0.5, %v3703
      %v4599 = vadd.f32 %v4598, 1.0
      %v4600 = vmul.f32 %v4599, %v3703
      %v4601 = vand.u32 2147483647, %v3703
      %vm4602 = vcmp.lt.f32.partialorder %v4601, 0.0004427343
      %v4603 = vsel %vm4602, %v4600, %v4597
      %v4604 = vadd.f32 %v3705, 1.0
      %v4605 = vlog2.pop %v4604
      %v4606 = vmul.f32 %v4605, 0.6931472
      %v4607 = vmul.f32 -0.5, %v3705
      %v4608 = vadd.f32 %v4607, 1.0
      %v4609 = vmul.f32 %v4608, %v3705
      %v4610 = vand.u32 2147483647, %v3705
      %vm4611 = vcmp.lt.f32.partialorder %v4610, 0.0004427343
      %v4612 = vsel %vm4611, %v4609, %v4606
      %v4613 = vadd.f32 %v3707, 1.0
      %v4614 = vlog2.pop %v4613
      %v4615 = vmul.f32 %v4614, 0.6931472
      %v4616 = vmul.f32 -0.5, %v3707
      %v4617 = vadd.f32 %v4616, 1.0
      %v4618 = vmul.f32 %v4617, %v3707
      %v4619 = vand.u32 2147483647, %v3707
      %vm4620 = vcmp.lt.f32.partialorder %v4619, 0.0004427343
      %v4621 = vsel %vm4620, %v4618, %v4615
      %v4622 = vadd.f32 %v3709, 1.0
      %v4623 = vlog2.pop %v4622
      %v4624 = vmul.f32 %v4623, 0.6931472
      %v4625 = vmul.f32 -0.5, %v3709
      %v4626 = vadd.f32 %v4625, 1.0
      %v4627 = vmul.f32 %v4626, %v3709
      %v4628 = vand.u32 2147483647, %v3709
      %vm4629 = vcmp.lt.f32.partialorder %v4628, 0.0004427343
      %v4630 = vsel %vm4629, %v4627, %v4624
      %v4631 = vadd.f32 %v3711, 1.0
      %v4632 = vlog2.pop %v4631
      %v4633 = vmul.f32 %v4632, 0.6931472
      %v4634 = vmul.f32 -0.5, %v3711
      %v4635 = vadd.f32 %v4634, 1.0
      %v4636 = vmul.f32 %v4635, %v3711
      %v4637 = vand.u32 2147483647, %v3711
      %vm4638 = vcmp.lt.f32.partialorder %v4637, 0.0004427343
      %v4639 = vsel %vm4638, %v4636, %v4633
      %v4640 = vadd.f32 %v3713, 1.0
      %v4641 = vlog2.pop %v4640
      %v4642 = vmul.f32 %v4641, 0.6931472
      %v4643 = vmul.f32 -0.5, %v3713
      %v4644 = vadd.f32 %v4643, 1.0
      %v4645 = vmul.f32 %v4644, %v3713
      %v4646 = vand.u32 2147483647, %v3713
      %vm4647 = vcmp.lt.f32.partialorder %v4646, 0.0004427343
      %v4648 = vsel %vm4647, %v4645, %v4642
      %v4649 = vadd.f32 %v3715, 1.0
      %v4650 = vlog2.pop %v4649
      %v4651 = vmul.f32 %v4650, 0.6931472
      %v4652 = vmul.f32 -0.5, %v3715
      %v4653 = vadd.f32 %v4652, 1.0
      %v4654 = vmul.f32 %v4653, %v3715
      %v4655 = vand.u32 2147483647, %v3715
      %vm4656 = vcmp.lt.f32.partialorder %v4655, 0.0004427343
      %v4657 = vsel %vm4656, %v4654, %v4651
      %v4658 = vadd.f32 %v3717, 1.0
      %v4659 = vlog2.pop %v4658
      %v4660 = vmul.f32 %v4659, 0.6931472
      %v4661 = vmul.f32 -0.5, %v3717
      %v4662 = vadd.f32 %v4661, 1.0
      %v4663 = vmul.f32 %v4662, %v3717
      %v4664 = vand.u32 2147483647, %v3717
      %vm4665 = vcmp.lt.f32.partialorder %v4664, 0.0004427343
      %v4666 = vsel %vm4665, %v4663, %v4660
      %v4667 = vadd.f32 %v3719, 1.0
      %v4668 = vlog2.pop %v4667
      %v4669 = vmul.f32 %v4668, 0.6931472
      %v4670 = vmul.f32 -0.5, %v3719
      %v4671 = vadd.f32 %v4670, 1.0
      %v4672 = vmul.f32 %v4671, %v3719
      %v4673 = vand.u32 2147483647, %v3719
      %vm4674 = vcmp.lt.f32.partialorder %v4673, 0.0004427343
      %v4675 = vsel %vm4674, %v4672, %v4669
      %v4676 = vadd.f32 %v3721, 1.0
      %v4677 = vlog2.pop %v4676
      %v4678 = vmul.f32 %v4677, 0.6931472
      %v4679 = vmul.f32 -0.5, %v3721
      %v4680 = vadd.f32 %v4679, 1.0
      %v4681 = vmul.f32 %v4680, %v3721
      %v4682 = vand.u32 2147483647, %v3721
      %vm4683 = vcmp.lt.f32.partialorder %v4682, 0.0004427343
      %v4684 = vsel %vm4683, %v4681, %v4678
      %v4685 = vadd.f32 %v3723, 1.0
      %v4686 = vlog2.pop %v4685
      %v4687 = vmul.f32 %v4686, 0.6931472
      %v4688 = vmul.f32 -0.5, %v3723
      %v4689 = vadd.f32 %v4688, 1.0
      %v4690 = vmul.f32 %v4689, %v3723
      %v4691 = vand.u32 2147483647, %v3723
      %vm4692 = vcmp.lt.f32.partialorder %v4691, 0.0004427343
      %v4693 = vsel %vm4692, %v4690, %v4687
      %v4694 = vadd.f32 %v3725, 1.0
      %v4695 = vlog2.pop %v4694
      %v4696 = vmul.f32 %v4695, 0.6931472
      %v4697 = vmul.f32 -0.5, %v3725
      %v4698 = vadd.f32 %v4697, 1.0
      %v4699 = vmul.f32 %v4698, %v3725
      %v4700 = vand.u32 2147483647, %v3725
      %vm4701 = vcmp.lt.f32.partialorder %v4700, 0.0004427343
      %v4702 = vsel %vm4701, %v4699, %v4696
      %v4703 = vadd.f32 %v3727, 1.0
      %v4704 = vlog2.pop %v4703
      %v4705 = vmul.f32 %v4704, 0.6931472
      %v4706 = vmul.f32 -0.5, %v3727
      %v4707 = vadd.f32 %v4706, 1.0
      %v4708 = vmul.f32 %v4707, %v3727
      %v4709 = vand.u32 2147483647, %v3727
      %vm4710 = vcmp.lt.f32.partialorder %v4709, 0.0004427343
      %v4711 = vsel %vm4710, %v4708, %v4705
      %v4712 = vadd.f32 %v3729, 1.0
      %v4713 = vlog2.pop %v4712
      %v4714 = vmul.f32 %v4713, 0.6931472
      %v4715 = vmul.f32 -0.5, %v3729
      %v4716 = vadd.f32 %v4715, 1.0
      %v4717 = vmul.f32 %v4716, %v3729
      %v4718 = vand.u32 2147483647, %v3729
      %vm4719 = vcmp.lt.f32.partialorder %v4718, 0.0004427343
      %v4720 = vsel %vm4719, %v4717, %v4714
      %v4721 = vadd.f32 %v3731, 1.0
      %v4722 = vlog2.pop %v4721
      %v4723 = vmul.f32 %v4722, 0.6931472
      %v4724 = vmul.f32 -0.5, %v3731
      %v4725 = vadd.f32 %v4724, 1.0
      %v4726 = vmul.f32 %v4725, %v3731
      %v4727 = vand.u32 2147483647, %v3731
      %vm4728 = vcmp.lt.f32.partialorder %v4727, 0.0004427343
      %v4729 = vsel %vm4728, %v4726, %v4723
      %v4730 = vadd.f32 %v3733, 1.0
      %v4731 = vlog2.pop %v4730
      %v4732 = vmul.f32 %v4731, 0.6931472
      %v4733 = vmul.f32 -0.5, %v3733
      %v4734 = vadd.f32 %v4733, 1.0
      %v4735 = vmul.f32 %v4734, %v3733
      %v4736 = vand.u32 2147483647, %v3733
      %vm4737 = vcmp.lt.f32.partialorder %v4736, 0.0004427343
      %v4738 = vsel %vm4737, %v4735, %v4732
      %v4739 = vadd.f32 %v3735, 1.0
      %v4740 = vlog2.pop %v4739
      %v4741 = vmul.f32 %v4740, 0.6931472
      %v4742 = vmul.f32 -0.5, %v3735
      %v4743 = vadd.f32 %v4742, 1.0
      %v4744 = vmul.f32 %v4743, %v3735
      %v4745 = vand.u32 2147483647, %v3735
      %vm4746 = vcmp.lt.f32.partialorder %v4745, 0.0004427343
      %v4747 = vsel %vm4746, %v4744, %v4741
      %v4748 = vadd.f32 %v3737, 1.0
      %v4749 = vlog2.pop %v4748
      %v4750 = vmul.f32 %v4749, 0.6931472
      %v4751 = vmul.f32 -0.5, %v3737
      %v4752 = vadd.f32 %v4751, 1.0
      %v4753 = vmul.f32 %v4752, %v3737
      %v4754 = vand.u32 2147483647, %v3737
      %vm4755 = vcmp.lt.f32.partialorder %v4754, 0.0004427343
      %v4756 = vsel %vm4755, %v4753, %v4750
      %v4757 = vadd.f32 %v3739, 1.0
      %v4758 = vlog2.pop %v4757
      %v4759 = vmul.f32 %v4758, 0.6931472
      %v4760 = vmul.f32 -0.5, %v3739
      %v4761 = vadd.f32 %v4760, 1.0
      %v4762 = vmul.f32 %v4761, %v3739
      %v4763 = vand.u32 2147483647, %v3739
      %vm4764 = vcmp.lt.f32.partialorder %v4763, 0.0004427343
      %v4765 = vsel %vm4764, %v4762, %v4759
      %v4766 = vadd.f32 %v3741, 1.0
      %v4767 = vlog2.pop %v4766
      %v4768 = vmul.f32 %v4767, 0.6931472
      %v4769 = vmul.f32 -0.5, %v3741
      %v4770 = vadd.f32 %v4769, 1.0
      %v4771 = vmul.f32 %v4770, %v3741
      %v4772 = vand.u32 2147483647, %v3741
      %vm4773 = vcmp.lt.f32.partialorder %v4772, 0.0004427343
      %v4774 = vsel %vm4773, %v4771, %v4768
      %v4775 = vadd.f32 %v3743, 1.0
      %v4776 = vlog2.pop %v4775
      %v4777 = vmul.f32 %v4776, 0.6931472
      %v4778 = vmul.f32 -0.5, %v3743
      %v4779 = vadd.f32 %v4778, 1.0
      %v4780 = vmul.f32 %v4779, %v3743
      %v4781 = vand.u32 2147483647, %v3743
      %vm4782 = vcmp.lt.f32.partialorder %v4781, 0.0004427343
      %v4783 = vsel %vm4782, %v4780, %v4777
      %v4784 = vadd.f32 %v3745, 1.0
      %v4785 = vlog2.pop %v4784
      %v4786 = vmul.f32 %v4785, 0.6931472
      %v4787 = vmul.f32 -0.5, %v3745
      %v4788 = vadd.f32 %v4787, 1.0
      %v4789 = vmul.f32 %v4788, %v3745
      %v4790 = vand.u32 2147483647, %v3745
      %vm4791 = vcmp.lt.f32.partialorder %v4790, 0.0004427343
      %v4792 = vsel %vm4791, %v4789, %v4786
      %v4793 = vadd.f32 %v3747, 1.0
      %v4794 = vlog2.pop %v4793
      %v4795 = vmul.f32 %v4794, 0.6931472
      %v4796 = vmul.f32 -0.5, %v3747
      %v4797 = vadd.f32 %v4796, 1.0
      %v4798 = vmul.f32 %v4797, %v3747
      %v4799 = vand.u32 2147483647, %v3747
      %vm4800 = vcmp.lt.f32.partialorder %v4799, 0.0004427343
      %v4801 = vsel %vm4800, %v4798, %v4795
      %v4802 = vadd.f32 %v3749, 1.0
      %v4803 = vlog2.pop %v4802
      %v4804 = vmul.f32 %v4803, 0.6931472
      %v4805 = vmul.f32 -0.5, %v3749
      %v4806 = vadd.f32 %v4805, 1.0
      %v4807 = vmul.f32 %v4806, %v3749
      %v4808 = vand.u32 2147483647, %v3749
      %vm4809 = vcmp.lt.f32.partialorder %v4808, 0.0004427343
      %v4810 = vsel %vm4809, %v4807, %v4804
      %v4811 = vadd.f32 %v3751, 1.0
      %v4812 = vlog2.pop %v4811
      %v4813 = vmul.f32 %v4812, 0.6931472
      %v4814 = vmul.f32 -0.5, %v3751
      %v4815 = vadd.f32 %v4814, 1.0
      %v4816 = vmul.f32 %v4815, %v3751
      %v4817 = vand.u32 2147483647, %v3751
      %vm4818 = vcmp.lt.f32.partialorder %v4817, 0.0004427343
      %v4819 = vsel %vm4818, %v4816, %v4813
      %v4820 = vadd.f32 %v3753, 1.0
      %v4821 = vlog2.pop %v4820
      %v4822 = vmul.f32 %v4821, 0.6931472
      %v4823 = vmul.f32 -0.5, %v3753
      %v4824 = vadd.f32 %v4823, 1.0
      %v4825 = vmul.f32 %v4824, %v3753
      %v4826 = vand.u32 2147483647, %v3753
      %vm4827 = vcmp.lt.f32.partialorder %v4826, 0.0004427343
      %v4828 = vsel %vm4827, %v4825, %v4822
      %v4829 = vadd.f32 %v3755, 1.0
      %v4830 = vlog2.pop %v4829
      %v4831 = vmul.f32 %v4830, 0.6931472
      %v4832 = vmul.f32 -0.5, %v3755
      %v4833 = vadd.f32 %v4832, 1.0
      %v4834 = vmul.f32 %v4833, %v3755
      %v4835 = vand.u32 2147483647, %v3755
      %vm4836 = vcmp.lt.f32.partialorder %v4835, 0.0004427343
      %v4837 = vsel %vm4836, %v4834, %v4831
      %v4838 = vadd.f32 %v3757, 1.0
      %v4839 = vlog2.pop %v4838
      %v4840 = vmul.f32 %v4839, 0.6931472
      %v4841 = vmul.f32 -0.5, %v3757
      %v4842 = vadd.f32 %v4841, 1.0
      %v4843 = vmul.f32 %v4842, %v3757
      %v4844 = vand.u32 2147483647, %v3757
      %vm4845 = vcmp.lt.f32.partialorder %v4844, 0.0004427343
      %v4846 = vsel %vm4845, %v4843, %v4840
      %v4847 = vadd.f32 %v3759, 1.0
      %v4848 = vlog2.pop %v4847
      %v4849 = vmul.f32 %v4848, 0.6931472
      %v4850 = vmul.f32 -0.5, %v3759
      %v4851 = vadd.f32 %v4850, 1.0
      %v4852 = vmul.f32 %v4851, %v3759
      %v4853 = vand.u32 2147483647, %v3759
      %vm4854 = vcmp.lt.f32.partialorder %v4853, 0.0004427343
      %v4855 = vsel %vm4854, %v4852, %v4849
      %v4856 = vadd.f32 %v3761, 1.0
      %v4857 = vlog2.pop %v4856
      %v4858 = vmul.f32 %v4857, 0.6931472
      %v4859 = vmul.f32 -0.5, %v3761
      %v4860 = vadd.f32 %v4859, 1.0
      %v4861 = vmul.f32 %v4860, %v3761
      %v4862 = vand.u32 2147483647, %v3761
      %vm4863 = vcmp.lt.f32.partialorder %v4862, 0.0004427343
      %v4864 = vsel %vm4863, %v4861, %v4858
      %v4865 = vadd.f32 %v3763, 1.0
      %v4866 = vlog2.pop %v4865
      %v4867 = vmul.f32 %v4866, 0.6931472
      %v4868 = vmul.f32 -0.5, %v3763
      %v4869 = vadd.f32 %v4868, 1.0
      %v4870 = vmul.f32 %v4869, %v3763
      %v4871 = vand.u32 2147483647, %v3763
      %vm4872 = vcmp.lt.f32.partialorder %v4871, 0.0004427343
      %v4873 = vsel %vm4872, %v4870, %v4867
      %v4874 = vadd.f32 %v3765, 1.0
      %v4875 = vlog2.pop %v4874
      %v4876 = vmul.f32 %v4875, 0.6931472
      %v4877 = vmul.f32 -0.5, %v3765
      %v4878 = vadd.f32 %v4877, 1.0
      %v4879 = vmul.f32 %v4878, %v3765
      %v4880 = vand.u32 2147483647, %v3765
      %vm4881 = vcmp.lt.f32.partialorder %v4880, 0.0004427343
      %v4882 = vsel %vm4881, %v4879, %v4876
      %v4883 = vadd.f32 %v3767, 1.0
      %v4884 = vlog2.pop %v4883
      %v4885 = vmul.f32 %v4884, 0.6931472
      %v4886 = vmul.f32 -0.5, %v3767
      %v4887 = vadd.f32 %v4886, 1.0
      %v4888 = vmul.f32 %v4887, %v3767
      %v4889 = vand.u32 2147483647, %v3767
      %vm4890 = vcmp.lt.f32.partialorder %v4889, 0.0004427343
      %v4891 = vsel %vm4890, %v4888, %v4885
      %v4892 = vadd.f32 %v3769, 1.0
      %v4893 = vlog2.pop %v4892
      %v4894 = vmul.f32 %v4893, 0.6931472
      %v4895 = vmul.f32 -0.5, %v3769
      %v4896 = vadd.f32 %v4895, 1.0
      %v4897 = vmul.f32 %v4896, %v3769
      %v4898 = vand.u32 2147483647, %v3769
      %vm4899 = vcmp.lt.f32.partialorder %v4898, 0.0004427343
      %v4900 = vsel %vm4899, %v4897, %v4894
      %v4901 = vadd.f32 %v3771, 1.0
      %v4902 = vlog2.pop %v4901
      %v4903 = vmul.f32 %v4902, 0.6931472
      %v4904 = vmul.f32 -0.5, %v3771
      %v4905 = vadd.f32 %v4904, 1.0
      %v4906 = vmul.f32 %v4905, %v3771
      %v4907 = vand.u32 2147483647, %v3771
      %vm4908 = vcmp.lt.f32.partialorder %v4907, 0.0004427343
      %v4909 = vsel %vm4908, %v4906, %v4903
      %v4910 = vadd.f32 %v3773, 1.0
      %v4911 = vlog2.pop %v4910
      %v4912 = vmul.f32 %v4911, 0.6931472
      %v4913 = vmul.f32 -0.5, %v3773
      %v4914 = vadd.f32 %v4913, 1.0
      %v4915 = vmul.f32 %v4914, %v3773
      %v4916 = vand.u32 2147483647, %v3773
      %vm4917 = vcmp.lt.f32.partialorder %v4916, 0.0004427343
      %v4918 = vsel %vm4917, %v4915, %v4912
      %v4919 = vadd.f32 %v3775, 1.0
      %v4920 = vlog2.pop %v4919
      %v4921 = vmul.f32 %v4920, 0.6931472
      %v4922 = vmul.f32 -0.5, %v3775
      %v4923 = vadd.f32 %v4922, 1.0
      %v4924 = vmul.f32 %v4923, %v3775
      %v4925 = vand.u32 2147483647, %v3775
      %vm4926 = vcmp.lt.f32.partialorder %v4925, 0.0004427343
      %v4927 = vsel %vm4926, %v4924, %v4921
      %v4928 = vadd.f32 %v2880, %v3784
      %v4929 = vadd.f32 %v2881, %v3793
      %v4930 = vadd.f32 %v2882, %v3802
      %v4931 = vadd.f32 %v2883, %v3811
      %v4932 = vadd.f32 %v2884, %v3820
      %v4933 = vadd.f32 %v2885, %v3829
      %v4934 = vadd.f32 %v2886, %v3838
      %v4935 = vadd.f32 %v2887, %v3847
      %v4936 = vadd.f32 %v2888, %v3856
      %v4937 = vadd.f32 %v2889, %v3865
      %v4938 = vadd.f32 %v2890, %v3874
      %v4939 = vadd.f32 %v2891, %v3883
      %v4940 = vadd.f32 %v2892, %v3892
      %v4941 = vadd.f32 %v2893, %v3901
      %v4942 = vadd.f32 %v2894, %v3910
      %v4943 = vadd.f32 %v2895, %v3919
      %v4944 = vadd.f32 %v2896, %v3928
      %v4945 = vadd.f32 %v2897, %v3937
      %v4946 = vadd.f32 %v2898, %v3946
      %v4947 = vadd.f32 %v2899, %v3955
      %v4948 = vadd.f32 %v2900, %v3964
      %v4949 = vadd.f32 %v2901, %v3973
      %v4950 = vadd.f32 %v2902, %v3982
      %v4951 = vadd.f32 %v2903, %v3991
      %v4952 = vadd.f32 %v2904, %v4000
      %v4953 = vadd.f32 %v2905, %v4009
      %v4954 = vadd.f32 %v2906, %v4018
      %v4955 = vadd.f32 %v2907, %v4027
      %v4956 = vadd.f32 %v2908, %v4036
      %v4957 = vadd.f32 %v2909, %v4045
      %v4958 = vadd.f32 %v2910, %v4054
      %v4959 = vadd.f32 %v2911, %v4063
      %v4960 = vadd.f32 %v2912, %v4072
      %v4961 = vadd.f32 %v2913, %v4081
      %v4962 = vadd.f32 %v2914, %v4090
      %v4963 = vadd.f32 %v2915, %v4099
      %v4964 = vadd.f32 %v2916, %v4108
      %v4965 = vadd.f32 %v2917, %v4117
      %v4966 = vadd.f32 %v2918, %v4126
      %v4967 = vadd.f32 %v2919, %v4135
      %v4968 = vadd.f32 %v2920, %v4144
      %v4969 = vadd.f32 %v2921, %v4153
      %v4970 = vadd.f32 %v2922, %v4162
      %v4971 = vadd.f32 %v2923, %v4171
      %v4972 = vadd.f32 %v2924, %v4180
      %v4973 = vadd.f32 %v2925, %v4189
      %v4974 = vadd.f32 %v2926, %v4198
      %v4975 = vadd.f32 %v2927, %v4207
      %v4976 = vadd.f32 %v2928, %v4216
      %v4977 = vadd.f32 %v2929, %v4225
      %v4978 = vadd.f32 %v2930, %v4234
      %v4979 = vadd.f32 %v2931, %v4243
      %v4980 = vadd.f32 %v2932, %v4252
      %v4981 = vadd.f32 %v2933, %v4261
      %v4982 = vadd.f32 %v2934, %v4270
      %v4983 = vadd.f32 %v2935, %v4279
      %v4984 = vadd.f32 %v2936, %v4288
      %v4985 = vadd.f32 %v2937, %v4297
      %v4986 = vadd.f32 %v2938, %v4306
      %v4987 = vadd.f32 %v2939, %v4315
      %v4988 = vadd.f32 %v2940, %v4324
      %v4989 = vadd.f32 %v2941, %v4333
      %v4990 = vadd.f32 %v2942, %v4342
      %v4991 = vadd.f32 %v2943, %v4351
      %v4992 = vadd.f32 %v2944, %v4360
      %v4993 = vadd.f32 %v2945, %v4369
      %v4994 = vadd.f32 %v2946, %v4378
      %v4995 = vadd.f32 %v2947, %v4387
      %v4996 = vadd.f32 %v2948, %v4396
      %v4997 = vadd.f32 %v2949, %v4405
      %v4998 = vadd.f32 %v2950, %v4414
      %v4999 = vadd.f32 %v2951, %v4423
      %v5000 = vadd.f32 %v2952, %v4432
      %v5001 = vadd.f32 %v2953, %v4441
      %v5002 = vadd.f32 %v2954, %v4450
      %v5003 = vadd.f32 %v2955, %v4459
      %v5004 = vadd.f32 %v2956, %v4468
      %v5005 = vadd.f32 %v2957, %v4477
      %v5006 = vadd.f32 %v2958, %v4486
      %v5007 = vadd.f32 %v2959, %v4495
      %v5008 = vadd.f32 %v2960, %v4504
      %v5009 = vadd.f32 %v2961, %v4513
      %v5010 = vadd.f32 %v2962, %v4522
      %v5011 = vadd.f32 %v2963, %v4531
      %v5012 = vadd.f32 %v2964, %v4540
      %v5013 = vadd.f32 %v2965, %v4549
      %v5014 = vadd.f32 %v2966, %v4558
      %v5015 = vadd.f32 %v2967, %v4567
      %v5016 = vadd.f32 %v2968, %v4576
      %v5017 = vadd.f32 %v2969, %v4585
      %v5018 = vadd.f32 %v2970, %v4594
      %v5019 = vadd.f32 %v2971, %v4603
      %v5020 = vadd.f32 %v2972, %v4612
      %v5021 = vadd.f32 %v2973, %v4621
      %v5022 = vadd.f32 %v2974, %v4630
      %v5023 = vadd.f32 %v2975, %v4639
      %v5024 = vadd.f32 %v2976, %v4648
      %v5025 = vadd.f32 %v2977, %v4657
      %v5026 = vadd.f32 %v2978, %v4666
      %v5027 = vadd.f32 %v2979, %v4675
      %v5028 = vadd.f32 %v2980, %v4684
      %v5029 = vadd.f32 %v2981, %v4693
      %v5030 = vadd.f32 %v2982, %v4702
      %v5031 = vadd.f32 %v2983, %v4711
      %v5032 = vadd.f32 %v2984, %v4720
      %v5033 = vadd.f32 %v2985, %v4729
      %v5034 = vadd.f32 %v2986, %v4738
      %v5035 = vadd.f32 %v2987, %v4747
      %v5036 = vadd.f32 %v2988, %v4756
      %v5037 = vadd.f32 %v2989, %v4765
      %v5038 = vadd.f32 %v2990, %v4774
      %v5039 = vadd.f32 %v2991, %v4783
      %v5040 = vadd.f32 %v2992, %v4792
      %v5041 = vadd.f32 %v2993, %v4801
      %v5042 = vadd.f32 %v2994, %v4810
      %v5043 = vadd.f32 %v2995, %v4819
      %v5044 = vadd.f32 %v2996, %v4828
      %v5045 = vadd.f32 %v2997, %v4837
      %v5046 = vadd.f32 %v2998, %v4846
      %v5047 = vadd.f32 %v2999, %v4855
      %v5048 = vadd.f32 %v3000, %v4864
      %v5049 = vadd.f32 %v3001, %v4873
      %v5050 = vadd.f32 %v3002, %v4882
      %v5051 = vadd.f32 %v3003, %v4891
      %v5052 = vadd.f32 %v3004, %v4900
      %v5053 = vadd.f32 %v3005, %v4909
      %v5054 = vadd.f32 %v3006, %v4918
      %v5055 = vadd.f32 %v3007, %v4927
      %v5056 = vsel %vm3008, %v3136, %v4928
      %v5057 = vsel %vm3009, %v3137, %v4929
      %v5058 = vsel %vm3010, %v3138, %v4930
      %v5059 = vsel %vm3011, %v3139, %v4931
      %v5060 = vsel %vm3012, %v3140, %v4932
      %v5061 = vsel %vm3013, %v3141, %v4933
      %v5062 = vsel %vm3014, %v3142, %v4934
      %v5063 = vsel %vm3015, %v3143, %v4935
      %v5064 = vsel %vm3016, %v3144, %v4936
      %v5065 = vsel %vm3017, %v3145, %v4937
      %v5066 = vsel %vm3018, %v3146, %v4938
      %v5067 = vsel %vm3019, %v3147, %v4939
      %v5068 = vsel %vm3020, %v3148, %v4940
      %v5069 = vsel %vm3021, %v3149, %v4941
      %v5070 = vsel %vm3022, %v3150, %v4942
      %v5071 = vsel %vm3023, %v3151, %v4943
      %v5072 = vsel %vm3024, %v3152, %v4944
      %v5073 = vsel %vm3025, %v3153, %v4945
      %v5074 = vsel %vm3026, %v3154, %v4946
      %v5075 = vsel %vm3027, %v3155, %v4947
      %v5076 = vsel %vm3028, %v3156, %v4948
      %v5077 = vsel %vm3029, %v3157, %v4949
      %v5078 = vsel %vm3030, %v3158, %v4950
      %v5079 = vsel %vm3031, %v3159, %v4951
      %v5080 = vsel %vm3032, %v3160, %v4952
      %v5081 = vsel %vm3033, %v3161, %v4953
      %v5082 = vsel %vm3034, %v3162, %v4954
      %v5083 = vsel %vm3035, %v3163, %v4955
      %v5084 = vsel %vm3036, %v3164, %v4956
      %v5085 = vsel %vm3037, %v3165, %v4957
      %v5086 = vsel %vm3038, %v3166, %v4958
      %v5087 = vsel %vm3039, %v3167, %v4959
      %v5088 = vsel %vm3040, %v3168, %v4960
      %v5089 = vsel %vm3041, %v3169, %v4961
      %v5090 = vsel %vm3042, %v3170, %v4962
      %v5091 = vsel %vm3043, %v3171, %v4963
      %v5092 = vsel %vm3044, %v3172, %v4964
      %v5093 = vsel %vm3045, %v3173, %v4965
      %v5094 = vsel %vm3046, %v3174, %v4966
      %v5095 = vsel %vm3047, %v3175, %v4967
      %v5096 = vsel %vm3048, %v3176, %v4968
      %v5097 = vsel %vm3049, %v3177, %v4969
      %v5098 = vsel %vm3050, %v3178, %v4970
      %v5099 = vsel %vm3051, %v3179, %v4971
      %v5100 = vsel %vm3052, %v3180, %v4972
      %v5101 = vsel %vm3053, %v3181, %v4973
      %v5102 = vsel %vm3054, %v3182, %v4974
      %v5103 = vsel %vm3055, %v3183, %v4975
      %v5104 = vsel %vm3056, %v3184, %v4976
      %v5105 = vsel %vm3057, %v3185, %v4977
      %v5106 = vsel %vm3058, %v3186, %v4978
      %v5107 = vsel %vm3059, %v3187, %v4979
      %v5108 = vsel %vm3060, %v3188, %v4980
      %v5109 = vsel %vm3061, %v3189, %v4981
      %v5110 = vsel %vm3062, %v3190, %v4982
      %v5111 = vsel %vm3063, %v3191, %v4983
      %v5112 = vsel %vm3064, %v3192, %v4984
      %v5113 = vsel %vm3065, %v3193, %v4985
      %v5114 = vsel %vm3066, %v3194, %v4986
      %v5115 = vsel %vm3067, %v3195, %v4987
      %v5116 = vsel %vm3068, %v3196, %v4988
      %v5117 = vsel %vm3069, %v3197, %v4989
      %v5118 = vsel %vm3070, %v3198, %v4990
      %v5119 = vsel %vm3071, %v3199, %v4991
      %v5120 = vsel %vm3072, %v3200, %v4992
      %v5121 = vsel %vm3073, %v3201, %v4993
      %v5122 = vsel %vm3074, %v3202, %v4994
      %v5123 = vsel %vm3075, %v3203, %v4995
      %v5124 = vsel %vm3076, %v3204, %v4996
      %v5125 = vsel %vm3077, %v3205, %v4997
      %v5126 = vsel %vm3078, %v3206, %v4998
      %v5127 = vsel %vm3079, %v3207, %v4999
      %v5128 = vsel %vm3080, %v3208, %v5000
      %v5129 = vsel %vm3081, %v3209, %v5001
      %v5130 = vsel %vm3082, %v3210, %v5002
      %v5131 = vsel %vm3083, %v3211, %v5003
      %v5132 = vsel %vm3084, %v3212, %v5004
      %v5133 = vsel %vm3085, %v3213, %v5005
      %v5134 = vsel %vm3086, %v3214, %v5006
      %v5135 = vsel %vm3087, %v3215, %v5007
      %v5136 = vsel %vm3088, %v3216, %v5008
      %v5137 = vsel %vm3089, %v3217, %v5009
      %v5138 = vsel %vm3090, %v3218, %v5010
      %v5139 = vsel %vm3091, %v3219, %v5011
      %v5140 = vsel %vm3092, %v3220, %v5012
      %v5141 = vsel %vm3093, %v3221, %v5013
      %v5142 = vsel %vm3094, %v3222, %v5014
      %v5143 = vsel %vm3095, %v3223, %v5015
      %v5144 = vsel %vm3096, %v3224, %v5016
      %v5145 = vsel %vm3097, %v3225, %v5017
      %v5146 = vsel %vm3098, %v3226, %v5018
      %v5147 = vsel %vm3099, %v3227, %v5019
      %v5148 = vsel %vm3100, %v3228, %v5020
      %v5149 = vsel %vm3101, %v3229, %v5021
      %v5150 = vsel %vm3102, %v3230, %v5022
      %v5151 = vsel %vm3103, %v3231, %v5023
      %v5152 = vsel %vm3104, %v3232, %v5024
      %v5153 = vsel %vm3105, %v3233, %v5025
      %v5154 = vsel %vm3106, %v3234, %v5026
      %v5155 = vsel %vm3107, %v3235, %v5027
      %v5156 = vsel %vm3108, %v3236, %v5028
      %v5157 = vsel %vm3109, %v3237, %v5029
      %v5158 = vsel %vm3110, %v3238, %v5030
      %v5159 = vsel %vm3111, %v3239, %v5031
      %v5160 = vsel %vm3112, %v3240, %v5032
      %v5161 = vsel %vm3113, %v3241, %v5033
      %v5162 = vsel %vm3114, %v3242, %v5034
      %v5163 = vsel %vm3115, %v3243, %v5035
      %v5164 = vsel %vm3116, %v3244, %v5036
      %v5165 = vsel %vm3117, %v3245, %v5037
      %v5166 = vsel %vm3118, %v3246, %v5038
      %v5167 = vsel %vm3119, %v3247, %v5039
      %v5168 = vsel %vm3120, %v3248, %v5040
      %v5169 = vsel %vm3121, %v3249, %v5041
      %v5170 = vsel %vm3122, %v3250, %v5042
      %v5171 = vsel %vm3123, %v3251, %v5043
      %v5172 = vsel %vm3124, %v3252, %v5044
      %v5173 = vsel %vm3125, %v3253, %v5045
      %v5174 = vsel %vm3126, %v3254, %v5046
      %v5175 = vsel %vm3127, %v3255, %v5047
      %v5176 = vsel %vm3128, %v3256, %v5048
      %v5177 = vsel %vm3129, %v3257, %v5049
      %v5178 = vsel %vm3130, %v3258, %v5050
      %v5179 = vsel %vm3131, %v3259, %v5051
      %v5180 = vsel %vm3132, %v3260, %v5052
      %v5181 = vsel %vm3133, %v3261, %v5053
      %v5182 = vsel %vm3134, %v3262, %v5054
      %v5183 = vsel %vm3135, %v3263, %v5055
      %v5184 = vld [vmem:[%s3] sm:$0xff]
      %v5185 = vld [vmem:[%s3 + $0x8] sm:$0xff]
      %v5186 = vld [vmem:[%s3 + $0x10] sm:$0xff]
      %v5187 = vld [vmem:[%s3 + $0x18] sm:$0xff]
      %v5188 = vld [vmem:[%s3 + $0x20] sm:$0xff]
      %v5189 = vld [vmem:[%s3 + $0x28] sm:$0xff]
      %v5190 = vld [vmem:[%s3 + $0x30] sm:$0xff]
      %v5191 = vld [vmem:[%s3 + $0x38] sm:$0xff]
      %v5192 = vld [vmem:[%s4] sm:$0x1]
      %v5194 = vlaneseq
      %v5195 = vshrl.u32 %v5194, 7
      %v5196 = vsub.s32 0, %v5195
      %v5197 = vrot.slane %v5192, %v5196
      %vm5199 = vcmask 523264
      %v5201 = vsel %vm5199, %v5056, 0
      %v5204 = vsel %vm5199, %v5057, 0
      %v5207 = vsel %vm5199, %v5058, 0
      %v5210 = vsel %vm5199, %v5059, 0
      %v5213 = vsel %vm5199, %v5060, 0
      %v5216 = vsel %vm5199, %v5061, 0
      %v5219 = vsel %vm5199, %v5062, 0
      %v5222 = vsel %vm5199, %v5063, 0
      %v5225 = vsel %vm5199, %v5064, 0
      %v5228 = vsel %vm5199, %v5065, 0
      %v5231 = vsel %vm5199, %v5066, 0
      %v5234 = vsel %vm5199, %v5067, 0
      %v5237 = vsel %vm5199, %v5068, 0
      %v5240 = vsel %vm5199, %v5069, 0
      %v5243 = vsel %vm5199, %v5070, 0
      %v5246 = vsel %vm5199, %v5071, 0
      %v5249 = vsel %vm5199, %v5072, 0
      %v5252 = vsel %vm5199, %v5073, 0
      %v5255 = vsel %vm5199, %v5074, 0
      %v5258 = vsel %vm5199, %v5075, 0
      %v5261 = vsel %vm5199, %v5076, 0
      %v5264 = vsel %vm5199, %v5077, 0
      %v5267 = vsel %vm5199, %v5078, 0
      %v5270 = vsel %vm5199, %v5079, 0
      %v5273 = vsel %vm5199, %v5080, 0
      %v5276 = vsel %vm5199, %v5081, 0
      %v5279 = vsel %vm5199, %v5082, 0
      %v5282 = vsel %vm5199, %v5083, 0
      %v5285 = vsel %vm5199, %v5084, 0
      %v5288 = vsel %vm5199, %v5085, 0
      %v5291 = vsel %vm5199, %v5086, 0
      %v5294 = vsel %vm5199, %v5087, 0
      %v5297 = vsel %vm5199, %v5088, 0
      %v5300 = vsel %vm5199, %v5089, 0
      %v5303 = vsel %vm5199, %v5090, 0
      %v5306 = vsel %vm5199, %v5091, 0
      %v5309 = vsel %vm5199, %v5092, 0
      %v5312 = vsel %vm5199, %v5093, 0
      %v5315 = vsel %vm5199, %v5094, 0
      %v5318 = vsel %vm5199, %v5095, 0
      %v5321 = vsel %vm5199, %v5096, 0
      %v5324 = vsel %vm5199, %v5097, 0
      %v5327 = vsel %vm5199, %v5098, 0
      %v5330 = vsel %vm5199, %v5099, 0
      %v5333 = vsel %vm5199, %v5100, 0
      %v5336 = vsel %vm5199, %v5101, 0
      %v5339 = vsel %vm5199, %v5102, 0
      %v5342 = vsel %vm5199, %v5103, 0
      %v5345 = vsel %vm5199, %v5104, 0
      %v5348 = vsel %vm5199, %v5105, 0
      %v5351 = vsel %vm5199, %v5106, 0
      %v5354 = vsel %vm5199, %v5107, 0
      %v5357 = vsel %vm5199, %v5108, 0
      %v5360 = vsel %vm5199, %v5109, 0
      %v5363 = vsel %vm5199, %v5110, 0
      %v5366 = vsel %vm5199, %v5111, 0
      %v5369 = vsel %vm5199, %v5112, 0
      %v5372 = vsel %vm5199, %v5113, 0
      %v5375 = vsel %vm5199, %v5114, 0
      %v5378 = vsel %vm5199, %v5115, 0
      %v5381 = vsel %vm5199, %v5116, 0
      %v5384 = vsel %vm5199, %v5117, 0
      %v5387 = vsel %vm5199, %v5118, 0
      %v5390 = vsel %vm5199, %v5119, 0
      %v5393 = vsel %vm5199, %v5120, 0
      %v5396 = vsel %vm5199, %v5121, 0
      %v5399 = vsel %vm5199, %v5122, 0
      %v5402 = vsel %vm5199, %v5123, 0
      %v5405 = vsel %vm5199, %v5124, 0
      %v5408 = vsel %vm5199, %v5125, 0
      %v5411 = vsel %vm5199, %v5126, 0
      %v5414 = vsel %vm5199, %v5127, 0
      %v5417 = vsel %vm5199, %v5128, 0
      %v5420 = vsel %vm5199, %v5129, 0
      %v5423 = vsel %vm5199, %v5130, 0
      %v5426 = vsel %vm5199, %v5131, 0
      %v5429 = vsel %vm5199, %v5132, 0
      %v5432 = vsel %vm5199, %v5133, 0
      %v5435 = vsel %vm5199, %v5134, 0
      %v5438 = vsel %vm5199, %v5135, 0
      %v5441 = vsel %vm5199, %v5136, 0
      %v5444 = vsel %vm5199, %v5137, 0
      %v5447 = vsel %vm5199, %v5138, 0
      %v5450 = vsel %vm5199, %v5139, 0
      %v5453 = vsel %vm5199, %v5140, 0
      %v5456 = vsel %vm5199, %v5141, 0
      %v5459 = vsel %vm5199, %v5142, 0
      %v5462 = vsel %vm5199, %v5143, 0
      %v5465 = vsel %vm5199, %v5144, 0
      %v5468 = vsel %vm5199, %v5145, 0
      %v5471 = vsel %vm5199, %v5146, 0
      %v5474 = vsel %vm5199, %v5147, 0
      %v5477 = vsel %vm5199, %v5148, 0
      %v5480 = vsel %vm5199, %v5149, 0
      %v5483 = vsel %vm5199, %v5150, 0
      %v5486 = vsel %vm5199, %v5151, 0
      %v5489 = vsel %vm5199, %v5152, 0
      %v5492 = vsel %vm5199, %v5153, 0
      %v5495 = vsel %vm5199, %v5154, 0
      %v5498 = vsel %vm5199, %v5155, 0
      %v5501 = vsel %vm5199, %v5156, 0
      %v5504 = vsel %vm5199, %v5157, 0
      %v5507 = vsel %vm5199, %v5158, 0
      %v5510 = vsel %vm5199, %v5159, 0
      %v5513 = vsel %vm5199, %v5160, 0
      %v5516 = vsel %vm5199, %v5161, 0
      %v5519 = vsel %vm5199, %v5162, 0
      %v5522 = vsel %vm5199, %v5163, 0
      %v5525 = vsel %vm5199, %v5164, 0
      %v5528 = vsel %vm5199, %v5165, 0
      %v5531 = vsel %vm5199, %v5166, 0
      %v5534 = vsel %vm5199, %v5167, 0
      %v5537 = vsel %vm5199, %v5168, 0
      %v5540 = vsel %vm5199, %v5169, 0
      %v5543 = vsel %vm5199, %v5170, 0
      %v5546 = vsel %vm5199, %v5171, 0
      %v5549 = vsel %vm5199, %v5172, 0
      %v5552 = vsel %vm5199, %v5173, 0
      %v5555 = vsel %vm5199, %v5174, 0
      %v5558 = vsel %vm5199, %v5175, 0
      %v5561 = vsel %vm5199, %v5176, 0
      %v5564 = vsel %vm5199, %v5177, 0
      %v5567 = vsel %vm5199, %v5178, 0
      %v5570 = vsel %vm5199, %v5179, 0
      %v5573 = vsel %vm5199, %v5180, 0
      %v5576 = vsel %vm5199, %v5181, 0
      %v5579 = vsel %vm5199, %v5182, 0
      %v5582 = vsel %vm5199, %v5183, 0
      %5584 = vmatprep.subr.mxu0 0.0
      %5585 = vmatpush1.msra.mxu0 0.0
      %5586 = vmatprep.subr.mxu0 0.0
      %5587 = vmatpush1.msra.mxu0 0.0
      %5588 = vmatprep.subr.mxu0 0.0
      %5589 = vmatpush1.msra.mxu0 0.0
      %5590 = vmatprep.subr.mxu0 0.0
      %5591 = vmatpush1.msra.mxu0 0.0
      %5592 = vmatprep.subr.mxu0 0.0
      %5593 = vmatpush1.msra.mxu0 0.0
      %5594 = vmatprep.subr.mxu0 0.0
      %5595 = vmatpush1.msra.mxu0 0.0
      %5596 = vmatprep.subr.mxu0 0.0
      %5597 = vmatpush1.msra.mxu0 0.0
      %5598 = vmatprep.subr.mxu0 0.0
      %5599 = vmatpush1.msra.mxu0 0.0
      %5600 = vmatprep.subr.mxu0 0.0
      %5601 = vmatpush1.msra.mxu0 %v5191
      %5602 = vmatprep.subr.mxu0 0.0
      %5603 = vmatpush1.msra.mxu0 %v5190
      %5604 = vmatprep.subr.mxu0 0.0
      %5605 = vmatpush1.msra.mxu0 %v5189
      %5606 = vmatprep.subr.mxu0 0.0
      %5607 = vmatpush1.msra.mxu0 %v5188
      %5608 = vmatprep.subr.mxu0 0.0
      %5609 = vmatpush1.msra.mxu0 %v5187
      %5610 = vmatprep.subr.mxu0 0.0
      %5611 = vmatpush1.msra.mxu0 %v5186
      %5612 = vmatprep.subr.mxu0 0.0
      %5613 = vmatpush1.msra.mxu0 %v5185
      %5614 = vmatprep.subr.mxu0 0.0
      %5615 = vmatpush1.msra.mxu0 %v5184
      %5616 = vmatprep.subr.mxu0 0.0
      %5617 = vmatpush2.msra.mxu0 0.0
      %5618 = vmatprep.subr.mxu0 0.0
      %5619 = vmatpush2.msra.mxu0 0.0
      %5620 = vmatprep.subr.mxu0 0.0
      %5621 = vmatpush2.msra.mxu0 0.0
      %5622 = vmatprep.subr.mxu0 0.0
      %5623 = vmatpush2.msra.mxu0 0.0
      %5624 = vmatprep.subr.mxu0 0.0
      %5625 = vmatpush2.msra.mxu0 0.0
      %5626 = vmatprep.subr.mxu0 0.0
      %5627 = vmatpush2.msra.mxu0 0.0
      %5628 = vmatprep.subr.mxu0 0.0
      %5629 = vmatpush2.msra.mxu0 0.0
      %5630 = vmatprep.subr.mxu0 0.0
      %5631 = vmatpush2.msra.mxu0 0.0
      %5632 = vmatprep.subr.mxu0 0.0
      %5633 = vmatpush2.msra.mxu0 0.0
      %5634 = vmatprep.subr.mxu0 0.0
      %5635 = vmatpush2.msra.mxu0 0.0
      %5636 = vmatprep.subr.mxu0 0.0
      %5637 = vmatpush2.msra.mxu0 0.0
      %5638 = vmatprep.subr.mxu0 0.0
      %5639 = vmatpush2.msra.mxu0 0.0
      %5640 = vmatprep.subr.mxu0 0.0
      %5641 = vmatpush2.msra.mxu0 0.0
      %5642 = vmatprep.subr.mxu0 0.0
      %5643 = vmatpush2.msra.mxu0 0.0
      %5644 = vmatprep.subr.mxu0 0.0
      %5645 = vmatpush2.msra.mxu0 0.0
      %5646 = vmatprep.subr.mxu0 0.0
      %5647 = vmatpush2.msra.mxu0 0.0
      %5648 = vmatprep.mubr.f32.mxu0 0.0
      %5649 = vmatmul.mubr.f32.gmra.mxu0 %v5201
      %v5650 = vpop.f32.mrf.mxu0
      %v5651 = vadd.f32 %v5197, %v5650
      %v5652 = vpop.f32.mrf.mxu0
      %5653 = vmatprep.mubr.f32.mxu0 0.0
      %5654 = vmatmul.mubr.f32.gmra.mxu0 %v5204
      %v5655 = vpop.f32.mrf.mxu0
      %v5656 = vadd.f32 %v5197, %v5655
      %v5657 = vpop.f32.mrf.mxu0
      %5658 = vmatprep.mubr.f32.mxu0 0.0
      %5659 = vmatmul.mubr.f32.gmra.mxu0 %v5207
      %v5660 = vpop.f32.mrf.mxu0
      %v5661 = vadd.f32 %v5197, %v5660
      %v5662 = vpop.f32.mrf.mxu0
      %5663 = vmatprep.mubr.f32.mxu0 0.0
      %5664 = vmatmul.mubr.f32.gmra.mxu0 %v5210
      %v5665 = vpop.f32.mrf.mxu0
      %v5666 = vadd.f32 %v5197, %v5665
      %v5667 = vpop.f32.mrf.mxu0
      %5668 = vmatprep.mubr.f32.mxu0 0.0
      %5669 = vmatmul.mubr.f32.gmra.mxu0 %v5213
      %v5670 = vpop.f32.mrf.mxu0
      %v5671 = vadd.f32 %v5197, %v5670
      %v5672 = vpop.f32.mrf.mxu0
      %5673 = vmatprep.mubr.f32.mxu0 0.0
      %5674 = vmatmul.mubr.f32.gmra.mxu0 %v5216
      %v5675 = vpop.f32.mrf.mxu0
      %v5676 = vadd.f32 %v5197, %v5675
      %v5677 = vpop.f32.mrf.mxu0
      %5678 = vmatprep.mubr.f32.mxu0 0.0
      %5679 = vmatmul.mubr.f32.gmra.mxu0 %v5219
      %v5680 = vpop.f32.mrf.mxu0
      %v5681 = vadd.f32 %v5197, %v5680
      %v5682 = vpop.f32.mrf.mxu0
      %5683 = vmatprep.mubr.f32.mxu0 0.0
      %5684 = vmatmul.mubr.f32.gmra.mxu0 %v5222
      %v5685 = vpop.f32.mrf.mxu0
      %v5686 = vadd.f32 %v5197, %v5685
      %v5687 = vpop.f32.mrf.mxu0
      %5688 = vmatprep.mubr.f32.mxu0 0.0
      %5689 = vmatmul.mubr.f32.gmra.mxu0 %v5225
      %v5690 = vpop.f32.mrf.mxu0
      %v5691 = vadd.f32 %v5197, %v5690
      %v5692 = vpop.f32.mrf.mxu0
      %5693 = vmatprep.mubr.f32.mxu0 0.0
      %5694 = vmatmul.mubr.f32.gmra.mxu0 %v5228
      %v5695 = vpop.f32.mrf.mxu0
      %v5696 = vadd.f32 %v5197, %v5695
      %v5697 = vpop.f32.mrf.mxu0
      %5698 = vmatprep.mubr.f32.mxu0 0.0
      %5699 = vmatmul.mubr.f32.gmra.mxu0 %v5231
      %v5700 = vpop.f32.mrf.mxu0
      %v5701 = vadd.f32 %v5197, %v5700
      %v5702 = vpop.f32.mrf.mxu0
      %5703 = vmatprep.mubr.f32.mxu0 0.0
      %5704 = vmatmul.mubr.f32.gmra.mxu0 %v5234
      %v5705 = vpop.f32.mrf.mxu0
      %v5706 = vadd.f32 %v5197, %v5705
      %v5707 = vpop.f32.mrf.mxu0
      %5708 = vmatprep.mubr.f32.mxu0 0.0
      %5709 = vmatmul.mubr.f32.gmra.mxu0 %v5237
      %v5710 = vpop.f32.mrf.mxu0
      %v5711 = vadd.f32 %v5197, %v5710
      %v5712 = vpop.f32.mrf.mxu0
      %5713 = vmatprep.mubr.f32.mxu0 0.0
      %5714 = vmatmul.mubr.f32.gmra.mxu0 %v5240
      %v5715 = vpop.f32.mrf.mxu0
      %v5716 = vadd.f32 %v5197, %v5715
      %v5717 = vpop.f32.mrf.mxu0
      %5718 = vmatprep.mubr.f32.mxu0 0.0
      %5719 = vmatmul.mubr.f32.gmra.mxu0 %v5243
      %v5720 = vpop.f32.mrf.mxu0
      %v5721 = vadd.f32 %v5197, %v5720
      %v5722 = vpop.f32.mrf.mxu0
      %5723 = vmatprep.mubr.f32.mxu0 0.0
      %5724 = vmatmul.mubr.f32.gmra.mxu0 %v5246
      %v5725 = vpop.f32.mrf.mxu0
      %v5726 = vadd.f32 %v5197, %v5725
      %v5727 = vpop.f32.mrf.mxu0
      %5728 = vmatprep.mubr.f32.mxu0 0.0
      %5729 = vmatmul.mubr.f32.gmra.mxu0 %v5249
      %v5730 = vpop.f32.mrf.mxu0
      %v5731 = vadd.f32 %v5197, %v5730
      %v5732 = vpop.f32.mrf.mxu0
      %5733 = vmatprep.mubr.f32.mxu0 0.0
      %5734 = vmatmul.mubr.f32.gmra.mxu0 %v5252
      %v5735 = vpop.f32.mrf.mxu0
      %v5736 = vadd.f32 %v5197, %v5735
      %v5737 = vpop.f32.mrf.mxu0
      %5738 = vmatprep.mubr.f32.mxu0 0.0
      %5739 = vmatmul.mubr.f32.gmra.mxu0 %v5255
      %v5740 = vpop.f32.mrf.mxu0
      %v5741 = vadd.f32 %v5197, %v5740
      %v5742 = vpop.f32.mrf.mxu0
      %5743 = vmatprep.mubr.f32.mxu0 0.0
      %5744 = vmatmul.mubr.f32.gmra.mxu0 %v5258
      %v5745 = vpop.f32.mrf.mxu0
      %v5746 = vadd.f32 %v5197, %v5745
      %v5747 = vpop.f32.mrf.mxu0
      %5748 = vmatprep.mubr.f32.mxu0 0.0
      %5749 = vmatmul.mubr.f32.gmra.mxu0 %v5261
      %v5750 = vpop.f32.mrf.mxu0
      %v5751 = vadd.f32 %v5197, %v5750
      %v5752 = vpop.f32.mrf.mxu0
      %5753 = vmatprep.mubr.f32.mxu0 0.0
      %5754 = vmatmul.mubr.f32.gmra.mxu0 %v5264
      %v5755 = vpop.f32.mrf.mxu0
      %v5756 = vadd.f32 %v5197, %v5755
      %v5757 = vpop.f32.mrf.mxu0
      %5758 = vmatprep.mubr.f32.mxu0 0.0
      %5759 = vmatmul.mubr.f32.gmra.mxu0 %v5267
      %v5760 = vpop.f32.mrf.mxu0
      %v5761 = vadd.f32 %v5197, %v5760
      %v5762 = vpop.f32.mrf.mxu0
      %5763 = vmatprep.mubr.f32.mxu0 0.0
      %5764 = vmatmul.mubr.f32.gmra.mxu0 %v5270
      %v5765 = vpop.f32.mrf.mxu0
      %v5766 = vadd.f32 %v5197, %v5765
      %v5767 = vpop.f32.mrf.mxu0
      %5768 = vmatprep.mubr.f32.mxu0 0.0
      %5769 = vmatmul.mubr.f32.gmra.mxu0 %v5273
      %v5770 = vpop.f32.mrf.mxu0
      %v5771 = vadd.f32 %v5197, %v5770
      %v5772 = vpop.f32.mrf.mxu0
      %5773 = vmatprep.mubr.f32.mxu0 0.0
      %5774 = vmatmul.mubr.f32.gmra.mxu0 %v5276
      %v5775 = vpop.f32.mrf.mxu0
      %v5776 = vadd.f32 %v5197, %v5775
      %v5777 = vpop.f32.mrf.mxu0
      %5778 = vmatprep.mubr.f32.mxu0 0.0
      %5779 = vmatmul.mubr.f32.gmra.mxu0 %v5279
      %v5780 = vpop.f32.mrf.mxu0
      %v5781 = vadd.f32 %v5197, %v5780
      %v5782 = vpop.f32.mrf.mxu0
      %5783 = vmatprep.mubr.f32.mxu0 0.0
      %5784 = vmatmul.mubr.f32.gmra.mxu0 %v5282
      %v5785 = vpop.f32.mrf.mxu0
      %v5786 = vadd.f32 %v5197, %v5785
      %v5787 = vpop.f32.mrf.mxu0
      %5788 = vmatprep.mubr.f32.mxu0 0.0
      %5789 = vmatmul.mubr.f32.gmra.mxu0 %v5285
      %v5790 = vpop.f32.mrf.mxu0
      %v5791 = vadd.f32 %v5197, %v5790
      %v5792 = vpop.f32.mrf.mxu0
      %5793 = vmatprep.mubr.f32.mxu0 0.0
      %5794 = vmatmul.mubr.f32.gmra.mxu0 %v5288
      %v5795 = vpop.f32.mrf.mxu0
      %v5796 = vadd.f32 %v5197, %v5795
      %v5797 = vpop.f32.mrf.mxu0
      %5798 = vmatprep.mubr.f32.mxu0 0.0
      %5799 = vmatmul.mubr.f32.gmra.mxu0 %v5291
      %v5800 = vpop.f32.mrf.mxu0
      %v5801 = vadd.f32 %v5197, %v5800
      %v5802 = vpop.f32.mrf.mxu0
      %5803 = vmatprep.mubr.f32.mxu0 0.0
      %5804 = vmatmul.mubr.f32.gmra.mxu0 %v5294
      %v5805 = vpop.f32.mrf.mxu0
      %v5806 = vadd.f32 %v5197, %v5805
      %v5807 = vpop.f32.mrf.mxu0
      %5808 = vmatprep.mubr.f32.mxu0 0.0
      %5809 = vmatmul.mubr.f32.gmra.mxu0 %v5297
      %v5810 = vpop.f32.mrf.mxu0
      %v5811 = vadd.f32 %v5197, %v5810
      %v5812 = vpop.f32.mrf.mxu0
      %5813 = vmatprep.mubr.f32.mxu0 0.0
      %5814 = vmatmul.mubr.f32.gmra.mxu0 %v5300
      %v5815 = vpop.f32.mrf.mxu0
      %v5816 = vadd.f32 %v5197, %v5815
      %v5817 = vpop.f32.mrf.mxu0
      %5818 = vmatprep.mubr.f32.mxu0 0.0
      %5819 = vmatmul.mubr.f32.gmra.mxu0 %v5303
      %v5820 = vpop.f32.mrf.mxu0
      %v5821 = vadd.f32 %v5197, %v5820
      %v5822 = vpop.f32.mrf.mxu0
      %5823 = vmatprep.mubr.f32.mxu0 0.0
      %5824 = vmatmul.mubr.f32.gmra.mxu0 %v5306
      %v5825 = vpop.f32.mrf.mxu0
      %v5826 = vadd.f32 %v5197, %v5825
      %v5827 = vpop.f32.mrf.mxu0
      %5828 = vmatprep.mubr.f32.mxu0 0.0
      %5829 = vmatmul.mubr.f32.gmra.mxu0 %v5309
      %v5830 = vpop.f32.mrf.mxu0
      %v5831 = vadd.f32 %v5197, %v5830
      %v5832 = vpop.f32.mrf.mxu0
      %5833 = vmatprep.mubr.f32.mxu0 0.0
      %5834 = vmatmul.mubr.f32.gmra.mxu0 %v5312
      %v5835 = vpop.f32.mrf.mxu0
      %v5836 = vadd.f32 %v5197, %v5835
      %v5837 = vpop.f32.mrf.mxu0
      %5838 = vmatprep.mubr.f32.mxu0 0.0
      %5839 = vmatmul.mubr.f32.gmra.mxu0 %v5315
      %v5840 = vpop.f32.mrf.mxu0
      %v5841 = vadd.f32 %v5197, %v5840
      %v5842 = vpop.f32.mrf.mxu0
      %5843 = vmatprep.mubr.f32.mxu0 0.0
      %5844 = vmatmul.mubr.f32.gmra.mxu0 %v5318
      %v5845 = vpop.f32.mrf.mxu0
      %v5846 = vadd.f32 %v5197, %v5845
      %v5847 = vpop.f32.mrf.mxu0
      %5848 = vmatprep.mubr.f32.mxu0 0.0
      %5849 = vmatmul.mubr.f32.gmra.mxu0 %v5321
      %v5850 = vpop.f32.mrf.mxu0
      %v5851 = vadd.f32 %v5197, %v5850
      %v5852 = vpop.f32.mrf.mxu0
      %5853 = vmatprep.mubr.f32.mxu0 0.0
      %5854 = vmatmul.mubr.f32.gmra.mxu0 %v5324
      %v5855 = vpop.f32.mrf.mxu0
      %v5856 = vadd.f32 %v5197, %v5855
      %v5857 = vpop.f32.mrf.mxu0
      %5858 = vmatprep.mubr.f32.mxu0 0.0
      %5859 = vmatmul.mubr.f32.gmra.mxu0 %v5327
      %v5860 = vpop.f32.mrf.mxu0
      %v5861 = vadd.f32 %v5197, %v5860
      %v5862 = vpop.f32.mrf.mxu0
      %5863 = vmatprep.mubr.f32.mxu0 0.0
      %5864 = vmatmul.mubr.f32.gmra.mxu0 %v5330
      %v5865 = vpop.f32.mrf.mxu0
      %v5866 = vadd.f32 %v5197, %v5865
      %v5867 = vpop.f32.mrf.mxu0
      %5868 = vmatprep.mubr.f32.mxu0 0.0
      %5869 = vmatmul.mubr.f32.gmra.mxu0 %v5333
      %v5870 = vpop.f32.mrf.mxu0
      %v5871 = vadd.f32 %v5197, %v5870
      %v5872 = vpop.f32.mrf.mxu0
      %5873 = vmatprep.mubr.f32.mxu0 0.0
      %5874 = vmatmul.mubr.f32.gmra.mxu0 %v5336
      %v5875 = vpop.f32.mrf.mxu0
      %v5876 = vadd.f32 %v5197, %v5875
      %v5877 = vpop.f32.mrf.mxu0
      %5878 = vmatprep.mubr.f32.mxu0 0.0
      %5879 = vmatmul.mubr.f32.gmra.mxu0 %v5339
      %v5880 = vpop.f32.mrf.mxu0
      %v5881 = vadd.f32 %v5197, %v5880
      %v5882 = vpop.f32.mrf.mxu0
      %5883 = vmatprep.mubr.f32.mxu0 0.0
      %5884 = vmatmul.mubr.f32.gmra.mxu0 %v5342
      %v5885 = vpop.f32.mrf.mxu0
      %v5886 = vadd.f32 %v5197, %v5885
      %v5887 = vpop.f32.mrf.mxu0
      %5888 = vmatprep.mubr.f32.mxu0 0.0
      %5889 = vmatmul.mubr.f32.gmra.mxu0 %v5345
      %v5890 = vpop.f32.mrf.mxu0
      %v5891 = vadd.f32 %v5197, %v5890
      %v5892 = vpop.f32.mrf.mxu0
      %5893 = vmatprep.mubr.f32.mxu0 0.0
      %5894 = vmatmul.mubr.f32.gmra.mxu0 %v5348
      %v5895 = vpop.f32.mrf.mxu0
      %v5896 = vadd.f32 %v5197, %v5895
      %v5897 = vpop.f32.mrf.mxu0
      %5898 = vmatprep.mubr.f32.mxu0 0.0
      %5899 = vmatmul.mubr.f32.gmra.mxu0 %v5351
      %v5900 = vpop.f32.mrf.mxu0
      %v5901 = vadd.f32 %v5197, %v5900
      %v5902 = vpop.f32.mrf.mxu0
      %5903 = vmatprep.mubr.f32.mxu0 0.0
      %5904 = vmatmul.mubr.f32.gmra.mxu0 %v5354
      %v5905 = vpop.f32.mrf.mxu0
      %v5906 = vadd.f32 %v5197, %v5905
      %v5907 = vpop.f32.mrf.mxu0
      %5908 = vmatprep.mubr.f32.mxu0 0.0
      %5909 = vmatmul.mubr.f32.gmra.mxu0 %v5357
      %v5910 = vpop.f32.mrf.mxu0
      %v5911 = vadd.f32 %v5197, %v5910
      %v5912 = vpop.f32.mrf.mxu0
      %5913 = vmatprep.mubr.f32.mxu0 0.0
      %5914 = vmatmul.mubr.f32.gmra.mxu0 %v5360
      %v5915 = vpop.f32.mrf.mxu0
      %v5916 = vadd.f32 %v5197, %v5915
      %v5917 = vpop.f32.mrf.mxu0
      %5918 = vmatprep.mubr.f32.mxu0 0.0
      %5919 = vmatmul.mubr.f32.gmra.mxu0 %v5363
      %v5920 = vpop.f32.mrf.mxu0
      %v5921 = vadd.f32 %v5197, %v5920
      %v5922 = vpop.f32.mrf.mxu0
      %5923 = vmatprep.mubr.f32.mxu0 0.0
      %5924 = vmatmul.mubr.f32.gmra.mxu0 %v5366
      %v5925 = vpop.f32.mrf.mxu0
      %v5926 = vadd.f32 %v5197, %v5925
      %v5927 = vpop.f32.mrf.mxu0
      %5928 = vmatprep.mubr.f32.mxu0 0.0
      %5929 = vmatmul.mubr.f32.gmra.mxu0 %v5369
      %v5930 = vpop.f32.mrf.mxu0
      %v5931 = vadd.f32 %v5197, %v5930
      %v5932 = vpop.f32.mrf.mxu0
      %5933 = vmatprep.mubr.f32.mxu0 0.0
      %5934 = vmatmul.mubr.f32.gmra.mxu0 %v5372
      %v5935 = vpop.f32.mrf.mxu0
      %v5936 = vadd.f32 %v5197, %v5935
      %v5937 = vpop.f32.mrf.mxu0
      %5938 = vmatprep.mubr.f32.mxu0 0.0
      %5939 = vmatmul.mubr.f32.gmra.mxu0 %v5375
      %v5940 = vpop.f32.mrf.mxu0
      %v5941 = vadd.f32 %v5197, %v5940
      %v5942 = vpop.f32.mrf.mxu0
      %5943 = vmatprep.mubr.f32.mxu0 0.0
      %5944 = vmatmul.mubr.f32.gmra.mxu0 %v5378
      %v5945 = vpop.f32.mrf.mxu0
      %v5946 = vadd.f32 %v5197, %v5945
      %v5947 = vpop.f32.mrf.mxu0
      %5948 = vmatprep.mubr.f32.mxu0 0.0
      %5949 = vmatmul.mubr.f32.gmra.mxu0 %v5381
      %v5950 = vpop.f32.mrf.mxu0
      %v5951 = vadd.f32 %v5197, %v5950
      %v5952 = vpop.f32.mrf.mxu0
      %5953 = vmatprep.mubr.f32.mxu0 0.0
      %5954 = vmatmul.mubr.f32.gmra.mxu0 %v5384
      %v5955 = vpop.f32.mrf.mxu0
      %v5956 = vadd.f32 %v5197, %v5955
      %v5957 = vpop.f32.mrf.mxu0
      %5958 = vmatprep.mubr.f32.mxu0 0.0
      %5959 = vmatmul.mubr.f32.gmra.mxu0 %v5387
      %v5960 = vpop.f32.mrf.mxu0
      %v5961 = vadd.f32 %v5197, %v5960
      %v5962 = vpop.f32.mrf.mxu0
      %5963 = vmatprep.mubr.f32.mxu0 0.0
      %5964 = vmatmul.mubr.f32.gmra.mxu0 %v5390
      %v5965 = vpop.f32.mrf.mxu0
      %v5966 = vadd.f32 %v5197, %v5965
      %v5967 = vpop.f32.mrf.mxu0
      %5968 = vmatprep.mubr.f32.mxu0 0.0
      %5969 = vmatmul.mubr.f32.gmra.mxu0 %v5393
      %v5970 = vpop.f32.mrf.mxu0
      %v5971 = vadd.f32 %v5197, %v5970
      %v5972 = vpop.f32.mrf.mxu0
      %5973 = vmatprep.mubr.f32.mxu0 0.0
      %5974 = vmatmul.mubr.f32.gmra.mxu0 %v5396
      %v5975 = vpop.f32.mrf.mxu0
      %v5976 = vadd.f32 %v5197, %v5975
      %v5977 = vpop.f32.mrf.mxu0
      %5978 = vmatprep.mubr.f32.mxu0 0.0
      %5979 = vmatmul.mubr.f32.gmra.mxu0 %v5399
      %v5980 = vpop.f32.mrf.mxu0
      %v5981 = vadd.f32 %v5197, %v5980
      %v5982 = vpop.f32.mrf.mxu0
      %5983 = vmatprep.mubr.f32.mxu0 0.0
      %5984 = vmatmul.mubr.f32.gmra.mxu0 %v5402
      %v5985 = vpop.f32.mrf.mxu0
      %v5986 = vadd.f32 %v5197, %v5985
      %v5987 = vpop.f32.mrf.mxu0
      %5988 = vmatprep.mubr.f32.mxu0 0.0
      %5989 = vmatmul.mubr.f32.gmra.mxu0 %v5405
      %v5990 = vpop.f32.mrf.mxu0
      %v5991 = vadd.f32 %v5197, %v5990
      %v5992 = vpop.f32.mrf.mxu0
      %5993 = vmatprep.mubr.f32.mxu0 0.0
      %5994 = vmatmul.mubr.f32.gmra.mxu0 %v5408
      %v5995 = vpop.f32.mrf.mxu0
      %v5996 = vadd.f32 %v5197, %v5995
      %v5997 = vpop.f32.mrf.mxu0
      %5998 = vmatprep.mubr.f32.mxu0 0.0
      %5999 = vmatmul.mubr.f32.gmra.mxu0 %v5411
      %v6000 = vpop.f32.mrf.mxu0
      %v6001 = vadd.f32 %v5197, %v6000
      %v6002 = vpop.f32.mrf.mxu0
      %6003 = vmatprep.mubr.f32.mxu0 0.0
      %6004 = vmatmul.mubr.f32.gmra.mxu0 %v5414
      %v6005 = vpop.f32.mrf.mxu0
      %v6006 = vadd.f32 %v5197, %v6005
      %v6007 = vpop.f32.mrf.mxu0
      %6008 = vmatprep.mubr.f32.mxu0 0.0
      %6009 = vmatmul.mubr.f32.gmra.mxu0 %v5417
      %v6010 = vpop.f32.mrf.mxu0
      %v6011 = vadd.f32 %v5197, %v6010
      %v6012 = vpop.f32.mrf.mxu0
      %6013 = vmatprep.mubr.f32.mxu0 0.0
      %6014 = vmatmul.mubr.f32.gmra.mxu0 %v5420
      %v6015 = vpop.f32.mrf.mxu0
      %v6016 = vadd.f32 %v5197, %v6015
      %v6017 = vpop.f32.mrf.mxu0
      %6018 = vmatprep.mubr.f32.mxu0 0.0
      %6019 = vmatmul.mubr.f32.gmra.mxu0 %v5423
      %v6020 = vpop.f32.mrf.mxu0
      %v6021 = vadd.f32 %v5197, %v6020
      %v6022 = vpop.f32.mrf.mxu0
      %6023 = vmatprep.mubr.f32.mxu0 0.0
      %6024 = vmatmul.mubr.f32.gmra.mxu0 %v5426
      %v6025 = vpop.f32.mrf.mxu0
      %v6026 = vadd.f32 %v5197, %v6025
      %v6027 = vpop.f32.mrf.mxu0
      %6028 = vmatprep.mubr.f32.mxu0 0.0
      %6029 = vmatmul.mubr.f32.gmra.mxu0 %v5429
      %v6030 = vpop.f32.mrf.mxu0
      %v6031 = vadd.f32 %v5197, %v6030
      %v6032 = vpop.f32.mrf.mxu0
      %6033 = vmatprep.mubr.f32.mxu0 0.0
      %6034 = vmatmul.mubr.f32.gmra.mxu0 %v5432
      %v6035 = vpop.f32.mrf.mxu0
      %v6036 = vadd.f32 %v5197, %v6035
      %v6037 = vpop.f32.mrf.mxu0
      %6038 = vmatprep.mubr.f32.mxu0 0.0
      %6039 = vmatmul.mubr.f32.gmra.mxu0 %v5435
      %v6040 = vpop.f32.mrf.mxu0
      %v6041 = vadd.f32 %v5197, %v6040
      %v6042 = vpop.f32.mrf.mxu0
      %6043 = vmatprep.mubr.f32.mxu0 0.0
      %6044 = vmatmul.mubr.f32.gmra.mxu0 %v5438
      %v6045 = vpop.f32.mrf.mxu0
      %v6046 = vadd.f32 %v5197, %v6045
      %v6047 = vpop.f32.mrf.mxu0
      %6048 = vmatprep.mubr.f32.mxu0 0.0
      %6049 = vmatmul.mubr.f32.gmra.mxu0 %v5441
      %v6050 = vpop.f32.mrf.mxu0
      %v6051 = vadd.f32 %v5197, %v6050
      %v6052 = vpop.f32.mrf.mxu0
      %6053 = vmatprep.mubr.f32.mxu0 0.0
      %6054 = vmatmul.mubr.f32.gmra.mxu0 %v5444
      %v6055 = vpop.f32.mrf.mxu0
      %v6056 = vadd.f32 %v5197, %v6055
      %v6057 = vpop.f32.mrf.mxu0
      %6058 = vmatprep.mubr.f32.mxu0 0.0
      %6059 = vmatmul.mubr.f32.gmra.mxu0 %v5447
      %v6060 = vpop.f32.mrf.mxu0
      %v6061 = vadd.f32 %v5197, %v6060
      %v6062 = vpop.f32.mrf.mxu0
      %6063 = vmatprep.mubr.f32.mxu0 0.0
      %6064 = vmatmul.mubr.f32.gmra.mxu0 %v5450
      %v6065 = vpop.f32.mrf.mxu0
      %v6066 = vadd.f32 %v5197, %v6065
      %v6067 = vpop.f32.mrf.mxu0
      %6068 = vmatprep.mubr.f32.mxu0 0.0
      %6069 = vmatmul.mubr.f32.gmra.mxu0 %v5453
      %v6070 = vpop.f32.mrf.mxu0
      %v6071 = vadd.f32 %v5197, %v6070
      %v6072 = vpop.f32.mrf.mxu0
      %6073 = vmatprep.mubr.f32.mxu0 0.0
      %6074 = vmatmul.mubr.f32.gmra.mxu0 %v5456
      %v6075 = vpop.f32.mrf.mxu0
      %v6076 = vadd.f32 %v5197, %v6075
      %v6077 = vpop.f32.mrf.mxu0
      %6078 = vmatprep.mubr.f32.mxu0 0.0
      %6079 = vmatmul.mubr.f32.gmra.mxu0 %v5459
      %v6080 = vpop.f32.mrf.mxu0
      %v6081 = vadd.f32 %v5197, %v6080
      %v6082 = vpop.f32.mrf.mxu0
      %6083 = vmatprep.mubr.f32.mxu0 0.0
      %6084 = vmatmul.mubr.f32.gmra.mxu0 %v5462
      %v6085 = vpop.f32.mrf.mxu0
      %v6086 = vadd.f32 %v5197, %v6085
      %v6087 = vpop.f32.mrf.mxu0
      %6088 = vmatprep.mubr.f32.mxu0 0.0
      %6089 = vmatmul.mubr.f32.gmra.mxu0 %v5465
      %v6090 = vpop.f32.mrf.mxu0
      %v6091 = vadd.f32 %v5197, %v6090
      %v6092 = vpop.f32.mrf.mxu0
      %6093 = vmatprep.mubr.f32.mxu0 0.0
      %6094 = vmatmul.mubr.f32.gmra.mxu0 %v5468
      %v6095 = vpop.f32.mrf.mxu0
      %v6096 = vadd.f32 %v5197, %v6095
      %v6097 = vpop.f32.mrf.mxu0
      %6098 = vmatprep.mubr.f32.mxu0 0.0
      %6099 = vmatmul.mubr.f32.gmra.mxu0 %v5471
      %v6100 = vpop.f32.mrf.mxu0
      %v6101 = vadd.f32 %v5197, %v6100
      %v6102 = vpop.f32.mrf.mxu0
      %6103 = vmatprep.mubr.f32.mxu0 0.0
      %6104 = vmatmul.mubr.f32.gmra.mxu0 %v5474
      %v6105 = vpop.f32.mrf.mxu0
      %v6106 = vadd.f32 %v5197, %v6105
      %v6107 = vpop.f32.mrf.mxu0
      %6108 = vmatprep.mubr.f32.mxu0 0.0
      %6109 = vmatmul.mubr.f32.gmra.mxu0 %v5477
      %v6110 = vpop.f32.mrf.mxu0
      %v6111 = vadd.f32 %v5197, %v6110
      %v6112 = vpop.f32.mrf.mxu0
      %6113 = vmatprep.mubr.f32.mxu0 0.0
      %6114 = vmatmul.mubr.f32.gmra.mxu0 %v5480
      %v6115 = vpop.f32.mrf.mxu0
      %v6116 = vadd.f32 %v5197, %v6115
      %v6117 = vpop.f32.mrf.mxu0
      %6118 = vmatprep.mubr.f32.mxu0 0.0
      %6119 = vmatmul.mubr.f32.gmra.mxu0 %v5483
      %v6120 = vpop.f32.mrf.mxu0
      %v6121 = vadd.f32 %v5197, %v6120
      %v6122 = vpop.f32.mrf.mxu0
      %6123 = vmatprep.mubr.f32.mxu0 0.0
      %6124 = vmatmul.mubr.f32.gmra.mxu0 %v5486
      %v6125 = vpop.f32.mrf.mxu0
      %v6126 = vadd.f32 %v5197, %v6125
      %v6127 = vpop.f32.mrf.mxu0
      %6128 = vmatprep.mubr.f32.mxu0 0.0
      %6129 = vmatmul.mubr.f32.gmra.mxu0 %v5489
      %v6130 = vpop.f32.mrf.mxu0
      %v6131 = vadd.f32 %v5197, %v6130
      %v6132 = vpop.f32.mrf.mxu0
      %6133 = vmatprep.mubr.f32.mxu0 0.0
      %6134 = vmatmul.mubr.f32.gmra.mxu0 %v5492
      %v6135 = vpop.f32.mrf.mxu0
      %v6136 = vadd.f32 %v5197, %v6135
      %v6137 = vpop.f32.mrf.mxu0
      %6138 = vmatprep.mubr.f32.mxu0 0.0
      %6139 = vmatmul.mubr.f32.gmra.mxu0 %v5495
      %v6140 = vpop.f32.mrf.mxu0
      %v6141 = vadd.f32 %v5197, %v6140
      %v6142 = vpop.f32.mrf.mxu0
      %6143 = vmatprep.mubr.f32.mxu0 0.0
      %6144 = vmatmul.mubr.f32.gmra.mxu0 %v5498
      %v6145 = vpop.f32.mrf.mxu0
      %v6146 = vadd.f32 %v5197, %v6145
      %v6147 = vpop.f32.mrf.mxu0
      %6148 = vmatprep.mubr.f32.mxu0 0.0
      %6149 = vmatmul.mubr.f32.gmra.mxu0 %v5501
      %v6150 = vpop.f32.mrf.mxu0
      %v6151 = vadd.f32 %v5197, %v6150
      %v6152 = vpop.f32.mrf.mxu0
      %6153 = vmatprep.mubr.f32.mxu0 0.0
      %6154 = vmatmul.mubr.f32.gmra.mxu0 %v5504
      %v6155 = vpop.f32.mrf.mxu0
      %v6156 = vadd.f32 %v5197, %v6155
      %v6157 = vpop.f32.mrf.mxu0
      %6158 = vmatprep.mubr.f32.mxu0 0.0
      %6159 = vmatmul.mubr.f32.gmra.mxu0 %v5507
      %v6160 = vpop.f32.mrf.mxu0
      %v6161 = vadd.f32 %v5197, %v6160
      %v6162 = vpop.f32.mrf.mxu0
      %6163 = vmatprep.mubr.f32.mxu0 0.0
      %6164 = vmatmul.mubr.f32.gmra.mxu0 %v5510
      %v6165 = vpop.f32.mrf.mxu0
      %v6166 = vadd.f32 %v5197, %v6165
      %v6167 = vpop.f32.mrf.mxu0
      %6168 = vmatprep.mubr.f32.mxu0 0.0
      %6169 = vmatmul.mubr.f32.gmra.mxu0 %v5513
      %v6170 = vpop.f32.mrf.mxu0
      %v6171 = vadd.f32 %v5197, %v6170
      %v6172 = vpop.f32.mrf.mxu0
      %6173 = vmatprep.mubr.f32.mxu0 0.0
      %6174 = vmatmul.mubr.f32.gmra.mxu0 %v5516
      %v6175 = vpop.f32.mrf.mxu0
      %v6176 = vadd.f32 %v5197, %v6175
      %v6177 = vpop.f32.mrf.mxu0
      %6178 = vmatprep.mubr.f32.mxu0 0.0
      %6179 = vmatmul.mubr.f32.gmra.mxu0 %v5519
      %v6180 = vpop.f32.mrf.mxu0
      %v6181 = vadd.f32 %v5197, %v6180
      %v6182 = vpop.f32.mrf.mxu0
      %6183 = vmatprep.mubr.f32.mxu0 0.0
      %6184 = vmatmul.mubr.f32.gmra.mxu0 %v5522
      %v6185 = vpop.f32.mrf.mxu0
      %v6186 = vadd.f32 %v5197, %v6185
      %v6187 = vpop.f32.mrf.mxu0
      %6188 = vmatprep.mubr.f32.mxu0 0.0
      %6189 = vmatmul.mubr.f32.gmra.mxu0 %v5525
      %v6190 = vpop.f32.mrf.mxu0
      %v6191 = vadd.f32 %v5197, %v6190
      %v6192 = vpop.f32.mrf.mxu0
      %6193 = vmatprep.mubr.f32.mxu0 0.0
      %6194 = vmatmul.mubr.f32.gmra.mxu0 %v5528
      %v6195 = vpop.f32.mrf.mxu0
      %v6196 = vadd.f32 %v5197, %v6195
      %v6197 = vpop.f32.mrf.mxu0
      %6198 = vmatprep.mubr.f32.mxu0 0.0
      %6199 = vmatmul.mubr.f32.gmra.mxu0 %v5531
      %v6200 = vpop.f32.mrf.mxu0
      %v6201 = vadd.f32 %v5197, %v6200
      %v6202 = vpop.f32.mrf.mxu0
      %6203 = vmatprep.mubr.f32.mxu0 0.0
      %6204 = vmatmul.mubr.f32.gmra.mxu0 %v5534
      %v6205 = vpop.f32.mrf.mxu0
      %v6206 = vadd.f32 %v5197, %v6205
      %v6207 = vpop.f32.mrf.mxu0
      %6208 = vmatprep.mubr.f32.mxu0 0.0
      %6209 = vmatmul.mubr.f32.gmra.mxu0 %v5537
      %v6210 = vpop.f32.mrf.mxu0
      %v6211 = vadd.f32 %v5197, %v6210
      %v6212 = vpop.f32.mrf.mxu0
      %6213 = vmatprep.mubr.f32.mxu0 0.0
      %6214 = vmatmul.mubr.f32.gmra.mxu0 %v5540
      %v6215 = vpop.f32.mrf.mxu0
      %v6216 = vadd.f32 %v5197, %v6215
      %v6217 = vpop.f32.mrf.mxu0
      %6218 = vmatprep.mubr.f32.mxu0 0.0
      %6219 = vmatmul.mubr.f32.gmra.mxu0 %v5543
      %v6220 = vpop.f32.mrf.mxu0
      %v6221 = vadd.f32 %v5197, %v6220
      %v6222 = vpop.f32.mrf.mxu0
      %6223 = vmatprep.mubr.f32.mxu0 0.0
      %6224 = vmatmul.mubr.f32.gmra.mxu0 %v5546
      %v6225 = vpop.f32.mrf.mxu0
      %v6226 = vadd.f32 %v5197, %v6225
      %v6227 = vpop.f32.mrf.mxu0
      %6228 = vmatprep.mubr.f32.mxu0 0.0
      %6229 = vmatmul.mubr.f32.gmra.mxu0 %v5549
      %v6230 = vpop.f32.mrf.mxu0
      %v6231 = vadd.f32 %v5197, %v6230
      %v6232 = vpop.f32.mrf.mxu0
      %6233 = vmatprep.mubr.f32.mxu0 0.0
      %6234 = vmatmul.mubr.f32.gmra.mxu0 %v5552
      %v6235 = vpop.f32.mrf.mxu0
      %v6236 = vadd.f32 %v5197, %v6235
      %v6237 = vpop.f32.mrf.mxu0
      %6238 = vmatprep.mubr.f32.mxu0 0.0
      %6239 = vmatmul.mubr.f32.gmra.mxu0 %v5555
      %v6240 = vpop.f32.mrf.mxu0
      %v6241 = vadd.f32 %v5197, %v6240
      %v6242 = vpop.f32.mrf.mxu0
      %6243 = vmatprep.mubr.f32.mxu0 0.0
      %6244 = vmatmul.mubr.f32.gmra.mxu0 %v5558
      %v6245 = vpop.f32.mrf.mxu0
      %v6246 = vadd.f32 %v5197, %v6245
      %v6247 = vpop.f32.mrf.mxu0
      %6248 = vmatprep.mubr.f32.mxu0 0.0
      %6249 = vmatmul.mubr.f32.gmra.mxu0 %v5561
      %v6250 = vpop.f32.mrf.mxu0
      %v6251 = vadd.f32 %v5197, %v6250
      %v6252 = vpop.f32.mrf.mxu0
      %6253 = vmatprep.mubr.f32.mxu0 0.0
      %6254 = vmatmul.mubr.f32.gmra.mxu0 %v5564
      %v6255 = vpop.f32.mrf.mxu0
      %v6256 = vadd.f32 %v5197, %v6255
      %v6257 = vpop.f32.mrf.mxu0
      %6258 = vmatprep.mubr.f32.mxu0 0.0
      %6259 = vmatmul.mubr.f32.gmra.mxu0 %v5567
      %v6260 = vpop.f32.mrf.mxu0
      %v6261 = vadd.f32 %v5197, %v6260
      %v6262 = vpop.f32.mrf.mxu0
      %6263 = vmatprep.mubr.f32.mxu0 0.0
      %6264 = vmatmul.mubr.f32.gmra.mxu0 %v5570
      %v6265 = vpop.f32.mrf.mxu0
      %v6266 = vadd.f32 %v5197, %v6265
      %v6267 = vpop.f32.mrf.mxu0
      %6268 = vmatprep.mubr.f32.mxu0 0.0
      %6269 = vmatmul.mubr.f32.gmra.mxu0 %v5573
      %v6270 = vpop.f32.mrf.mxu0
      %v6271 = vadd.f32 %v5197, %v6270
      %v6272 = vpop.f32.mrf.mxu0
      %6273 = vmatprep.mubr.f32.mxu0 0.0
      %6274 = vmatmul.mubr.f32.gmra.mxu0 %v5576
      %v6275 = vpop.f32.mrf.mxu0
      %v6276 = vadd.f32 %v5197, %v6275
      %v6277 = vpop.f32.mrf.mxu0
      %6278 = vmatprep.mubr.f32.mxu0 0.0
      %6279 = vmatmul.mubr.f32.gmra.mxu0 %v5579
      %v6280 = vpop.f32.mrf.mxu0
      %v6281 = vadd.f32 %v5197, %v6280
      %v6282 = vpop.f32.mrf.mxu0
      %6283 = vmatprep.mubr.f32.mxu0 0.0
      %6284 = vmatmul.mubr.f32.gmra.mxu0 %v5582
      %v6285 = vpop.f32.mrf.mxu0
      %v6286 = vadd.f32 %v5197, %v6285
      %v6287 = vpop.f32.mrf.mxu0
      %6288 = vdwg.mxu0
      %v6289 = vxor.u32 %v5651, 2147483648
      %v6290 = vxor.u32 %v5656, 2147483648
      %v6291 = vxor.u32 %v5661, 2147483648
      %v6292 = vxor.u32 %v5666, 2147483648
      %v6293 = vxor.u32 %v5671, 2147483648
      %v6294 = vxor.u32 %v5676, 2147483648
      %v6295 = vxor.u32 %v5681, 2147483648
      %v6296 = vxor.u32 %v5686, 2147483648
      %v6297 = vxor.u32 %v5691, 2147483648
      %v6298 = vxor.u32 %v5696, 2147483648
      %v6299 = vxor.u32 %v5701, 2147483648
      %v6300 = vxor.u32 %v5706, 2147483648
      %v6301 = vxor.u32 %v5711, 2147483648
      %v6302 = vxor.u32 %v5716, 2147483648
      %v6303 = vxor.u32 %v5721, 2147483648
      %v6304 = vxor.u32 %v5726, 2147483648
      %v6305 = vxor.u32 %v5731, 2147483648
      %v6306 = vxor.u32 %v5736, 2147483648
      %v6307 = vxor.u32 %v5741, 2147483648
      %v6308 = vxor.u32 %v5746, 2147483648
      %v6309 = vxor.u32 %v5751, 2147483648
      %v6310 = vxor.u32 %v5756, 2147483648
      %v6311 = vxor.u32 %v5761, 2147483648
      %v6312 = vxor.u32 %v5766, 2147483648
      %v6313 = vxor.u32 %v5771, 2147483648
      %v6314 = vxor.u32 %v5776, 2147483648
      %v6315 = vxor.u32 %v5781, 2147483648
      %v6316 = vxor.u32 %v5786, 2147483648
      %v6317 = vxor.u32 %v5791, 2147483648
      %v6318 = vxor.u32 %v5796, 2147483648
      %v6319 = vxor.u32 %v5801, 2147483648
      %v6320 = vxor.u32 %v5806, 2147483648
      %v6321 = vxor.u32 %v5811, 2147483648
      %v6322 = vxor.u32 %v5816, 2147483648
      %v6323 = vxor.u32 %v5821, 2147483648
      %v6324 = vxor.u32 %v5826, 2147483648
      %v6325 = vxor.u32 %v5831, 2147483648
      %v6326 = vxor.u32 %v5836, 2147483648
      %v6327 = vxor.u32 %v5841, 2147483648
      %v6328 = vxor.u32 %v5846, 2147483648
      %v6329 = vxor.u32 %v5851, 2147483648
      %v6330 = vxor.u32 %v5856, 2147483648
      %v6331 = vxor.u32 %v5861, 2147483648
      %v6332 = vxor.u32 %v5866, 2147483648
      %v6333 = vxor.u32 %v5871, 2147483648
      %v6334 = vxor.u32 %v5876, 2147483648
      %v6335 = vxor.u32 %v5881, 2147483648
      %v6336 = vxor.u32 %v5886, 2147483648
      %v6337 = vxor.u32 %v5891, 2147483648
      %v6338 = vxor.u32 %v5896, 2147483648
      %v6339 = vxor.u32 %v5901, 2147483648
      %v6340 = vxor.u32 %v5906, 2147483648
      %v6341 = vxor.u32 %v5911, 2147483648
      %v6342 = vxor.u32 %v5916, 2147483648
      %v6343 = vxor.u32 %v5921, 2147483648
      %v6344 = vxor.u32 %v5926, 2147483648
      %v6345 = vxor.u32 %v5931, 2147483648
      %v6346 = vxor.u32 %v5936, 2147483648
      %v6347 = vxor.u32 %v5941, 2147483648
      %v6348 = vxor.u32 %v5946, 2147483648
      %v6349 = vxor.u32 %v5951, 2147483648
      %v6350 = vxor.u32 %v5956, 2147483648
      %v6351 = vxor.u32 %v5961, 2147483648
      %v6352 = vxor.u32 %v5966, 2147483648
      %v6353 = vxor.u32 %v5971, 2147483648
      %v6354 = vxor.u32 %v5976, 2147483648
      %v6355 = vxor.u32 %v5981, 2147483648
      %v6356 = vxor.u32 %v5986, 2147483648
      %v6357 = vxor.u32 %v5991, 2147483648
      %v6358 = vxor.u32 %v5996, 2147483648
      %v6359 = vxor.u32 %v6001, 2147483648
      %v6360 = vxor.u32 %v6006, 2147483648
      %v6361 = vxor.u32 %v6011, 2147483648
      %v6362 = vxor.u32 %v6016, 2147483648
      %v6363 = vxor.u32 %v6021, 2147483648
      %v6364 = vxor.u32 %v6026, 2147483648
      %v6365 = vxor.u32 %v6031, 2147483648
      %v6366 = vxor.u32 %v6036, 2147483648
      %v6367 = vxor.u32 %v6041, 2147483648
      %v6368 = vxor.u32 %v6046, 2147483648
      %v6369 = vxor.u32 %v6051, 2147483648
      %v6370 = vxor.u32 %v6056, 2147483648
      %v6371 = vxor.u32 %v6061, 2147483648
      %v6372 = vxor.u32 %v6066, 2147483648
      %v6373 = vxor.u32 %v6071, 2147483648
      %v6374 = vxor.u32 %v6076, 2147483648
      %v6375 = vxor.u32 %v6081, 2147483648
      %v6376 = vxor.u32 %v6086, 2147483648
      %v6377 = vxor.u32 %v6091, 2147483648
      %v6378 = vxor.u32 %v6096, 2147483648
      %v6379 = vxor.u32 %v6101, 2147483648
      %v6380 = vxor.u32 %v6106, 2147483648
      %v6381 = vxor.u32 %v6111, 2147483648
      %v6382 = vxor.u32 %v6116, 2147483648
      %v6383 = vxor.u32 %v6121, 2147483648
      %v6384 = vxor.u32 %v6126, 2147483648
      %v6385 = vxor.u32 %v6131, 2147483648
      %v6386 = vxor.u32 %v6136, 2147483648
      %v6387 = vxor.u32 %v6141, 2147483648
      %v6388 = vxor.u32 %v6146, 2147483648
      %v6389 = vxor.u32 %v6151, 2147483648
      %v6390 = vxor.u32 %v6156, 2147483648
      %v6391 = vxor.u32 %v6161, 2147483648
      %v6392 = vxor.u32 %v6166, 2147483648
      %v6393 = vxor.u32 %v6171, 2147483648
      %v6394 = vxor.u32 %v6176, 2147483648
      %v6395 = vxor.u32 %v6181, 2147483648
      %v6396 = vxor.u32 %v6186, 2147483648
      %v6397 = vxor.u32 %v6191, 2147483648
      %v6398 = vxor.u32 %v6196, 2147483648
      %v6399 = vxor.u32 %v6201, 2147483648
      %v6400 = vxor.u32 %v6206, 2147483648
      %v6401 = vxor.u32 %v6211, 2147483648
      %v6402 = vxor.u32 %v6216, 2147483648
      %v6403 = vxor.u32 %v6221, 2147483648
      %v6404 = vxor.u32 %v6226, 2147483648
      %v6405 = vxor.u32 %v6231, 2147483648
      %v6406 = vxor.u32 %v6236, 2147483648
      %v6407 = vxor.u32 %v6241, 2147483648
      %v6408 = vxor.u32 %v6246, 2147483648
      %v6409 = vxor.u32 %v6251, 2147483648
      %v6410 = vxor.u32 %v6256, 2147483648
      %v6411 = vxor.u32 %v6261, 2147483648
      %v6412 = vxor.u32 %v6266, 2147483648
      %v6413 = vxor.u32 %v6271, 2147483648
      %v6414 = vxor.u32 %v6276, 2147483648
      %v6415 = vxor.u32 %v6281, 2147483648
      %v6416 = vxor.u32 %v6286, 2147483648
      %v6417 = vmul.f32 %v6289, 1.442695
      %v6418 = vpow.pop %v6417
      %v6419 = vmul.f32 %v6290, 1.442695
      %v6420 = vpow.pop %v6419
      %v6421 = vmul.f32 %v6291, 1.442695
      %v6422 = vpow.pop %v6421
      %v6423 = vmul.f32 %v6292, 1.442695
      %v6424 = vpow.pop %v6423
      %v6425 = vmul.f32 %v6293, 1.442695
      %v6426 = vpow.pop %v6425
      %v6427 = vmul.f32 %v6294, 1.442695
      %v6428 = vpow.pop %v6427
      %v6429 = vmul.f32 %v6295, 1.442695
      %v6430 = vpow.pop %v6429
      %v6431 = vmul.f32 %v6296, 1.442695
      %v6432 = vpow.pop %v6431
      %v6433 = vmul.f32 %v6297, 1.442695
      %v6434 = vpow.pop %v6433
      %v6435 = vmul.f32 %v6298, 1.442695
      %v6436 = vpow.pop %v6435
      %v6437 = vmul.f32 %v6299, 1.442695
      %v6438 = vpow.pop %v6437
      %v6439 = vmul.f32 %v6300, 1.442695
      %v6440 = vpow.pop %v6439
      %v6441 = vmul.f32 %v6301, 1.442695
      %v6442 = vpow.pop %v6441
      %v6443 = vmul.f32 %v6302, 1.442695
      %v6444 = vpow.pop %v6443
      %v6445 = vmul.f32 %v6303, 1.442695
      %v6446 = vpow.pop %v6445
      %v6447 = vmul.f32 %v6304, 1.442695
      %v6448 = vpow.pop %v6447
      %v6449 = vmul.f32 %v6305, 1.442695
      %v6450 = vpow.pop %v6449
      %v6451 = vmul.f32 %v6306, 1.442695
      %v6452 = vpow.pop %v6451
      %v6453 = vmul.f32 %v6307, 1.442695
      %v6454 = vpow.pop %v6453
      %v6455 = vmul.f32 %v6308, 1.442695
      %v6456 = vpow.pop %v6455
      %v6457 = vmul.f32 %v6309, 1.442695
      %v6458 = vpow.pop %v6457
      %v6459 = vmul.f32 %v6310, 1.442695
      %v6460 = vpow.pop %v6459
      %v6461 = vmul.f32 %v6311, 1.442695
      %v6462 = vpow.pop %v6461
      %v6463 = vmul.f32 %v6312, 1.442695
      %v6464 = vpow.pop %v6463
      %v6465 = vmul.f32 %v6313, 1.442695
      %v6466 = vpow.pop %v6465
      %v6467 = vmul.f32 %v6314, 1.442695
      %v6468 = vpow.pop %v6467
      %v6469 = vmul.f32 %v6315, 1.442695
      %v6470 = vpow.pop %v6469
      %v6471 = vmul.f32 %v6316, 1.442695
      %v6472 = vpow.pop %v6471
      %v6473 = vmul.f32 %v6317, 1.442695
      %v6474 = vpow.pop %v6473
      %v6475 = vmul.f32 %v6318, 1.442695
      %v6476 = vpow.pop %v6475
      %v6477 = vmul.f32 %v6319, 1.442695
      %v6478 = vpow.pop %v6477
      %v6479 = vmul.f32 %v6320, 1.442695
      %v6480 = vpow.pop %v6479
      %v6481 = vmul.f32 %v6321, 1.442695
      %v6482 = vpow.pop %v6481
      %v6483 = vmul.f32 %v6322, 1.442695
      %v6484 = vpow.pop %v6483
      %v6485 = vmul.f32 %v6323, 1.442695
      %v6486 = vpow.pop %v6485
      %v6487 = vmul.f32 %v6324, 1.442695
      %v6488 = vpow.pop %v6487
      %v6489 = vmul.f32 %v6325, 1.442695
      %v6490 = vpow.pop %v6489
      %v6491 = vmul.f32 %v6326, 1.442695
      %v6492 = vpow.pop %v6491
      %v6493 = vmul.f32 %v6327, 1.442695
      %v6494 = vpow.pop %v6493
      %v6495 = vmul.f32 %v6328, 1.442695
      %v6496 = vpow.pop %v6495
      %v6497 = vmul.f32 %v6329, 1.442695
      %v6498 = vpow.pop %v6497
      %v6499 = vmul.f32 %v6330, 1.442695
      %v6500 = vpow.pop %v6499
      %v6501 = vmul.f32 %v6331, 1.442695
      %v6502 = vpow.pop %v6501
      %v6503 = vmul.f32 %v6332, 1.442695
      %v6504 = vpow.pop %v6503
      %v6505 = vmul.f32 %v6333, 1.442695
      %v6506 = vpow.pop %v6505
      %v6507 = vmul.f32 %v6334, 1.442695
      %v6508 = vpow.pop %v6507
      %v6509 = vmul.f32 %v6335, 1.442695
      %v6510 = vpow.pop %v6509
      %v6511 = vmul.f32 %v6336, 1.442695
      %v6512 = vpow.pop %v6511
      %v6513 = vmul.f32 %v6337, 1.442695
      %v6514 = vpow.pop %v6513
      %v6515 = vmul.f32 %v6338, 1.442695
      %v6516 = vpow.pop %v6515
      %v6517 = vmul.f32 %v6339, 1.442695
      %v6518 = vpow.pop %v6517
      %v6519 = vmul.f32 %v6340, 1.442695
      %v6520 = vpow.pop %v6519
      %v6521 = vmul.f32 %v6341, 1.442695
      %v6522 = vpow.pop %v6521
      %v6523 = vmul.f32 %v6342, 1.442695
      %v6524 = vpow.pop %v6523
      %v6525 = vmul.f32 %v6343, 1.442695
      %v6526 = vpow.pop %v6525
      %v6527 = vmul.f32 %v6344, 1.442695
      %v6528 = vpow.pop %v6527
      %v6529 = vmul.f32 %v6345, 1.442695
      %v6530 = vpow.pop %v6529
      %v6531 = vmul.f32 %v6346, 1.442695
      %v6532 = vpow.pop %v6531
      %v6533 = vmul.f32 %v6347, 1.442695
      %v6534 = vpow.pop %v6533
      %v6535 = vmul.f32 %v6348, 1.442695
      %v6536 = vpow.pop %v6535
      %v6537 = vmul.f32 %v6349, 1.442695
      %v6538 = vpow.pop %v6537
      %v6539 = vmul.f32 %v6350, 1.442695
      %v6540 = vpow.pop %v6539
      %v6541 = vmul.f32 %v6351, 1.442695
      %v6542 = vpow.pop %v6541
      %v6543 = vmul.f32 %v6352, 1.442695
      %v6544 = vpow.pop %v6543
      %v6545 = vmul.f32 %v6353, 1.442695
      %v6546 = vpow.pop %v6545
      %v6547 = vmul.f32 %v6354, 1.442695
      %v6548 = vpow.pop %v6547
      %v6549 = vmul.f32 %v6355, 1.442695
      %v6550 = vpow.pop %v6549
      %v6551 = vmul.f32 %v6356, 1.442695
      %v6552 = vpow.pop %v6551
      %v6553 = vmul.f32 %v6357, 1.442695
      %v6554 = vpow.pop %v6553
      %v6555 = vmul.f32 %v6358, 1.442695
      %v6556 = vpow.pop %v6555
      %v6557 = vmul.f32 %v6359, 1.442695
      %v6558 = vpow.pop %v6557
      %v6559 = vmul.f32 %v6360, 1.442695
      %v6560 = vpow.pop %v6559
      %v6561 = vmul.f32 %v6361, 1.442695
      %v6562 = vpow.pop %v6561
      %v6563 = vmul.f32 %v6362, 1.442695
      %v6564 = vpow.pop %v6563
      %v6565 = vmul.f32 %v6363, 1.442695
      %v6566 = vpow.pop %v6565
      %v6567 = vmul.f32 %v6364, 1.442695
      %v6568 = vpow.pop %v6567
      %v6569 = vmul.f32 %v6365, 1.442695
      %v6570 = vpow.pop %v6569
      %v6571 = vmul.f32 %v6366, 1.442695
      %v6572 = vpow.pop %v6571
      %v6573 = vmul.f32 %v6367, 1.442695
      %v6574 = vpow.pop %v6573
      %v6575 = vmul.f32 %v6368, 1.442695
      %v6576 = vpow.pop %v6575
      %v6577 = vmul.f32 %v6369, 1.442695
      %v6578 = vpow.pop %v6577
      %v6579 = vmul.f32 %v6370, 1.442695
      %v6580 = vpow.pop %v6579
      %v6581 = vmul.f32 %v6371, 1.442695
      %v6582 = vpow.pop %v6581
      %v6583 = vmul.f32 %v6372, 1.442695
      %v6584 = vpow.pop %v6583
      %v6585 = vmul.f32 %v6373, 1.442695
      %v6586 = vpow.pop %v6585
      %v6587 = vmul.f32 %v6374, 1.442695
      %v6588 = vpow.pop %v6587
      %v6589 = vmul.f32 %v6375, 1.442695
      %v6590 = vpow.pop %v6589
      %v6591 = vmul.f32 %v6376, 1.442695
      %v6592 = vpow.pop %v6591
      %v6593 = vmul.f32 %v6377, 1.442695
      %v6594 = vpow.pop %v6593
      %v6595 = vmul.f32 %v6378, 1.442695
      %v6596 = vpow.pop %v6595
      %v6597 = vmul.f32 %v6379, 1.442695
      %v6598 = vpow.pop %v6597
      %v6599 = vmul.f32 %v6380, 1.442695
      %v6600 = vpow.pop %v6599
      %v6601 = vmul.f32 %v6381, 1.442695
      %v6602 = vpow.pop %v6601
      %v6603 = vmul.f32 %v6382, 1.442695
      %v6604 = vpow.pop %v6603
      %v6605 = vmul.f32 %v6383, 1.442695
      %v6606 = vpow.pop %v6605
      %v6607 = vmul.f32 %v6384, 1.442695
      %v6608 = vpow.pop %v6607
      %v6609 = vmul.f32 %v6385, 1.442695
      %v6610 = vpow.pop %v6609
      %v6611 = vmul.f32 %v6386, 1.442695
      %v6612 = vpow.pop %v6611
      %v6613 = vmul.f32 %v6387, 1.442695
      %v6614 = vpow.pop %v6613
      %v6615 = vmul.f32 %v6388, 1.442695
      %v6616 = vpow.pop %v6615
      %v6617 = vmul.f32 %v6389, 1.442695
      %v6618 = vpow.pop %v6617
      %v6619 = vmul.f32 %v6390, 1.442695
      %v6620 = vpow.pop %v6619
      %v6621 = vmul.f32 %v6391, 1.442695
      %v6622 = vpow.pop %v6621
      %v6623 = vmul.f32 %v6392, 1.442695
      %v6624 = vpow.pop %v6623
      %v6625 = vmul.f32 %v6393, 1.442695
      %v6626 = vpow.pop %v6625
      %v6627 = vmul.f32 %v6394, 1.442695
      %v6628 = vpow.pop %v6627
      %v6629 = vmul.f32 %v6395, 1.442695
      %v6630 = vpow.pop %v6629
      %v6631 = vmul.f32 %v6396, 1.442695
      %v6632 = vpow.pop %v6631
      %v6633 = vmul.f32 %v6397, 1.442695
      %v6634 = vpow.pop %v6633
      %v6635 = vmul.f32 %v6398, 1.442695
      %v6636 = vpow.pop %v6635
      %v6637 = vmul.f32 %v6399, 1.442695
      %v6638 = vpow.pop %v6637
      %v6639 = vmul.f32 %v6400, 1.442695
      %v6640 = vpow.pop %v6639
      %v6641 = vmul.f32 %v6401, 1.442695
      %v6642 = vpow.pop %v6641
      %v6643 = vmul.f32 %v6402, 1.442695
      %v6644 = vpow.pop %v6643
      %v6645 = vmul.f32 %v6403, 1.442695
      %v6646 = vpow.pop %v6645
      %v6647 = vmul.f32 %v6404, 1.442695
      %v6648 = vpow.pop %v6647
      %v6649 = vmul.f32 %v6405, 1.442695
      %v6650 = vpow.pop %v6649
      %v6651 = vmul.f32 %v6406, 1.442695
      %v6652 = vpow.pop %v6651
      %v6653 = vmul.f32 %v6407, 1.442695
      %v6654 = vpow.pop %v6653
      %v6655 = vmul.f32 %v6408, 1.442695
      %v6656 = vpow.pop %v6655
      %v6657 = vmul.f32 %v6409, 1.442695
      %v6658 = vpow.pop %v6657
      %v6659 = vmul.f32 %v6410, 1.442695
      %v6660 = vpow.pop %v6659
      %v6661 = vmul.f32 %v6411, 1.442695
      %v6662 = vpow.pop %v6661
      %v6663 = vmul.f32 %v6412, 1.442695
      %v6664 = vpow.pop %v6663
      %v6665 = vmul.f32 %v6413, 1.442695
      %v6666 = vpow.pop %v6665
      %v6667 = vmul.f32 %v6414, 1.442695
      %v6668 = vpow.pop %v6667
      %v6669 = vmul.f32 %v6415, 1.442695
      %v6670 = vpow.pop %v6669
      %v6671 = vmul.f32 %v6416, 1.442695
      %v6672 = vpow.pop %v6671
      %v6673 = vadd.f32 %v6418, 1.0
      %v6674 = vadd.f32 %v6420, 1.0
      %v6675 = vadd.f32 %v6422, 1.0
      %v6676 = vadd.f32 %v6424, 1.0
      %v6677 = vadd.f32 %v6426, 1.0
      %v6678 = vadd.f32 %v6428, 1.0
      %v6679 = vadd.f32 %v6430, 1.0
      %v6680 = vadd.f32 %v6432, 1.0
      %v6681 = vadd.f32 %v6434, 1.0
      %v6682 = vadd.f32 %v6436, 1.0
      %v6683 = vadd.f32 %v6438, 1.0
      %v6684 = vadd.f32 %v6440, 1.0
      %v6685 = vadd.f32 %v6442, 1.0
      %v6686 = vadd.f32 %v6444, 1.0
      %v6687 = vadd.f32 %v6446, 1.0
      %v6688 = vadd.f32 %v6448, 1.0
      %v6689 = vadd.f32 %v6450, 1.0
      %v6690 = vadd.f32 %v6452, 1.0
      %v6691 = vadd.f32 %v6454, 1.0
      %v6692 = vadd.f32 %v6456, 1.0
      %v6693 = vadd.f32 %v6458, 1.0
      %v6694 = vadd.f32 %v6460, 1.0
      %v6695 = vadd.f32 %v6462, 1.0
      %v6696 = vadd.f32 %v6464, 1.0
      %v6697 = vadd.f32 %v6466, 1.0
      %v6698 = vadd.f32 %v6468, 1.0
      %v6699 = vadd.f32 %v6470, 1.0
      %v6700 = vadd.f32 %v6472, 1.0
      %v6701 = vadd.f32 %v6474, 1.0
      %v6702 = vadd.f32 %v6476, 1.0
      %v6703 = vadd.f32 %v6478, 1.0
      %v6704 = vadd.f32 %v6480, 1.0
      %v6705 = vadd.f32 %v6482, 1.0
      %v6706 = vadd.f32 %v6484, 1.0
      %v6707 = vadd.f32 %v6486, 1.0
      %v6708 = vadd.f32 %v6488, 1.0
      %v6709 = vadd.f32 %v6490, 1.0
      %v6710 = vadd.f32 %v6492, 1.0
      %v6711 = vadd.f32 %v6494, 1.0
      %v6712 = vadd.f32 %v6496, 1.0
      %v6713 = vadd.f32 %v6498, 1.0
      %v6714 = vadd.f32 %v6500, 1.0
      %v6715 = vadd.f32 %v6502, 1.0
      %v6716 = vadd.f32 %v6504, 1.0
      %v6717 = vadd.f32 %v6506, 1.0
      %v6718 = vadd.f32 %v6508, 1.0
      %v6719 = vadd.f32 %v6510, 1.0
      %v6720 = vadd.f32 %v6512, 1.0
      %v6721 = vadd.f32 %v6514, 1.0
      %v6722 = vadd.f32 %v6516, 1.0
      %v6723 = vadd.f32 %v6518, 1.0
      %v6724 = vadd.f32 %v6520, 1.0
      %v6725 = vadd.f32 %v6522, 1.0
      %v6726 = vadd.f32 %v6524, 1.0
      %v6727 = vadd.f32 %v6526, 1.0
      %v6728 = vadd.f32 %v6528, 1.0
      %v6729 = vadd.f32 %v6530, 1.0
      %v6730 = vadd.f32 %v6532, 1.0
      %v6731 = vadd.f32 %v6534, 1.0
      %v6732 = vadd.f32 %v6536, 1.0
      %v6733 = vadd.f32 %v6538, 1.0
      %v6734 = vadd.f32 %v6540, 1.0
      %v6735 = vadd.f32 %v6542, 1.0
      %v6736 = vadd.f32 %v6544, 1.0
      %v6737 = vadd.f32 %v6546, 1.0
      %v6738 = vadd.f32 %v6548, 1.0
      %v6739 = vadd.f32 %v6550, 1.0
      %v6740 = vadd.f32 %v6552, 1.0
      %v6741 = vadd.f32 %v6554, 1.0
      %v6742 = vadd.f32 %v6556, 1.0
      %v6743 = vadd.f32 %v6558, 1.0
      %v6744 = vadd.f32 %v6560, 1.0
      %v6745 = vadd.f32 %v6562, 1.0
      %v6746 = vadd.f32 %v6564, 1.0
      %v6747 = vadd.f32 %v6566, 1.0
      %v6748 = vadd.f32 %v6568, 1.0
      %v6749 = vadd.f32 %v6570, 1.0
      %v6750 = vadd.f32 %v6572, 1.0
      %v6751 = vadd.f32 %v6574, 1.0
      %v6752 = vadd.f32 %v6576, 1.0
      %v6753 = vadd.f32 %v6578, 1.0
      %v6754 = vadd.f32 %v6580, 1.0
      %v6755 = vadd.f32 %v6582, 1.0
      %v6756 = vadd.f32 %v6584, 1.0
      %v6757 = vadd.f32 %v6586, 1.0
      %v6758 = vadd.f32 %v6588, 1.0
      %v6759 = vadd.f32 %v6590, 1.0
      %v6760 = vadd.f32 %v6592, 1.0
      %v6761 = vadd.f32 %v6594, 1.0
      %v6762 = vadd.f32 %v6596, 1.0
      %v6763 = vadd.f32 %v6598, 1.0
      %v6764 = vadd.f32 %v6600, 1.0
      %v6765 = vadd.f32 %v6602, 1.0
      %v6766 = vadd.f32 %v6604, 1.0
      %v6767 = vadd.f32 %v6606, 1.0
      %v6768 = vadd.f32 %v6608, 1.0
      %v6769 = vadd.f32 %v6610, 1.0
      %v6770 = vadd.f32 %v6612, 1.0
      %v6771 = vadd.f32 %v6614, 1.0
      %v6772 = vadd.f32 %v6616, 1.0
      %v6773 = vadd.f32 %v6618, 1.0
      %v6774 = vadd.f32 %v6620, 1.0
      %v6775 = vadd.f32 %v6622, 1.0
      %v6776 = vadd.f32 %v6624, 1.0
      %v6777 = vadd.f32 %v6626, 1.0
      %v6778 = vadd.f32 %v6628, 1.0
      %v6779 = vadd.f32 %v6630, 1.0
      %v6780 = vadd.f32 %v6632, 1.0
      %v6781 = vadd.f32 %v6634, 1.0
      %v6782 = vadd.f32 %v6636, 1.0
      %v6783 = vadd.f32 %v6638, 1.0
      %v6784 = vadd.f32 %v6640, 1.0
      %v6785 = vadd.f32 %v6642, 1.0
      %v6786 = vadd.f32 %v6644, 1.0
      %v6787 = vadd.f32 %v6646, 1.0
      %v6788 = vadd.f32 %v6648, 1.0
      %v6789 = vadd.f32 %v6650, 1.0
      %v6790 = vadd.f32 %v6652, 1.0
      %v6791 = vadd.f32 %v6654, 1.0
      %v6792 = vadd.f32 %v6656, 1.0
      %v6793 = vadd.f32 %v6658, 1.0
      %v6794 = vadd.f32 %v6660, 1.0
      %v6795 = vadd.f32 %v6662, 1.0
      %v6796 = vadd.f32 %v6664, 1.0
      %v6797 = vadd.f32 %v6666, 1.0
      %v6798 = vadd.f32 %v6668, 1.0
      %v6799 = vadd.f32 %v6670, 1.0
      %v6800 = vadd.f32 %v6672, 1.0
      %v6801 = vrcp.pop %v6673
      %v6802 = vmul.f32 1.0, %v6801
      %v6803 = vrcp.pop %v6674
      %v6804 = vmul.f32 1.0, %v6803
      %v6805 = vrcp.pop %v6675
      %v6806 = vmul.f32 1.0, %v6805
      %v6807 = vrcp.pop %v6676
      %v6808 = vmul.f32 1.0, %v6807
      %v6809 = vrcp.pop %v6677
      %v6810 = vmul.f32 1.0, %v6809
      %v6811 = vrcp.pop %v6678
      %v6812 = vmul.f32 1.0, %v6811
      %v6813 = vrcp.pop %v6679
      %v6814 = vmul.f32 1.0, %v6813
      %v6815 = vrcp.pop %v6680
      %v6816 = vmul.f32 1.0, %v6815
      %v6817 = vrcp.pop %v6681
      %v6818 = vmul.f32 1.0, %v6817
      %v6819 = vrcp.pop %v6682
      %v6820 = vmul.f32 1.0, %v6819
      %v6821 = vrcp.pop %v6683
      %v6822 = vmul.f32 1.0, %v6821
      %v6823 = vrcp.pop %v6684
      %v6824 = vmul.f32 1.0, %v6823
      %v6825 = vrcp.pop %v6685
      %v6826 = vmul.f32 1.0, %v6825
      %v6827 = vrcp.pop %v6686
      %v6828 = vmul.f32 1.0, %v6827
      %v6829 = vrcp.pop %v6687
      %v6830 = vmul.f32 1.0, %v6829
      %v6831 = vrcp.pop %v6688
      %v6832 = vmul.f32 1.0, %v6831
      %v6833 = vrcp.pop %v6689
      %v6834 = vmul.f32 1.0, %v6833
      %v6835 = vrcp.pop %v6690
      %v6836 = vmul.f32 1.0, %v6835
      %v6837 = vrcp.pop %v6691
      %v6838 = vmul.f32 1.0, %v6837
      %v6839 = vrcp.pop %v6692
      %v6840 = vmul.f32 1.0, %v6839
      %v6841 = vrcp.pop %v6693
      %v6842 = vmul.f32 1.0, %v6841
      %v6843 = vrcp.pop %v6694
      %v6844 = vmul.f32 1.0, %v6843
      %v6845 = vrcp.pop %v6695
      %v6846 = vmul.f32 1.0, %v6845
      %v6847 = vrcp.pop %v6696
      %v6848 = vmul.f32 1.0, %v6847
      %v6849 = vrcp.pop %v6697
      %v6850 = vmul.f32 1.0, %v6849
      %v6851 = vrcp.pop %v6698
      %v6852 = vmul.f32 1.0, %v6851
      %v6853 = vrcp.pop %v6699
      %v6854 = vmul.f32 1.0, %v6853
      %v6855 = vrcp.pop %v6700
      %v6856 = vmul.f32 1.0, %v6855
      %v6857 = vrcp.pop %v6701
      %v6858 = vmul.f32 1.0, %v6857
      %v6859 = vrcp.pop %v6702
      %v6860 = vmul.f32 1.0, %v6859
      %v6861 = vrcp.pop %v6703
      %v6862 = vmul.f32 1.0, %v6861
      %v6863 = vrcp.pop %v6704
      %v6864 = vmul.f32 1.0, %v6863
      %v6865 = vrcp.pop %v6705
      %v6866 = vmul.f32 1.0, %v6865
      %v6867 = vrcp.pop %v6706
      %v6868 = vmul.f32 1.0, %v6867
      %v6869 = vrcp.pop %v6707
      %v6870 = vmul.f32 1.0, %v6869
      %v6871 = vrcp.pop %v6708
      %v6872 = vmul.f32 1.0, %v6871
      %v6873 = vrcp.pop %v6709
      %v6874 = vmul.f32 1.0, %v6873
      %v6875 = vrcp.pop %v6710
      %v6876 = vmul.f32 1.0, %v6875
      %v6877 = vrcp.pop %v6711
      %v6878 = vmul.f32 1.0, %v6877
      %v6879 = vrcp.pop %v6712
      %v6880 = vmul.f32 1.0, %v6879
      %v6881 = vrcp.pop %v6713
      %v6882 = vmul.f32 1.0, %v6881
      %v6883 = vrcp.pop %v6714
      %v6884 = vmul.f32 1.0, %v6883
      %v6885 = vrcp.pop %v6715
      %v6886 = vmul.f32 1.0, %v6885
      %v6887 = vrcp.pop %v6716
      %v6888 = vmul.f32 1.0, %v6887
      %v6889 = vrcp.pop %v6717
      %v6890 = vmul.f32 1.0, %v6889
      %v6891 = vrcp.pop %v6718
      %v6892 = vmul.f32 1.0, %v6891
      %v6893 = vrcp.pop %v6719
      %v6894 = vmul.f32 1.0, %v6893
      %v6895 = vrcp.pop %v6720
      %v6896 = vmul.f32 1.0, %v6895
      %v6897 = vrcp.pop %v6721
      %v6898 = vmul.f32 1.0, %v6897
      %v6899 = vrcp.pop %v6722
      %v6900 = vmul.f32 1.0, %v6899
      %v6901 = vrcp.pop %v6723
      %v6902 = vmul.f32 1.0, %v6901
      %v6903 = vrcp.pop %v6724
      %v6904 = vmul.f32 1.0, %v6903
      %v6905 = vrcp.pop %v6725
      %v6906 = vmul.f32 1.0, %v6905
      %v6907 = vrcp.pop %v6726
      %v6908 = vmul.f32 1.0, %v6907
      %v6909 = vrcp.pop %v6727
      %v6910 = vmul.f32 1.0, %v6909
      %v6911 = vrcp.pop %v6728
      %v6912 = vmul.f32 1.0, %v6911
      %v6913 = vrcp.pop %v6729
      %v6914 = vmul.f32 1.0, %v6913
      %v6915 = vrcp.pop %v6730
      %v6916 = vmul.f32 1.0, %v6915
      %v6917 = vrcp.pop %v6731
      %v6918 = vmul.f32 1.0, %v6917
      %v6919 = vrcp.pop %v6732
      %v6920 = vmul.f32 1.0, %v6919
      %v6921 = vrcp.pop %v6733
      %v6922 = vmul.f32 1.0, %v6921
      %v6923 = vrcp.pop %v6734
      %v6924 = vmul.f32 1.0, %v6923
      %v6925 = vrcp.pop %v6735
      %v6926 = vmul.f32 1.0, %v6925
      %v6927 = vrcp.pop %v6736
      %v6928 = vmul.f32 1.0, %v6927
      %v6929 = vrcp.pop %v6737
      %v6930 = vmul.f32 1.0, %v6929
      %v6931 = vrcp.pop %v6738
      %v6932 = vmul.f32 1.0, %v6931
      %v6933 = vrcp.pop %v6739
      %v6934 = vmul.f32 1.0, %v6933
      %v6935 = vrcp.pop %v6740
      %v6936 = vmul.f32 1.0, %v6935
      %v6937 = vrcp.pop %v6741
      %v6938 = vmul.f32 1.0, %v6937
      %v6939 = vrcp.pop %v6742
      %v6940 = vmul.f32 1.0, %v6939
      %v6941 = vrcp.pop %v6743
      %v6942 = vmul.f32 1.0, %v6941
      %v6943 = vrcp.pop %v6744
      %v6944 = vmul.f32 1.0, %v6943
      %v6945 = vrcp.pop %v6745
      %v6946 = vmul.f32 1.0, %v6945
      %v6947 = vrcp.pop %v6746
      %v6948 = vmul.f32 1.0, %v6947
      %v6949 = vrcp.pop %v6747
      %v6950 = vmul.f32 1.0, %v6949
      %v6951 = vrcp.pop %v6748
      %v6952 = vmul.f32 1.0, %v6951
      %v6953 = vrcp.pop %v6749
      %v6954 = vmul.f32 1.0, %v6953
      %v6955 = vrcp.pop %v6750
      %v6956 = vmul.f32 1.0, %v6955
      %v6957 = vrcp.pop %v6751
      %v6958 = vmul.f32 1.0, %v6957
      %v6959 = vrcp.pop %v6752
      %v6960 = vmul.f32 1.0, %v6959
      %v6961 = vrcp.pop %v6753
      %v6962 = vmul.f32 1.0, %v6961
      %v6963 = vrcp.pop %v6754
      %v6964 = vmul.f32 1.0, %v6963
      %v6965 = vrcp.pop %v6755
      %v6966 = vmul.f32 1.0, %v6965
      %v6967 = vrcp.pop %v6756
      %v6968 = vmul.f32 1.0, %v6967
      %v6969 = vrcp.pop %v6757
      %v6970 = vmul.f32 1.0, %v6969
      %v6971 = vrcp.pop %v6758
      %v6972 = vmul.f32 1.0, %v6971
      %v6973 = vrcp.pop %v6759
      %v6974 = vmul.f32 1.0, %v6973
      %v6975 = vrcp.pop %v6760
      %v6976 = vmul.f32 1.0, %v6975
      %v6977 = vrcp.pop %v6761
      %v6978 = vmul.f32 1.0, %v6977
      %v6979 = vrcp.pop %v6762
      %v6980 = vmul.f32 1.0, %v6979
      %v6981 = vrcp.pop %v6763
      %v6982 = vmul.f32 1.0, %v6981
      %v6983 = vrcp.pop %v6764
      %v6984 = vmul.f32 1.0, %v6983
      %v6985 = vrcp.pop %v6765
      %v6986 = vmul.f32 1.0, %v6985
      %v6987 = vrcp.pop %v6766
      %v6988 = vmul.f32 1.0, %v6987
      %v6989 = vrcp.pop %v6767
      %v6990 = vmul.f32 1.0, %v6989
      %v6991 = vrcp.pop %v6768
      %v6992 = vmul.f32 1.0, %v6991
      %v6993 = vrcp.pop %v6769
      %v6994 = vmul.f32 1.0, %v6993
      %v6995 = vrcp.pop %v6770
      %v6996 = vmul.f32 1.0, %v6995
      %v6997 = vrcp.pop %v6771
      %v6998 = vmul.f32 1.0, %v6997
      %v6999 = vrcp.pop %v6772
      %v7000 = vmul.f32 1.0, %v6999
      %v7001 = vrcp.pop %v6773
      %v7002 = vmul.f32 1.0, %v7001
      %v7003 = vrcp.pop %v6774
      %v7004 = vmul.f32 1.0, %v7003
      %v7005 = vrcp.pop %v6775
      %v7006 = vmul.f32 1.0, %v7005
      %v7007 = vrcp.pop %v6776
      %v7008 = vmul.f32 1.0, %v7007
      %v7009 = vrcp.pop %v6777
      %v7010 = vmul.f32 1.0, %v7009
      %v7011 = vrcp.pop %v6778
      %v7012 = vmul.f32 1.0, %v7011
      %v7013 = vrcp.pop %v6779
      %v7014 = vmul.f32 1.0, %v7013
      %v7015 = vrcp.pop %v6780
      %v7016 = vmul.f32 1.0, %v7015
      %v7017 = vrcp.pop %v6781
      %v7018 = vmul.f32 1.0, %v7017
      %v7019 = vrcp.pop %v6782
      %v7020 = vmul.f32 1.0, %v7019
      %v7021 = vrcp.pop %v6783
      %v7022 = vmul.f32 1.0, %v7021
      %v7023 = vrcp.pop %v6784
      %v7024 = vmul.f32 1.0, %v7023
      %v7025 = vrcp.pop %v6785
      %v7026 = vmul.f32 1.0, %v7025
      %v7027 = vrcp.pop %v6786
      %v7028 = vmul.f32 1.0, %v7027
      %v7029 = vrcp.pop %v6787
      %v7030 = vmul.f32 1.0, %v7029
      %v7031 = vrcp.pop %v6788
      %v7032 = vmul.f32 1.0, %v7031
      %v7033 = vrcp.pop %v6789
      %v7034 = vmul.f32 1.0, %v7033
      %v7035 = vrcp.pop %v6790
      %v7036 = vmul.f32 1.0, %v7035
      %v7037 = vrcp.pop %v6791
      %v7038 = vmul.f32 1.0, %v7037
      %v7039 = vrcp.pop %v6792
      %v7040 = vmul.f32 1.0, %v7039
      %v7041 = vrcp.pop %v6793
      %v7042 = vmul.f32 1.0, %v7041
      %v7043 = vrcp.pop %v6794
      %v7044 = vmul.f32 1.0, %v7043
      %v7045 = vrcp.pop %v6795
      %v7046 = vmul.f32 1.0, %v7045
      %v7047 = vrcp.pop %v6796
      %v7048 = vmul.f32 1.0, %v7047
      %v7049 = vrcp.pop %v6797
      %v7050 = vmul.f32 1.0, %v7049
      %v7051 = vrcp.pop %v6798
      %v7052 = vmul.f32 1.0, %v7051
      %v7053 = vrcp.pop %v6799
      %v7054 = vmul.f32 1.0, %v7053
      %v7055 = vrcp.pop %v6800
      %v7056 = vmul.f32 1.0, %v7055
      %v7057 = vmul.f32 %v6802, 1.002
      %v7058 = vmul.f32 %v6804, 1.002
      %v7059 = vmul.f32 %v6806, 1.002
      %v7060 = vmul.f32 %v6808, 1.002
      %v7061 = vmul.f32 %v6810, 1.002
      %v7062 = vmul.f32 %v6812, 1.002
      %v7063 = vmul.f32 %v6814, 1.002
      %v7064 = vmul.f32 %v6816, 1.002
      %v7065 = vmul.f32 %v6818, 1.002
      %v7066 = vmul.f32 %v6820, 1.002
      %v7067 = vmul.f32 %v6822, 1.002
      %v7068 = vmul.f32 %v6824, 1.002
      %v7069 = vmul.f32 %v6826, 1.002
      %v7070 = vmul.f32 %v6828, 1.002
      %v7071 = vmul.f32 %v6830, 1.002
      %v7072 = vmul.f32 %v6832, 1.002
      %v7073 = vmul.f32 %v6834, 1.002
      %v7074 = vmul.f32 %v6836, 1.002
      %v7075 = vmul.f32 %v6838, 1.002
      %v7076 = vmul.f32 %v6840, 1.002
      %v7077 = vmul.f32 %v6842, 1.002
      %v7078 = vmul.f32 %v6844, 1.002
      %v7079 = vmul.f32 %v6846, 1.002
      %v7080 = vmul.f32 %v6848, 1.002
      %v7081 = vmul.f32 %v6850, 1.002
      %v7082 = vmul.f32 %v6852, 1.002
      %v7083 = vmul.f32 %v6854, 1.002
      %v7084 = vmul.f32 %v6856, 1.002
      %v7085 = vmul.f32 %v6858, 1.002
      %v7086 = vmul.f32 %v6860, 1.002
      %v7087 = vmul.f32 %v6862, 1.002
      %v7088 = vmul.f32 %v6864, 1.002
      %v7089 = vmul.f32 %v6866, 1.002
      %v7090 = vmul.f32 %v6868, 1.002
      %v7091 = vmul.f32 %v6870, 1.002
      %v7092 = vmul.f32 %v6872, 1.002
      %v7093 = vmul.f32 %v6874, 1.002
      %v7094 = vmul.f32 %v6876, 1.002
      %v7095 = vmul.f32 %v6878, 1.002
      %v7096 = vmul.f32 %v6880, 1.002
      %v7097 = vmul.f32 %v6882, 1.002
      %v7098 = vmul.f32 %v6884, 1.002
      %v7099 = vmul.f32 %v6886, 1.002
      %v7100 = vmul.f32 %v6888, 1.002
      %v7101 = vmul.f32 %v6890, 1.002
      %v7102 = vmul.f32 %v6892, 1.002
      %v7103 = vmul.f32 %v6894, 1.002
      %v7104 = vmul.f32 %v6896, 1.002
      %v7105 = vmul.f32 %v6898, 1.002
      %v7106 = vmul.f32 %v6900, 1.002
      %v7107 = vmul.f32 %v6902, 1.002
      %v7108 = vmul.f32 %v6904, 1.002
      %v7109 = vmul.f32 %v6906, 1.002
      %v7110 = vmul.f32 %v6908, 1.002
      %v7111 = vmul.f32 %v6910, 1.002
      %v7112 = vmul.f32 %v6912, 1.002
      %v7113 = vmul.f32 %v6914, 1.002
      %v7114 = vmul.f32 %v6916, 1.002
      %v7115 = vmul.f32 %v6918, 1.002
      %v7116 = vmul.f32 %v6920, 1.002
      %v7117 = vmul.f32 %v6922, 1.002
      %v7118 = vmul.f32 %v6924, 1.002
      %v7119 = vmul.f32 %v6926, 1.002
      %v7120 = vmul.f32 %v6928, 1.002
      %v7121 = vmul.f32 %v6930, 1.002
      %v7122 = vmul.f32 %v6932, 1.002
      %v7123 = vmul.f32 %v6934, 1.002
      %v7124 = vmul.f32 %v6936, 1.002
      %v7125 = vmul.f32 %v6938, 1.002
      %v7126 = vmul.f32 %v6940, 1.002
      %v7127 = vmul.f32 %v6942, 1.002
      %v7128 = vmul.f32 %v6944, 1.002
      %v7129 = vmul.f32 %v6946, 1.002
      %v7130 = vmul.f32 %v6948, 1.002
      %v7131 = vmul.f32 %v6950, 1.002
      %v7132 = vmul.f32 %v6952, 1.002
      %v7133 = vmul.f32 %v6954, 1.002
      %v7134 = vmul.f32 %v6956, 1.002
      %v7135 = vmul.f32 %v6958, 1.002
      %v7136 = vmul.f32 %v6960, 1.002
      %v7137 = vmul.f32 %v6962, 1.002
      %v7138 = vmul.f32 %v6964, 1.002
      %v7139 = vmul.f32 %v6966, 1.002
      %v7140 = vmul.f32 %v6968, 1.002
      %v7141 = vmul.f32 %v6970, 1.002
      %v7142 = vmul.f32 %v6972, 1.002
      %v7143 = vmul.f32 %v6974, 1.002
      %v7144 = vmul.f32 %v6976, 1.002
      %v7145 = vmul.f32 %v6978, 1.002
      %v7146 = vmul.f32 %v6980, 1.002
      %v7147 = vmul.f32 %v6982, 1.002
      %v7148 = vmul.f32 %v6984, 1.002
      %v7149 = vmul.f32 %v6986, 1.002
      %v7150 = vmul.f32 %v6988, 1.002
      %v7151 = vmul.f32 %v6990, 1.002
      %v7152 = vmul.f32 %v6992, 1.002
      %v7153 = vmul.f32 %v6994, 1.002
      %v7154 = vmul.f32 %v6996, 1.002
      %v7155 = vmul.f32 %v6998, 1.002
      %v7156 = vmul.f32 %v7000, 1.002
      %v7157 = vmul.f32 %v7002, 1.002
      %v7158 = vmul.f32 %v7004, 1.002
      %v7159 = vmul.f32 %v7006, 1.002
      %v7160 = vmul.f32 %v7008, 1.002
      %v7161 = vmul.f32 %v7010, 1.002
      %v7162 = vmul.f32 %v7012, 1.002
      %v7163 = vmul.f32 %v7014, 1.002
      %v7164 = vmul.f32 %v7016, 1.002
      %v7165 = vmul.f32 %v7018, 1.002
      %v7166 = vmul.f32 %v7020, 1.002
      %v7167 = vmul.f32 %v7022, 1.002
      %v7168 = vmul.f32 %v7024, 1.002
      %v7169 = vmul.f32 %v7026, 1.002
      %v7170 = vmul.f32 %v7028, 1.002
      %v7171 = vmul.f32 %v7030, 1.002
      %v7172 = vmul.f32 %v7032, 1.002
      %v7173 = vmul.f32 %v7034, 1.002
      %v7174 = vmul.f32 %v7036, 1.002
      %v7175 = vmul.f32 %v7038, 1.002
      %v7176 = vmul.f32 %v7040, 1.002
      %v7177 = vmul.f32 %v7042, 1.002
      %v7178 = vmul.f32 %v7044, 1.002
      %v7179 = vmul.f32 %v7046, 1.002
      %v7180 = vmul.f32 %v7048, 1.002
      %v7181 = vmul.f32 %v7050, 1.002
      %v7182 = vmul.f32 %v7052, 1.002
      %v7183 = vmul.f32 %v7054, 1.002
      %v7184 = vmul.f32 %v7056, 1.002
      %v7185 = vsub.f32 %v7057, 0.001
      %v7186 = vsub.f32 %v7058, 0.001
      %v7187 = vsub.f32 %v7059, 0.001
      %v7188 = vsub.f32 %v7060, 0.001
      %v7189 = vsub.f32 %v7061, 0.001
      %v7190 = vsub.f32 %v7062, 0.001
      %v7191 = vsub.f32 %v7063, 0.001
      %v7192 = vsub.f32 %v7064, 0.001
      %v7193 = vsub.f32 %v7065, 0.001
      %v7194 = vsub.f32 %v7066, 0.001
      %v7195 = vsub.f32 %v7067, 0.001
      %v7196 = vsub.f32 %v7068, 0.001
      %v7197 = vsub.f32 %v7069, 0.001
      %v7198 = vsub.f32 %v7070, 0.001
      %v7199 = vsub.f32 %v7071, 0.001
      %v7200 = vsub.f32 %v7072, 0.001
      %v7201 = vsub.f32 %v7073, 0.001
      %v7202 = vsub.f32 %v7074, 0.001
      %v7203 = vsub.f32 %v7075, 0.001
      %v7204 = vsub.f32 %v7076, 0.001
      %v7205 = vsub.f32 %v7077, 0.001
      %v7206 = vsub.f32 %v7078, 0.001
      %v7207 = vsub.f32 %v7079, 0.001
      %v7208 = vsub.f32 %v7080, 0.001
      %v7209 = vsub.f32 %v7081, 0.001
      %v7210 = vsub.f32 %v7082, 0.001
      %v7211 = vsub.f32 %v7083, 0.001
      %v7212 = vsub.f32 %v7084, 0.001
      %v7213 = vsub.f32 %v7085, 0.001
      %v7214 = vsub.f32 %v7086, 0.001
      %v7215 = vsub.f32 %v7087, 0.001
      %v7216 = vsub.f32 %v7088, 0.001
      %v7217 = vsub.f32 %v7089, 0.001
      %v7218 = vsub.f32 %v7090, 0.001
      %v7219 = vsub.f32 %v7091, 0.001
      %v7220 = vsub.f32 %v7092, 0.001
      %v7221 = vsub.f32 %v7093, 0.001
      %v7222 = vsub.f32 %v7094, 0.001
      %v7223 = vsub.f32 %v7095, 0.001
      %v7224 = vsub.f32 %v7096, 0.001
      %v7225 = vsub.f32 %v7097, 0.001
      %v7226 = vsub.f32 %v7098, 0.001
      %v7227 = vsub.f32 %v7099, 0.001
      %v7228 = vsub.f32 %v7100, 0.001
      %v7229 = vsub.f32 %v7101, 0.001
      %v7230 = vsub.f32 %v7102, 0.001
      %v7231 = vsub.f32 %v7103, 0.001
      %v7232 = vsub.f32 %v7104, 0.001
      %v7233 = vsub.f32 %v7105, 0.001
      %v7234 = vsub.f32 %v7106, 0.001
      %v7235 = vsub.f32 %v7107, 0.001
      %v7236 = vsub.f32 %v7108, 0.001
      %v7237 = vsub.f32 %v7109, 0.001
      %v7238 = vsub.f32 %v7110, 0.001
      %v7239 = vsub.f32 %v7111, 0.001
      %v7240 = vsub.f32 %v7112, 0.001
      %v7241 = vsub.f32 %v7113, 0.001
      %v7242 = vsub.f32 %v7114, 0.001
      %v7243 = vsub.f32 %v7115, 0.001
      %v7244 = vsub.f32 %v7116, 0.001
      %v7245 = vsub.f32 %v7117, 0.001
      %v7246 = vsub.f32 %v7118, 0.001
      %v7247 = vsub.f32 %v7119, 0.001
      %v7248 = vsub.f32 %v7120, 0.001
      %v7249 = vsub.f32 %v7121, 0.001
      %v7250 = vsub.f32 %v7122, 0.001
      %v7251 = vsub.f32 %v7123, 0.001
      %v7252 = vsub.f32 %v7124, 0.001
      %v7253 = vsub.f32 %v7125, 0.001
      %v7254 = vsub.f32 %v7126, 0.001
      %v7255 = vsub.f32 %v7127, 0.001
      %v7256 = vsub.f32 %v7128, 0.001
      %v7257 = vsub.f32 %v7129, 0.001
      %v7258 = vsub.f32 %v7130, 0.001
      %v7259 = vsub.f32 %v7131, 0.001
      %v7260 = vsub.f32 %v7132, 0.001
      %v7261 = vsub.f32 %v7133, 0.001
      %v7262 = vsub.f32 %v7134, 0.001
      %v7263 = vsub.f32 %v7135, 0.001
      %v7264 = vsub.f32 %v7136, 0.001
      %v7265 = vsub.f32 %v7137, 0.001
      %v7266 = vsub.f32 %v7138, 0.001
      %v7267 = vsub.f32 %v7139, 0.001
      %v7268 = vsub.f32 %v7140, 0.001
      %v7269 = vsub.f32 %v7141, 0.001
      %v7270 = vsub.f32 %v7142, 0.001
      %v7271 = vsub.f32 %v7143, 0.001
      %v7272 = vsub.f32 %v7144, 0.001
      %v7273 = vsub.f32 %v7145, 0.001
      %v7274 = vsub.f32 %v7146, 0.001
      %v7275 = vsub.f32 %v7147, 0.001
      %v7276 = vsub.f32 %v7148, 0.001
      %v7277 = vsub.f32 %v7149, 0.001
      %v7278 = vsub.f32 %v7150, 0.001
      %v7279 = vsub.f32 %v7151, 0.001
      %v7280 = vsub.f32 %v7152, 0.001
      %v7281 = vsub.f32 %v7153, 0.001
      %v7282 = vsub.f32 %v7154, 0.001
      %v7283 = vsub.f32 %v7155, 0.001
      %v7284 = vsub.f32 %v7156, 0.001
      %v7285 = vsub.f32 %v7157, 0.001
      %v7286 = vsub.f32 %v7158, 0.001
      %v7287 = vsub.f32 %v7159, 0.001
      %v7288 = vsub.f32 %v7160, 0.001
      %v7289 = vsub.f32 %v7161, 0.001
      %v7290 = vsub.f32 %v7162, 0.001
      %v7291 = vsub.f32 %v7163, 0.001
      %v7292 = vsub.f32 %v7164, 0.001
      %v7293 = vsub.f32 %v7165, 0.001
      %v7294 = vsub.f32 %v7166, 0.001
      %v7295 = vsub.f32 %v7167, 0.001
      %v7296 = vsub.f32 %v7168, 0.001
      %v7297 = vsub.f32 %v7169, 0.001
      %v7298 = vsub.f32 %v7170, 0.001
      %v7299 = vsub.f32 %v7171, 0.001
      %v7300 = vsub.f32 %v7172, 0.001
      %v7301 = vsub.f32 %v7173, 0.001
      %v7302 = vsub.f32 %v7174, 0.001
      %v7303 = vsub.f32 %v7175, 0.001
      %v7304 = vsub.f32 %v7176, 0.001
      %v7305 = vsub.f32 %v7177, 0.001
      %v7306 = vsub.f32 %v7178, 0.001
      %v7307 = vsub.f32 %v7179, 0.001
      %v7308 = vsub.f32 %v7180, 0.001
      %v7309 = vsub.f32 %v7181, 0.001
      %v7310 = vsub.f32 %v7182, 0.001
      %v7311 = vsub.f32 %v7183, 0.001
      %v7312 = vsub.f32 %v7184, 0.001
      %7313 = vst.msk [vmem:[%s359] sm:$0xff] %vm1139, %v7185
      %7314 = vst.msk [vmem:[%s359 + $0x8] sm:$0xff] %vm1139, %v7186
      %7315 = vst.msk [vmem:[%s359 + $0x10] sm:$0xff] %vm1139, %v7187
      %7316 = vst.msk [vmem:[%s359 + $0x18] sm:$0xff] %vm1139, %v7188
      %7317 = vst.msk [vmem:[%s359 + $0x20] sm:$0xff] %vm1139, %v7189
      %7318 = vst.msk [vmem:[%s359 + $0x28] sm:$0xff] %vm1139, %v7190
      %7319 = vst.msk [vmem:[%s359 + $0x30] sm:$0xff] %vm1139, %v7191
      %7320 = vst.msk [vmem:[%s359 + $0x38] sm:$0xff] %vm1139, %v7192
      %7321 = vst.msk [vmem:[%s359 + $0x40] sm:$0xff] %vm1139, %v7193
      %7322 = vst.msk [vmem:[%s359 + $0x48] sm:$0xff] %vm1139, %v7194
      %7323 = vst.msk [vmem:[%s359 + $0x50] sm:$0xff] %vm1139, %v7195
      %7324 = vst.msk [vmem:[%s359 + $0x58] sm:$0xff] %vm1139, %v7196
      %7325 = vst.msk [vmem:[%s359 + $0x60] sm:$0xff] %vm1139, %v7197
      %7326 = vst.msk [vmem:[%s359 + $0x68] sm:$0xff] %vm1139, %v7198
      %7327 = vst.msk [vmem:[%s359 + $0x70] sm:$0xff] %vm1139, %v7199
      %7328 = vst.msk [vmem:[%s359 + $0x78] sm:$0xff] %vm1139, %v7200
      %7329 = vst.msk [vmem:[%s359 + $0x80] sm:$0xff] %vm1139, %v7201
      %7330 = vst.msk [vmem:[%s359 + $0x88] sm:$0xff] %vm1139, %v7202
      %7331 = vst.msk [vmem:[%s359 + $0x90] sm:$0xff] %vm1139, %v7203
      %7332 = vst.msk [vmem:[%s359 + $0x98] sm:$0xff] %vm1139, %v7204
      %7333 = vst.msk [vmem:[%s359 + $0xa0] sm:$0xff] %vm1139, %v7205
      %7334 = vst.msk [vmem:[%s359 + $0xa8] sm:$0xff] %vm1139, %v7206
      %7335 = vst.msk [vmem:[%s359 + $0xb0] sm:$0xff] %vm1139, %v7207
      %7336 = vst.msk [vmem:[%s359 + $0xb8] sm:$0xff] %vm1139, %v7208
      %7337 = vst.msk [vmem:[%s359 + $0xc0] sm:$0xff] %vm1139, %v7209
      %7338 = vst.msk [vmem:[%s359 + $0xc8] sm:$0xff] %vm1139, %v7210
      %7339 = vst.msk [vmem:[%s359 + $0xd0] sm:$0xff] %vm1139, %v7211
      %7340 = vst.msk [vmem:[%s359 + $0xd8] sm:$0xff] %vm1139, %v7212
      %7341 = vst.msk [vmem:[%s359 + $0xe0] sm:$0xff] %vm1139, %v7213
      %7342 = vst.msk [vmem:[%s359 + $0xe8] sm:$0xff] %vm1139, %v7214
      %7343 = vst.msk [vmem:[%s359 + $0xf0] sm:$0xff] %vm1139, %v7215
      %7344 = vst.msk [vmem:[%s359 + $0xf8] sm:$0xff] %vm1139, %v7216
      %7345 = vst.msk [vmem:[%s359 + $0x100] sm:$0xff] %vm1139, %v7217
      %7346 = vst.msk [vmem:[%s359 + $0x108] sm:$0xff] %vm1139, %v7218
      %7347 = vst.msk [vmem:[%s359 + $0x110] sm:$0xff] %vm1139, %v7219
      %7348 = vst.msk [vmem:[%s359 + $0x118] sm:$0xff] %vm1139, %v7220
      %7349 = vst.msk [vmem:[%s359 + $0x120] sm:$0xff] %vm1139, %v7221
      %7350 = vst.msk [vmem:[%s359 + $0x128] sm:$0xff] %vm1139, %v7222
      %7351 = vst.msk [vmem:[%s359 + $0x130] sm:$0xff] %vm1139, %v7223
      %7352 = vst.msk [vmem:[%s359 + $0x138] sm:$0xff] %vm1139, %v7224
      %7353 = vst.msk [vmem:[%s359 + $0x140] sm:$0xff] %vm1139, %v7225
      %7354 = vst.msk [vmem:[%s359 + $0x148] sm:$0xff] %vm1139, %v7226
      %7355 = vst.msk [vmem:[%s359 + $0x150] sm:$0xff] %vm1139, %v7227
      %7356 = vst.msk [vmem:[%s359 + $0x158] sm:$0xff] %vm1139, %v7228
      %7357 = vst.msk [vmem:[%s359 + $0x160] sm:$0xff] %vm1139, %v7229
      %7358 = vst.msk [vmem:[%s359 + $0x168] sm:$0xff] %vm1139, %v7230
      %7359 = vst.msk [vmem:[%s359 + $0x170] sm:$0xff] %vm1139, %v7231
      %7360 = vst.msk [vmem:[%s359 + $0x178] sm:$0xff] %vm1139, %v7232
      %7361 = vst.msk [vmem:[%s359 + $0x180] sm:$0xff] %vm1139, %v7233
      %7362 = vst.msk [vmem:[%s359 + $0x188] sm:$0xff] %vm1139, %v7234
      %7363 = vst.msk [vmem:[%s359 + $0x190] sm:$0xff] %vm1139, %v7235
      %7364 = vst.msk [vmem:[%s359 + $0x198] sm:$0xff] %vm1139, %v7236
      %7365 = vst.msk [vmem:[%s359 + $0x1a0] sm:$0xff] %vm1139, %v7237
      %7366 = vst.msk [vmem:[%s359 + $0x1a8] sm:$0xff] %vm1139, %v7238
      %7367 = vst.msk [vmem:[%s359 + $0x1b0] sm:$0xff] %vm1139, %v7239
      %7368 = vst.msk [vmem:[%s359 + $0x1b8] sm:$0xff] %vm1139, %v7240
      %7369 = vst.msk [vmem:[%s359 + $0x1c0] sm:$0xff] %vm1139, %v7241
      %7370 = vst.msk [vmem:[%s359 + $0x1c8] sm:$0xff] %vm1139, %v7242
      %7371 = vst.msk [vmem:[%s359 + $0x1d0] sm:$0xff] %vm1139, %v7243
      %7372 = vst.msk [vmem:[%s359 + $0x1d8] sm:$0xff] %vm1139, %v7244
      %7373 = vst.msk [vmem:[%s359 + $0x1e0] sm:$0xff] %vm1139, %v7245
      %7374 = vst.msk [vmem:[%s359 + $0x1e8] sm:$0xff] %vm1139, %v7246
      %7375 = vst.msk [vmem:[%s359 + $0x1f0] sm:$0xff] %vm1139, %v7247
      %7376 = vst.msk [vmem:[%s359 + $0x1f8] sm:$0xff] %vm1139, %v7248
      %7377 = vst.msk [vmem:[%s359 + $0x200] sm:$0xff] %vm1139, %v7249
      %7378 = vst.msk [vmem:[%s359 + $0x208] sm:$0xff] %vm1139, %v7250
      %7379 = vst.msk [vmem:[%s359 + $0x210] sm:$0xff] %vm1139, %v7251
      %7380 = vst.msk [vmem:[%s359 + $0x218] sm:$0xff] %vm1139, %v7252
      %7381 = vst.msk [vmem:[%s359 + $0x220] sm:$0xff] %vm1139, %v7253
      %7382 = vst.msk [vmem:[%s359 + $0x228] sm:$0xff] %vm1139, %v7254
      %7383 = vst.msk [vmem:[%s359 + $0x230] sm:$0xff] %vm1139, %v7255
      %7384 = vst.msk [vmem:[%s359 + $0x238] sm:$0xff] %vm1139, %v7256
      %7385 = vst.msk [vmem:[%s359 + $0x240] sm:$0xff] %vm1139, %v7257
      %7386 = vst.msk [vmem:[%s359 + $0x248] sm:$0xff] %vm1139, %v7258
      %7387 = vst.msk [vmem:[%s359 + $0x250] sm:$0xff] %vm1139, %v7259
      %7388 = vst.msk [vmem:[%s359 + $0x258] sm:$0xff] %vm1139, %v7260
      %7389 = vst.msk [vmem:[%s359 + $0x260] sm:$0xff] %vm1139, %v7261
      %7390 = vst.msk [vmem:[%s359 + $0x268] sm:$0xff] %vm1139, %v7262
      %7391 = vst.msk [vmem:[%s359 + $0x270] sm:$0xff] %vm1139, %v7263
      %7392 = vst.msk [vmem:[%s359 + $0x278] sm:$0xff] %vm1139, %v7264
      %7393 = vst.msk [vmem:[%s359 + $0x280] sm:$0xff] %vm1139, %v7265
      %7394 = vst.msk [vmem:[%s359 + $0x288] sm:$0xff] %vm1139, %v7266
      %7395 = vst.msk [vmem:[%s359 + $0x290] sm:$0xff] %vm1139, %v7267
      %7396 = vst.msk [vmem:[%s359 + $0x298] sm:$0xff] %vm1139, %v7268
      %7397 = vst.msk [vmem:[%s359 + $0x2a0] sm:$0xff] %vm1139, %v7269
      %7398 = vst.msk [vmem:[%s359 + $0x2a8] sm:$0xff] %vm1139, %v7270
      %7399 = vst.msk [vmem:[%s359 + $0x2b0] sm:$0xff] %vm1139, %v7271
      %7400 = vst.msk [vmem:[%s359 + $0x2b8] sm:$0xff] %vm1139, %v7272
      %7401 = vst.msk [vmem:[%s359 + $0x2c0] sm:$0xff] %vm1139, %v7273
      %7402 = vst.msk [vmem:[%s359 + $0x2c8] sm:$0xff] %vm1139, %v7274
      %7403 = vst.msk [vmem:[%s359 + $0x2d0] sm:$0xff] %vm1139, %v7275
      %7404 = vst.msk [vmem:[%s359 + $0x2d8] sm:$0xff] %vm1139, %v7276
      %7405 = vst.msk [vmem:[%s359 + $0x2e0] sm:$0xff] %vm1139, %v7277
      %7406 = vst.msk [vmem:[%s359 + $0x2e8] sm:$0xff] %vm1139, %v7278
      %7407 = vst.msk [vmem:[%s359 + $0x2f0] sm:$0xff] %vm1139, %v7279
      %7408 = vst.msk [vmem:[%s359 + $0x2f8] sm:$0xff] %vm1139, %v7280
      %7409 = vst.msk [vmem:[%s359 + $0x300] sm:$0xff] %vm1139, %v7281
      %7410 = vst.msk [vmem:[%s359 + $0x308] sm:$0xff] %vm1139, %v7282
      %7411 = vst.msk [vmem:[%s359 + $0x310] sm:$0xff] %vm1139, %v7283
      %7412 = vst.msk [vmem:[%s359 + $0x318] sm:$0xff] %vm1139, %v7284
      %7413 = vst.msk [vmem:[%s359 + $0x320] sm:$0xff] %vm1139, %v7285
      %7414 = vst.msk [vmem:[%s359 + $0x328] sm:$0xff] %vm1139, %v7286
      %7415 = vst.msk [vmem:[%s359 + $0x330] sm:$0xff] %vm1139, %v7287
      %7416 = vst.msk [vmem:[%s359 + $0x338] sm:$0xff] %vm1139, %v7288
      %7417 = vst.msk [vmem:[%s359 + $0x340] sm:$0xff] %vm1139, %v7289
      %7418 = vst.msk [vmem:[%s359 + $0x348] sm:$0xff] %vm1139, %v7290
      %7419 = vst.msk [vmem:[%s359 + $0x350] sm:$0xff] %vm1139, %v7291
      %7420 = vst.msk [vmem:[%s359 + $0x358] sm:$0xff] %vm1139, %v7292
      %7421 = vst.msk [vmem:[%s359 + $0x360] sm:$0xff] %vm1139, %v7293
      %7422 = vst.msk [vmem:[%s359 + $0x368] sm:$0xff] %vm1139, %v7294
      %7423 = vst.msk [vmem:[%s359 + $0x370] sm:$0xff] %vm1139, %v7295
      %7424 = vst.msk [vmem:[%s359 + $0x378] sm:$0xff] %vm1139, %v7296
      %7425 = vst.msk [vmem:[%s359 + $0x380] sm:$0xff] %vm1139, %v7297
      %7426 = vst.msk [vmem:[%s359 + $0x388] sm:$0xff] %vm1139, %v7298
      %7427 = vst.msk [vmem:[%s359 + $0x390] sm:$0xff] %vm1139, %v7299
      %7428 = vst.msk [vmem:[%s359 + $0x398] sm:$0xff] %vm1139, %v7300
      %7429 = vst.msk [vmem:[%s359 + $0x3a0] sm:$0xff] %vm1139, %v7301
      %7430 = vst.msk [vmem:[%s359 + $0x3a8] sm:$0xff] %vm1139, %v7302
      %7431 = vst.msk [vmem:[%s359 + $0x3b0] sm:$0xff] %vm1139, %v7303
      %7432 = vst.msk [vmem:[%s359 + $0x3b8] sm:$0xff] %vm1139, %v7304
      %7433 = vst.msk [vmem:[%s359 + $0x3c0] sm:$0xff] %vm1139, %v7305
      %7434 = vst.msk [vmem:[%s359 + $0x3c8] sm:$0xff] %vm1139, %v7306
      %7435 = vst.msk [vmem:[%s359 + $0x3d0] sm:$0xff] %vm1139, %v7307
      %7436 = vst.msk [vmem:[%s359 + $0x3d8] sm:$0xff] %vm1139, %v7308
      %7437 = vst.msk [vmem:[%s359 + $0x3e0] sm:$0xff] %vm1139, %v7309
      %7438 = vst.msk [vmem:[%s359 + $0x3e8] sm:$0xff] %vm1139, %v7310
      %7439 = vst.msk [vmem:[%s359 + $0x3f0] sm:$0xff] %vm1139, %v7311
      %7440 = vst.msk [vmem:[%s359 + $0x3f8] sm:$0xff] %vm1139, %v7312
      %v7441 = vld [vmem:[%s5] sm:$0xff]
      %v7442 = vld [vmem:[%s5 + $0x8] sm:$0xff]
      %v7443 = vld [vmem:[%s5 + $0x10] sm:$0xff]
      %v7444 = vld [vmem:[%s5 + $0x18] sm:$0xff]
      %v7445 = vld [vmem:[%s5 + $0x20] sm:$0xff]
      %v7446 = vld [vmem:[%s5 + $0x28] sm:$0xff]
      %v7447 = vld [vmem:[%s5 + $0x30] sm:$0xff]
      %v7448 = vld [vmem:[%s5 + $0x38] sm:$0xff]
      %v7449 = vld [vmem:[#allocation2] sm:$0x1]
      %v7451 = vlaneseq
      %v7452 = vshrl.u32 %v7451, 7
      %v7453 = vsub.s32 0, %v7452
      %v7454 = vrot.slane %v7449, %v7453
      %7456 = vmatprep.subr.mxu0 0.0
      %7457 = vmatpush1.msra.mxu0 0.0
      %7458 = vmatprep.subr.mxu0 0.0
      %7459 = vmatpush1.msra.mxu0 0.0
      %7460 = vmatprep.subr.mxu0 0.0
      %7461 = vmatpush1.msra.mxu0 0.0
      %7462 = vmatprep.subr.mxu0 0.0
      %7463 = vmatpush1.msra.mxu0 0.0
      %7464 = vmatprep.subr.mxu0 0.0
      %7465 = vmatpush1.msra.mxu0 0.0
      %7466 = vmatprep.subr.mxu0 0.0
      %7467 = vmatpush1.msra.mxu0 0.0
      %7468 = vmatprep.subr.mxu0 0.0
      %7469 = vmatpush1.msra.mxu0 0.0
      %7470 = vmatprep.subr.mxu0 0.0
      %7471 = vmatpush1.msra.mxu0 0.0
      %7472 = vmatprep.subr.mxu0 0.0
      %7473 = vmatpush1.msra.mxu0 %v7448
      %7474 = vmatprep.subr.mxu0 0.0
      %7475 = vmatpush1.msra.mxu0 %v7447
      %7476 = vmatprep.subr.mxu0 0.0
      %7477 = vmatpush1.msra.mxu0 %v7446
      %7478 = vmatprep.subr.mxu0 0.0
      %7479 = vmatpush1.msra.mxu0 %v7445
      %7480 = vmatprep.subr.mxu0 0.0
      %7481 = vmatpush1.msra.mxu0 %v7444
      %7482 = vmatprep.subr.mxu0 0.0
      %7483 = vmatpush1.msra.mxu0 %v7443
      %7484 = vmatprep.subr.mxu0 0.0
      %7485 = vmatpush1.msra.mxu0 %v7442
      %7486 = vmatprep.subr.mxu0 0.0
      %7487 = vmatpush1.msra.mxu0 %v7441
      %7488 = vmatprep.subr.mxu0 0.0
      %7489 = vmatpush2.msra.mxu0 0.0
      %7490 = vmatprep.subr.mxu0 0.0
      %7491 = vmatpush2.msra.mxu0 0.0
      %7492 = vmatprep.subr.mxu0 0.0
      %7493 = vmatpush2.msra.mxu0 0.0
      %7494 = vmatprep.subr.mxu0 0.0
      %7495 = vmatpush2.msra.mxu0 0.0
      %7496 = vmatprep.subr.mxu0 0.0
      %7497 = vmatpush2.msra.mxu0 0.0
      %7498 = vmatprep.subr.mxu0 0.0
      %7499 = vmatpush2.msra.mxu0 0.0
      %7500 = vmatprep.subr.mxu0 0.0
      %7501 = vmatpush2.msra.mxu0 0.0
      %7502 = vmatprep.subr.mxu0 0.0
      %7503 = vmatpush2.msra.mxu0 0.0
      %7504 = vmatprep.subr.mxu0 0.0
      %7505 = vmatpush2.msra.mxu0 0.0
      %7506 = vmatprep.subr.mxu0 0.0
      %7507 = vmatpush2.msra.mxu0 0.0
      %7508 = vmatprep.subr.mxu0 0.0
      %7509 = vmatpush2.msra.mxu0 0.0
      %7510 = vmatprep.subr.mxu0 0.0
      %7511 = vmatpush2.msra.mxu0 0.0
      %7512 = vmatprep.subr.mxu0 0.0
      %7513 = vmatpush2.msra.mxu0 0.0
      %7514 = vmatprep.subr.mxu0 0.0
      %7515 = vmatpush2.msra.mxu0 0.0
      %7516 = vmatprep.subr.mxu0 0.0
      %7517 = vmatpush2.msra.mxu0 0.0
      %7518 = vmatprep.subr.mxu0 0.0
      %7519 = vmatpush2.msra.mxu0 0.0
      %7520 = vmatprep.mubr.f32.mxu0 0.0
      %7521 = vmatmul.mubr.f32.gmra.mxu0 %v5201
      %v7522 = vpop.f32.mrf.mxu0
      %v7523 = vadd.f32 %v7454, %v7522
      %v7524 = vpop.f32.mrf.mxu0
      %7525 = vmatprep.mubr.f32.mxu0 0.0
      %7526 = vmatmul.mubr.f32.gmra.mxu0 %v5204
      %v7527 = vpop.f32.mrf.mxu0
      %v7528 = vadd.f32 %v7454, %v7527
      %v7529 = vpop.f32.mrf.mxu0
      %7530 = vmatprep.mubr.f32.mxu0 0.0
      %7531 = vmatmul.mubr.f32.gmra.mxu0 %v5207
      %v7532 = vpop.f32.mrf.mxu0
      %v7533 = vadd.f32 %v7454, %v7532
      %v7534 = vpop.f32.mrf.mxu0
      %7535 = vmatprep.mubr.f32.mxu0 0.0
      %7536 = vmatmul.mubr.f32.gmra.mxu0 %v5210
      %v7537 = vpop.f32.mrf.mxu0
      %v7538 = vadd.f32 %v7454, %v7537
      %v7539 = vpop.f32.mrf.mxu0
      %7540 = vmatprep.mubr.f32.mxu0 0.0
      %7541 = vmatmul.mubr.f32.gmra.mxu0 %v5213
      %v7542 = vpop.f32.mrf.mxu0
      %v7543 = vadd.f32 %v7454, %v7542
      %v7544 = vpop.f32.mrf.mxu0
      %7545 = vmatprep.mubr.f32.mxu0 0.0
      %7546 = vmatmul.mubr.f32.gmra.mxu0 %v5216
      %v7547 = vpop.f32.mrf.mxu0
      %v7548 = vadd.f32 %v7454, %v7547
      %v7549 = vpop.f32.mrf.mxu0
      %7550 = vmatprep.mubr.f32.mxu0 0.0
      %7551 = vmatmul.mubr.f32.gmra.mxu0 %v5219
      %v7552 = vpop.f32.mrf.mxu0
      %v7553 = vadd.f32 %v7454, %v7552
      %v7554 = vpop.f32.mrf.mxu0
      %7555 = vmatprep.mubr.f32.mxu0 0.0
      %7556 = vmatmul.mubr.f32.gmra.mxu0 %v5222
      %v7557 = vpop.f32.mrf.mxu0
      %v7558 = vadd.f32 %v7454, %v7557
      %v7559 = vpop.f32.mrf.mxu0
      %7560 = vmatprep.mubr.f32.mxu0 0.0
      %7561 = vmatmul.mubr.f32.gmra.mxu0 %v5225
      %v7562 = vpop.f32.mrf.mxu0
      %v7563 = vadd.f32 %v7454, %v7562
      %v7564 = vpop.f32.mrf.mxu0
      %7565 = vmatprep.mubr.f32.mxu0 0.0
      %7566 = vmatmul.mubr.f32.gmra.mxu0 %v5228
      %v7567 = vpop.f32.mrf.mxu0
      %v7568 = vadd.f32 %v7454, %v7567
      %v7569 = vpop.f32.mrf.mxu0
      %7570 = vmatprep.mubr.f32.mxu0 0.0
      %7571 = vmatmul.mubr.f32.gmra.mxu0 %v5231
      %v7572 = vpop.f32.mrf.mxu0
      %v7573 = vadd.f32 %v7454, %v7572
      %v7574 = vpop.f32.mrf.mxu0
      %7575 = vmatprep.mubr.f32.mxu0 0.0
      %7576 = vmatmul.mubr.f32.gmra.mxu0 %v5234
      %v7577 = vpop.f32.mrf.mxu0
      %v7578 = vadd.f32 %v7454, %v7577
      %v7579 = vpop.f32.mrf.mxu0
      %7580 = vmatprep.mubr.f32.mxu0 0.0
      %7581 = vmatmul.mubr.f32.gmra.mxu0 %v5237
      %v7582 = vpop.f32.mrf.mxu0
      %v7583 = vadd.f32 %v7454, %v7582
      %v7584 = vpop.f32.mrf.mxu0
      %7585 = vmatprep.mubr.f32.mxu0 0.0
      %7586 = vmatmul.mubr.f32.gmra.mxu0 %v5240
      %v7587 = vpop.f32.mrf.mxu0
      %v7588 = vadd.f32 %v7454, %v7587
      %v7589 = vpop.f32.mrf.mxu0
      %7590 = vmatprep.mubr.f32.mxu0 0.0
      %7591 = vmatmul.mubr.f32.gmra.mxu0 %v5243
      %v7592 = vpop.f32.mrf.mxu0
      %v7593 = vadd.f32 %v7454, %v7592
      %v7594 = vpop.f32.mrf.mxu0
      %7595 = vmatprep.mubr.f32.mxu0 0.0
      %7596 = vmatmul.mubr.f32.gmra.mxu0 %v5246
      %v7597 = vpop.f32.mrf.mxu0
      %v7598 = vadd.f32 %v7454, %v7597
      %v7599 = vpop.f32.mrf.mxu0
      %7600 = vmatprep.mubr.f32.mxu0 0.0
      %7601 = vmatmul.mubr.f32.gmra.mxu0 %v5249
      %v7602 = vpop.f32.mrf.mxu0
      %v7603 = vadd.f32 %v7454, %v7602
      %v7604 = vpop.f32.mrf.mxu0
      %7605 = vmatprep.mubr.f32.mxu0 0.0
      %7606 = vmatmul.mubr.f32.gmra.mxu0 %v5252
      %v7607 = vpop.f32.mrf.mxu0
      %v7608 = vadd.f32 %v7454, %v7607
      %v7609 = vpop.f32.mrf.mxu0
      %7610 = vmatprep.mubr.f32.mxu0 0.0
      %7611 = vmatmul.mubr.f32.gmra.mxu0 %v5255
      %v7612 = vpop.f32.mrf.mxu0
      %v7613 = vadd.f32 %v7454, %v7612
      %v7614 = vpop.f32.mrf.mxu0
      %7615 = vmatprep.mubr.f32.mxu0 0.0
      %7616 = vmatmul.mubr.f32.gmra.mxu0 %v5258
      %v7617 = vpop.f32.mrf.mxu0
      %v7618 = vadd.f32 %v7454, %v7617
      %v7619 = vpop.f32.mrf.mxu0
      %7620 = vmatprep.mubr.f32.mxu0 0.0
      %7621 = vmatmul.mubr.f32.gmra.mxu0 %v5261
      %v7622 = vpop.f32.mrf.mxu0
      %v7623 = vadd.f32 %v7454, %v7622
      %v7624 = vpop.f32.mrf.mxu0
      %7625 = vmatprep.mubr.f32.mxu0 0.0
      %7626 = vmatmul.mubr.f32.gmra.mxu0 %v5264
      %v7627 = vpop.f32.mrf.mxu0
      %v7628 = vadd.f32 %v7454, %v7627
      %v7629 = vpop.f32.mrf.mxu0
      %7630 = vmatprep.mubr.f32.mxu0 0.0
      %7631 = vmatmul.mubr.f32.gmra.mxu0 %v5267
      %v7632 = vpop.f32.mrf.mxu0
      %v7633 = vadd.f32 %v7454, %v7632
      %v7634 = vpop.f32.mrf.mxu0
      %7635 = vmatprep.mubr.f32.mxu0 0.0
      %7636 = vmatmul.mubr.f32.gmra.mxu0 %v5270
      %v7637 = vpop.f32.mrf.mxu0
      %v7638 = vadd.f32 %v7454, %v7637
      %v7639 = vpop.f32.mrf.mxu0
      %7640 = vmatprep.mubr.f32.mxu0 0.0
      %7641 = vmatmul.mubr.f32.gmra.mxu0 %v5273
      %v7642 = vpop.f32.mrf.mxu0
      %v7643 = vadd.f32 %v7454, %v7642
      %v7644 = vpop.f32.mrf.mxu0
      %7645 = vmatprep.mubr.f32.mxu0 0.0
      %7646 = vmatmul.mubr.f32.gmra.mxu0 %v5276
      %v7647 = vpop.f32.mrf.mxu0
      %v7648 = vadd.f32 %v7454, %v7647
      %v7649 = vpop.f32.mrf.mxu0
      %7650 = vmatprep.mubr.f32.mxu0 0.0
      %7651 = vmatmul.mubr.f32.gmra.mxu0 %v5279
      %v7652 = vpop.f32.mrf.mxu0
      %v7653 = vadd.f32 %v7454, %v7652
      %v7654 = vpop.f32.mrf.mxu0
      %7655 = vmatprep.mubr.f32.mxu0 0.0
      %7656 = vmatmul.mubr.f32.gmra.mxu0 %v5282
      %v7657 = vpop.f32.mrf.mxu0
      %v7658 = vadd.f32 %v7454, %v7657
      %v7659 = vpop.f32.mrf.mxu0
      %7660 = vmatprep.mubr.f32.mxu0 0.0
      %7661 = vmatmul.mubr.f32.gmra.mxu0 %v5285
      %v7662 = vpop.f32.mrf.mxu0
      %v7663 = vadd.f32 %v7454, %v7662
      %v7664 = vpop.f32.mrf.mxu0
      %7665 = vmatprep.mubr.f32.mxu0 0.0
      %7666 = vmatmul.mubr.f32.gmra.mxu0 %v5288
      %v7667 = vpop.f32.mrf.mxu0
      %v7668 = vadd.f32 %v7454, %v7667
      %v7669 = vpop.f32.mrf.mxu0
      %7670 = vmatprep.mubr.f32.mxu0 0.0
      %7671 = vmatmul.mubr.f32.gmra.mxu0 %v5291
      %v7672 = vpop.f32.mrf.mxu0
      %v7673 = vadd.f32 %v7454, %v7672
      %v7674 = vpop.f32.mrf.mxu0
      %7675 = vmatprep.mubr.f32.mxu0 0.0
      %7676 = vmatmul.mubr.f32.gmra.mxu0 %v5294
      %v7677 = vpop.f32.mrf.mxu0
      %v7678 = vadd.f32 %v7454, %v7677
      %v7679 = vpop.f32.mrf.mxu0
      %7680 = vmatprep.mubr.f32.mxu0 0.0
      %7681 = vmatmul.mubr.f32.gmra.mxu0 %v5297
      %v7682 = vpop.f32.mrf.mxu0
      %v7683 = vadd.f32 %v7454, %v7682
      %v7684 = vpop.f32.mrf.mxu0
      %7685 = vmatprep.mubr.f32.mxu0 0.0
      %7686 = vmatmul.mubr.f32.gmra.mxu0 %v5300
      %v7687 = vpop.f32.mrf.mxu0
      %v7688 = vadd.f32 %v7454, %v7687
      %v7689 = vpop.f32.mrf.mxu0
      %7690 = vmatprep.mubr.f32.mxu0 0.0
      %7691 = vmatmul.mubr.f32.gmra.mxu0 %v5303
      %v7692 = vpop.f32.mrf.mxu0
      %v7693 = vadd.f32 %v7454, %v7692
      %v7694 = vpop.f32.mrf.mxu0
      %7695 = vmatprep.mubr.f32.mxu0 0.0
      %7696 = vmatmul.mubr.f32.gmra.mxu0 %v5306
      %v7697 = vpop.f32.mrf.mxu0
      %v7698 = vadd.f32 %v7454, %v7697
      %v7699 = vpop.f32.mrf.mxu0
      %7700 = vmatprep.mubr.f32.mxu0 0.0
      %7701 = vmatmul.mubr.f32.gmra.mxu0 %v5309
      %v7702 = vpop.f32.mrf.mxu0
      %v7703 = vadd.f32 %v7454, %v7702
      %v7704 = vpop.f32.mrf.mxu0
      %7705 = vmatprep.mubr.f32.mxu0 0.0
      %7706 = vmatmul.mubr.f32.gmra.mxu0 %v5312
      %v7707 = vpop.f32.mrf.mxu0
      %v7708 = vadd.f32 %v7454, %v7707
      %v7709 = vpop.f32.mrf.mxu0
      %7710 = vmatprep.mubr.f32.mxu0 0.0
      %7711 = vmatmul.mubr.f32.gmra.mxu0 %v5315
      %v7712 = vpop.f32.mrf.mxu0
      %v7713 = vadd.f32 %v7454, %v7712
      %v7714 = vpop.f32.mrf.mxu0
      %7715 = vmatprep.mubr.f32.mxu0 0.0
      %7716 = vmatmul.mubr.f32.gmra.mxu0 %v5318
      %v7717 = vpop.f32.mrf.mxu0
      %v7718 = vadd.f32 %v7454, %v7717
      %v7719 = vpop.f32.mrf.mxu0
      %7720 = vmatprep.mubr.f32.mxu0 0.0
      %7721 = vmatmul.mubr.f32.gmra.mxu0 %v5321
      %v7722 = vpop.f32.mrf.mxu0
      %v7723 = vadd.f32 %v7454, %v7722
      %v7724 = vpop.f32.mrf.mxu0
      %7725 = vmatprep.mubr.f32.mxu0 0.0
      %7726 = vmatmul.mubr.f32.gmra.mxu0 %v5324
      %v7727 = vpop.f32.mrf.mxu0
      %v7728 = vadd.f32 %v7454, %v7727
      %v7729 = vpop.f32.mrf.mxu0
      %7730 = vmatprep.mubr.f32.mxu0 0.0
      %7731 = vmatmul.mubr.f32.gmra.mxu0 %v5327
      %v7732 = vpop.f32.mrf.mxu0
      %v7733 = vadd.f32 %v7454, %v7732
      %v7734 = vpop.f32.mrf.mxu0
      %7735 = vmatprep.mubr.f32.mxu0 0.0
      %7736 = vmatmul.mubr.f32.gmra.mxu0 %v5330
      %v7737 = vpop.f32.mrf.mxu0
      %v7738 = vadd.f32 %v7454, %v7737
      %v7739 = vpop.f32.mrf.mxu0
      %7740 = vmatprep.mubr.f32.mxu0 0.0
      %7741 = vmatmul.mubr.f32.gmra.mxu0 %v5333
      %v7742 = vpop.f32.mrf.mxu0
      %v7743 = vadd.f32 %v7454, %v7742
      %v7744 = vpop.f32.mrf.mxu0
      %7745 = vmatprep.mubr.f32.mxu0 0.0
      %7746 = vmatmul.mubr.f32.gmra.mxu0 %v5336
      %v7747 = vpop.f32.mrf.mxu0
      %v7748 = vadd.f32 %v7454, %v7747
      %v7749 = vpop.f32.mrf.mxu0
      %7750 = vmatprep.mubr.f32.mxu0 0.0
      %7751 = vmatmul.mubr.f32.gmra.mxu0 %v5339
      %v7752 = vpop.f32.mrf.mxu0
      %v7753 = vadd.f32 %v7454, %v7752
      %v7754 = vpop.f32.mrf.mxu0
      %7755 = vmatprep.mubr.f32.mxu0 0.0
      %7756 = vmatmul.mubr.f32.gmra.mxu0 %v5342
      %v7757 = vpop.f32.mrf.mxu0
      %v7758 = vadd.f32 %v7454, %v7757
      %v7759 = vpop.f32.mrf.mxu0
      %7760 = vmatprep.mubr.f32.mxu0 0.0
      %7761 = vmatmul.mubr.f32.gmra.mxu0 %v5345
      %v7762 = vpop.f32.mrf.mxu0
      %v7763 = vadd.f32 %v7454, %v7762
      %v7764 = vpop.f32.mrf.mxu0
      %7765 = vmatprep.mubr.f32.mxu0 0.0
      %7766 = vmatmul.mubr.f32.gmra.mxu0 %v5348
      %v7767 = vpop.f32.mrf.mxu0
      %v7768 = vadd.f32 %v7454, %v7767
      %v7769 = vpop.f32.mrf.mxu0
      %7770 = vmatprep.mubr.f32.mxu0 0.0
      %7771 = vmatmul.mubr.f32.gmra.mxu0 %v5351
      %v7772 = vpop.f32.mrf.mxu0
      %v7773 = vadd.f32 %v7454, %v7772
      %v7774 = vpop.f32.mrf.mxu0
      %7775 = vmatprep.mubr.f32.mxu0 0.0
      %7776 = vmatmul.mubr.f32.gmra.mxu0 %v5354
      %v7777 = vpop.f32.mrf.mxu0
      %v7778 = vadd.f32 %v7454, %v7777
      %v7779 = vpop.f32.mrf.mxu0
      %7780 = vmatprep.mubr.f32.mxu0 0.0
      %7781 = vmatmul.mubr.f32.gmra.mxu0 %v5357
      %v7782 = vpop.f32.mrf.mxu0
      %v7783 = vadd.f32 %v7454, %v7782
      %v7784 = vpop.f32.mrf.mxu0
      %7785 = vmatprep.mubr.f32.mxu0 0.0
      %7786 = vmatmul.mubr.f32.gmra.mxu0 %v5360
      %v7787 = vpop.f32.mrf.mxu0
      %v7788 = vadd.f32 %v7454, %v7787
      %v7789 = vpop.f32.mrf.mxu0
      %7790 = vmatprep.mubr.f32.mxu0 0.0
      %7791 = vmatmul.mubr.f32.gmra.mxu0 %v5363
      %v7792 = vpop.f32.mrf.mxu0
      %v7793 = vadd.f32 %v7454, %v7792
      %v7794 = vpop.f32.mrf.mxu0
      %7795 = vmatprep.mubr.f32.mxu0 0.0
      %7796 = vmatmul.mubr.f32.gmra.mxu0 %v5366
      %v7797 = vpop.f32.mrf.mxu0
      %v7798 = vadd.f32 %v7454, %v7797
      %v7799 = vpop.f32.mrf.mxu0
      %7800 = vmatprep.mubr.f32.mxu0 0.0
      %7801 = vmatmul.mubr.f32.gmra.mxu0 %v5369
      %v7802 = vpop.f32.mrf.mxu0
      %v7803 = vadd.f32 %v7454, %v7802
      %v7804 = vpop.f32.mrf.mxu0
      %7805 = vmatprep.mubr.f32.mxu0 0.0
      %7806 = vmatmul.mubr.f32.gmra.mxu0 %v5372
      %v7807 = vpop.f32.mrf.mxu0
      %v7808 = vadd.f32 %v7454, %v7807
      %v7809 = vpop.f32.mrf.mxu0
      %7810 = vmatprep.mubr.f32.mxu0 0.0
      %7811 = vmatmul.mubr.f32.gmra.mxu0 %v5375
      %v7812 = vpop.f32.mrf.mxu0
      %v7813 = vadd.f32 %v7454, %v7812
      %v7814 = vpop.f32.mrf.mxu0
      %7815 = vmatprep.mubr.f32.mxu0 0.0
      %7816 = vmatmul.mubr.f32.gmra.mxu0 %v5378
      %v7817 = vpop.f32.mrf.mxu0
      %v7818 = vadd.f32 %v7454, %v7817
      %v7819 = vpop.f32.mrf.mxu0
      %7820 = vmatprep.mubr.f32.mxu0 0.0
      %7821 = vmatmul.mubr.f32.gmra.mxu0 %v5381
      %v7822 = vpop.f32.mrf.mxu0
      %v7823 = vadd.f32 %v7454, %v7822
      %v7824 = vpop.f32.mrf.mxu0
      %7825 = vmatprep.mubr.f32.mxu0 0.0
      %7826 = vmatmul.mubr.f32.gmra.mxu0 %v5384
      %v7827 = vpop.f32.mrf.mxu0
      %v7828 = vadd.f32 %v7454, %v7827
      %v7829 = vpop.f32.mrf.mxu0
      %7830 = vmatprep.mubr.f32.mxu0 0.0
      %7831 = vmatmul.mubr.f32.gmra.mxu0 %v5387
      %v7832 = vpop.f32.mrf.mxu0
      %v7833 = vadd.f32 %v7454, %v7832
      %v7834 = vpop.f32.mrf.mxu0
      %7835 = vmatprep.mubr.f32.mxu0 0.0
      %7836 = vmatmul.mubr.f32.gmra.mxu0 %v5390
      %v7837 = vpop.f32.mrf.mxu0
      %v7838 = vadd.f32 %v7454, %v7837
      %v7839 = vpop.f32.mrf.mxu0
      %7840 = vmatprep.mubr.f32.mxu0 0.0
      %7841 = vmatmul.mubr.f32.gmra.mxu0 %v5393
      %v7842 = vpop.f32.mrf.mxu0
      %v7843 = vadd.f32 %v7454, %v7842
      %v7844 = vpop.f32.mrf.mxu0
      %7845 = vmatprep.mubr.f32.mxu0 0.0
      %7846 = vmatmul.mubr.f32.gmra.mxu0 %v5396
      %v7847 = vpop.f32.mrf.mxu0
      %v7848 = vadd.f32 %v7454, %v7847
      %v7849 = vpop.f32.mrf.mxu0
      %7850 = vmatprep.mubr.f32.mxu0 0.0
      %7851 = vmatmul.mubr.f32.gmra.mxu0 %v5399
      %v7852 = vpop.f32.mrf.mxu0
      %v7853 = vadd.f32 %v7454, %v7852
      %v7854 = vpop.f32.mrf.mxu0
      %7855 = vmatprep.mubr.f32.mxu0 0.0
      %7856 = vmatmul.mubr.f32.gmra.mxu0 %v5402
      %v7857 = vpop.f32.mrf.mxu0
      %v7858 = vadd.f32 %v7454, %v7857
      %v7859 = vpop.f32.mrf.mxu0
      %7860 = vmatprep.mubr.f32.mxu0 0.0
      %7861 = vmatmul.mubr.f32.gmra.mxu0 %v5405
      %v7862 = vpop.f32.mrf.mxu0
      %v7863 = vadd.f32 %v7454, %v7862
      %v7864 = vpop.f32.mrf.mxu0
      %7865 = vmatprep.mubr.f32.mxu0 0.0
      %7866 = vmatmul.mubr.f32.gmra.mxu0 %v5408
      %v7867 = vpop.f32.mrf.mxu0
      %v7868 = vadd.f32 %v7454, %v7867
      %v7869 = vpop.f32.mrf.mxu0
      %7870 = vmatprep.mubr.f32.mxu0 0.0
      %7871 = vmatmul.mubr.f32.gmra.mxu0 %v5411
      %v7872 = vpop.f32.mrf.mxu0
      %v7873 = vadd.f32 %v7454, %v7872
      %v7874 = vpop.f32.mrf.mxu0
      %7875 = vmatprep.mubr.f32.mxu0 0.0
      %7876 = vmatmul.mubr.f32.gmra.mxu0 %v5414
      %v7877 = vpop.f32.mrf.mxu0
      %v7878 = vadd.f32 %v7454, %v7877
      %v7879 = vpop.f32.mrf.mxu0
      %7880 = vmatprep.mubr.f32.mxu0 0.0
      %7881 = vmatmul.mubr.f32.gmra.mxu0 %v5417
      %v7882 = vpop.f32.mrf.mxu0
      %v7883 = vadd.f32 %v7454, %v7882
      %v7884 = vpop.f32.mrf.mxu0
      %7885 = vmatprep.mubr.f32.mxu0 0.0
      %7886 = vmatmul.mubr.f32.gmra.mxu0 %v5420
      %v7887 = vpop.f32.mrf.mxu0
      %v7888 = vadd.f32 %v7454, %v7887
      %v7889 = vpop.f32.mrf.mxu0
      %7890 = vmatprep.mubr.f32.mxu0 0.0
      %7891 = vmatmul.mubr.f32.gmra.mxu0 %v5423
      %v7892 = vpop.f32.mrf.mxu0
      %v7893 = vadd.f32 %v7454, %v7892
      %v7894 = vpop.f32.mrf.mxu0
      %7895 = vmatprep.mubr.f32.mxu0 0.0
      %7896 = vmatmul.mubr.f32.gmra.mxu0 %v5426
      %v7897 = vpop.f32.mrf.mxu0
      %v7898 = vadd.f32 %v7454, %v7897
      %v7899 = vpop.f32.mrf.mxu0
      %7900 = vmatprep.mubr.f32.mxu0 0.0
      %7901 = vmatmul.mubr.f32.gmra.mxu0 %v5429
      %v7902 = vpop.f32.mrf.mxu0
      %v7903 = vadd.f32 %v7454, %v7902
      %v7904 = vpop.f32.mrf.mxu0
      %7905 = vmatprep.mubr.f32.mxu0 0.0
      %7906 = vmatmul.mubr.f32.gmra.mxu0 %v5432
      %v7907 = vpop.f32.mrf.mxu0
      %v7908 = vadd.f32 %v7454, %v7907
      %v7909 = vpop.f32.mrf.mxu0
      %7910 = vmatprep.mubr.f32.mxu0 0.0
      %7911 = vmatmul.mubr.f32.gmra.mxu0 %v5435
      %v7912 = vpop.f32.mrf.mxu0
      %v7913 = vadd.f32 %v7454, %v7912
      %v7914 = vpop.f32.mrf.mxu0
      %7915 = vmatprep.mubr.f32.mxu0 0.0
      %7916 = vmatmul.mubr.f32.gmra.mxu0 %v5438
      %v7917 = vpop.f32.mrf.mxu0
      %v7918 = vadd.f32 %v7454, %v7917
      %v7919 = vpop.f32.mrf.mxu0
      %7920 = vmatprep.mubr.f32.mxu0 0.0
      %7921 = vmatmul.mubr.f32.gmra.mxu0 %v5441
      %v7922 = vpop.f32.mrf.mxu0
      %v7923 = vadd.f32 %v7454, %v7922
      %v7924 = vpop.f32.mrf.mxu0
      %7925 = vmatprep.mubr.f32.mxu0 0.0
      %7926 = vmatmul.mubr.f32.gmra.mxu0 %v5444
      %v7927 = vpop.f32.mrf.mxu0
      %v7928 = vadd.f32 %v7454, %v7927
      %v7929 = vpop.f32.mrf.mxu0
      %7930 = vmatprep.mubr.f32.mxu0 0.0
      %7931 = vmatmul.mubr.f32.gmra.mxu0 %v5447
      %v7932 = vpop.f32.mrf.mxu0
      %v7933 = vadd.f32 %v7454, %v7932
      %v7934 = vpop.f32.mrf.mxu0
      %7935 = vmatprep.mubr.f32.mxu0 0.0
      %7936 = vmatmul.mubr.f32.gmra.mxu0 %v5450
      %v7937 = vpop.f32.mrf.mxu0
      %v7938 = vadd.f32 %v7454, %v7937
      %v7939 = vpop.f32.mrf.mxu0
      %7940 = vmatprep.mubr.f32.mxu0 0.0
      %7941 = vmatmul.mubr.f32.gmra.mxu0 %v5453
      %v7942 = vpop.f32.mrf.mxu0
      %v7943 = vadd.f32 %v7454, %v7942
      %v7944 = vpop.f32.mrf.mxu0
      %7945 = vmatprep.mubr.f32.mxu0 0.0
      %7946 = vmatmul.mubr.f32.gmra.mxu0 %v5456
      %v7947 = vpop.f32.mrf.mxu0
      %v7948 = vadd.f32 %v7454, %v7947
      %v7949 = vpop.f32.mrf.mxu0
      %7950 = vmatprep.mubr.f32.mxu0 0.0
      %7951 = vmatmul.mubr.f32.gmra.mxu0 %v5459
      %v7952 = vpop.f32.mrf.mxu0
      %v7953 = vadd.f32 %v7454, %v7952
      %v7954 = vpop.f32.mrf.mxu0
      %7955 = vmatprep.mubr.f32.mxu0 0.0
      %7956 = vmatmul.mubr.f32.gmra.mxu0 %v5462
      %v7957 = vpop.f32.mrf.mxu0
      %v7958 = vadd.f32 %v7454, %v7957
      %v7959 = vpop.f32.mrf.mxu0
      %7960 = vmatprep.mubr.f32.mxu0 0.0
      %7961 = vmatmul.mubr.f32.gmra.mxu0 %v5465
      %v7962 = vpop.f32.mrf.mxu0
      %v7963 = vadd.f32 %v7454, %v7962
      %v7964 = vpop.f32.mrf.mxu0
      %7965 = vmatprep.mubr.f32.mxu0 0.0
      %7966 = vmatmul.mubr.f32.gmra.mxu0 %v5468
      %v7967 = vpop.f32.mrf.mxu0
      %v7968 = vadd.f32 %v7454, %v7967
      %v7969 = vpop.f32.mrf.mxu0
      %7970 = vmatprep.mubr.f32.mxu0 0.0
      %7971 = vmatmul.mubr.f32.gmra.mxu0 %v5471
      %v7972 = vpop.f32.mrf.mxu0
      %v7973 = vadd.f32 %v7454, %v7972
      %v7974 = vpop.f32.mrf.mxu0
      %7975 = vmatprep.mubr.f32.mxu0 0.0
      %7976 = vmatmul.mubr.f32.gmra.mxu0 %v5474
      %v7977 = vpop.f32.mrf.mxu0
      %v7978 = vadd.f32 %v7454, %v7977
      %v7979 = vpop.f32.mrf.mxu0
      %7980 = vmatprep.mubr.f32.mxu0 0.0
      %7981 = vmatmul.mubr.f32.gmra.mxu0 %v5477
      %v7982 = vpop.f32.mrf.mxu0
      %v7983 = vadd.f32 %v7454, %v7982
      %v7984 = vpop.f32.mrf.mxu0
      %7985 = vmatprep.mubr.f32.mxu0 0.0
      %7986 = vmatmul.mubr.f32.gmra.mxu0 %v5480
      %v7987 = vpop.f32.mrf.mxu0
      %v7988 = vadd.f32 %v7454, %v7987
      %v7989 = vpop.f32.mrf.mxu0
      %7990 = vmatprep.mubr.f32.mxu0 0.0
      %7991 = vmatmul.mubr.f32.gmra.mxu0 %v5483
      %v7992 = vpop.f32.mrf.mxu0
      %v7993 = vadd.f32 %v7454, %v7992
      %v7994 = vpop.f32.mrf.mxu0
      %7995 = vmatprep.mubr.f32.mxu0 0.0
      %7996 = vmatmul.mubr.f32.gmra.mxu0 %v5486
      %v7997 = vpop.f32.mrf.mxu0
      %v7998 = vadd.f32 %v7454, %v7997
      %v7999 = vpop.f32.mrf.mxu0
      %8000 = vmatprep.mubr.f32.mxu0 0.0
      %8001 = vmatmul.mubr.f32.gmra.mxu0 %v5489
      %v8002 = vpop.f32.mrf.mxu0
      %v8003 = vadd.f32 %v7454, %v8002
      %v8004 = vpop.f32.mrf.mxu0
      %8005 = vmatprep.mubr.f32.mxu0 0.0
      %8006 = vmatmul.mubr.f32.gmra.mxu0 %v5492
      %v8007 = vpop.f32.mrf.mxu0
      %v8008 = vadd.f32 %v7454, %v8007
      %v8009 = vpop.f32.mrf.mxu0
      %8010 = vmatprep.mubr.f32.mxu0 0.0
      %8011 = vmatmul.mubr.f32.gmra.mxu0 %v5495
      %v8012 = vpop.f32.mrf.mxu0
      %v8013 = vadd.f32 %v7454, %v8012
      %v8014 = vpop.f32.mrf.mxu0
      %8015 = vmatprep.mubr.f32.mxu0 0.0
      %8016 = vmatmul.mubr.f32.gmra.mxu0 %v5498
      %v8017 = vpop.f32.mrf.mxu0
      %v8018 = vadd.f32 %v7454, %v8017
      %v8019 = vpop.f32.mrf.mxu0
      %8020 = vmatprep.mubr.f32.mxu0 0.0
      %8021 = vmatmul.mubr.f32.gmra.mxu0 %v5501
      %v8022 = vpop.f32.mrf.mxu0
      %v8023 = vadd.f32 %v7454, %v8022
      %v8024 = vpop.f32.mrf.mxu0
      %8025 = vmatprep.mubr.f32.mxu0 0.0
      %8026 = vmatmul.mubr.f32.gmra.mxu0 %v5504
      %v8027 = vpop.f32.mrf.mxu0
      %v8028 = vadd.f32 %v7454, %v8027
      %v8029 = vpop.f32.mrf.mxu0
      %8030 = vmatprep.mubr.f32.mxu0 0.0
      %8031 = vmatmul.mubr.f32.gmra.mxu0 %v5507
      %v8032 = vpop.f32.mrf.mxu0
      %v8033 = vadd.f32 %v7454, %v8032
      %v8034 = vpop.f32.mrf.mxu0
      %8035 = vmatprep.mubr.f32.mxu0 0.0
      %8036 = vmatmul.mubr.f32.gmra.mxu0 %v5510
      %v8037 = vpop.f32.mrf.mxu0
      %v8038 = vadd.f32 %v7454, %v8037
      %v8039 = vpop.f32.mrf.mxu0
      %8040 = vmatprep.mubr.f32.mxu0 0.0
      %8041 = vmatmul.mubr.f32.gmra.mxu0 %v5513
      %v8042 = vpop.f32.mrf.mxu0
      %v8043 = vadd.f32 %v7454, %v8042
      %v8044 = vpop.f32.mrf.mxu0
      %8045 = vmatprep.mubr.f32.mxu0 0.0
      %8046 = vmatmul.mubr.f32.gmra.mxu0 %v5516
      %v8047 = vpop.f32.mrf.mxu0
      %v8048 = vadd.f32 %v7454, %v8047
      %v8049 = vpop.f32.mrf.mxu0
      %8050 = vmatprep.mubr.f32.mxu0 0.0
      %8051 = vmatmul.mubr.f32.gmra.mxu0 %v5519
      %v8052 = vpop.f32.mrf.mxu0
      %v8053 = vadd.f32 %v7454, %v8052
      %v8054 = vpop.f32.mrf.mxu0
      %8055 = vmatprep.mubr.f32.mxu0 0.0
      %8056 = vmatmul.mubr.f32.gmra.mxu0 %v5522
      %v8057 = vpop.f32.mrf.mxu0
      %v8058 = vadd.f32 %v7454, %v8057
      %v8059 = vpop.f32.mrf.mxu0
      %8060 = vmatprep.mubr.f32.mxu0 0.0
      %8061 = vmatmul.mubr.f32.gmra.mxu0 %v5525
      %v8062 = vpop.f32.mrf.mxu0
      %v8063 = vadd.f32 %v7454, %v8062
      %v8064 = vpop.f32.mrf.mxu0
      %8065 = vmatprep.mubr.f32.mxu0 0.0
      %8066 = vmatmul.mubr.f32.gmra.mxu0 %v5528
      %v8067 = vpop.f32.mrf.mxu0
      %v8068 = vadd.f32 %v7454, %v8067
      %v8069 = vpop.f32.mrf.mxu0
      %8070 = vmatprep.mubr.f32.mxu0 0.0
      %8071 = vmatmul.mubr.f32.gmra.mxu0 %v5531
      %v8072 = vpop.f32.mrf.mxu0
      %v8073 = vadd.f32 %v7454, %v8072
      %v8074 = vpop.f32.mrf.mxu0
      %8075 = vmatprep.mubr.f32.mxu0 0.0
      %8076 = vmatmul.mubr.f32.gmra.mxu0 %v5534
      %v8077 = vpop.f32.mrf.mxu0
      %v8078 = vadd.f32 %v7454, %v8077
      %v8079 = vpop.f32.mrf.mxu0
      %8080 = vmatprep.mubr.f32.mxu0 0.0
      %8081 = vmatmul.mubr.f32.gmra.mxu0 %v5537
      %v8082 = vpop.f32.mrf.mxu0
      %v8083 = vadd.f32 %v7454, %v8082
      %v8084 = vpop.f32.mrf.mxu0
      %8085 = vmatprep.mubr.f32.mxu0 0.0
      %8086 = vmatmul.mubr.f32.gmra.mxu0 %v5540
      %v8087 = vpop.f32.mrf.mxu0
      %v8088 = vadd.f32 %v7454, %v8087
      %v8089 = vpop.f32.mrf.mxu0
      %8090 = vmatprep.mubr.f32.mxu0 0.0
      %8091 = vmatmul.mubr.f32.gmra.mxu0 %v5543
      %v8092 = vpop.f32.mrf.mxu0
      %v8093 = vadd.f32 %v7454, %v8092
      %v8094 = vpop.f32.mrf.mxu0
      %8095 = vmatprep.mubr.f32.mxu0 0.0
      %8096 = vmatmul.mubr.f32.gmra.mxu0 %v5546
      %v8097 = vpop.f32.mrf.mxu0
      %v8098 = vadd.f32 %v7454, %v8097
      %v8099 = vpop.f32.mrf.mxu0
      %8100 = vmatprep.mubr.f32.mxu0 0.0
      %8101 = vmatmul.mubr.f32.gmra.mxu0 %v5549
      %v8102 = vpop.f32.mrf.mxu0
      %v8103 = vadd.f32 %v7454, %v8102
      %v8104 = vpop.f32.mrf.mxu0
      %8105 = vmatprep.mubr.f32.mxu0 0.0
      %8106 = vmatmul.mubr.f32.gmra.mxu0 %v5552
      %v8107 = vpop.f32.mrf.mxu0
      %v8108 = vadd.f32 %v7454, %v8107
      %v8109 = vpop.f32.mrf.mxu0
      %8110 = vmatprep.mubr.f32.mxu0 0.0
      %8111 = vmatmul.mubr.f32.gmra.mxu0 %v5555
      %v8112 = vpop.f32.mrf.mxu0
      %v8113 = vadd.f32 %v7454, %v8112
      %v8114 = vpop.f32.mrf.mxu0
      %8115 = vmatprep.mubr.f32.mxu0 0.0
      %8116 = vmatmul.mubr.f32.gmra.mxu0 %v5558
      %v8117 = vpop.f32.mrf.mxu0
      %v8118 = vadd.f32 %v7454, %v8117
      %v8119 = vpop.f32.mrf.mxu0
      %8120 = vmatprep.mubr.f32.mxu0 0.0
      %8121 = vmatmul.mubr.f32.gmra.mxu0 %v5561
      %v8122 = vpop.f32.mrf.mxu0
      %v8123 = vadd.f32 %v7454, %v8122
      %v8124 = vpop.f32.mrf.mxu0
      %8125 = vmatprep.mubr.f32.mxu0 0.0
      %8126 = vmatmul.mubr.f32.gmra.mxu0 %v5564
      %v8127 = vpop.f32.mrf.mxu0
      %v8128 = vadd.f32 %v7454, %v8127
      %v8129 = vpop.f32.mrf.mxu0
      %8130 = vmatprep.mubr.f32.mxu0 0.0
      %8131 = vmatmul.mubr.f32.gmra.mxu0 %v5567
      %v8132 = vpop.f32.mrf.mxu0
      %v8133 = vadd.f32 %v7454, %v8132
      %v8134 = vpop.f32.mrf.mxu0
      %8135 = vmatprep.mubr.f32.mxu0 0.0
      %8136 = vmatmul.mubr.f32.gmra.mxu0 %v5570
      %v8137 = vpop.f32.mrf.mxu0
      %v8138 = vadd.f32 %v7454, %v8137
      %v8139 = vpop.f32.mrf.mxu0
      %8140 = vmatprep.mubr.f32.mxu0 0.0
      %8141 = vmatmul.mubr.f32.gmra.mxu0 %v5573
      %v8142 = vpop.f32.mrf.mxu0
      %v8143 = vadd.f32 %v7454, %v8142
      %v8144 = vpop.f32.mrf.mxu0
      %8145 = vmatprep.mubr.f32.mxu0 0.0
      %8146 = vmatmul.mubr.f32.gmra.mxu0 %v5576
      %v8147 = vpop.f32.mrf.mxu0
      %v8148 = vadd.f32 %v7454, %v8147
      %v8149 = vpop.f32.mrf.mxu0
      %8150 = vmatprep.mubr.f32.mxu0 0.0
      %8151 = vmatmul.mubr.f32.gmra.mxu0 %v5579
      %v8152 = vpop.f32.mrf.mxu0
      %v8153 = vadd.f32 %v7454, %v8152
      %v8154 = vpop.f32.mrf.mxu0
      %8155 = vmatprep.mubr.f32.mxu0 0.0
      %8156 = vmatmul.mubr.f32.gmra.mxu0 %v5582
      %v8157 = vpop.f32.mrf.mxu0
      %v8158 = vadd.f32 %v7454, %v8157
      %v8159 = vpop.f32.mrf.mxu0
      %8160 = vdwg.mxu0
      %vm8161 = vcmask 7168
      %8162 = vst.msk [vmem:[%s369] sm:$0xff] %vm8161, %v7523
      %8163 = vst.msk [vmem:[%s369 + $0x8] sm:$0xff] %vm8161, %v7528
      %8164 = vst.msk [vmem:[%s369 + $0x10] sm:$0xff] %vm8161, %v7533
      %8165 = vst.msk [vmem:[%s369 + $0x18] sm:$0xff] %vm8161, %v7538
      %8166 = vst.msk [vmem:[%s369 + $0x20] sm:$0xff] %vm8161, %v7543
      %8167 = vst.msk [vmem:[%s369 + $0x28] sm:$0xff] %vm8161, %v7548
      %8168 = vst.msk [vmem:[%s369 + $0x30] sm:$0xff] %vm8161, %v7553
      %8169 = vst.msk [vmem:[%s369 + $0x38] sm:$0xff] %vm8161, %v7558
      %8170 = vst.msk [vmem:[%s369 + $0x40] sm:$0xff] %vm8161, %v7563
      %8171 = vst.msk [vmem:[%s369 + $0x48] sm:$0xff] %vm8161, %v7568
      %8172 = vst.msk [vmem:[%s369 + $0x50] sm:$0xff] %vm8161, %v7573
      %8173 = vst.msk [vmem:[%s369 + $0x58] sm:$0xff] %vm8161, %v7578
      %8174 = vst.msk [vmem:[%s369 + $0x60] sm:$0xff] %vm8161, %v7583
      %8175 = vst.msk [vmem:[%s369 + $0x68] sm:$0xff] %vm8161, %v7588
      %8176 = vst.msk [vmem:[%s369 + $0x70] sm:$0xff] %vm8161, %v7593
      %8177 = vst.msk [vmem:[%s369 + $0x78] sm:$0xff] %vm8161, %v7598
      %8178 = vst.msk [vmem:[%s369 + $0x80] sm:$0xff] %vm8161, %v7603
      %8179 = vst.msk [vmem:[%s369 + $0x88] sm:$0xff] %vm8161, %v7608
      %8180 = vst.msk [vmem:[%s369 + $0x90] sm:$0xff] %vm8161, %v7613
      %8181 = vst.msk [vmem:[%s369 + $0x98] sm:$0xff] %vm8161, %v7618
      %8182 = vst.msk [vmem:[%s369 + $0xa0] sm:$0xff] %vm8161, %v7623
      %8183 = vst.msk [vmem:[%s369 + $0xa8] sm:$0xff] %vm8161, %v7628
      %8184 = vst.msk [vmem:[%s369 + $0xb0] sm:$0xff] %vm8161, %v7633
      %8185 = vst.msk [vmem:[%s369 + $0xb8] sm:$0xff] %vm8161, %v7638
      %8186 = vst.msk [vmem:[%s369 + $0xc0] sm:$0xff] %vm8161, %v7643
      %8187 = vst.msk [vmem:[%s369 + $0xc8] sm:$0xff] %vm8161, %v7648
      %8188 = vst.msk [vmem:[%s369 + $0xd0] sm:$0xff] %vm8161, %v7653
      %8189 = vst.msk [vmem:[%s369 + $0xd8] sm:$0xff] %vm8161, %v7658
      %8190 = vst.msk [vmem:[%s369 + $0xe0] sm:$0xff] %vm8161, %v7663
      %8191 = vst.msk [vmem:[%s369 + $0xe8] sm:$0xff] %vm8161, %v7668
      %8192 = vst.msk [vmem:[%s369 + $0xf0] sm:$0xff] %vm8161, %v7673
      %8193 = vst.msk [vmem:[%s369 + $0xf8] sm:$0xff] %vm8161, %v7678
      %8194 = vst.msk [vmem:[%s369 + $0x100] sm:$0xff] %vm8161, %v7683
      %8195 = vst.msk [vmem:[%s369 + $0x108] sm:$0xff] %vm8161, %v7688
      %8196 = vst.msk [vmem:[%s369 + $0x110] sm:$0xff] %vm8161, %v7693
      %8197 = vst.msk [vmem:[%s369 + $0x118] sm:$0xff] %vm8161, %v7698
      %8198 = vst.msk [vmem:[%s369 + $0x120] sm:$0xff] %vm8161, %v7703
      %8199 = vst.msk [vmem:[%s369 + $0x128] sm:$0xff] %vm8161, %v7708
      %8200 = vst.msk [vmem:[%s369 + $0x130] sm:$0xff] %vm8161, %v7713
      %8201 = vst.msk [vmem:[%s369 + $0x138] sm:$0xff] %vm8161, %v7718
      %8202 = vst.msk [vmem:[%s369 + $0x140] sm:$0xff] %vm8161, %v7723
      %8203 = vst.msk [vmem:[%s369 + $0x148] sm:$0xff] %vm8161, %v7728
      %8204 = vst.msk [vmem:[%s369 + $0x150] sm:$0xff] %vm8161, %v7733
      %8205 = vst.msk [vmem:[%s369 + $0x158] sm:$0xff] %vm8161, %v7738
      %8206 = vst.msk [vmem:[%s369 + $0x160] sm:$0xff] %vm8161, %v7743
      %8207 = vst.msk [vmem:[%s369 + $0x168] sm:$0xff] %vm8161, %v7748
      %8208 = vst.msk [vmem:[%s369 + $0x170] sm:$0xff] %vm8161, %v7753
      %8209 = vst.msk [vmem:[%s369 + $0x178] sm:$0xff] %vm8161, %v7758
      %8210 = vst.msk [vmem:[%s369 + $0x180] sm:$0xff] %vm8161, %v7763
      %8211 = vst.msk [vmem:[%s369 + $0x188] sm:$0xff] %vm8161, %v7768
      %8212 = vst.msk [vmem:[%s369 + $0x190] sm:$0xff] %vm8161, %v7773
      %8213 = vst.msk [vmem:[%s369 + $0x198] sm:$0xff] %vm8161, %v7778
      %8214 = vst.msk [vmem:[%s369 + $0x1a0] sm:$0xff] %vm8161, %v7783
      %8215 = vst.msk [vmem:[%s369 + $0x1a8] sm:$0xff] %vm8161, %v7788
      %8216 = vst.msk [vmem:[%s369 + $0x1b0] sm:$0xff] %vm8161, %v7793
      %8217 = vst.msk [vmem:[%s369 + $0x1b8] sm:$0xff] %vm8161, %v7798
      %8218 = vst.msk [vmem:[%s369 + $0x1c0] sm:$0xff] %vm8161, %v7803
      %8219 = vst.msk [vmem:[%s369 + $0x1c8] sm:$0xff] %vm8161, %v7808
      %8220 = vst.msk [vmem:[%s369 + $0x1d0] sm:$0xff] %vm8161, %v7813
      %8221 = vst.msk [vmem:[%s369 + $0x1d8] sm:$0xff] %vm8161, %v7818
      %8222 = vst.msk [vmem:[%s369 + $0x1e0] sm:$0xff] %vm8161, %v7823
      %8223 = vst.msk [vmem:[%s369 + $0x1e8] sm:$0xff] %vm8161, %v7828
      %8224 = vst.msk [vmem:[%s369 + $0x1f0] sm:$0xff] %vm8161, %v7833
      %8225 = vst.msk [vmem:[%s369 + $0x1f8] sm:$0xff] %vm8161, %v7838
      %8226 = vst.msk [vmem:[%s369 + $0x200] sm:$0xff] %vm8161, %v7843
      %8227 = vst.msk [vmem:[%s369 + $0x208] sm:$0xff] %vm8161, %v7848
      %8228 = vst.msk [vmem:[%s369 + $0x210] sm:$0xff] %vm8161, %v7853
      %8229 = vst.msk [vmem:[%s369 + $0x218] sm:$0xff] %vm8161, %v7858
      %8230 = vst.msk [vmem:[%s369 + $0x220] sm:$0xff] %vm8161, %v7863
      %8231 = vst.msk [vmem:[%s369 + $0x228] sm:$0xff] %vm8161, %v7868
      %8232 = vst.msk [vmem:[%s369 + $0x230] sm:$0xff] %vm8161, %v7873
      %8233 = vst.msk [vmem:[%s369 + $0x238] sm:$0xff] %vm8161, %v7878
      %8234 = vst.msk [vmem:[%s369 + $0x240] sm:$0xff] %vm8161, %v7883
      %8235 = vst.msk [vmem:[%s369 + $0x248] sm:$0xff] %vm8161, %v7888
      %8236 = vst.msk [vmem:[%s369 + $0x250] sm:$0xff] %vm8161, %v7893
      %8237 = vst.msk [vmem:[%s369 + $0x258] sm:$0xff] %vm8161, %v7898
      %8238 = vst.msk [vmem:[%s369 + $0x260] sm:$0xff] %vm8161, %v7903
      %8239 = vst.msk [vmem:[%s369 + $0x268] sm:$0xff] %vm8161, %v7908
      %8240 = vst.msk [vmem:[%s369 + $0x270] sm:$0xff] %vm8161, %v7913
      %8241 = vst.msk [vmem:[%s369 + $0x278] sm:$0xff] %vm8161, %v7918
      %8242 = vst.msk [vmem:[%s369 + $0x280] sm:$0xff] %vm8161, %v7923
      %8243 = vst.msk [vmem:[%s369 + $0x288] sm:$0xff] %vm8161, %v7928
      %8244 = vst.msk [vmem:[%s369 + $0x290] sm:$0xff] %vm8161, %v7933
      %8245 = vst.msk [vmem:[%s369 + $0x298] sm:$0xff] %vm8161, %v7938
      %8246 = vst.msk [vmem:[%s369 + $0x2a0] sm:$0xff] %vm8161, %v7943
      %8247 = vst.msk [vmem:[%s369 + $0x2a8] sm:$0xff] %vm8161, %v7948
      %8248 = vst.msk [vmem:[%s369 + $0x2b0] sm:$0xff] %vm8161, %v7953
      %8249 = vst.msk [vmem:[%s369 + $0x2b8] sm:$0xff] %vm8161, %v7958
      %8250 = vst.msk [vmem:[%s369 + $0x2c0] sm:$0xff] %vm8161, %v7963
      %8251 = vst.msk [vmem:[%s369 + $0x2c8] sm:$0xff] %vm8161, %v7968
      %8252 = vst.msk [vmem:[%s369 + $0x2d0] sm:$0xff] %vm8161, %v7973
      %8253 = vst.msk [vmem:[%s369 + $0x2d8] sm:$0xff] %vm8161, %v7978
      %8254 = vst.msk [vmem:[%s369 + $0x2e0] sm:$0xff] %vm8161, %v7983
      %8255 = vst.msk [vmem:[%s369 + $0x2e8] sm:$0xff] %vm8161, %v7988
      %8256 = vst.msk [vmem:[%s369 + $0x2f0] sm:$0xff] %vm8161, %v7993
      %8257 = vst.msk [vmem:[%s369 + $0x2f8] sm:$0xff] %vm8161, %v7998
      %8258 = vst.msk [vmem:[%s369 + $0x300] sm:$0xff] %vm8161, %v8003
      %8259 = vst.msk [vmem:[%s369 + $0x308] sm:$0xff] %vm8161, %v8008
      %8260 = vst.msk [vmem:[%s369 + $0x310] sm:$0xff] %vm8161, %v8013
      %8261 = vst.msk [vmem:[%s369 + $0x318] sm:$0xff] %vm8161, %v8018
      %8262 = vst.msk [vmem:[%s369 + $0x320] sm:$0xff] %vm8161, %v8023
      %8263 = vst.msk [vmem:[%s369 + $0x328] sm:$0xff] %vm8161, %v8028
      %8264 = vst.msk [vmem:[%s369 + $0x330] sm:$0xff] %vm8161, %v8033
      %8265 = vst.msk [vmem:[%s369 + $0x338] sm:$0xff] %vm8161, %v8038
      %8266 = vst.msk [vmem:[%s369 + $0x340] sm:$0xff] %vm8161, %v8043
      %8267 = vst.msk [vmem:[%s369 + $0x348] sm:$0xff] %vm8161, %v8048
      %8268 = vst.msk [vmem:[%s369 + $0x350] sm:$0xff] %vm8161, %v8053
      %8269 = vst.msk [vmem:[%s369 + $0x358] sm:$0xff] %vm8161, %v8058
      %8270 = vst.msk [vmem:[%s369 + $0x360] sm:$0xff] %vm8161, %v8063
      %8271 = vst.msk [vmem:[%s369 + $0x368] sm:$0xff] %vm8161, %v8068
      %8272 = vst.msk [vmem:[%s369 + $0x370] sm:$0xff] %vm8161, %v8073
      %8273 = vst.msk [vmem:[%s369 + $0x378] sm:$0xff] %vm8161, %v8078
      %8274 = vst.msk [vmem:[%s369 + $0x380] sm:$0xff] %vm8161, %v8083
      %8275 = vst.msk [vmem:[%s369 + $0x388] sm:$0xff] %vm8161, %v8088
      %8276 = vst.msk [vmem:[%s369 + $0x390] sm:$0xff] %vm8161, %v8093
      %8277 = vst.msk [vmem:[%s369 + $0x398] sm:$0xff] %vm8161, %v8098
      %8278 = vst.msk [vmem:[%s369 + $0x3a0] sm:$0xff] %vm8161, %v8103
      %8279 = vst.msk [vmem:[%s369 + $0x3a8] sm:$0xff] %vm8161, %v8108
      %8280 = vst.msk [vmem:[%s369 + $0x3b0] sm:$0xff] %vm8161, %v8113
      %8281 = vst.msk [vmem:[%s369 + $0x3b8] sm:$0xff] %vm8161, %v8118
      %8282 = vst.msk [vmem:[%s369 + $0x3c0] sm:$0xff] %vm8161, %v8123
      %8283 = vst.msk [vmem:[%s369 + $0x3c8] sm:$0xff] %vm8161, %v8128
      %8284 = vst.msk [vmem:[%s369 + $0x3d0] sm:$0xff] %vm8161, %v8133
      %8285 = vst.msk [vmem:[%s369 + $0x3d8] sm:$0xff] %vm8161, %v8138
      %8286 = vst.msk [vmem:[%s369 + $0x3e0] sm:$0xff] %vm8161, %v8143
      %8287 = vst.msk [vmem:[%s369 + $0x3e8] sm:$0xff] %vm8161, %v8148
      %8288 = vst.msk [vmem:[%s369 + $0x3f0] sm:$0xff] %vm8161, %v8153
      %8289 = vst.msk [vmem:[%s369 + $0x3f8] sm:$0xff] %vm8161, %v8158
      %s8290 = smul.u32 128, %s27
      %p8291 = scmp.lt.s32.totalorder %s26, 1
      %s8292 = scalar_select %p8291, %s26, 1
      %p8293 = scmp.lt.s32.totalorder %s8290, 127
      %s8294 = scalar_select %p8293, %s8290, 127
      %s8295 = smul.addr %s8292, 128
      %s8296 = sadd.s32 %s8294, %s8295
      %s8297 = smul.addr %s8296, 8
      %s8298 = scalar_lea.vmem %s7, %s8297
      %s8299 = smul.u32 128, %s27
      %p8300 = scmp.lt.s32.totalorder %s26, 1
      %s8301 = scalar_select %p8300, %s26, 1
      %p8302 = scmp.lt.s32.totalorder %s8299, 127
      %s8303 = scalar_select %p8302, %s8299, 127
      %s8304 = smul.addr %s8301, 128
      %s8305 = sadd.s32 %s8303, %s8304
      %s8306 = smul.addr %s8305, 8
      %s8307 = scalar_lea.vmem %s8, %s8306
      // Predicated region
      $region49: #{tpu_custom_call.1} parent=47 // pred_check
        %p8308 = pneg %p208
      $region50: #{tpu_custom_call.1} parent=47 // pred_check_branch
        %8310 = sbr.rel (%p8308) target = $region52
      $region51: #{tpu_custom_call.1} parent=47 // pred_region
        %s8311 = smul.u32 128, %s27
      $region52: #{tpu_custom_call.1} parent=47 // pred_fallthru
        _
      // Predicated region
      $region53: #{tpu_custom_call.1} parent=47 // pred_check
        %p8312 = pneg %p236
      $region54: #{tpu_custom_call.1} parent=47 // pred_check_branch
        %8314 = sbr.rel (%p8312) target = $region56
      $region55: #{tpu_custom_call.1} parent=47 // pred_region
        %s8315 = smul.u32 128, %s27
      $region56: #{tpu_custom_call.1} parent=47 // pred_fallthru
        _
    $region48: #{tpu_custom_call.1} parent=5 // pred_fallthru
      _
    %p8316 = scmp.le.s32.totalorder 2, %s17
    // Predicated region
    $region57: #{tpu_custom_call.1} parent=5 // pred_check
      %p8317 = pneg %p8316
    $region58: #{tpu_custom_call.1} parent=5 // pred_check_branch
      %8319 = sbr.rel (%p8317) target = $region60
    $region59: #{tpu_custom_call.1} parent=5 // pred_region
      %s8320 = ssub.s32 %s17, 2
      // Predicated region
      $region61: #{tpu_custom_call.1} parent=59 // pred_check
        %p8321 = pneg %p214
      $region62: #{tpu_custom_call.1} parent=59 // pred_check_branch
        %8323 = sbr.rel (%p8321) target = $region64
      $region63: #{tpu_custom_call.1} parent=59 // pred_region
        %s8324 = smul.u32 128, %s29
        %p8325 = scmp.lt.s32.totalorder %s28, 1
        %s8326 = scalar_select %p8325, %s28, 1
        %p8327 = scmp.lt.s32.totalorder %s8324, 127
        %s8328 = scalar_select %p8327, %s8324, 127
        %s8329 = smul.addr %s8326, 128
        %s8330 = sadd.s32 %s8328, %s8329
        %s8331 = smul.addr %s8330, 8
        %s8332 = scalar_lea.vmem %s7, %s8331
      $region64: #{tpu_custom_call.1} parent=59 // pred_fallthru
        _
      // Predicated region
      $region65: #{tpu_custom_call.1} parent=59 // pred_check
        %p8333 = pneg %p242
      $region66: #{tpu_custom_call.1} parent=59 // pred_check_branch
        %8335 = sbr.rel (%p8333) target = $region68
      $region67: #{tpu_custom_call.1} parent=59 // pred_region
        %s8336 = smul.u32 128, %s29
        %p8337 = scmp.lt.s32.totalorder %s28, 1
        %s8338 = scalar_select %p8337, %s28, 1
        %p8339 = scmp.lt.s32.totalorder %s8336, 127
        %s8340 = scalar_select %p8339, %s8336, 127
        %s8341 = smul.addr %s8338, 128
        %s8342 = sadd.s32 %s8340, %s8341
        %s8343 = smul.addr %s8342, 8
        %s8344 = scalar_lea.vmem %s8, %s8343
      $region68: #{tpu_custom_call.1} parent=59 // pred_fallthru
        _
    $region60: #{tpu_custom_call.1} parent=5 // pred_fallthru
      _
  $region6: #{tpu_custom_call.1} parent=0 // loop_footer
    %s21 = sadd.s32 1, %s17
  $region7: #{tpu_custom_call.1} parent=0 // loop_footer_branch
    %16 = sbr.rel target = $region3
  $region8: #{tpu_custom_call.1} parent=0 // loop_exit
    _

</llo_original>
